<compile_context>
chip_gen: v5e
topology: v5e:2x2
jax: 0.10.0
libtpu: 0.0.40
codegen_flags: <defaults>
</compile_context>

<pallas_src>
import numpy as np

import jax
import jax.numpy as jnp
from jax.experimental import pallas as pl
from jax.experimental.pallas import tpu as pltpu

latent_dim = 128
beat_resolution = 4
measure_resolution = 4 * beat_resolution   # 16
n_measures = 4
n_pitches = 72
n_tracks = 5
EPS = 1e-5


# ------------------------------ fused kernel -------------------------------- #

def _generator_kernel(
    z_ref, w0_ref, w1_ref, w2_ref, w3_ref, w4_ref, w5_ref, gb_ref,
    out_ref,
    x0_ref, x1_ref, x2_ref, s3_ref, x3t_ref, x4_ref, st4_ref, st5_ref,
):
    B = z_ref.shape[0]
    f32 = jnp.float32
    bf16 = jnp.bfloat16

    def gvec(lo, hi):
        return gb_ref[0:1, lo:hi], gb_ref[1:2, lo:hi]

    def bn_relu(x, lo, hi):
        # Column-wise train-mode batch norm (biased variance) + ReLU.
        g, b = gvec(lo, hi)
        n = x.shape[0]
        mean = jnp.sum(x, axis=0, keepdims=True) * (1.0 / n)
        xc = x - mean                                   # reused for var + output
        var = jnp.sum(xc * xc, axis=0, keepdims=True) * (1.0 / n)
        return jnp.maximum(xc * jax.lax.rsqrt(var + EPS) * g + b, 0.0)

    def mm(a, w_ref):
        return jnp.dot(a.astype(bf16), w_ref[...], preferred_element_type=f32)

    # ---- transconv0: 128 -> 256 ch, d: 1 -> 4 (kernel == stride (4,1,1)) ----
    y = mm(z_ref[...], w0_ref)                          # (B, 4*256) cols (tap_d, c)
    for k in range(4):
        x0_ref[k * B:(k + 1) * B, :] = y[:, k * 256:(k + 1) * 256]
    a = bn_relu(x0_ref[...], 0, 256)                    # (4B, 256) rows (d, b)

    # ---- transconv1: 256 -> 128 ch, h: 1 -> 4 ----
    y = mm(a, w1_ref)                                   # (4B, 4*128)
    for k in range(4):
        x1_ref[k * 4 * B:(k + 1) * 4 * B, :] = y[:, k * 128:(k + 1) * 128]
    a = bn_relu(x1_ref[...], 256, 384)                  # (16B, 128) rows (h2, d, b)

    # ---- transconv2: 128 -> 64 ch (padded to 128 lanes), w: 1 -> 4 ----
    y = mm(a, w2_ref)                                   # (16B, 4*128)
    for k in range(4):
        x2_ref[k * 16 * B:(k + 1) * 16 * B, :] = y[:, k * 128:(k + 1) * 128]
    a = bn_relu(x2_ref[...], 384, 512)                  # (64B, 128) rows (w, h2, d, b)

    # ---- transconv3: 64 -> 32 ch (padded to 128), w: 4 -> 6, stride-1 overlap-add ----
    y = mm(a, w3_ref)                                   # (64B, 3*128)
    s3_ref[...] = jnp.zeros_like(s3_ref)
    blk = 16 * B
    for tap in range(3):                                # 3 shifted full-width slab adds
        s3_ref[tap * blk:tap * blk + 64 * B, :] = (
            s3_ref[tap * blk:tap * blk + 64 * B, :] + y[:, tap * 128:(tap + 1) * 128])
    a = bn_relu(s3_ref[...], 512, 640)                  # (96B, 128) rows (w', h2, d, b)

    # ---- move w' from rows to lanes: (16B, 6*128), rows (h2, d, b) ----
    for wp in range(6):
        x3t_ref[:, wp * 128:(wp + 1) * 128] = a[wp * blk:(wp + 1) * blk, :]

    # ---- transconv4 (ALL 5 tracks, one matmul): 32 -> 16 ch, h2 -> (h2, tap_h) ----
    y = mm(x3t_ref[...], w4_ref)                        # (16B, 4*512) cols (tap_h, (w',t,c)+pad)
    for k in range(4):
        x4_ref[k * blk:(k + 1) * blk, :] = y[:, k * 512:(k + 1) * 512]

    # BatchNorm per (track, channel): reduce rows AND the 6 w' lane groups.
    x4 = x4_ref[...]                                    # (64B, 512) rows (tap_h, h2, d, b)
    n4 = 64 * B * 6
    g4, be4 = gvec(640, 1152)
    csum = jnp.sum(x4, axis=0, keepdims=True)           # (1, 512)
    grp = (csum[:, 0:80] + csum[:, 80:160] + csum[:, 160:240]
           + csum[:, 240:320] + csum[:, 320:400] + csum[:, 400:480])
    mean80 = grp * (1.0 / n4)
    for k in range(6):
        st4_ref[0:1, k * 80:(k + 1) * 80] = mean80
    st4_ref[0:1, 480:512] = jnp.zeros((1, 32), f32)
    xc = x4 - st4_ref[0:1, :]
    csq = jnp.sum(xc * xc, axis=0, keepdims=True)
    grpv = (csq[:, 0:80] + csq[:, 80:160] + csq[:, 160:240]
            + csq[:, 240:320] + csq[:, 320:400] + csq[:, 400:480])
    var80 = grpv * (1.0 / n4)
    for k in range(6):
        st4_ref[1:2, k * 80:(k + 1) * 80] = var80
    st4_ref[1:2, 480:512] = jnp.zeros((1, 32), f32)
    a = jnp.maximum(xc * jax.lax.rsqrt(st4_ref[1:2, :] + EPS) * g4 + be4, 0.0)

    # ---- transconv5 (ALL tracks, one block-diag matmul): 16 ch -> 12 tap_w ----
    y = mm(a, w5_ref)                                   # (64B, 384) cols (track, w) + 24 pad
    n5 = 64 * B * 72
    g5, be5 = gvec(1152, 1536)
    csum = jnp.sum(y, axis=0, keepdims=True)            # (1, 384)
    ones72 = jnp.ones((1, 72), f32)
    for t in range(n_tracks):
        s_t = jnp.sum(csum[:, t * 72:(t + 1) * 72], keepdims=True) * (1.0 / n5)
        st5_ref[0:1, t * 72:(t + 1) * 72] = s_t * ones72
    st5_ref[0:1, 360:384] = jnp.zeros((1, 24), f32)
    xc = y - st5_ref[0:1, :]
    csq = jnp.sum(xc * xc, axis=0, keepdims=True)
    for t in range(n_tracks):
        v_t = jnp.sum(csq[:, t * 72:(t + 1) * 72], keepdims=True) * (1.0 / n5)
        st5_ref[1:2, t * 72:(t + 1) * 72] = v_t * ones72
    st5_ref[1:2, 360:384] = jnp.zeros((1, 24), f32)
    out_ref[...] = jnp.maximum(
        xc * jax.lax.rsqrt(st5_ref[1:2, :] + EPS) * g5 + be5, 0.0)


# --------------------------- parameter repacking ----------------------------- #

def pack_params(p):
    """Torch-layout params -> matmul-layout (lane-padded, bf16) kernel inputs.

    Conv biases are dropped: every conv feeds a train-mode BatchNorm, whose
    mean subtraction cancels a per-channel constant exactly.
    """
    def np_(a):
        return np.asarray(a, np.float32)

    # transconv0: (128, 256, 4, 1, 1) -> (128, 4*256), cols (tap_d, c)
    w0 = np_(p["W0"]).reshape(latent_dim, 256, 4).transpose(0, 2, 1).reshape(latent_dim, 1024)
    # transconv1: (256, 128, 1, 4, 1) -> (256, 4*128), cols (tap_h2, c)
    w1 = np_(p["W1"]).reshape(256, 128, 4).transpose(0, 2, 1).reshape(256, 512)
    # transconv2: (128, 64, 1, 1, 4) -> (128, 4*128), cout padded 64 -> 128
    w2 = np_(p["W2"]).reshape(128, 64, 4).transpose(0, 2, 1)          # (cin, kw, cout)
    w2 = np.pad(w2, ((0, 0), (0, 0), (0, 64))).reshape(128, 512)
    # transconv3: (64, 32, 1, 1, 3) -> (128, 3*128), cin 64->128, cout 32->128
    w3 = np_(p["W3"]).reshape(64, 32, 3).transpose(0, 2, 1)           # (cin, kw, cout)
    w3 = np.pad(w3, ((0, 64), (0, 0), (0, 96))).reshape(128, 384)

    # transconv4 (all tracks): input lanes (w', c_pad128) -> cols (tap_h, (w', t, c)+pad32)
    w4 = np.zeros((768, 2048), np.float32)
    for t in range(n_tracks):
        wt = np_(p["W4"][t]).reshape(32, 16, 4)                       # (cin, cout, kh)
        for wp in range(6):
            for kh in range(4):
                w4[wp * 128:wp * 128 + 32,
                   kh * 512 + wp * 80 + t * 16: kh * 512 + wp * 80 + (t + 1) * 16] = wt[:, :, kh]

    # transconv5 (all tracks, block-diag): rows (w', t, c)+pad -> cols (t, w'*12+tap_w)+pad
    w5 = np.zeros((512, 384), np.float32)
    for t in range(n_tracks):
        wt = np_(p["W5"][t]).reshape(16, 12)                          # (cin, kw)
        for wp in range(6):
            w5[wp * 80 + t * 16: wp * 80 + (t + 1) * 16,
               t * 72 + wp * 12: t * 72 + (wp + 1) * 12] = wt

    # gamma / beta table (2, 1536): offsets 0,256,384,512,640,1152 (all 128-multiples)
    gb = np.zeros((2, 1536), np.float32)

    def put(col, g, b):
        g, b = np_(g), np_(b)
        gb[0, col:col + g.size] = g
        gb[1, col:col + b.size] = b

    put(0, p["g0"], p["be0"])
    put(256, p["g1"], p["be1"])
    put(384, p["g2"], p["be2"])
    put(512, p["g3"], p["be3"])
    g4 = np.concatenate([np_(p["g4"][t]) for t in range(n_tracks)])   # (80,)
    b4 = np.concatenate([np_(p["be4"][t]) for t in range(n_tracks)])
    gb[0, 640:640 + 480] = np.tile(g4, 6)
    gb[1, 640:640 + 480] = np.tile(b4, 6)
    g5 = np.concatenate([np.repeat(np_(p["g5"][t]), 72) for t in range(n_tracks)])
    b5 = np.concatenate([np.repeat(np_(p["be5"][t]), 72) for t in range(n_tracks)])
    gb[0, 1152:1152 + 360] = g5
    gb[1, 1152:1152 + 360] = b5

    bf = lambda a: jnp.asarray(a, jnp.bfloat16)
    return (bf(w0), bf(w1), bf(w2), bf(w3), bf(w4), bf(w5), jnp.asarray(gb, jnp.float32))


# ------------------------------- forward pass -------------------------------- #

def generator_forward(z, packed):
    B = z.shape[0]
    w0, w1, w2, w3, w4, w5, gb = packed
    vspec = pl.BlockSpec(memory_space=pltpu.MemorySpace.VMEM)

    flat = pl.pallas_call(
        _generator_kernel,
        out_shape=jax.ShapeDtypeStruct((64 * B, 384), jnp.float32),
        in_specs=[vspec] * 8,
        out_specs=vspec,
        scratch_shapes=[
            pltpu.VMEM((4 * B, 256), jnp.float32),    # x0: rows (d, b)
            pltpu.VMEM((16 * B, 128), jnp.float32),   # x1: rows (h2, d, b)
            pltpu.VMEM((64 * B, 128), jnp.float32),   # x2: rows (w, h2, d, b)
            pltpu.VMEM((96 * B, 128), jnp.float32),   # s3: overlap-add, rows (w', h2, d, b)
            pltpu.VMEM((16 * B, 768), jnp.float32),   # x3t: rows (h2, d, b), lanes (w', c)
            pltpu.VMEM((64 * B, 512), jnp.float32),   # x4: rows (tap_h, h2, d, b)
            pltpu.VMEM((2, 512), jnp.float32),        # stage-4 BN mean/var broadcast
            pltpu.VMEM((2, 384), jnp.float32),        # stage-5 BN mean/var broadcast
        ],
        compiler_params=pltpu.CompilerParams(vmem_limit_bytes=32 * 1024 * 1024),
    )(z, w0, w1, w2, w3, w4, w5, gb)

    # kernel rows: (tap_h, h2, d, b); cols: (track, w) + 24 zero pad lanes
    o = flat[:, :360].reshape(4, 4, 4, B, n_tracks, 72)
    o = o.transpose(3, 4, 2, 1, 0, 5)                  # (b, t, d, h2, tap_h, w)
    return o.reshape(B, n_tracks, n_measures * measure_resolution, n_pitches)


# ------------------------ pure-JAX reference (checking) ---------------------- #

def _ref_transconv_stride_eq(x, W, b):
    B, D, H, Wd, Cin = x.shape
    _, Cout, kD, kH, kW = W.shape
    y = x.reshape(-1, Cin) @ W.reshape(Cin, -1)
    y = y + jnp.broadcast_to(b[:, None], (Cout, kD * kH * kW)).reshape(1, -1)
    y = y.reshape(B, D, H, Wd, Cout, kD, kH, kW)
    y = y.transpose(0, 1, 5, 2, 6, 3, 7, 4)
    return y.reshape(B, D * kD, H * kH, Wd * kW, Cout)


def _ref_transconv_w3_s1(x, W, b):
    B, D, H, Wd, Cin = x.shape
    _, Cout, _, _, kW = W.shape
    y = (x.reshape(-1, Cin) @ W.reshape(Cin, -1)).reshape(B, D, H, Wd, Cout, kW)
    Wout = Wd + kW - 1
    out = jnp.zeros((B, D, H, Wout, Cout), jnp.float32)
    for kw in range(kW):
        out = out + jnp.pad(y[..., kw], ((0, 0), (0, 0), (0, 0), (kw, Wout - Wd - kw), (0, 0)))
    return out + b[None, None, None, None, :]


def _ref_bn_relu(x, gamma, beta):
    flat = x.reshape(-1, x.shape[-1])
    mean = flat.mean(axis=0)
    var = ((flat - mean) ** 2).mean(axis=0)
    return jnp.maximum((x - mean) * jax.lax.rsqrt(var + EPS) * gamma + beta, 0.0)


def reference_forward(z, p):
    B = z.shape[0]
    x = z.reshape(B, 1, 1, 1, latent_dim)
    for i in range(3):
        x = _ref_transconv_stride_eq(x, p[f"W{i}"], p[f"b{i}"])
        x = _ref_bn_relu(x, p[f"g{i}"], p[f"be{i}"])
    x = _ref_transconv_w3_s1(x, p["W3"], p["b3"])
    x = _ref_bn_relu(x, p["g3"], p["be3"])
    tracks = []
    for t in range(n_tracks):
        h = _ref_transconv_stride_eq(x, p["W4"][t], p["b4"][t])
        h = _ref_bn_relu(h, p["g4"][t], p["be4"][t])
        h = _ref_transconv_stride_eq(h, p["W5"][t], p["b5"][t])
        h = _ref_bn_relu(h, p["g5"][t], p["be5"][t])
        tracks.append(h[..., 0])                      # (B, 4, 16, 72)
    out = jnp.stack(tracks, axis=1)                   # (B, 5, 4, 16, 72)
    return out.reshape(B, n_tracks, n_measures * measure_resolution, n_pitches)


# ------------------------------- parameters ----------------------------------- #

def init_params(key):
    keys = list(jax.random.split(key, 64))
    it = iter(keys)

    def nxt():
        return next(it)

    params = {}
    specs = [
        (latent_dim, 256, (4, 1, 1)),
        (256, 128, (1, 4, 1)),
        (128, 64, (1, 1, 4)),
        (64, 32, (1, 1, 3)),
    ]
    for i, (cin, cout, ker) in enumerate(specs):
        params[f"W{i}"] = 0.1 * jax.random.normal(nxt(), (cin, cout) + ker, jnp.float32)
        params[f"b{i}"] = 0.02 * jax.random.normal(nxt(), (cout,), jnp.float32)
        params[f"g{i}"] = 1.0 + 0.1 * jax.random.normal(nxt(), (cout,), jnp.float32)
        params[f"be{i}"] = 0.05 * jax.random.normal(nxt(), (cout,), jnp.float32)

    track_specs = {"4": (32, 16, (1, 4, 1)), "5": (16, 1, (1, 1, 12))}
    for name, (cin, cout, ker) in track_specs.items():
        params[f"W{name}"] = [
            0.1 * jax.random.normal(nxt(), (cin, cout) + ker, jnp.float32)
            for _ in range(n_tracks)
        ]
        params[f"b{name}"] = [
            0.02 * jax.random.normal(nxt(), (cout,), jnp.float32) for _ in range(n_tracks)
        ]
        params[f"g{name}"] = [
            1.0 + 0.1 * jax.random.normal(nxt(), (cout,), jnp.float32)
            for _ in range(n_tracks)
        ]
        params[f"be{name}"] = [
            0.05 * jax.random.normal(nxt(), (cout,), jnp.float32) for _ in range(n_tracks)
        ]
    return params


if __name__ == "__main__":
    key = jax.random.PRNGKey(0)
    kz, kp = jax.random.split(key)

    B = 2
    z = jax.random.normal(kz, (B, latent_dim), jnp.float32)
    params = init_params(kp)
    packed = pack_params(params)          # host-side (numpy) repacking, outside jit

    fwd = jax.jit(generator_forward)
    out = jax.block_until_ready(fwd(z, packed))

    assert out.shape == (B, n_tracks, n_measures * measure_resolution, n_pitches), out.shape
    assert out.dtype == jnp.float32
    assert bool(jnp.all(jnp.isfinite(out)))
    assert bool(jnp.all(out >= 0.0))      # final op is ReLU

    # cross-check against an independent pure-JAX implementation (f32, with biases)
    ref = jax.block_until_ready(jax.jit(reference_forward)(z, params))
    rel_l2 = float(jnp.linalg.norm(out - ref) / (jnp.linalg.norm(ref) + 1e-12))
    assert rel_l2 < 0.05, f"mismatch vs pure-JAX reference: rel_l2={rel_l2}"

    print("KERNEL_OK")
</pallas_src>

<mosaic_0001>
module attributes {stable_mosaic.version = 11 : i64} {
  func.func @_generator_kernel(%arg0: memref<2x128xf32, #tpu.memory_space<vmem>>, %arg1: memref<128x1024xbf16, #tpu.memory_space<vmem>>, %arg2: memref<256x512xbf16, #tpu.memory_space<vmem>>, %arg3: memref<128x512xbf16, #tpu.memory_space<vmem>>, %arg4: memref<128x384xbf16, #tpu.memory_space<vmem>>, %arg5: memref<768x2048xbf16, #tpu.memory_space<vmem>>, %arg6: memref<512x384xbf16, #tpu.memory_space<vmem>>, %arg7: memref<2x1536xf32, #tpu.memory_space<vmem>>, %arg8: memref<128x384xf32, #tpu.memory_space<vmem>>, %arg9: memref<8x256xf32, #tpu.memory_space<vmem>>, %arg10: memref<32x128xf32, #tpu.memory_space<vmem>>, %arg11: memref<128x128xf32, #tpu.memory_space<vmem>>, %arg12: memref<192x128xf32, #tpu.memory_space<vmem>>, %arg13: memref<32x768xf32, #tpu.memory_space<vmem>>, %arg14: memref<128x512xf32, #tpu.memory_space<vmem>>, %arg15: memref<2x512xf32, #tpu.memory_space<vmem>>, %arg16: memref<2x384xf32, #tpu.memory_space<vmem>>) attributes {dimension_semantics = [], scalar_prefetch = 0 : i64, scratch_operands = 8 : i64, tpu.core_type = #tpu.core_type<tc>} {
    %c0 = arith.constant 0 : index
    %c0_0 = arith.constant 0 : index
    %0 = vector.load %arg0[%c0, %c0_0] : memref<2x128xf32, #tpu.memory_space<vmem>>, vector<2x128xf32>
    %1 = arith.truncf %0 : vector<2x128xf32> to vector<2x128xbf16>
    %c0_1 = arith.constant 0 : index
    %c0_2 = arith.constant 0 : index
    %2 = vector.load %arg1[%c0_1, %c0_2] : memref<128x1024xbf16, #tpu.memory_space<vmem>>, vector<128x1024xbf16>
    %cst = arith.constant dense<0.000000e+00> : vector<2x1024xf32>
    %3 = tpu.matmul %1, %2, %cst {dimension_numbers = #tpu.dot_dimension_numbers<[1], [0], [0], [1], [0, 0, 1, 1], [], []>} : vector<2x128xbf16>, vector<128x1024xbf16>, vector<2x1024xf32> -> vector<2x1024xf32>
    %4 = vector.extract_strided_slice %3 {offsets = [0, 0], sizes = [2, 256], strides = [1, 1]} : vector<2x1024xf32> to vector<2x256xf32>
    %c0_3 = arith.constant 0 : index
    %c0_4 = arith.constant 0 : index
    %5 = vector.load %arg9[%c0_3, %c0_4] : memref<8x256xf32, #tpu.memory_space<vmem>>, vector<2x256xf32>
    tpu.vector_store %arg9[%c0_3, %c0_4], %4 {strides = array<i32>} : memref<8x256xf32, #tpu.memory_space<vmem>>, vector<2x256xf32>,
    %6 = vector.extract_strided_slice %3 {offsets = [0, 256], sizes = [2, 256], strides = [1, 1]} : vector<2x1024xf32> to vector<2x256xf32>
    %c2 = arith.constant 2 : index
    %c0_5 = arith.constant 0 : index
    %7 = vector.load %arg9[%c2, %c0_5] : memref<8x256xf32, #tpu.memory_space<vmem>>, vector<2x256xf32>
    tpu.vector_store %arg9[%c2, %c0_5], %6 {strides = array<i32>} : memref<8x256xf32, #tpu.memory_space<vmem>>, vector<2x256xf32>,
    %8 = vector.extract_strided_slice %3 {offsets = [0, 512], sizes = [2, 256], strides = [1, 1]} : vector<2x1024xf32> to vector<2x256xf32>
    %c4 = arith.constant 4 : index
    %c0_6 = arith.constant 0 : index
    %9 = vector.load %arg9[%c4, %c0_6] : memref<8x256xf32, #tpu.memory_space<vmem>>, vector<2x256xf32>
    tpu.vector_store %arg9[%c4, %c0_6], %8 {strides = array<i32>} : memref<8x256xf32, #tpu.memory_space<vmem>>, vector<2x256xf32>,
    %10 = vector.extract_strided_slice %3 {offsets = [0, 768], sizes = [2, 256], strides = [1, 1]} : vector<2x1024xf32> to vector<2x256xf32>
    %c6 = arith.constant 6 : index
    %c0_7 = arith.constant 0 : index
    %11 = vector.load %arg9[%c6, %c0_7] : memref<8x256xf32, #tpu.memory_space<vmem>>, vector<2x256xf32>
    tpu.vector_store %arg9[%c6, %c0_7], %10 {strides = array<i32>} : memref<8x256xf32, #tpu.memory_space<vmem>>, vector<2x256xf32>,
    %c0_8 = arith.constant 0 : index
    %c0_9 = arith.constant 0 : index
    %12 = vector.load %arg9[%c0_8, %c0_9] : memref<8x256xf32, #tpu.memory_space<vmem>>, vector<8x256xf32>
    %c0_10 = arith.constant 0 : index
    %c0_11 = arith.constant 0 : index
    %13 = vector.load %arg7[%c0_10, %c0_11] : memref<2x1536xf32, #tpu.memory_space<vmem>>, vector<1x256xf32>
    %c1 = arith.constant 1 : index
    %c0_12 = arith.constant 0 : index
    %14 = vector.load %arg7[%c1, %c0_12] : memref<2x1536xf32, #tpu.memory_space<vmem>>, vector<1x256xf32>
    %cst_13 = arith.constant dense<0.000000e+00> : vector<256xf32>
    %15 = vector.multi_reduction <add>, %12, %cst_13 [0] : vector<8x256xf32> to vector<256xf32>
    %16 = vector.shape_cast %15 : vector<256xf32> to vector<1x256xf32>
    %cst_14 = arith.constant 1.250000e-01 : f32
    %17 = vector.broadcast %cst_14 : f32 to vector<1x256xf32>
    %18 = arith.mulf %16, %17 : vector<1x256xf32>
    %19 = vector.broadcast %18 : vector<1x256xf32> to vector<8x256xf32>
    %20 = arith.subf %12, %19 : vector<8x256xf32>
    %21 = arith.mulf %20, %20 : vector<8x256xf32>
    %cst_15 = arith.constant dense<0.000000e+00> : vector<256xf32>
    %22 = vector.multi_reduction <add>, %21, %cst_15 [0] : vector<8x256xf32> to vector<256xf32>
    %23 = vector.shape_cast %22 : vector<256xf32> to vector<1x256xf32>
    %cst_16 = arith.constant 1.250000e-01 : f32
    %24 = vector.broadcast %cst_16 : f32 to vector<1x256xf32>
    %25 = arith.mulf %23, %24 : vector<1x256xf32>
    %cst_17 = arith.constant 9.99999974E-6 : f32
    %26 = vector.broadcast %cst_17 : f32 to vector<1x256xf32>
    %27 = arith.addf %25, %26 : vector<1x256xf32>
    %28 = math.rsqrt %27 : vector<1x256xf32>
    %29 = vector.broadcast %28 : vector<1x256xf32> to vector<8x256xf32>
    %30 = arith.mulf %20, %29 : vector<8x256xf32>
    %31 = vector.broadcast %13 : vector<1x256xf32> to vector<8x256xf32>
    %32 = arith.mulf %30, %31 : vector<8x256xf32>
    %33 = vector.broadcast %14 : vector<1x256xf32> to vector<8x256xf32>
    %34 = arith.addf %32, %33 : vector<8x256xf32>
    %cst_18 = arith.constant 0.000000e+00 : f32
    %35 = vector.broadcast %cst_18 : f32 to vector<8x256xf32>
    %36 = arith.maximumf %34, %35 : vector<8x256xf32>
    %37 = arith.truncf %36 : vector<8x256xf32> to vector<8x256xbf16>
    %c0_19 = arith.constant 0 : index
    %c0_20 = arith.constant 0 : index
    %38 = vector.load %arg2[%c0_19, %c0_20] : memref<256x512xbf16, #tpu.memory_space<vmem>>, vector<256x512xbf16>
    %cst_21 = arith.constant dense<0.000000e+00> : vector<8x512xf32>
    %39 = tpu.matmul %37, %38, %cst_21 {dimension_numbers = #tpu.dot_dimension_numbers<[1], [0], [0], [1], [0, 0, 1, 1], [], []>} : vector<8x256xbf16>, vector<256x512xbf16>, vector<8x512xf32> -> vector<8x512xf32>
    %40 = vector.extract_strided_slice %39 {offsets = [0, 0], sizes = [8, 128], strides = [1, 1]} : vector<8x512xf32> to vector<8x128xf32>
    %c0_22 = arith.constant 0 : index
    %c0_23 = arith.constant 0 : index
    %41 = vector.load %arg10[%c0_22, %c0_23] : memref<32x128xf32, #tpu.memory_space<vmem>>, vector<8x128xf32>
    tpu.vector_store %arg10[%c0_22, %c0_23], %40 {strides = array<i32>} : memref<32x128xf32, #tpu.memory_space<vmem>>, vector<8x128xf32>,
    %42 = vector.extract_strided_slice %39 {offsets = [0, 128], sizes = [8, 128], strides = [1, 1]} : vector<8x512xf32> to vector<8x128xf32>
    %c8 = arith.constant 8 : index
    %c0_24 = arith.constant 0 : index
    %43 = vector.load %arg10[%c8, %c0_24] : memref<32x128xf32, #tpu.memory_space<vmem>>, vector<8x128xf32>
    tpu.vector_store %arg10[%c8, %c0_24], %42 {strides = array<i32>} : memref<32x128xf32, #tpu.memory_space<vmem>>, vector<8x128xf32>,
    %44 = vector.extract_strided_slice %39 {offsets = [0, 256], sizes = [8, 128], strides = [1, 1]} : vector<8x512xf32> to vector<8x128xf32>
    %c16 = arith.constant 16 : index
    %c0_25 = arith.constant 0 : index
    %45 = vector.load %arg10[%c16, %c0_25] : memref<32x128xf32, #tpu.memory_space<vmem>>, vector<8x128xf32>
    tpu.vector_store %arg10[%c16, %c0_25], %44 {strides = array<i32>} : memref<32x128xf32, #tpu.memory_space<vmem>>, vector<8x128xf32>,
    %46 = vector.extract_strided_slice %39 {offsets = [0, 384], sizes = [8, 128], strides = [1, 1]} : vector<8x512xf32> to vector<8x128xf32>
    %c24 = arith.constant 24 : index
    %c0_26 = arith.constant 0 : index
    %47 = vector.load %arg10[%c24, %c0_26] : memref<32x128xf32, #tpu.memory_space<vmem>>, vector<8x128xf32>
    tpu.vector_store %arg10[%c24, %c0_26], %46 {strides = array<i32>} : memref<32x128xf32, #tpu.memory_space<vmem>>, vector<8x128xf32>,
    %c0_27 = arith.constant 0 : index
    %c0_28 = arith.constant 0 : index
    %48 = vector.load %arg10[%c0_27, %c0_28] : memref<32x128xf32, #tpu.memory_space<vmem>>, vector<32x128xf32>
    %c0_29 = arith.constant 0 : index
    %c256 = arith.constant 256 : index
    %49 = vector.load %arg7[%c0_29, %c256] : memref<2x1536xf32, #tpu.memory_space<vmem>>, vector<1x128xf32>
    %c1_30 = arith.constant 1 : index
    %c256_31 = arith.constant 256 : index
    %50 = vector.load %arg7[%c1_30, %c256_31] : memref<2x1536xf32, #tpu.memory_space<vmem>>, vector<1x128xf32>
    %cst_32 = arith.constant dense<0.000000e+00> : vector<128xf32>
    %51 = vector.multi_reduction <add>, %48, %cst_32 [0] : vector<32x128xf32> to vector<128xf32>
    %52 = vector.shape_cast %51 : vector<128xf32> to vector<1x128xf32>
    %cst_33 = arith.constant 3.125000e-02 : f32
    %53 = vector.broadcast %cst_33 : f32 to vector<1x128xf32>
    %54 = arith.mulf %52, %53 : vector<1x128xf32>
    %55 = vector.broadcast %54 : vector<1x128xf32> to vector<32x128xf32>
    %56 = arith.subf %48, %55 : vector<32x128xf32>
    %57 = arith.mulf %56, %56 : vector<32x128xf32>
    %cst_34 = arith.constant dense<0.000000e+00> : vector<128xf32>
    %58 = vector.multi_reduction <add>, %57, %cst_34 [0] : vector<32x128xf32> to vector<128xf32>
    %59 = vector.shape_cast %58 : vector<128xf32> to vector<1x128xf32>
    %cst_35 = arith.constant 3.125000e-02 : f32
    %60 = vector.broadcast %cst_35 : f32 to vector<1x128xf32>
    %61 = arith.mulf %59, %60 : vector<1x128xf32>
    %cst_36 = arith.constant 9.99999974E-6 : f32
    %62 = vector.broadcast %cst_36 : f32 to vector<1x128xf32>
    %63 = arith.addf %61, %62 : vector<1x128xf32>
    %64 = math.rsqrt %63 : vector<1x128xf32>
    %65 = vector.broadcast %64 : vector<1x128xf32> to vector<32x128xf32>
    %66 = arith.mulf %56, %65 : vector<32x128xf32>
    %67 = vector.broadcast %49 : vector<1x128xf32> to vector<32x128xf32>
    %68 = arith.mulf %66, %67 : vector<32x128xf32>
    %69 = vector.broadcast %50 : vector<1x128xf32> to vector<32x128xf32>
    %70 = arith.addf %68, %69 : vector<32x128xf32>
    %cst_37 = arith.constant 0.000000e+00 : f32
    %71 = vector.broadcast %cst_37 : f32 to vector<32x128xf32>
    %72 = arith.maximumf %70, %71 : vector<32x128xf32>
    %73 = arith.truncf %72 : vector<32x128xf32> to vector<32x128xbf16>
    %c0_38 = arith.constant 0 : index
    %c0_39 = arith.constant 0 : index
    %74 = vector.load %arg3[%c0_38, %c0_39] : memref<128x512xbf16, #tpu.memory_space<vmem>>, vector<128x512xbf16>
    %cst_40 = arith.constant dense<0.000000e+00> : vector<32x512xf32>
    %75 = tpu.matmul %73, %74, %cst_40 {dimension_numbers = #tpu.dot_dimension_numbers<[1], [0], [0], [1], [0, 0, 1, 1], [], []>} : vector<32x128xbf16>, vector<128x512xbf16>, vector<32x512xf32> -> vector<32x512xf32>
    %76 = vector.extract_strided_slice %75 {offsets = [0, 0], sizes = [32, 128], strides = [1, 1]} : vector<32x512xf32> to vector<32x128xf32>
    %c0_41 = arith.constant 0 : index
    %c0_42 = arith.constant 0 : index
    %77 = vector.load %arg11[%c0_41, %c0_42] : memref<128x128xf32, #tpu.memory_space<vmem>>, vector<32x128xf32>
    tpu.vector_store %arg11[%c0_41, %c0_42], %76 {strides = array<i32>} : memref<128x128xf32, #tpu.memory_space<vmem>>, vector<32x128xf32>,
    %78 = vector.extract_strided_slice %75 {offsets = [0, 128], sizes = [32, 128], strides = [1, 1]} : vector<32x512xf32> to vector<32x128xf32>
    %c32 = arith.constant 32 : index
    %c0_43 = arith.constant 0 : index
    %79 = vector.load %arg11[%c32, %c0_43] : memref<128x128xf32, #tpu.memory_space<vmem>>, vector<32x128xf32>
    tpu.vector_store %arg11[%c32, %c0_43], %78 {strides = array<i32>} : memref<128x128xf32, #tpu.memory_space<vmem>>, vector<32x128xf32>,
    %80 = vector.extract_strided_slice %75 {offsets = [0, 256], sizes = [32, 128], strides = [1, 1]} : vector<32x512xf32> to vector<32x128xf32>
    %c64 = arith.constant 64 : index
    %c0_44 = arith.constant 0 : index
    %81 = vector.load %arg11[%c64, %c0_44] : memref<128x128xf32, #tpu.memory_space<vmem>>, vector<32x128xf32>
    tpu.vector_store %arg11[%c64, %c0_44], %80 {strides = array<i32>} : memref<128x128xf32, #tpu.memory_space<vmem>>, vector<32x128xf32>,
    %82 = vector.extract_strided_slice %75 {offsets = [0, 384], sizes = [32, 128], strides = [1, 1]} : vector<32x512xf32> to vector<32x128xf32>
    %c96 = arith.constant 96 : index
    %c0_45 = arith.constant 0 : index
    %83 = vector.load %arg11[%c96, %c0_45] : memref<128x128xf32, #tpu.memory_space<vmem>>, vector<32x128xf32>
    tpu.vector_store %arg11[%c96, %c0_45], %82 {strides = array<i32>} : memref<128x128xf32, #tpu.memory_space<vmem>>, vector<32x128xf32>,
    %c0_46 = arith.constant 0 : index
    %c0_47 = arith.constant 0 : index
    %84 = vector.load %arg11[%c0_46, %c0_47] : memref<128x128xf32, #tpu.memory_space<vmem>>, vector<128x128xf32>
    %c0_48 = arith.constant 0 : index
    %c384 = arith.constant 384 : index
    %85 = vector.load %arg7[%c0_48, %c384] : memref<2x1536xf32, #tpu.memory_space<vmem>>, vector<1x128xf32>
    %c1_49 = arith.constant 1 : index
    %c384_50 = arith.constant 384 : index
    %86 = vector.load %arg7[%c1_49, %c384_50] : memref<2x1536xf32, #tpu.memory_space<vmem>>, vector<1x128xf32>
    %cst_51 = arith.constant dense<0.000000e+00> : vector<128xf32>
    %87 = vector.multi_reduction <add>, %84, %cst_51 [0] : vector<128x128xf32> to vector<128xf32>
    %88 = vector.shape_cast %87 : vector<128xf32> to vector<1x128xf32>
    %cst_52 = arith.constant 7.812500e-03 : f32
    %89 = vector.broadcast %cst_52 : f32 to vector<1x128xf32>
    %90 = arith.mulf %88, %89 : vector<1x128xf32>
    %91 = vector.broadcast %90 : vector<1x128xf32> to vector<128x128xf32>
    %92 = arith.subf %84, %91 : vector<128x128xf32>
    %93 = arith.mulf %92, %92 : vector<128x128xf32>
    %cst_53 = arith.constant dense<0.000000e+00> : vector<128xf32>
    %94 = vector.multi_reduction <add>, %93, %cst_53 [0] : vector<128x128xf32> to vector<128xf32>
    %95 = vector.shape_cast %94 : vector<128xf32> to vector<1x128xf32>
    %cst_54 = arith.constant 7.812500e-03 : f32
    %96 = vector.broadcast %cst_54 : f32 to vector<1x128xf32>
    %97 = arith.mulf %95, %96 : vector<1x128xf32>
    %cst_55 = arith.constant 9.99999974E-6 : f32
    %98 = vector.broadcast %cst_55 : f32 to vector<1x128xf32>
    %99 = arith.addf %97, %98 : vector<1x128xf32>
    %100 = math.rsqrt %99 : vector<1x128xf32>
    %101 = vector.broadcast %100 : vector<1x128xf32> to vector<128x128xf32>
    %102 = arith.mulf %92, %101 : vector<128x128xf32>
    %103 = vector.broadcast %85 : vector<1x128xf32> to vector<128x128xf32>
    %104 = arith.mulf %102, %103 : vector<128x128xf32>
    %105 = vector.broadcast %86 : vector<1x128xf32> to vector<128x128xf32>
    %106 = arith.addf %104, %105 : vector<128x128xf32>
    %cst_56 = arith.constant 0.000000e+00 : f32
    %107 = vector.broadcast %cst_56 : f32 to vector<128x128xf32>
    %108 = arith.maximumf %106, %107 : vector<128x128xf32>
    %109 = arith.truncf %108 : vector<128x128xf32> to vector<128x128xbf16>
    %c0_57 = arith.constant 0 : index
    %c0_58 = arith.constant 0 : index
    %110 = vector.load %arg4[%c0_57, %c0_58] : memref<128x384xbf16, #tpu.memory_space<vmem>>, vector<128x384xbf16>
    %cst_59 = arith.constant dense<0.000000e+00> : vector<128x384xf32>
    %111 = tpu.matmul %109, %110, %cst_59 {dimension_numbers = #tpu.dot_dimension_numbers<[1], [0], [0], [1], [0, 0, 1, 1], [], []>} : vector<128x128xbf16>, vector<128x384xbf16>, vector<128x384xf32> -> vector<128x384xf32>
    %cst_60 = arith.constant 0.000000e+00 : f32
    %112 = vector.broadcast %cst_60 : f32 to vector<192x128xf32>
    %c0_61 = arith.constant 0 : index
    %c0_62 = arith.constant 0 : index
    %113 = vector.load %arg12[%c0_61, %c0_62] : memref<192x128xf32, #tpu.memory_space<vmem>>, vector<192x128xf32>
    tpu.vector_store %arg12[%c0_61, %c0_62], %112 {strides = array<i32>} : memref<192x128xf32, #tpu.memory_space<vmem>>, vector<192x128xf32>,
    %c0_63 = arith.constant 0 : index
    %c0_64 = arith.constant 0 : index
    %114 = vector.load %arg12[%c0_63, %c0_64] : memref<192x128xf32, #tpu.memory_space<vmem>>, vector<128x128xf32>
    %115 = vector.extract_strided_slice %111 {offsets = [0, 0], sizes = [128, 128], strides = [1, 1]} : vector<128x384xf32> to vector<128x128xf32>
    %116 = arith.addf %114, %115 : vector<128x128xf32>
    %c0_65 = arith.constant 0 : index
    %c0_66 = arith.constant 0 : index
    %117 = vector.load %arg12[%c0_65, %c0_66] : memref<192x128xf32, #tpu.memory_space<vmem>>, vector<128x128xf32>
    tpu.vector_store %arg12[%c0_65, %c0_66], %116 {strides = array<i32>} : memref<192x128xf32, #tpu.memory_space<vmem>>, vector<128x128xf32>,
    %c32_67 = arith.constant 32 : index
    %c0_68 = arith.constant 0 : index
    %118 = vector.load %arg12[%c32_67, %c0_68] : memref<192x128xf32, #tpu.memory_space<vmem>>, vector<128x128xf32>
    %119 = vector.extract_strided_slice %111 {offsets = [0, 128], sizes = [128, 128], strides = [1, 1]} : vector<128x384xf32> to vector<128x128xf32>
    %120 = arith.addf %118, %119 : vector<128x128xf32>
    %c32_69 = arith.constant 32 : index
    %c0_70 = arith.constant 0 : index
    %121 = vector.load %arg12[%c32_69, %c0_70] : memref<192x128xf32, #tpu.memory_space<vmem>>, vector<128x128xf32>
    tpu.vector_store %arg12[%c32_69, %c0_70], %120 {strides = array<i32>} : memref<192x128xf32, #tpu.memory_space<vmem>>, vector<128x128xf32>,
    %c64_71 = arith.constant 64 : index
    %c0_72 = arith.constant 0 : index
    %122 = vector.load %arg12[%c64_71, %c0_72] : memref<192x128xf32, #tpu.memory_space<vmem>>, vector<128x128xf32>
    %123 = vector.extract_strided_slice %111 {offsets = [0, 256], sizes = [128, 128], strides = [1, 1]} : vector<128x384xf32> to vector<128x128xf32>
    %124 = arith.addf %122, %123 : vector<128x128xf32>
    %c64_73 = arith.constant 64 : index
    %c0_74 = arith.constant 0 : index
    %125 = vector.load %arg12[%c64_73, %c0_74] : memref<192x128xf32, #tpu.memory_space<vmem>>, vector<128x128xf32>
    tpu.vector_store %arg12[%c64_73, %c0_74], %124 {strides = array<i32>} : memref<192x128xf32, #tpu.memory_space<vmem>>, vector<128x128xf32>,
    %c0_75 = arith.constant 0 : index
    %c0_76 = arith.constant 0 : index
    %126 = vector.load %arg12[%c0_75, %c0_76] : memref<192x128xf32, #tpu.memory_space<vmem>>, vector<192x128xf32>
    %c0_77 = arith.constant 0 : index
    %c512 = arith.constant 512 : index
    %127 = vector.load %arg7[%c0_77, %c512] : memref<2x1536xf32, #tpu.memory_space<vmem>>, vector<1x128xf32>
    %c1_78 = arith.constant 1 : index
    %c512_79 = arith.constant 512 : index
    %128 = vector.load %arg7[%c1_78, %c512_79] : memref<2x1536xf32, #tpu.memory_space<vmem>>, vector<1x128xf32>
    %cst_80 = arith.constant dense<0.000000e+00> : vector<128xf32>
    %129 = vector.multi_reduction <add>, %126, %cst_80 [0] : vector<192x128xf32> to vector<128xf32>
    %130 = vector.shape_cast %129 : vector<128xf32> to vector<1x128xf32>
    %cst_81 = arith.constant 0.00520833349 : f32
    %131 = vector.broadcast %cst_81 : f32 to vector<1x128xf32>
    %132 = arith.mulf %130, %131 : vector<1x128xf32>
    %133 = vector.broadcast %132 : vector<1x128xf32> to vector<192x128xf32>
    %134 = arith.subf %126, %133 : vector<192x128xf32>
    %135 = arith.mulf %134, %134 : vector<192x128xf32>
    %cst_82 = arith.constant dense<0.000000e+00> : vector<128xf32>
    %136 = vector.multi_reduction <add>, %135, %cst_82 [0] : vector<192x128xf32> to vector<128xf32>
    %137 = vector.shape_cast %136 : vector<128xf32> to vector<1x128xf32>
    %cst_83 = arith.constant 0.00520833349 : f32
    %138 = vector.broadcast %cst_83 : f32 to vector<1x128xf32>
    %139 = arith.mulf %137, %138 : vector<1x128xf32>
    %cst_84 = arith.constant 9.99999974E-6 : f32
    %140 = vector.broadcast %cst_84 : f32 to vector<1x128xf32>
    %141 = arith.addf %139, %140 : vector<1x128xf32>
    %142 = math.rsqrt %141 : vector<1x128xf32>
    %143 = vector.broadcast %142 : vector<1x128xf32> to vector<192x128xf32>
    %144 = arith.mulf %134, %143 : vector<192x128xf32>
    %145 = vector.broadcast %127 : vector<1x128xf32> to vector<192x128xf32>
    %146 = arith.mulf %144, %145 : vector<192x128xf32>
    %147 = vector.broadcast %128 : vector<1x128xf32> to vector<192x128xf32>
    %148 = arith.addf %146, %147 : vector<192x128xf32>
    %cst_85 = arith.constant 0.000000e+00 : f32
    %149 = vector.broadcast %cst_85 : f32 to vector<192x128xf32>
    %150 = arith.maximumf %148, %149 : vector<192x128xf32>
    %151 = vector.extract_strided_slice %150 {offsets = [0, 0], sizes = [32, 128], strides = [1, 1]} : vector<192x128xf32> to vector<32x128xf32>
    %c0_86 = arith.constant 0 : index
    %c0_87 = arith.constant 0 : index
    %152 = vector.load %arg13[%c0_86, %c0_87] : memref<32x768xf32, #tpu.memory_space<vmem>>, vector<32x128xf32>
    tpu.vector_store %arg13[%c0_86, %c0_87], %151 {strides = array<i32>} : memref<32x768xf32, #tpu.memory_space<vmem>>, vector<32x128xf32>,
    %153 = vector.extract_strided_slice %150 {offsets = [32, 0], sizes = [32, 128], strides = [1, 1]} : vector<192x128xf32> to vector<32x128xf32>
    %c0_88 = arith.constant 0 : index
    %c128 = arith.constant 128 : index
    %154 = vector.load %arg13[%c0_88, %c128] : memref<32x768xf32, #tpu.memory_space<vmem>>, vector<32x128xf32>
    tpu.vector_store %arg13[%c0_88, %c128], %153 {strides = array<i32>} : memref<32x768xf32, #tpu.memory_space<vmem>>, vector<32x128xf32>,
    %155 = vector.extract_strided_slice %150 {offsets = [64, 0], sizes = [32, 128], strides = [1, 1]} : vector<192x128xf32> to vector<32x128xf32>
    %c0_89 = arith.constant 0 : index
    %c256_90 = arith.constant 256 : index
    %156 = vector.load %arg13[%c0_89, %c256_90] : memref<32x768xf32, #tpu.memory_space<vmem>>, vector<32x128xf32>
    tpu.vector_store %arg13[%c0_89, %c256_90], %155 {strides = array<i32>} : memref<32x768xf32, #tpu.memory_space<vmem>>, vector<32x128xf32>,
    %157 = vector.extract_strided_slice %150 {offsets = [96, 0], sizes = [32, 128], strides = [1, 1]} : vector<192x128xf32> to vector<32x128xf32>
    %c0_91 = arith.constant 0 : index
    %c384_92 = arith.constant 384 : index
    %158 = vector.load %arg13[%c0_91, %c384_92] : memref<32x768xf32, #tpu.memory_space<vmem>>, vector<32x128xf32>
    tpu.vector_store %arg13[%c0_91, %c384_92], %157 {strides = array<i32>} : memref<32x768xf32, #tpu.memory_space<vmem>>, vector<32x128xf32>,
    %159 = vector.extract_strided_slice %150 {offsets = [128, 0], sizes = [32, 128], strides = [1, 1]} : vector<192x128xf32> to vector<32x128xf32>
    %c0_93 = arith.constant 0 : index
    %c512_94 = arith.constant 512 : index
    %160 = vector.load %arg13[%c0_93, %c512_94] : memref<32x768xf32, #tpu.memory_space<vmem>>, vector<32x128xf32>
    tpu.vector_store %arg13[%c0_93, %c512_94], %159 {strides = array<i32>} : memref<32x768xf32, #tpu.memory_space<vmem>>, vector<32x128xf32>,
    %161 = vector.extract_strided_slice %150 {offsets = [160, 0], sizes = [32, 128], strides = [1, 1]} : vector<192x128xf32> to vector<32x128xf32>
    %c0_95 = arith.constant 0 : index
    %c640 = arith.constant 640 : index
    %162 = vector.load %arg13[%c0_95, %c640] : memref<32x768xf32, #tpu.memory_space<vmem>>, vector<32x128xf32>
    tpu.vector_store %arg13[%c0_95, %c640], %161 {strides = array<i32>} : memref<32x768xf32, #tpu.memory_space<vmem>>, vector<32x128xf32>,
    %c0_96 = arith.constant 0 : index
    %c0_97 = arith.constant 0 : index
    %163 = vector.load %arg13[%c0_96, %c0_97] : memref<32x768xf32, #tpu.memory_space<vmem>>, vector<32x768xf32>
    %164 = arith.truncf %163 : vector<32x768xf32> to vector<32x768xbf16>
    %c0_98 = arith.constant 0 : index
    %c0_99 = arith.constant 0 : index
    %165 = vector.load %arg5[%c0_98, %c0_99] : memref<768x2048xbf16, #tpu.memory_space<vmem>>, vector<768x2048xbf16>
    %cst_100 = arith.constant dense<0.000000e+00> : vector<32x2048xf32>
    %166 = tpu.matmul %164, %165, %cst_100 {dimension_numbers = #tpu.dot_dimension_numbers<[1], [0], [0], [1], [0, 0, 1, 1], [], []>} : vector<32x768xbf16>, vector<768x2048xbf16>, vector<32x2048xf32> -> vector<32x2048xf32>
    %167 = vector.extract_strided_slice %166 {offsets = [0, 0], sizes = [32, 512], strides = [1, 1]} : vector<32x2048xf32> to vector<32x512xf32>
    %c0_101 = arith.constant 0 : index
    %c0_102 = arith.constant 0 : index
    %168 = vector.load %arg14[%c0_101, %c0_102] : memref<128x512xf32, #tpu.memory_space<vmem>>, vector<32x512xf32>
    tpu.vector_store %arg14[%c0_101, %c0_102], %167 {strides = array<i32>} : memref<128x512xf32, #tpu.memory_space<vmem>>, vector<32x512xf32>,
    %169 = vector.extract_strided_slice %166 {offsets = [0, 512], sizes = [32, 512], strides = [1, 1]} : vector<32x2048xf32> to vector<32x512xf32>
    %c32_103 = arith.constant 32 : index
    %c0_104 = arith.constant 0 : index
    %170 = vector.load %arg14[%c32_103, %c0_104] : memref<128x512xf32, #tpu.memory_space<vmem>>, vector<32x512xf32>
    tpu.vector_store %arg14[%c32_103, %c0_104], %169 {strides = array<i32>} : memref<128x512xf32, #tpu.memory_space<vmem>>, vector<32x512xf32>,
    %171 = vector.extract_strided_slice %166 {offsets = [0, 1024], sizes = [32, 512], strides = [1, 1]} : vector<32x2048xf32> to vector<32x512xf32>
    %c64_105 = arith.constant 64 : index
    %c0_106 = arith.constant 0 : index
    %172 = vector.load %arg14[%c64_105, %c0_106] : memref<128x512xf32, #tpu.memory_space<vmem>>, vector<32x512xf32>
    tpu.vector_store %arg14[%c64_105, %c0_106], %171 {strides = array<i32>} : memref<128x512xf32, #tpu.memory_space<vmem>>, vector<32x512xf32>,
    %173 = vector.extract_strided_slice %166 {offsets = [0, 1536], sizes = [32, 512], strides = [1, 1]} : vector<32x2048xf32> to vector<32x512xf32>
    %c96_107 = arith.constant 96 : index
    %c0_108 = arith.constant 0 : index
    %174 = vector.load %arg14[%c96_107, %c0_108] : memref<128x512xf32, #tpu.memory_space<vmem>>, vector<32x512xf32>
    tpu.vector_store %arg14[%c96_107, %c0_108], %173 {strides = array<i32>} : memref<128x512xf32, #tpu.memory_space<vmem>>, vector<32x512xf32>,
    %c0_109 = arith.constant 0 : index
    %c0_110 = arith.constant 0 : index
    %175 = vector.load %arg14[%c0_109, %c0_110] : memref<128x512xf32, #tpu.memory_space<vmem>>, vector<128x512xf32>
    %c0_111 = arith.constant 0 : index
    %c640_112 = arith.constant 640 : index
    %176 = vector.load %arg7[%c0_111, %c640_112] : memref<2x1536xf32, #tpu.memory_space<vmem>>, vector<1x512xf32>
    %c1_113 = arith.constant 1 : index
    %c640_114 = arith.constant 640 : index
    %177 = vector.load %arg7[%c1_113, %c640_114] : memref<2x1536xf32, #tpu.memory_space<vmem>>, vector<1x512xf32>
    %cst_115 = arith.constant dense<0.000000e+00> : vector<512xf32>
    %178 = vector.multi_reduction <add>, %175, %cst_115 [0] : vector<128x512xf32> to vector<512xf32>
    %179 = vector.shape_cast %178 : vector<512xf32> to vector<1x512xf32>
    %180 = vector.extract_strided_slice %179 {offsets = [0, 0], sizes = [1, 80], strides = [1, 1]} : vector<1x512xf32> to vector<1x80xf32>
    %181 = vector.extract_strided_slice %179 {offsets = [0, 80], sizes = [1, 80], strides = [1, 1]} : vector<1x512xf32> to vector<1x80xf32>
    %182 = arith.addf %180, %181 : vector<1x80xf32>
    %183 = vector.extract_strided_slice %179 {offsets = [0, 160], sizes = [1, 80], strides = [1, 1]} : vector<1x512xf32> to vector<1x80xf32>
    %184 = arith.addf %182, %183 : vector<1x80xf32>
    %185 = vector.extract_strided_slice %179 {offsets = [0, 240], sizes = [1, 80], strides = [1, 1]} : vector<1x512xf32> to vector<1x80xf32>
    %186 = arith.addf %184, %185 : vector<1x80xf32>
    %187 = vector.extract_strided_slice %179 {offsets = [0, 320], sizes = [1, 80], strides = [1, 1]} : vector<1x512xf32> to vector<1x80xf32>
    %188 = arith.addf %186, %187 : vector<1x80xf32>
    %189 = vector.extract_strided_slice %179 {offsets = [0, 400], sizes = [1, 80], strides = [1, 1]} : vector<1x512xf32> to vector<1x80xf32>
    %190 = arith.addf %188, %189 : vector<1x80xf32>
    %cst_116 = arith.constant 0.00130208337 : f32
    %191 = vector.broadcast %cst_116 : f32 to vector<1x80xf32>
    %192 = arith.mulf %190, %191 : vector<1x80xf32>
    %c0_117 = arith.constant 0 : index
    %c0_118 = arith.constant 0 : index
    %193 = vector.load %arg15[%c0_117, %c0_118] : memref<2x512xf32, #tpu.memory_space<vmem>>, vector<1x80xf32>
    tpu.vector_store %arg15[%c0_117, %c0_118], %192 {strides = array<i32>} : memref<2x512xf32, #tpu.memory_space<vmem>>, vector<1x80xf32>,
    %c0_119 = arith.constant 0 : index
    %c80 = arith.constant 80 : index
    %194 = vector.load %arg15[%c0_119, %c80] : memref<2x512xf32, #tpu.memory_space<vmem>>, vector<1x80xf32>
    tpu.vector_store %arg15[%c0_119, %c80], %192 {strides = array<i32>} : memref<2x512xf32, #tpu.memory_space<vmem>>, vector<1x80xf32>,
    %c0_120 = arith.constant 0 : index
    %c160 = arith.constant 160 : index
    %195 = vector.load %arg15[%c0_120, %c160] : memref<2x512xf32, #tpu.memory_space<vmem>>, vector<1x80xf32>
    tpu.vector_store %arg15[%c0_120, %c160], %192 {strides = array<i32>} : memref<2x512xf32, #tpu.memory_space<vmem>>, vector<1x80xf32>,
    %c0_121 = arith.constant 0 : index
    %c240 = arith.constant 240 : index
    %196 = vector.load %arg15[%c0_121, %c240] : memref<2x512xf32, #tpu.memory_space<vmem>>, vector<1x80xf32>
    tpu.vector_store %arg15[%c0_121, %c240], %192 {strides = array<i32>} : memref<2x512xf32, #tpu.memory_space<vmem>>, vector<1x80xf32>,
    %c0_122 = arith.constant 0 : index
    %c320 = arith.constant 320 : index
    %197 = vector.load %arg15[%c0_122, %c320] : memref<2x512xf32, #tpu.memory_space<vmem>>, vector<1x80xf32>
    tpu.vector_store %arg15[%c0_122, %c320], %192 {strides = array<i32>} : memref<2x512xf32, #tpu.memory_space<vmem>>, vector<1x80xf32>,
    %c0_123 = arith.constant 0 : index
    %c400 = arith.constant 400 : index
    %198 = vector.load %arg15[%c0_123, %c400] : memref<2x512xf32, #tpu.memory_space<vmem>>, vector<1x80xf32>
    tpu.vector_store %arg15[%c0_123, %c400], %192 {strides = array<i32>} : memref<2x512xf32, #tpu.memory_space<vmem>>, vector<1x80xf32>,
    %cst_124 = arith.constant 0.000000e+00 : f32
    %199 = vector.broadcast %cst_124 : f32 to vector<1x32xf32>
    %c0_125 = arith.constant 0 : index
    %c480 = arith.constant 480 : index
    %200 = vector.load %arg15[%c0_125, %c480] : memref<2x512xf32, #tpu.memory_space<vmem>>, vector<1x32xf32>
    tpu.vector_store %arg15[%c0_125, %c480], %199 {strides = array<i32>} : memref<2x512xf32, #tpu.memory_space<vmem>>, vector<1x32xf32>,
    %c0_126 = arith.constant 0 : index
    %c0_127 = arith.constant 0 : index
    %201 = vector.load %arg15[%c0_126, %c0_127] : memref<2x512xf32, #tpu.memory_space<vmem>>, vector<1x512xf32>
    %202 = vector.broadcast %201 : vector<1x512xf32> to vector<128x512xf32>
    %203 = arith.subf %175, %202 : vector<128x512xf32>
    %204 = arith.mulf %203, %203 : vector<128x512xf32>
    %cst_128 = arith.constant dense<0.000000e+00> : vector<512xf32>
    %205 = vector.multi_reduction <add>, %204, %cst_128 [0] : vector<128x512xf32> to vector<512xf32>
    %206 = vector.shape_cast %205 : vector<512xf32> to vector<1x512xf32>
    %207 = vector.extract_strided_slice %206 {offsets = [0, 0], sizes = [1, 80], strides = [1, 1]} : vector<1x512xf32> to vector<1x80xf32>
    %208 = vector.extract_strided_slice %206 {offsets = [0, 80], sizes = [1, 80], strides = [1, 1]} : vector<1x512xf32> to vector<1x80xf32>
    %209 = arith.addf %207, %208 : vector<1x80xf32>
    %210 = vector.extract_strided_slice %206 {offsets = [0, 160], sizes = [1, 80], strides = [1, 1]} : vector<1x512xf32> to vector<1x80xf32>
    %211 = arith.addf %209, %210 : vector<1x80xf32>
    %212 = vector.extract_strided_slice %206 {offsets = [0, 240], sizes = [1, 80], strides = [1, 1]} : vector<1x512xf32> to vector<1x80xf32>
    %213 = arith.addf %211, %212 : vector<1x80xf32>
    %214 = vector.extract_strided_slice %206 {offsets = [0, 320], sizes = [1, 80], strides = [1, 1]} : vector<1x512xf32> to vector<1x80xf32>
    %215 = arith.addf %213, %214 : vector<1x80xf32>
    %216 = vector.extract_strided_slice %206 {offsets = [0, 400], sizes = [1, 80], strides = [1, 1]} : vector<1x512xf32> to vector<1x80xf32>
    %217 = arith.addf %215, %216 : vector<1x80xf32>
    %cst_129 = arith.constant 0.00130208337 : f32
    %218 = vector.broadcast %cst_129 : f32 to vector<1x80xf32>
    %219 = arith.mulf %217, %218 : vector<1x80xf32>
    %c1_130 = arith.constant 1 : index
    %c0_131 = arith.constant 0 : index
    %220 = vector.load %arg15[%c1_130, %c0_131] : memref<2x512xf32, #tpu.memory_space<vmem>>, vector<1x80xf32>
    tpu.vector_store %arg15[%c1_130, %c0_131], %219 {strides = array<i32>} : memref<2x512xf32, #tpu.memory_space<vmem>>, vector<1x80xf32>,
    %c1_132 = arith.constant 1 : index
    %c80_133 = arith.constant 80 : index
    %221 = vector.load %arg15[%c1_132, %c80_133] : memref<2x512xf32, #tpu.memory_space<vmem>>, vector<1x80xf32>
    tpu.vector_store %arg15[%c1_132, %c80_133], %219 {strides = array<i32>} : memref<2x512xf32, #tpu.memory_space<vmem>>, vector<1x80xf32>,
    %c1_134 = arith.constant 1 : index
    %c160_135 = arith.constant 160 : index
    %222 = vector.load %arg15[%c1_134, %c160_135] : memref<2x512xf32, #tpu.memory_space<vmem>>, vector<1x80xf32>
    tpu.vector_store %arg15[%c1_134, %c160_135], %219 {strides = array<i32>} : memref<2x512xf32, #tpu.memory_space<vmem>>, vector<1x80xf32>,
    %c1_136 = arith.constant 1 : index
    %c240_137 = arith.constant 240 : index
    %223 = vector.load %arg15[%c1_136, %c240_137] : memref<2x512xf32, #tpu.memory_space<vmem>>, vector<1x80xf32>
    tpu.vector_store %arg15[%c1_136, %c240_137], %219 {strides = array<i32>} : memref<2x512xf32, #tpu.memory_space<vmem>>, vector<1x80xf32>,
    %c1_138 = arith.constant 1 : index
    %c320_139 = arith.constant 320 : index
    %224 = vector.load %arg15[%c1_138, %c320_139] : memref<2x512xf32, #tpu.memory_space<vmem>>, vector<1x80xf32>
    tpu.vector_store %arg15[%c1_138, %c320_139], %219 {strides = array<i32>} : memref<2x512xf32, #tpu.memory_space<vmem>>, vector<1x80xf32>,
    %c1_140 = arith.constant 1 : index
    %c400_141 = arith.constant 400 : index
    %225 = vector.load %arg15[%c1_140, %c400_141] : memref<2x512xf32, #tpu.memory_space<vmem>>, vector<1x80xf32>
    tpu.vector_store %arg15[%c1_140, %c400_141], %219 {strides = array<i32>} : memref<2x512xf32, #tpu.memory_space<vmem>>, vector<1x80xf32>,
    %cst_142 = arith.constant 0.000000e+00 : f32
    %226 = vector.broadcast %cst_142 : f32 to vector<1x32xf32>
    %c1_143 = arith.constant 1 : index
    %c480_144 = arith.constant 480 : index
    %227 = vector.load %arg15[%c1_143, %c480_144] : memref<2x512xf32, #tpu.memory_space<vmem>>, vector<1x32xf32>
    tpu.vector_store %arg15[%c1_143, %c480_144], %226 {strides = array<i32>} : memref<2x512xf32, #tpu.memory_space<vmem>>, vector<1x32xf32>,
    %c1_145 = arith.constant 1 : index
    %c0_146 = arith.constant 0 : index
    %228 = vector.load %arg15[%c1_145, %c0_146] : memref<2x512xf32, #tpu.memory_space<vmem>>, vector<1x512xf32>
    %cst_147 = arith.constant 9.99999974E-6 : f32
    %229 = vector.broadcast %cst_147 : f32 to vector<1x512xf32>
    %230 = arith.addf %228, %229 : vector<1x512xf32>
    %231 = math.rsqrt %230 : vector<1x512xf32>
    %232 = vector.broadcast %231 : vector<1x512xf32> to vector<128x512xf32>
    %233 = arith.mulf %203, %232 : vector<128x512xf32>
    %234 = vector.broadcast %176 : vector<1x512xf32> to vector<128x512xf32>
    %235 = arith.mulf %233, %234 : vector<128x512xf32>
    %236 = vector.broadcast %177 : vector<1x512xf32> to vector<128x512xf32>
    %237 = arith.addf %235, %236 : vector<128x512xf32>
    %cst_148 = arith.constant 0.000000e+00 : f32
    %238 = vector.broadcast %cst_148 : f32 to vector<128x512xf32>
    %239 = arith.maximumf %237, %238 : vector<128x512xf32>
    %240 = arith.truncf %239 : vector<128x512xf32> to vector<128x512xbf16>
    %c0_149 = arith.constant 0 : index
    %c0_150 = arith.constant 0 : index
    %241 = vector.load %arg6[%c0_149, %c0_150] : memref<512x384xbf16, #tpu.memory_space<vmem>>, vector<512x384xbf16>
    %cst_151 = arith.constant dense<0.000000e+00> : vector<128x384xf32>
    %242 = tpu.matmul %240, %241, %cst_151 {dimension_numbers = #tpu.dot_dimension_numbers<[1], [0], [0], [1], [0, 0, 1, 1], [], []>} : vector<128x512xbf16>, vector<512x384xbf16>, vector<128x384xf32> -> vector<128x384xf32>
    %c0_152 = arith.constant 0 : index
    %c1152 = arith.constant 1152 : index
    %243 = vector.load %arg7[%c0_152, %c1152] : memref<2x1536xf32, #tpu.memory_space<vmem>>, vector<1x384xf32>
    %c1_153 = arith.constant 1 : index
    %c1152_154 = arith.constant 1152 : index
    %244 = vector.load %arg7[%c1_153, %c1152_154] : memref<2x1536xf32, #tpu.memory_space<vmem>>, vector<1x384xf32>
    %cst_155 = arith.constant dense<0.000000e+00> : vector<384xf32>
    %245 = vector.multi_reduction <add>, %242, %cst_155 [0] : vector<128x384xf32> to vector<384xf32>
    %246 = vector.shape_cast %245 : vector<384xf32> to vector<1x384xf32>
    %cst_156 = arith.constant 1.000000e+00 : f32
    %247 = vector.broadcast %cst_156 : f32 to vector<1x72xf32>
    %248 = vector.extract_strided_slice %246 {offsets = [0, 0], sizes = [1, 72], strides = [1, 1]} : vector<1x384xf32> to vector<1x72xf32>
    %249 = vector.shape_cast %248 : vector<1x72xf32> to vector<1x1x72xf32>
    %cst_157 = arith.constant dense<0.000000e+00> : vector<1xf32>
    %250 = vector.multi_reduction <add>, %249, %cst_157 [1, 2] : vector<1x1x72xf32> to vector<1xf32>
    %251 = vector.shape_cast %250 : vector<1xf32> to vector<1x1x1xf32>
    %252 = vector.extract %251[0, 0, 0] : f32 from vector<1x1x1xf32>
    %253 = vector.broadcast %252 : f32 to vector<1x1xf32>
    %cst_158 = arith.constant 1.08506945E-4 : f32
    %254 = vector.broadcast %cst_158 : f32 to vector<1x1xf32>
    %255 = arith.mulf %253, %254 : vector<1x1xf32>
    %256 = vector.broadcast %255 : vector<1x1xf32> to vector<1x72xf32>
    %257 = arith.mulf %256, %247 : vector<1x72xf32>
    %c0_159 = arith.constant 0 : index
    %c0_160 = arith.constant 0 : index
    %258 = vector.load %arg16[%c0_159, %c0_160] : memref<2x384xf32, #tpu.memory_space<vmem>>, vector<1x72xf32>
    tpu.vector_store %arg16[%c0_159, %c0_160], %257 {strides = array<i32>} : memref<2x384xf32, #tpu.memory_space<vmem>>, vector<1x72xf32>,
    %259 = vector.extract_strided_slice %246 {offsets = [0, 72], sizes = [1, 72], strides = [1, 1]} : vector<1x384xf32> to vector<1x72xf32>
    %260 = vector.shape_cast %259 : vector<1x72xf32> to vector<1x1x72xf32>
    %cst_161 = arith.constant dense<0.000000e+00> : vector<1xf32>
    %261 = vector.multi_reduction <add>, %260, %cst_161 [1, 2] : vector<1x1x72xf32> to vector<1xf32>
    %262 = vector.shape_cast %261 : vector<1xf32> to vector<1x1x1xf32>
    %263 = vector.extract %262[0, 0, 0] : f32 from vector<1x1x1xf32>
    %264 = vector.broadcast %263 : f32 to vector<1x1xf32>
    %cst_162 = arith.constant 1.08506945E-4 : f32
    %265 = vector.broadcast %cst_162 : f32 to vector<1x1xf32>
    %266 = arith.mulf %264, %265 : vector<1x1xf32>
    %267 = vector.broadcast %266 : vector<1x1xf32> to vector<1x72xf32>
    %268 = arith.mulf %267, %247 : vector<1x72xf32>
    %c0_163 = arith.constant 0 : index
    %c72 = arith.constant 72 : index
    %269 = vector.load %arg16[%c0_163, %c72] : memref<2x384xf32, #tpu.memory_space<vmem>>, vector<1x72xf32>
    tpu.vector_store %arg16[%c0_163, %c72], %268 {strides = array<i32>} : memref<2x384xf32, #tpu.memory_space<vmem>>, vector<1x72xf32>,
    %270 = vector.extract_strided_slice %246 {offsets = [0, 144], sizes = [1, 72], strides = [1, 1]} : vector<1x384xf32> to vector<1x72xf32>
    %271 = vector.shape_cast %270 : vector<1x72xf32> to vector<1x1x72xf32>
    %cst_164 = arith.constant dense<0.000000e+00> : vector<1xf32>
    %272 = vector.multi_reduction <add>, %271, %cst_164 [1, 2] : vector<1x1x72xf32> to vector<1xf32>
    %273 = vector.shape_cast %272 : vector<1xf32> to vector<1x1x1xf32>
    %274 = vector.extract %273[0, 0, 0] : f32 from vector<1x1x1xf32>
    %275 = vector.broadcast %274 : f32 to vector<1x1xf32>
    %cst_165 = arith.constant 1.08506945E-4 : f32
    %276 = vector.broadcast %cst_165 : f32 to vector<1x1xf32>
    %277 = arith.mulf %275, %276 : vector<1x1xf32>
    %278 = vector.broadcast %277 : vector<1x1xf32> to vector<1x72xf32>
    %279 = arith.mulf %278, %247 : vector<1x72xf32>
    %c0_166 = arith.constant 0 : index
    %c144 = arith.constant 144 : index
    %280 = vector.load %arg16[%c0_166, %c144] : memref<2x384xf32, #tpu.memory_space<vmem>>, vector<1x72xf32>
    tpu.vector_store %arg16[%c0_166, %c144], %279 {strides = array<i32>} : memref<2x384xf32, #tpu.memory_space<vmem>>, vector<1x72xf32>,
    %281 = vector.extract_strided_slice %246 {offsets = [0, 216], sizes = [1, 72], strides = [1, 1]} : vector<1x384xf32> to vector<1x72xf32>
    %282 = vector.shape_cast %281 : vector<1x72xf32> to vector<1x1x72xf32>
    %cst_167 = arith.constant dense<0.000000e+00> : vector<1xf32>
    %283 = vector.multi_reduction <add>, %282, %cst_167 [1, 2] : vector<1x1x72xf32> to vector<1xf32>
    %284 = vector.shape_cast %283 : vector<1xf32> to vector<1x1x1xf32>
    %285 = vector.extract %284[0, 0, 0] : f32 from vector<1x1x1xf32>
    %286 = vector.broadcast %285 : f32 to vector<1x1xf32>
    %cst_168 = arith.constant 1.08506945E-4 : f32
    %287 = vector.broadcast %cst_168 : f32 to vector<1x1xf32>
    %288 = arith.mulf %286, %287 : vector<1x1xf32>
    %289 = vector.broadcast %288 : vector<1x1xf32> to vector<1x72xf32>
    %290 = arith.mulf %289, %247 : vector<1x72xf32>
    %c0_169 = arith.constant 0 : index
    %c216 = arith.constant 216 : index
    %291 = vector.load %arg16[%c0_169, %c216] : memref<2x384xf32, #tpu.memory_space<vmem>>, vector<1x72xf32>
    tpu.vector_store %arg16[%c0_169, %c216], %290 {strides = array<i32>} : memref<2x384xf32, #tpu.memory_space<vmem>>, vector<1x72xf32>,
    %292 = vector.extract_strided_slice %246 {offsets = [0, 288], sizes = [1, 72], strides = [1, 1]} : vector<1x384xf32> to vector<1x72xf32>
    %293 = vector.shape_cast %292 : vector<1x72xf32> to vector<1x1x72xf32>
    %cst_170 = arith.constant dense<0.000000e+00> : vector<1xf32>
    %294 = vector.multi_reduction <add>, %293, %cst_170 [1, 2] : vector<1x1x72xf32> to vector<1xf32>
    %295 = vector.shape_cast %294 : vector<1xf32> to vector<1x1x1xf32>
    %296 = vector.extract %295[0, 0, 0] : f32 from vector<1x1x1xf32>
    %297 = vector.broadcast %296 : f32 to vector<1x1xf32>
    %cst_171 = arith.constant 1.08506945E-4 : f32
    %298 = vector.broadcast %cst_171 : f32 to vector<1x1xf32>
    %299 = arith.mulf %297, %298 : vector<1x1xf32>
    %300 = vector.broadcast %299 : vector<1x1xf32> to vector<1x72xf32>
    %301 = arith.mulf %300, %247 : vector<1x72xf32>
    %c0_172 = arith.constant 0 : index
    %c288 = arith.constant 288 : index
    %302 = vector.load %arg16[%c0_172, %c288] : memref<2x384xf32, #tpu.memory_space<vmem>>, vector<1x72xf32>
    tpu.vector_store %arg16[%c0_172, %c288], %301 {strides = array<i32>} : memref<2x384xf32, #tpu.memory_space<vmem>>, vector<1x72xf32>,
    %cst_173 = arith.constant 0.000000e+00 : f32
    %303 = vector.broadcast %cst_173 : f32 to vector<1x24xf32>
    %c0_174 = arith.constant 0 : index
    %c360 = arith.constant 360 : index
    %304 = vector.load %arg16[%c0_174, %c360] : memref<2x384xf32, #tpu.memory_space<vmem>>, vector<1x24xf32>
    tpu.vector_store %arg16[%c0_174, %c360], %303 {strides = array<i32>} : memref<2x384xf32, #tpu.memory_space<vmem>>, vector<1x24xf32>,
    %c0_175 = arith.constant 0 : index
    %c0_176 = arith.constant 0 : index
    %305 = vector.load %arg16[%c0_175, %c0_176] : memref<2x384xf32, #tpu.memory_space<vmem>>, vector<1x384xf32>
    %306 = vector.broadcast %305 : vector<1x384xf32> to vector<128x384xf32>
    %307 = arith.subf %242, %306 : vector<128x384xf32>
    %308 = arith.mulf %307, %307 : vector<128x384xf32>
    %cst_177 = arith.constant dense<0.000000e+00> : vector<384xf32>
    %309 = vector.multi_reduction <add>, %308, %cst_177 [0] : vector<128x384xf32> to vector<384xf32>
    %310 = vector.shape_cast %309 : vector<384xf32> to vector<1x384xf32>
    %311 = vector.extract_strided_slice %310 {offsets = [0, 0], sizes = [1, 72], strides = [1, 1]} : vector<1x384xf32> to vector<1x72xf32>
    %312 = vector.shape_cast %311 : vector<1x72xf32> to vector<1x1x72xf32>
    %cst_178 = arith.constant dense<0.000000e+00> : vector<1xf32>
    %313 = vector.multi_reduction <add>, %312, %cst_178 [1, 2] : vector<1x1x72xf32> to vector<1xf32>
    %314 = vector.shape_cast %313 : vector<1xf32> to vector<1x1x1xf32>
    %315 = vector.extract %314[0, 0, 0] : f32 from vector<1x1x1xf32>
    %316 = vector.broadcast %315 : f32 to vector<1x1xf32>
    %cst_179 = arith.constant 1.08506945E-4 : f32
    %317 = vector.broadcast %cst_179 : f32 to vector<1x1xf32>
    %318 = arith.mulf %316, %317 : vector<1x1xf32>
    %319 = vector.broadcast %318 : vector<1x1xf32> to vector<1x72xf32>
    %320 = arith.mulf %319, %247 : vector<1x72xf32>
    %c1_180 = arith.constant 1 : index
    %c0_181 = arith.constant 0 : index
    %321 = vector.load %arg16[%c1_180, %c0_181] : memref<2x384xf32, #tpu.memory_space<vmem>>, vector<1x72xf32>
    tpu.vector_store %arg16[%c1_180, %c0_181], %320 {strides = array<i32>} : memref<2x384xf32, #tpu.memory_space<vmem>>, vector<1x72xf32>,
    %322 = vector.extract_strided_slice %310 {offsets = [0, 72], sizes = [1, 72], strides = [1, 1]} : vector<1x384xf32> to vector<1x72xf32>
    %323 = vector.shape_cast %322 : vector<1x72xf32> to vector<1x1x72xf32>
    %cst_182 = arith.constant dense<0.000000e+00> : vector<1xf32>
    %324 = vector.multi_reduction <add>, %323, %cst_182 [1, 2] : vector<1x1x72xf32> to vector<1xf32>
    %325 = vector.shape_cast %324 : vector<1xf32> to vector<1x1x1xf32>
    %326 = vector.extract %325[0, 0, 0] : f32 from vector<1x1x1xf32>
    %327 = vector.broadcast %326 : f32 to vector<1x1xf32>
    %cst_183 = arith.constant 1.08506945E-4 : f32
    %328 = vector.broadcast %cst_183 : f32 to vector<1x1xf32>
    %329 = arith.mulf %327, %328 : vector<1x1xf32>
    %330 = vector.broadcast %329 : vector<1x1xf32> to vector<1x72xf32>
    %331 = arith.mulf %330, %247 : vector<1x72xf32>
    %c1_184 = arith.constant 1 : index
    %c72_185 = arith.constant 72 : index
    %332 = vector.load %arg16[%c1_184, %c72_185] : memref<2x384xf32, #tpu.memory_space<vmem>>, vector<1x72xf32>
    tpu.vector_store %arg16[%c1_184, %c72_185], %331 {strides = array<i32>} : memref<2x384xf32, #tpu.memory_space<vmem>>, vector<1x72xf32>,
    %333 = vector.extract_strided_slice %310 {offsets = [0, 144], sizes = [1, 72], strides = [1, 1]} : vector<1x384xf32> to vector<1x72xf32>
    %334 = vector.shape_cast %333 : vector<1x72xf32> to vector<1x1x72xf32>
    %cst_186 = arith.constant dense<0.000000e+00> : vector<1xf32>
    %335 = vector.multi_reduction <add>, %334, %cst_186 [1, 2] : vector<1x1x72xf32> to vector<1xf32>
    %336 = vector.shape_cast %335 : vector<1xf32> to vector<1x1x1xf32>
    %337 = vector.extract %336[0, 0, 0] : f32 from vector<1x1x1xf32>
    %338 = vector.broadcast %337 : f32 to vector<1x1xf32>
    %cst_187 = arith.constant 1.08506945E-4 : f32
    %339 = vector.broadcast %cst_187 : f32 to vector<1x1xf32>
    %340 = arith.mulf %338, %339 : vector<1x1xf32>
    %341 = vector.broadcast %340 : vector<1x1xf32> to vector<1x72xf32>
    %342 = arith.mulf %341, %247 : vector<1x72xf32>
    %c1_188 = arith.constant 1 : index
    %c144_189 = arith.constant 144 : index
    %343 = vector.load %arg16[%c1_188, %c144_189] : memref<2x384xf32, #tpu.memory_space<vmem>>, vector<1x72xf32>
    tpu.vector_store %arg16[%c1_188, %c144_189], %342 {strides = array<i32>} : memref<2x384xf32, #tpu.memory_space<vmem>>, vector<1x72xf32>,
    %344 = vector.extract_strided_slice %310 {offsets = [0, 216], sizes = [1, 72], strides = [1, 1]} : vector<1x384xf32> to vector<1x72xf32>
    %345 = vector.shape_cast %344 : vector<1x72xf32> to vector<1x1x72xf32>
    %cst_190 = arith.constant dense<0.000000e+00> : vector<1xf32>
    %346 = vector.multi_reduction <add>, %345, %cst_190 [1, 2] : vector<1x1x72xf32> to vector<1xf32>
    %347 = vector.shape_cast %346 : vector<1xf32> to vector<1x1x1xf32>
    %348 = vector.extract %347[0, 0, 0] : f32 from vector<1x1x1xf32>
    %349 = vector.broadcast %348 : f32 to vector<1x1xf32>
    %cst_191 = arith.constant 1.08506945E-4 : f32
    %350 = vector.broadcast %cst_191 : f32 to vector<1x1xf32>
    %351 = arith.mulf %349, %350 : vector<1x1xf32>
    %352 = vector.broadcast %351 : vector<1x1xf32> to vector<1x72xf32>
    %353 = arith.mulf %352, %247 : vector<1x72xf32>
    %c1_192 = arith.constant 1 : index
    %c216_193 = arith.constant 216 : index
    %354 = vector.load %arg16[%c1_192, %c216_193] : memref<2x384xf32, #tpu.memory_space<vmem>>, vector<1x72xf32>
    tpu.vector_store %arg16[%c1_192, %c216_193], %353 {strides = array<i32>} : memref<2x384xf32, #tpu.memory_space<vmem>>, vector<1x72xf32>,
    %355 = vector.extract_strided_slice %310 {offsets = [0, 288], sizes = [1, 72], strides = [1, 1]} : vector<1x384xf32> to vector<1x72xf32>
    %356 = vector.shape_cast %355 : vector<1x72xf32> to vector<1x1x72xf32>
    %cst_194 = arith.constant dense<0.000000e+00> : vector<1xf32>
    %357 = vector.multi_reduction <add>, %356, %cst_194 [1, 2] : vector<1x1x72xf32> to vector<1xf32>
    %358 = vector.shape_cast %357 : vector<1xf32> to vector<1x1x1xf32>
    %359 = vector.extract %358[0, 0, 0] : f32 from vector<1x1x1xf32>
    %360 = vector.broadcast %359 : f32 to vector<1x1xf32>
    %cst_195 = arith.constant 1.08506945E-4 : f32
    %361 = vector.broadcast %cst_195 : f32 to vector<1x1xf32>
    %362 = arith.mulf %360, %361 : vector<1x1xf32>
    %363 = vector.broadcast %362 : vector<1x1xf32> to vector<1x72xf32>
    %364 = arith.mulf %363, %247 : vector<1x72xf32>
    %c1_196 = arith.constant 1 : index
    %c288_197 = arith.constant 288 : index
    %365 = vector.load %arg16[%c1_196, %c288_197] : memref<2x384xf32, #tpu.memory_space<vmem>>, vector<1x72xf32>
    tpu.vector_store %arg16[%c1_196, %c288_197], %364 {strides = array<i32>} : memref<2x384xf32, #tpu.memory_space<vmem>>, vector<1x72xf32>,
    %cst_198 = arith.constant 0.000000e+00 : f32
    %366 = vector.broadcast %cst_198 : f32 to vector<1x24xf32>
    %c1_199 = arith.constant 1 : index
    %c360_200 = arith.constant 360 : index
    %367 = vector.load %arg16[%c1_199, %c360_200] : memref<2x384xf32, #tpu.memory_space<vmem>>, vector<1x24xf32>
    tpu.vector_store %arg16[%c1_199, %c360_200], %366 {strides = array<i32>} : memref<2x384xf32, #tpu.memory_space<vmem>>, vector<1x24xf32>,
    %c1_201 = arith.constant 1 : index
    %c0_202 = arith.constant 0 : index
    %368 = vector.load %arg16[%c1_201, %c0_202] : memref<2x384xf32, #tpu.memory_space<vmem>>, vector<1x384xf32>
    %cst_203 = arith.constant 9.99999974E-6 : f32
    %369 = vector.broadcast %cst_203 : f32 to vector<1x384xf32>
    %370 = arith.addf %368, %369 : vector<1x384xf32>
    %371 = math.rsqrt %370 : vector<1x384xf32>
    %372 = vector.broadcast %371 : vector<1x384xf32> to vector<128x384xf32>
    %373 = arith.mulf %307, %372 : vector<128x384xf32>
    %374 = vector.broadcast %243 : vector<1x384xf32> to vector<128x384xf32>
    %375 = arith.mulf %373, %374 : vector<128x384xf32>
    %376 = vector.broadcast %244 : vector<1x384xf32> to vector<128x384xf32>
    %377 = arith.addf %375, %376 : vector<128x384xf32>
    %cst_204 = arith.constant 0.000000e+00 : f32
    %378 = vector.broadcast %cst_204 : f32 to vector<128x384xf32>
    %379 = arith.maximumf %377, %378 : vector<128x384xf32>
    %c0_205 = arith.constant 0 : index
    %c0_206 = arith.constant 0 : index
    %380 = vector.load %arg8[%c0_205, %c0_206] : memref<128x384xf32, #tpu.memory_space<vmem>>, vector<128x384xf32>
    tpu.vector_store %arg8[%c0_205, %c0_206], %379 {strides = array<i32>} : memref<128x384xf32, #tpu.memory_space<vmem>>, vector<128x384xf32>,
    return
  }
}

</mosaic_0001>

<llo_original>
// kernel: generator_forward.1
$region0: #{generator_forward.1}
  #allocation0 [shape = 'u32[]', space=smem, size = 0x4, offset = 0x4, fixed_abs, tag = 'smem constant byte address 0x4 - core index']
  #allocation1 [shape = 'u32[72,128]{1,0:T(1,128)}', space=vmem, size = 0x9000, scoped, tag = 'internal scratch']
  #allocation2 [shape = 'f32[8,256]{1,0:T(8,128)}', space=vmem, size = 0x2000, scoped, tag = 'scratch operand']
  #allocation3 [shape = 'f32[32,128]{1,0:T(8,128)}', space=vmem, size = 0x4000, scoped, tag = 'scratch operand']
  #allocation4 [shape = 'f32[128,128]{1,0:T(8,128)}', space=vmem, size = 0x10000, scoped, tag = 'scratch operand']
  #allocation5 [shape = 'f32[192,128]{1,0:T(8,128)}', space=vmem, size = 0x18000, scoped, tag = 'scratch operand']
  #allocation6 [shape = 'f32[32,768]{1,0:T(8,128)}', space=vmem, size = 0x18000, scoped, tag = 'scratch operand']
  #allocation7 [shape = 'f32[128,512]{1,0:T(8,128)}', space=vmem, size = 0x40000, scoped, tag = 'scratch operand']
  #allocation8 [shape = 'f32[2,512]{1,0:T(2,128)}', space=vmem, size = 0x1000, scoped, tag = 'scratch operand']
  #allocation9 [shape = 'f32[2,384]{1,0:T(2,128)}', space=vmem, size = 0xc00, scoped, tag = 'scratch operand']
  %s0 = inlined_call_operand.hbm [shape: f32[2,128], index: 0, kind: input, shape index: {}]
  %s1 = inlined_call_operand.hbm [shape: bf16[128,1024], index: 1, kind: input, shape index: {}]
  %s2 = inlined_call_operand.hbm [shape: bf16[256,512], index: 2, kind: input, shape index: {}]
  %s3 = inlined_call_operand.hbm [shape: bf16[128,512], index: 3, kind: input, shape index: {}]
  %s4 = inlined_call_operand.hbm [shape: bf16[128,384], index: 4, kind: input, shape index: {}]
  %s5 = inlined_call_operand.hbm [shape: bf16[768,2048], index: 5, kind: input, shape index: {}]
  %s6 = inlined_call_operand.hbm [shape: bf16[512,384], index: 6, kind: input, shape index: {}]
  %s7 = inlined_call_operand.hbm [shape: f32[2,1536], index: 7, kind: input, shape index: {}]
  %s8 = inlined_call_operand.vmem [shape: f32[128,384], index: 8, kind: output, shape index: {}]
  %s9 = sld [smem:[#allocation0]]
  $region74: #{generator_forward.1} parent=0
    _
  %s11 = ssub.s32 1, %s9
  %s12 = scalar_select 0, %s11, %s9
  $region1: #{generator_forward.1} parent=0
    #allocation10 [shape = 'u8[1024]{0}', space=vmem, size = 0x400, scoped, tag = 'input window, operand 0, single buffered']
    #allocation11 [shape = 's32[1]{0}', space=sflag, size = 0x4, scoped, tag = 'scoped memory for generator_forward.1']
    #allocation12 [shape = 'u8[262144]{0}', space=vmem, size = 0x40000, scoped, tag = 'input window, operand 1, single buffered']
    #allocation13 [shape = 's32[1]{0}', space=sflag, size = 0x4, scoped, tag = 'scoped memory for generator_forward.1']
    #allocation14 [shape = 'u8[262144]{0}', space=vmem, size = 0x40000, scoped, tag = 'input window, operand 2, single buffered']
    #allocation15 [shape = 'u8[131072]{0}', space=vmem, size = 0x20000, scoped, tag = 'input window, operand 3, single buffered']
    #allocation16 [shape = 's32[1]{0}', space=sflag, size = 0x4, scoped, tag = 'scoped memory for generator_forward.1']
    #allocation17 [shape = 'u8[98304]{0}', space=vmem, size = 0x18000, scoped, tag = 'input window, operand 4, single buffered']
    #allocation18 [shape = 'u8[3145728]{0}', space=vmem, size = 0x300000, scoped, tag = 'input window, operand 5, single buffered']
    #allocation19 [shape = 's32[1]{0}', space=sflag, size = 0x4, scoped, tag = 'scoped memory for generator_forward.1']
    #allocation20 [shape = 'u8[393216]{0}', space=vmem, size = 0x60000, scoped, tag = 'input window, operand 6, single buffered']
    #allocation21 [shape = 'u8[12288]{0}', space=vmem, size = 0x3000, scoped, tag = 'input window, operand 7, single buffered']
    #allocation22 [shape = 's32[1]{0}', space=sflag, size = 0x4, scoped, tag = 'scoped memory for generator_forward.1']
    %13 = vsyncpa [#allocation11], 0
    %14 = vsyncpa [#allocation13], 0
    %15 = vsyncpa [#allocation16], 0
    %16 = vsyncpa [#allocation19], 0
    %17 = vsyncpa [#allocation22], 0
    // Predicated region
    $region2: #{generator_forward.1} parent=1 // pred_check
      _
    $region3: #{generator_forward.1} parent=1 // pred_check_branch
      %19 = sbr.rel (0) target = $region5
    $region4: #{generator_forward.1} parent=1 // pred_region
      %21 = vsyncadd [#allocation11], 0
      %s23 = sshll.u32 %s0, 4
      %s24 = int_to_ptr.hbm [resolvable:$true] %s23
      %s25 = sshll.u32 [#allocation10], 4
      %s26 = int_to_ptr.vmem [resolvable:$true] %s25
      %28 = dma.hbm_to_vmem [thread:$0]  %s24, 32, %s26, [#allocation11]
    $region5: #{generator_forward.1} parent=1 // pred_fallthru
      _
    // Predicated region
    $region6: #{generator_forward.1} parent=1 // pred_check
      _
    $region7: #{generator_forward.1} parent=1 // pred_check_branch
      %30 = sbr.rel (0) target = $region9
    $region8: #{generator_forward.1} parent=1 // pred_region
      %32 = vsyncadd [#allocation13], 0
      %s33 = sshll.u32 %s1, 4
      %s34 = int_to_ptr.hbm [resolvable:$true] %s33
      %s35 = sshll.u32 [#allocation12], 4
      %s36 = int_to_ptr.vmem [resolvable:$true] %s35
      %41 = dma.hbm_to_vmem [thread:$0]  %s34, 8192, %s36, [#allocation13], 512, 512, 32
    $region9: #{generator_forward.1} parent=1 // pred_fallthru
      _
    // Predicated region
    $region10: #{generator_forward.1} parent=1 // pred_check
      _
    $region11: #{generator_forward.1} parent=1 // pred_check_branch
      %43 = sbr.rel (0) target = $region13
    $region12: #{generator_forward.1} parent=1 // pred_region
      %45 = vsyncadd [#allocation13], 0
      %s46 = sshll.u32 %s2, 4
      %s47 = int_to_ptr.hbm [resolvable:$true] %s46
      %s48 = sshll.u32 [#allocation14], 4
      %s49 = int_to_ptr.vmem [resolvable:$true] %s48
      %54 = dma.hbm_to_vmem [thread:$0]  %s47, 8192, %s49, [#allocation13], 256, 256, 16
    $region13: #{generator_forward.1} parent=1 // pred_fallthru
      _
    // Predicated region
    $region14: #{generator_forward.1} parent=1 // pred_check
      _
    $region15: #{generator_forward.1} parent=1 // pred_check_branch
      %56 = sbr.rel (0) target = $region17
    $region16: #{generator_forward.1} parent=1 // pred_region
      %58 = vsyncadd [#allocation16], 0
      %s59 = sshll.u32 %s3, 4
      %s60 = int_to_ptr.hbm [resolvable:$true] %s59
      %s61 = sshll.u32 [#allocation15], 4
      %s62 = int_to_ptr.vmem [resolvable:$true] %s61
      %67 = dma.hbm_to_vmem [thread:$0]  %s60, 4096, %s62, [#allocation16], 256, 256, 16
    $region17: #{generator_forward.1} parent=1 // pred_fallthru
      _
    // Predicated region
    $region18: #{generator_forward.1} parent=1 // pred_check
      _
    $region19: #{generator_forward.1} parent=1 // pred_check_branch
      %69 = sbr.rel (0) target = $region21
    $region20: #{generator_forward.1} parent=1 // pred_region
      %71 = vsyncadd [#allocation16], 0
      %s72 = sshll.u32 %s4, 4
      %s73 = int_to_ptr.hbm [resolvable:$true] %s72
      %s74 = sshll.u32 [#allocation17], 4
      %s75 = int_to_ptr.vmem [resolvable:$true] %s74
      %80 = dma.hbm_to_vmem [thread:$0]  %s73, 3072, %s75, [#allocation16], 192, 192, 12
    $region21: #{generator_forward.1} parent=1 // pred_fallthru
      _
    // Predicated region
    $region22: #{generator_forward.1} parent=1 // pred_check
      _
    $region23: #{generator_forward.1} parent=1 // pred_check_branch
      %82 = sbr.rel (0) target = $region25
    $region24: #{generator_forward.1} parent=1 // pred_region
      %84 = vsyncadd [#allocation19], 0
      %s85 = sshll.u32 %s5, 4
      %s86 = int_to_ptr.hbm [resolvable:$true] %s85
      %s87 = sshll.u32 [#allocation18], 4
      %s88 = int_to_ptr.vmem [resolvable:$true] %s87
      %93 = dma.hbm_to_vmem [thread:$0]  %s86, 98304, %s88, [#allocation19], 1024, 1024, 64
    $region25: #{generator_forward.1} parent=1 // pred_fallthru
      _
    // Predicated region
    $region26: #{generator_forward.1} parent=1 // pred_check
      _
    $region27: #{generator_forward.1} parent=1 // pred_check_branch
      %95 = sbr.rel (0) target = $region29
    $region28: #{generator_forward.1} parent=1 // pred_region
      %97 = vsyncadd [#allocation19], 0
      %s98 = sshll.u32 %s6, 4
      %s99 = int_to_ptr.hbm [resolvable:$true] %s98
      %s100 = sshll.u32 [#allocation20], 4
      %s101 = int_to_ptr.vmem [resolvable:$true] %s100
      %106 = dma.hbm_to_vmem [thread:$0]  %s99, 12288, %s101, [#allocation19], 192, 192, 12
    $region29: #{generator_forward.1} parent=1 // pred_fallthru
      _
    // Predicated region
    $region30: #{generator_forward.1} parent=1 // pred_check
      _
    $region31: #{generator_forward.1} parent=1 // pred_check_branch
      %108 = sbr.rel (0) target = $region33
    $region32: #{generator_forward.1} parent=1 // pred_region
      %110 = vsyncadd [#allocation22], 0
      %s112 = sshll.u32 %s7, 4
      %s113 = int_to_ptr.hbm [resolvable:$true] %s112
      %s114 = sshll.u32 [#allocation21], 4
      %s115 = int_to_ptr.vmem [resolvable:$true] %s114
      %117 = dma.hbm_to_vmem [thread:$0]  %s113, 384, %s115, [#allocation22]
    $region33: #{generator_forward.1} parent=1 // pred_fallthru
      _
    // Predicated region
    $region34: #{generator_forward.1} parent=1 // pred_check
      _
    $region35: #{generator_forward.1} parent=1 // pred_check_branch
      %119 = sbr.rel (0) target = $region37
    $region36: #{generator_forward.1} parent=1 // pred_region
      %121 = dma.done [#allocation11], 32
    $region37: #{generator_forward.1} parent=1 // pred_fallthru
      _
    // Predicated region
    $region38: #{generator_forward.1} parent=1 // pred_check
      _
    $region39: #{generator_forward.1} parent=1 // pred_check_branch
      %123 = sbr.rel (0) target = $region41
    $region40: #{generator_forward.1} parent=1 // pred_region
      %125 = dma.done [#allocation13], 8192
    $region41: #{generator_forward.1} parent=1 // pred_fallthru
      _
    // Predicated region
    $region42: #{generator_forward.1} parent=1 // pred_check
      _
    $region43: #{generator_forward.1} parent=1 // pred_check_branch
      %127 = sbr.rel (0) target = $region45
    $region44: #{generator_forward.1} parent=1 // pred_region
      %129 = dma.done [#allocation13], 8192
    $region45: #{generator_forward.1} parent=1 // pred_fallthru
      _
    // Predicated region
    $region46: #{generator_forward.1} parent=1 // pred_check
      _
    $region47: #{generator_forward.1} parent=1 // pred_check_branch
      %131 = sbr.rel (0) target = $region49
    $region48: #{generator_forward.1} parent=1 // pred_region
      %133 = dma.done [#allocation16], 4096
    $region49: #{generator_forward.1} parent=1 // pred_fallthru
      _
    // Predicated region
    $region50: #{generator_forward.1} parent=1 // pred_check
      _
    $region51: #{generator_forward.1} parent=1 // pred_check_branch
      %135 = sbr.rel (0) target = $region53
    $region52: #{generator_forward.1} parent=1 // pred_region
      %137 = dma.done [#allocation16], 3072
    $region53: #{generator_forward.1} parent=1 // pred_fallthru
      _
    // Predicated region
    $region54: #{generator_forward.1} parent=1 // pred_check
      _
    $region55: #{generator_forward.1} parent=1 // pred_check_branch
      %139 = sbr.rel (0) target = $region57
    $region56: #{generator_forward.1} parent=1 // pred_region
      %141 = dma.done [#allocation19], 98304
    $region57: #{generator_forward.1} parent=1 // pred_fallthru
      _
    // Predicated region
    $region58: #{generator_forward.1} parent=1 // pred_check
      _
    $region59: #{generator_forward.1} parent=1 // pred_check_branch
      %143 = sbr.rel (0) target = $region61
    $region60: #{generator_forward.1} parent=1 // pred_region
      %145 = dma.done [#allocation19], 12288
    $region61: #{generator_forward.1} parent=1 // pred_fallthru
      _
    // Predicated region
    $region62: #{generator_forward.1} parent=1 // pred_check
      _
    $region63: #{generator_forward.1} parent=1 // pred_check_branch
      %147 = sbr.rel (0) target = $region65
    $region64: #{generator_forward.1} parent=1 // pred_region
      %149 = dma.done [#allocation22], 384
    $region65: #{generator_forward.1} parent=1 // pred_fallthru
      _
    %v150 = vld [vmem:[#allocation10] sm:$0x3]
    %v151 = vpack.c.bf16 %v150, %v150
    %v152 = vld [vmem:[#allocation12] sm:$0xff]
    %v153 = vld [vmem:[#allocation12 + $0x8] sm:$0xff]
    %v154 = vld [vmem:[#allocation12 + $0x10] sm:$0xff]
    %v155 = vld [vmem:[#allocation12 + $0x18] sm:$0xff]
    %v156 = vld [vmem:[#allocation12 + $0x20] sm:$0xff]
    %v157 = vld [vmem:[#allocation12 + $0x28] sm:$0xff]
    %v158 = vld [vmem:[#allocation12 + $0x30] sm:$0xff]
    %v159 = vld [vmem:[#allocation12 + $0x38] sm:$0xff]
    %v160 = vld [vmem:[#allocation12 + $0x40] sm:$0xff]
    %v161 = vld [vmem:[#allocation12 + $0x48] sm:$0xff]
    %v162 = vld [vmem:[#allocation12 + $0x50] sm:$0xff]
    %v163 = vld [vmem:[#allocation12 + $0x58] sm:$0xff]
    %v164 = vld [vmem:[#allocation12 + $0x60] sm:$0xff]
    %v165 = vld [vmem:[#allocation12 + $0x68] sm:$0xff]
    %v166 = vld [vmem:[#allocation12 + $0x70] sm:$0xff]
    %v167 = vld [vmem:[#allocation12 + $0x78] sm:$0xff]
    %v168 = vld [vmem:[#allocation12 + $0x80] sm:$0xff]
    %v169 = vld [vmem:[#allocation12 + $0x88] sm:$0xff]
    %v170 = vld [vmem:[#allocation12 + $0x90] sm:$0xff]
    %v171 = vld [vmem:[#allocation12 + $0x98] sm:$0xff]
    %v172 = vld [vmem:[#allocation12 + $0xa0] sm:$0xff]
    %v173 = vld [vmem:[#allocation12 + $0xa8] sm:$0xff]
    %v174 = vld [vmem:[#allocation12 + $0xb0] sm:$0xff]
    %v175 = vld [vmem:[#allocation12 + $0xb8] sm:$0xff]
    %v176 = vld [vmem:[#allocation12 + $0xc0] sm:$0xff]
    %v177 = vld [vmem:[#allocation12 + $0xc8] sm:$0xff]
    %v178 = vld [vmem:[#allocation12 + $0xd0] sm:$0xff]
    %v179 = vld [vmem:[#allocation12 + $0xd8] sm:$0xff]
    %v180 = vld [vmem:[#allocation12 + $0xe0] sm:$0xff]
    %v181 = vld [vmem:[#allocation12 + $0xe8] sm:$0xff]
    %v182 = vld [vmem:[#allocation12 + $0xf0] sm:$0xff]
    %v183 = vld [vmem:[#allocation12 + $0xf8] sm:$0xff]
    %v184 = vld [vmem:[#allocation12 + $0x100] sm:$0xff]
    %v185 = vld [vmem:[#allocation12 + $0x108] sm:$0xff]
    %v186 = vld [vmem:[#allocation12 + $0x110] sm:$0xff]
    %v187 = vld [vmem:[#allocation12 + $0x118] sm:$0xff]
    %v188 = vld [vmem:[#allocation12 + $0x120] sm:$0xff]
    %v189 = vld [vmem:[#allocation12 + $0x128] sm:$0xff]
    %v190 = vld [vmem:[#allocation12 + $0x130] sm:$0xff]
    %v191 = vld [vmem:[#allocation12 + $0x138] sm:$0xff]
    %v192 = vld [vmem:[#allocation12 + $0x140] sm:$0xff]
    %v193 = vld [vmem:[#allocation12 + $0x148] sm:$0xff]
    %v194 = vld [vmem:[#allocation12 + $0x150] sm:$0xff]
    %v195 = vld [vmem:[#allocation12 + $0x158] sm:$0xff]
    %v196 = vld [vmem:[#allocation12 + $0x160] sm:$0xff]
    %v197 = vld [vmem:[#allocation12 + $0x168] sm:$0xff]
    %v198 = vld [vmem:[#allocation12 + $0x170] sm:$0xff]
    %v199 = vld [vmem:[#allocation12 + $0x178] sm:$0xff]
    %v200 = vld [vmem:[#allocation12 + $0x180] sm:$0xff]
    %v201 = vld [vmem:[#allocation12 + $0x188] sm:$0xff]
    %v202 = vld [vmem:[#allocation12 + $0x190] sm:$0xff]
    %v203 = vld [vmem:[#allocation12 + $0x198] sm:$0xff]
    %v204 = vld [vmem:[#allocation12 + $0x1a0] sm:$0xff]
    %v205 = vld [vmem:[#allocation12 + $0x1a8] sm:$0xff]
    %v206 = vld [vmem:[#allocation12 + $0x1b0] sm:$0xff]
    %v207 = vld [vmem:[#allocation12 + $0x1b8] sm:$0xff]
    %v208 = vld [vmem:[#allocation12 + $0x1c0] sm:$0xff]
    %v209 = vld [vmem:[#allocation12 + $0x1c8] sm:$0xff]
    %v210 = vld [vmem:[#allocation12 + $0x1d0] sm:$0xff]
    %v211 = vld [vmem:[#allocation12 + $0x1d8] sm:$0xff]
    %v212 = vld [vmem:[#allocation12 + $0x1e0] sm:$0xff]
    %v213 = vld [vmem:[#allocation12 + $0x1e8] sm:$0xff]
    %v214 = vld [vmem:[#allocation12 + $0x1f0] sm:$0xff]
    %v215 = vld [vmem:[#allocation12 + $0x1f8] sm:$0xff]
    %v280 = vunpack.c.l.b16 %v152
    %v281 = vunpack.c.h.b16 %v152
    %v282 = vunpack.c.l.b16 %v153
    %v283 = vunpack.c.h.b16 %v153
    %v284 = vunpack.c.l.b16 %v154
    %v285 = vunpack.c.h.b16 %v154
    %v286 = vunpack.c.l.b16 %v155
    %v287 = vunpack.c.h.b16 %v155
    %v288 = vunpack.c.l.b16 %v156
    %v289 = vunpack.c.h.b16 %v156
    %v290 = vunpack.c.l.b16 %v157
    %v291 = vunpack.c.h.b16 %v157
    %v292 = vunpack.c.l.b16 %v158
    %v293 = vunpack.c.h.b16 %v158
    %v294 = vunpack.c.l.b16 %v159
    %v295 = vunpack.c.h.b16 %v159
    %v296 = vunpack.c.l.b16 %v160
    %v297 = vunpack.c.h.b16 %v160
    %v298 = vunpack.c.l.b16 %v161
    %v299 = vunpack.c.h.b16 %v161
    %v300 = vunpack.c.l.b16 %v162
    %v301 = vunpack.c.h.b16 %v162
    %v302 = vunpack.c.l.b16 %v163
    %v303 = vunpack.c.h.b16 %v163
    %v304 = vunpack.c.l.b16 %v164
    %v305 = vunpack.c.h.b16 %v164
    %v306 = vunpack.c.l.b16 %v165
    %v307 = vunpack.c.h.b16 %v165
    %v308 = vunpack.c.l.b16 %v166
    %v309 = vunpack.c.h.b16 %v166
    %v310 = vunpack.c.l.b16 %v167
    %v311 = vunpack.c.h.b16 %v167
    %v312 = vunpack.c.l.b16 %v168
    %v313 = vunpack.c.h.b16 %v168
    %v314 = vunpack.c.l.b16 %v169
    %v315 = vunpack.c.h.b16 %v169
    %v316 = vunpack.c.l.b16 %v170
    %v317 = vunpack.c.h.b16 %v170
    %v318 = vunpack.c.l.b16 %v171
    %v319 = vunpack.c.h.b16 %v171
    %v320 = vunpack.c.l.b16 %v172
    %v321 = vunpack.c.h.b16 %v172
    %v322 = vunpack.c.l.b16 %v173
    %v323 = vunpack.c.h.b16 %v173
    %v324 = vunpack.c.l.b16 %v174
    %v325 = vunpack.c.h.b16 %v174
    %v326 = vunpack.c.l.b16 %v175
    %v327 = vunpack.c.h.b16 %v175
    %v328 = vunpack.c.l.b16 %v176
    %v329 = vunpack.c.h.b16 %v176
    %v330 = vunpack.c.l.b16 %v177
    %v331 = vunpack.c.h.b16 %v177
    %v332 = vunpack.c.l.b16 %v178
    %v333 = vunpack.c.h.b16 %v178
    %v334 = vunpack.c.l.b16 %v179
    %v335 = vunpack.c.h.b16 %v179
    %v336 = vunpack.c.l.b16 %v180
    %v337 = vunpack.c.h.b16 %v180
    %v338 = vunpack.c.l.b16 %v181
    %v339 = vunpack.c.h.b16 %v181
    %v340 = vunpack.c.l.b16 %v182
    %v341 = vunpack.c.h.b16 %v182
    %v342 = vunpack.c.l.b16 %v183
    %v343 = vunpack.c.h.b16 %v183
    %v344 = vunpack.c.l.b16 %v184
    %v345 = vunpack.c.h.b16 %v184
    %v346 = vunpack.c.l.b16 %v185
    %v347 = vunpack.c.h.b16 %v185
    %v348 = vunpack.c.l.b16 %v186
    %v349 = vunpack.c.h.b16 %v186
    %v350 = vunpack.c.l.b16 %v187
    %v351 = vunpack.c.h.b16 %v187
    %v352 = vunpack.c.l.b16 %v188
    %v353 = vunpack.c.h.b16 %v188
    %v354 = vunpack.c.l.b16 %v189
    %v355 = vunpack.c.h.b16 %v189
    %v356 = vunpack.c.l.b16 %v190
    %v357 = vunpack.c.h.b16 %v190
    %v358 = vunpack.c.l.b16 %v191
    %v359 = vunpack.c.h.b16 %v191
    %v360 = vunpack.c.l.b16 %v192
    %v361 = vunpack.c.h.b16 %v192
    %v362 = vunpack.c.l.b16 %v193
    %v363 = vunpack.c.h.b16 %v193
    %v364 = vunpack.c.l.b16 %v194
    %v365 = vunpack.c.h.b16 %v194
    %v366 = vunpack.c.l.b16 %v195
    %v367 = vunpack.c.h.b16 %v195
    %v368 = vunpack.c.l.b16 %v196
    %v369 = vunpack.c.h.b16 %v196
    %v370 = vunpack.c.l.b16 %v197
    %v371 = vunpack.c.h.b16 %v197
    %v372 = vunpack.c.l.b16 %v198
    %v373 = vunpack.c.h.b16 %v198
    %v374 = vunpack.c.l.b16 %v199
    %v375 = vunpack.c.h.b16 %v199
    %v376 = vunpack.c.l.b16 %v200
    %v377 = vunpack.c.h.b16 %v200
    %v378 = vunpack.c.l.b16 %v201
    %v379 = vunpack.c.h.b16 %v201
    %v380 = vunpack.c.l.b16 %v202
    %v381 = vunpack.c.h.b16 %v202
    %v382 = vunpack.c.l.b16 %v203
    %v383 = vunpack.c.h.b16 %v203
    %v384 = vunpack.c.l.b16 %v204
    %v385 = vunpack.c.h.b16 %v204
    %v386 = vunpack.c.l.b16 %v205
    %v387 = vunpack.c.h.b16 %v205
    %v388 = vunpack.c.l.b16 %v206
    %v389 = vunpack.c.h.b16 %v206
    %v390 = vunpack.c.l.b16 %v207
    %v391 = vunpack.c.h.b16 %v207
    %v392 = vunpack.c.l.b16 %v208
    %v393 = vunpack.c.h.b16 %v208
    %v394 = vunpack.c.l.b16 %v209
    %v395 = vunpack.c.h.b16 %v209
    %v396 = vunpack.c.l.b16 %v210
    %v397 = vunpack.c.h.b16 %v210
    %v398 = vunpack.c.l.b16 %v211
    %v399 = vunpack.c.h.b16 %v211
    %v400 = vunpack.c.l.b16 %v212
    %v401 = vunpack.c.h.b16 %v212
    %v402 = vunpack.c.l.b16 %v213
    %v403 = vunpack.c.h.b16 %v213
    %v404 = vunpack.c.l.b16 %v214
    %v405 = vunpack.c.h.b16 %v214
    %v406 = vunpack.c.l.b16 %v215
    %v407 = vunpack.c.h.b16 %v215
    %v408 = vpack.c.b16 %v288, %v280
    %v409 = vpack.c.b16 %v289, %v281
    %v410 = vpack.c.b16 %v290, %v282
    %v411 = vpack.c.b16 %v291, %v283
    %v412 = vpack.c.b16 %v292, %v284
    %v413 = vpack.c.b16 %v293, %v285
    %v414 = vpack.c.b16 %v294, %v286
    %v415 = vpack.c.b16 %v295, %v287
    %v416 = vpack.c.b16 %v304, %v296
    %v417 = vpack.c.b16 %v305, %v297
    %v418 = vpack.c.b16 %v306, %v298
    %v419 = vpack.c.b16 %v307, %v299
    %v420 = vpack.c.b16 %v308, %v300
    %v421 = vpack.c.b16 %v309, %v301
    %v422 = vpack.c.b16 %v310, %v302
    %v423 = vpack.c.b16 %v311, %v303
    %v424 = vpack.c.b16 %v320, %v312
    %v425 = vpack.c.b16 %v321, %v313
    %v426 = vpack.c.b16 %v322, %v314
    %v427 = vpack.c.b16 %v323, %v315
    %v428 = vpack.c.b16 %v324, %v316
    %v429 = vpack.c.b16 %v325, %v317
    %v430 = vpack.c.b16 %v326, %v318
    %v431 = vpack.c.b16 %v327, %v319
    %v432 = vpack.c.b16 %v336, %v328
    %v433 = vpack.c.b16 %v337, %v329
    %v434 = vpack.c.b16 %v338, %v330
    %v435 = vpack.c.b16 %v339, %v331
    %v436 = vpack.c.b16 %v340, %v332
    %v437 = vpack.c.b16 %v341, %v333
    %v438 = vpack.c.b16 %v342, %v334
    %v439 = vpack.c.b16 %v343, %v335
    %v440 = vpack.c.b16 %v352, %v344
    %v441 = vpack.c.b16 %v353, %v345
    %v442 = vpack.c.b16 %v354, %v346
    %v443 = vpack.c.b16 %v355, %v347
    %v444 = vpack.c.b16 %v356, %v348
    %v445 = vpack.c.b16 %v357, %v349
    %v446 = vpack.c.b16 %v358, %v350
    %v447 = vpack.c.b16 %v359, %v351
    %v448 = vpack.c.b16 %v368, %v360
    %v449 = vpack.c.b16 %v369, %v361
    %v450 = vpack.c.b16 %v370, %v362
    %v451 = vpack.c.b16 %v371, %v363
    %v452 = vpack.c.b16 %v372, %v364
    %v453 = vpack.c.b16 %v373, %v365
    %v454 = vpack.c.b16 %v374, %v366
    %v455 = vpack.c.b16 %v375, %v367
    %v456 = vpack.c.b16 %v384, %v376
    %v457 = vpack.c.b16 %v385, %v377
    %v458 = vpack.c.b16 %v386, %v378
    %v459 = vpack.c.b16 %v387, %v379
    %v460 = vpack.c.b16 %v388, %v380
    %v461 = vpack.c.b16 %v389, %v381
    %v462 = vpack.c.b16 %v390, %v382
    %v463 = vpack.c.b16 %v391, %v383
    %v464 = vpack.c.b16 %v400, %v392
    %v465 = vpack.c.b16 %v401, %v393
    %v466 = vpack.c.b16 %v402, %v394
    %v467 = vpack.c.b16 %v403, %v395
    %v468 = vpack.c.b16 %v404, %v396
    %v469 = vpack.c.b16 %v405, %v397
    %v470 = vpack.c.b16 %v406, %v398
    %v471 = vpack.c.b16 %v407, %v399
    %536 = vmatpush.bf16.msra.mxu0 %v464
    %537 = vmatpush.bf16.msra.mxu0 %v456
    %538 = vmatpush.bf16.msra.mxu0 %v448
    %539 = vmatpush.bf16.msra.mxu0 %v440
    %540 = vmatpush.bf16.msra.mxu0 %v432
    %541 = vmatpush.bf16.msra.mxu0 %v424
    %542 = vmatpush.bf16.msra.mxu0 %v416
    %543 = vmatpush.bf16.msra.mxu0 %v408
    %544 = vmatmul.bf16.gmra.mxu0 %v151
    %v545 = vpop.f32.mrf.mxu0
    %v546 = vadd.f32 0.0, %v545
    %v547 = vpop.f32.mrf.mxu0
    %548 = vdwg.mxu0
    %549 = vmatpush.bf16.msra.mxu0 %v465
    %550 = vmatpush.bf16.msra.mxu0 %v457
    %551 = vmatpush.bf16.msra.mxu0 %v449
    %552 = vmatpush.bf16.msra.mxu0 %v441
    %553 = vmatpush.bf16.msra.mxu0 %v433
    %554 = vmatpush.bf16.msra.mxu0 %v425
    %555 = vmatpush.bf16.msra.mxu0 %v417
    %556 = vmatpush.bf16.msra.mxu0 %v409
    %557 = vmatmul.bf16.gmra.mxu0 %v151
    %v558 = vpop.f32.mrf.mxu0
    %v559 = vadd.f32 0.0, %v558
    %v560 = vpop.f32.mrf.mxu0
    %561 = vdwg.mxu0
    %562 = vmatpush.bf16.msra.mxu0 %v466
    %563 = vmatpush.bf16.msra.mxu0 %v458
    %564 = vmatpush.bf16.msra.mxu0 %v450
    %565 = vmatpush.bf16.msra.mxu0 %v442
    %566 = vmatpush.bf16.msra.mxu0 %v434
    %567 = vmatpush.bf16.msra.mxu0 %v426
    %568 = vmatpush.bf16.msra.mxu0 %v418
    %569 = vmatpush.bf16.msra.mxu0 %v410
    %570 = vmatmul.bf16.gmra.mxu0 %v151
    %v571 = vpop.f32.mrf.mxu0
    %v572 = vadd.f32 0.0, %v571
    %v573 = vpop.f32.mrf.mxu0
    %574 = vdwg.mxu0
    %575 = vmatpush.bf16.msra.mxu0 %v467
    %576 = vmatpush.bf16.msra.mxu0 %v459
    %577 = vmatpush.bf16.msra.mxu0 %v451
    %578 = vmatpush.bf16.msra.mxu0 %v443
    %579 = vmatpush.bf16.msra.mxu0 %v435
    %580 = vmatpush.bf16.msra.mxu0 %v427
    %581 = vmatpush.bf16.msra.mxu0 %v419
    %582 = vmatpush.bf16.msra.mxu0 %v411
    %583 = vmatmul.bf16.gmra.mxu0 %v151
    %v584 = vpop.f32.mrf.mxu0
    %v585 = vadd.f32 0.0, %v584
    %v586 = vpop.f32.mrf.mxu0
    %587 = vdwg.mxu0
    %588 = vmatpush.bf16.msra.mxu0 %v468
    %589 = vmatpush.bf16.msra.mxu0 %v460
    %590 = vmatpush.bf16.msra.mxu0 %v452
    %591 = vmatpush.bf16.msra.mxu0 %v444
    %592 = vmatpush.bf16.msra.mxu0 %v436
    %593 = vmatpush.bf16.msra.mxu0 %v428
    %594 = vmatpush.bf16.msra.mxu0 %v420
    %595 = vmatpush.bf16.msra.mxu0 %v412
    %596 = vmatmul.bf16.gmra.mxu0 %v151
    %v597 = vpop.f32.mrf.mxu0
    %v598 = vadd.f32 0.0, %v597
    %v599 = vpop.f32.mrf.mxu0
    %600 = vdwg.mxu0
    %601 = vmatpush.bf16.msra.mxu0 %v469
    %602 = vmatpush.bf16.msra.mxu0 %v461
    %603 = vmatpush.bf16.msra.mxu0 %v453
    %604 = vmatpush.bf16.msra.mxu0 %v445
    %605 = vmatpush.bf16.msra.mxu0 %v437
    %606 = vmatpush.bf16.msra.mxu0 %v429
    %607 = vmatpush.bf16.msra.mxu0 %v421
    %608 = vmatpush.bf16.msra.mxu0 %v413
    %609 = vmatmul.bf16.gmra.mxu0 %v151
    %v610 = vpop.f32.mrf.mxu0
    %v611 = vadd.f32 0.0, %v610
    %v612 = vpop.f32.mrf.mxu0
    %613 = vdwg.mxu0
    %614 = vmatpush.bf16.msra.mxu0 %v470
    %615 = vmatpush.bf16.msra.mxu0 %v462
    %616 = vmatpush.bf16.msra.mxu0 %v454
    %617 = vmatpush.bf16.msra.mxu0 %v446
    %618 = vmatpush.bf16.msra.mxu0 %v438
    %619 = vmatpush.bf16.msra.mxu0 %v430
    %620 = vmatpush.bf16.msra.mxu0 %v422
    %621 = vmatpush.bf16.msra.mxu0 %v414
    %622 = vmatmul.bf16.gmra.mxu0 %v151
    %v623 = vpop.f32.mrf.mxu0
    %v624 = vadd.f32 0.0, %v623
    %v625 = vpop.f32.mrf.mxu0
    %626 = vdwg.mxu0
    %627 = vmatpush.bf16.msra.mxu0 %v471
    %628 = vmatpush.bf16.msra.mxu0 %v463
    %629 = vmatpush.bf16.msra.mxu0 %v455
    %630 = vmatpush.bf16.msra.mxu0 %v447
    %631 = vmatpush.bf16.msra.mxu0 %v439
    %632 = vmatpush.bf16.msra.mxu0 %v431
    %633 = vmatpush.bf16.msra.mxu0 %v423
    %634 = vmatpush.bf16.msra.mxu0 %v415
    %635 = vmatmul.bf16.gmra.mxu0 %v151
    %v636 = vpop.f32.mrf.mxu0
    %v637 = vadd.f32 0.0, %v636
    %v638 = vpop.f32.mrf.mxu0
    %639 = vdwg.mxu0
    %640 = vst [vmem:[#allocation2] sm:$0x3] %v546
    %641 = vst [vmem:[#allocation2 + $0x8] sm:$0x3] %v559
    %v644 = vrot.slane %v572, 6
    %v645 = vrot.slane %v585, 6
    %648 = vst [vmem:[#allocation2] sm:$0xc] %v644
    %649 = vst [vmem:[#allocation2 + $0x8] sm:$0xc] %v645
    %v652 = vrot.slane %v598, 4
    %v653 = vrot.slane %v611, 4
    %656 = vst [vmem:[#allocation2] sm:$0x30] %v652
    %657 = vst [vmem:[#allocation2 + $0x8] sm:$0x30] %v653
    %v660 = vrot.slane %v624, 2
    %v661 = vrot.slane %v637, 2
    %664 = vst [vmem:[#allocation2] sm:$0xc0] %v660
    %665 = vst [vmem:[#allocation2 + $0x8] sm:$0xc0] %v661
    %v666 = vld [vmem:[#allocation2] sm:$0xff]
    %v667 = vld [vmem:[#allocation2 + $0x8] sm:$0xff]
    %v668 = vld [vmem:[#allocation21] ss:$2 sm:$0x3]
    %s669 = scalar_lea.vmem [#allocation21], 1
    %v670 = vld [vmem:[%s669] ss:$2 sm:$0x3]
    %v671 = vrot.slane %v666, 4
    %v672 = vadd.f32 %v666, %v671
    %v673 = vrot.slane %v672, 2
    %v674 = vadd.f32 %v672, %v673
    %v675 = vrot.slane %v674, 1
    %v676 = vadd.f32 %v674, %v675
    %v677 = vrot.slane %v667, 4
    %v678 = vadd.f32 %v667, %v677
    %v679 = vrot.slane %v678, 2
    %v680 = vadd.f32 %v678, %v679
    %v681 = vrot.slane %v680, 1
    %v682 = vadd.f32 %v680, %v681
    %v683 = vmul.f32 %v676, 0.125
    %v684 = vmul.f32 %v682, 0.125
    %v685 = vsub.f32 %v666, %v683
    %v686 = vsub.f32 %v667, %v684
    %v687 = vmul.f32 %v685, %v685
    %v688 = vmul.f32 %v686, %v686
    %v689 = vrot.slane %v687, 4
    %v690 = vadd.f32 %v687, %v689
    %v691 = vrot.slane %v690, 2
    %v692 = vadd.f32 %v690, %v691
    %v693 = vrot.slane %v692, 1
    %v694 = vadd.f32 %v692, %v693
    %v695 = vrot.slane %v688, 4
    %v696 = vadd.f32 %v688, %v695
    %v697 = vrot.slane %v696, 2
    %v698 = vadd.f32 %v696, %v697
    %v699 = vrot.slane %v698, 1
    %v700 = vadd.f32 %v698, %v699
    %v701 = vmul.f32 %v694, 0.125
    %v702 = vmul.f32 %v700, 0.125
    %v703 = vadd.f32 %v701, 1e-05
    %v704 = vadd.f32 %v702, 1e-05
    %v705 = vrsqrt.pop %v703
    %v706 = vmul.f32 %v705, %v703
    %v707 = vmul.f32 %v706, %v705
    %v708 = vmul.f32 0.5, %v707
    %v709 = vsub.f32 1.5, %v708
    %v710 = vmul.f32 %v705, %v709
    %vm711 = vweird.f32 %v703
    %vm712 = vweird.f32 %v705
    %vm713 = vmor %vm711, %vm712
    %v714 = vsel %vm713, %v705, %v710
    %v715 = vrsqrt.pop %v704
    %v716 = vmul.f32 %v715, %v704
    %v717 = vmul.f32 %v716, %v715
    %v718 = vmul.f32 0.5, %v717
    %v719 = vsub.f32 1.5, %v718
    %v720 = vmul.f32 %v715, %v719
    %vm721 = vweird.f32 %v704
    %vm722 = vweird.f32 %v715
    %vm723 = vmor %vm721, %vm722
    %v724 = vsel %vm723, %v715, %v720
    %v725 = vmul.f32 %v685, %v714
    %v726 = vmul.f32 %v686, %v724
    %v728 = vperm.slane %v668, 0
    %v729 = vperm.slane %v668, 1
    %v732 = vmul.f32 %v725, %v728
    %v733 = vmul.f32 %v726, %v729
    %v735 = vperm.slane %v670, 0
    %v736 = vperm.slane %v670, 1
    %v739 = vadd.f32 %v732, %v735
    %v740 = vadd.f32 %v733, %v736
    %v741 = vmax.f32 %v739, 0.0
    %v742 = vmax.f32 %v740, 0.0
    %v743 = vpack.c.bf16 %v741, %v741
    %v744 = vpack.c.bf16 %v742, %v742
    %v745 = vld [vmem:[#allocation14] sm:$0xff]
    %v746 = vld [vmem:[#allocation14 + $0x8] sm:$0xff]
    %v747 = vld [vmem:[#allocation14 + $0x10] sm:$0xff]
    %v748 = vld [vmem:[#allocation14 + $0x18] sm:$0xff]
    %v749 = vld [vmem:[#allocation14 + $0x20] sm:$0xff]
    %v750 = vld [vmem:[#allocation14 + $0x28] sm:$0xff]
    %v751 = vld [vmem:[#allocation14 + $0x30] sm:$0xff]
    %v752 = vld [vmem:[#allocation14 + $0x38] sm:$0xff]
    %v753 = vld [vmem:[#allocation14 + $0x40] sm:$0xff]
    %v754 = vld [vmem:[#allocation14 + $0x48] sm:$0xff]
    %v755 = vld [vmem:[#allocation14 + $0x50] sm:$0xff]
    %v756 = vld [vmem:[#allocation14 + $0x58] sm:$0xff]
    %v757 = vld [vmem:[#allocation14 + $0x60] sm:$0xff]
    %v758 = vld [vmem:[#allocation14 + $0x68] sm:$0xff]
    %v759 = vld [vmem:[#allocation14 + $0x70] sm:$0xff]
    %v760 = vld [vmem:[#allocation14 + $0x78] sm:$0xff]
    %v761 = vld [vmem:[#allocation14 + $0x80] sm:$0xff]
    %v762 = vld [vmem:[#allocation14 + $0x88] sm:$0xff]
    %v763 = vld [vmem:[#allocation14 + $0x90] sm:$0xff]
    %v764 = vld [vmem:[#allocation14 + $0x98] sm:$0xff]
    %v765 = vld [vmem:[#allocation14 + $0xa0] sm:$0xff]
    %v766 = vld [vmem:[#allocation14 + $0xa8] sm:$0xff]
    %v767 = vld [vmem:[#allocation14 + $0xb0] sm:$0xff]
    %v768 = vld [vmem:[#allocation14 + $0xb8] sm:$0xff]
    %v769 = vld [vmem:[#allocation14 + $0xc0] sm:$0xff]
    %v770 = vld [vmem:[#allocation14 + $0xc8] sm:$0xff]
    %v771 = vld [vmem:[#allocation14 + $0xd0] sm:$0xff]
    %v772 = vld [vmem:[#allocation14 + $0xd8] sm:$0xff]
    %v773 = vld [vmem:[#allocation14 + $0xe0] sm:$0xff]
    %v774 = vld [vmem:[#allocation14 + $0xe8] sm:$0xff]
    %v775 = vld [vmem:[#allocation14 + $0xf0] sm:$0xff]
    %v776 = vld [vmem:[#allocation14 + $0xf8] sm:$0xff]
    %v777 = vld [vmem:[#allocation14 + $0x100] sm:$0xff]
    %v778 = vld [vmem:[#allocation14 + $0x108] sm:$0xff]
    %v779 = vld [vmem:[#allocation14 + $0x110] sm:$0xff]
    %v780 = vld [vmem:[#allocation14 + $0x118] sm:$0xff]
    %v781 = vld [vmem:[#allocation14 + $0x120] sm:$0xff]
    %v782 = vld [vmem:[#allocation14 + $0x128] sm:$0xff]
    %v783 = vld [vmem:[#allocation14 + $0x130] sm:$0xff]
    %v784 = vld [vmem:[#allocation14 + $0x138] sm:$0xff]
    %v785 = vld [vmem:[#allocation14 + $0x140] sm:$0xff]
    %v786 = vld [vmem:[#allocation14 + $0x148] sm:$0xff]
    %v787 = vld [vmem:[#allocation14 + $0x150] sm:$0xff]
    %v788 = vld [vmem:[#allocation14 + $0x158] sm:$0xff]
    %v789 = vld [vmem:[#allocation14 + $0x160] sm:$0xff]
    %v790 = vld [vmem:[#allocation14 + $0x168] sm:$0xff]
    %v791 = vld [vmem:[#allocation14 + $0x170] sm:$0xff]
    %v792 = vld [vmem:[#allocation14 + $0x178] sm:$0xff]
    %v793 = vld [vmem:[#allocation14 + $0x180] sm:$0xff]
    %v794 = vld [vmem:[#allocation14 + $0x188] sm:$0xff]
    %v795 = vld [vmem:[#allocation14 + $0x190] sm:$0xff]
    %v796 = vld [vmem:[#allocation14 + $0x198] sm:$0xff]
    %v797 = vld [vmem:[#allocation14 + $0x1a0] sm:$0xff]
    %v798 = vld [vmem:[#allocation14 + $0x1a8] sm:$0xff]
    %v799 = vld [vmem:[#allocation14 + $0x1b0] sm:$0xff]
    %v800 = vld [vmem:[#allocation14 + $0x1b8] sm:$0xff]
    %v801 = vld [vmem:[#allocation14 + $0x1c0] sm:$0xff]
    %v802 = vld [vmem:[#allocation14 + $0x1c8] sm:$0xff]
    %v803 = vld [vmem:[#allocation14 + $0x1d0] sm:$0xff]
    %v804 = vld [vmem:[#allocation14 + $0x1d8] sm:$0xff]
    %v805 = vld [vmem:[#allocation14 + $0x1e0] sm:$0xff]
    %v806 = vld [vmem:[#allocation14 + $0x1e8] sm:$0xff]
    %v807 = vld [vmem:[#allocation14 + $0x1f0] sm:$0xff]
    %v808 = vld [vmem:[#allocation14 + $0x1f8] sm:$0xff]
    %v873 = vunpack.c.l.b16 %v745
    %v874 = vunpack.c.h.b16 %v745
    %v875 = vunpack.c.l.b16 %v746
    %v876 = vunpack.c.h.b16 %v746
    %v877 = vunpack.c.l.b16 %v747
    %v878 = vunpack.c.h.b16 %v747
    %v879 = vunpack.c.l.b16 %v748
    %v880 = vunpack.c.h.b16 %v748
    %v881 = vunpack.c.l.b16 %v749
    %v882 = vunpack.c.h.b16 %v749
    %v883 = vunpack.c.l.b16 %v750
    %v884 = vunpack.c.h.b16 %v750
    %v885 = vunpack.c.l.b16 %v751
    %v886 = vunpack.c.h.b16 %v751
    %v887 = vunpack.c.l.b16 %v752
    %v888 = vunpack.c.h.b16 %v752
    %v889 = vunpack.c.l.b16 %v753
    %v890 = vunpack.c.h.b16 %v753
    %v891 = vunpack.c.l.b16 %v754
    %v892 = vunpack.c.h.b16 %v754
    %v893 = vunpack.c.l.b16 %v755
    %v894 = vunpack.c.h.b16 %v755
    %v895 = vunpack.c.l.b16 %v756
    %v896 = vunpack.c.h.b16 %v756
    %v897 = vunpack.c.l.b16 %v757
    %v898 = vunpack.c.h.b16 %v757
    %v899 = vunpack.c.l.b16 %v758
    %v900 = vunpack.c.h.b16 %v758
    %v901 = vunpack.c.l.b16 %v759
    %v902 = vunpack.c.h.b16 %v759
    %v903 = vunpack.c.l.b16 %v760
    %v904 = vunpack.c.h.b16 %v760
    %v905 = vunpack.c.l.b16 %v761
    %v906 = vunpack.c.h.b16 %v761
    %v907 = vunpack.c.l.b16 %v762
    %v908 = vunpack.c.h.b16 %v762
    %v909 = vunpack.c.l.b16 %v763
    %v910 = vunpack.c.h.b16 %v763
    %v911 = vunpack.c.l.b16 %v764
    %v912 = vunpack.c.h.b16 %v764
    %v913 = vunpack.c.l.b16 %v765
    %v914 = vunpack.c.h.b16 %v765
    %v915 = vunpack.c.l.b16 %v766
    %v916 = vunpack.c.h.b16 %v766
    %v917 = vunpack.c.l.b16 %v767
    %v918 = vunpack.c.h.b16 %v767
    %v919 = vunpack.c.l.b16 %v768
    %v920 = vunpack.c.h.b16 %v768
    %v921 = vunpack.c.l.b16 %v769
    %v922 = vunpack.c.h.b16 %v769
    %v923 = vunpack.c.l.b16 %v770
    %v924 = vunpack.c.h.b16 %v770
    %v925 = vunpack.c.l.b16 %v771
    %v926 = vunpack.c.h.b16 %v771
    %v927 = vunpack.c.l.b16 %v772
    %v928 = vunpack.c.h.b16 %v772
    %v929 = vunpack.c.l.b16 %v773
    %v930 = vunpack.c.h.b16 %v773
    %v931 = vunpack.c.l.b16 %v774
    %v932 = vunpack.c.h.b16 %v774
    %v933 = vunpack.c.l.b16 %v775
    %v934 = vunpack.c.h.b16 %v775
    %v935 = vunpack.c.l.b16 %v776
    %v936 = vunpack.c.h.b16 %v776
    %v937 = vunpack.c.l.b16 %v777
    %v938 = vunpack.c.h.b16 %v777
    %v939 = vunpack.c.l.b16 %v778
    %v940 = vunpack.c.h.b16 %v778
    %v941 = vunpack.c.l.b16 %v779
    %v942 = vunpack.c.h.b16 %v779
    %v943 = vunpack.c.l.b16 %v780
    %v944 = vunpack.c.h.b16 %v780
    %v945 = vunpack.c.l.b16 %v781
    %v946 = vunpack.c.h.b16 %v781
    %v947 = vunpack.c.l.b16 %v782
    %v948 = vunpack.c.h.b16 %v782
    %v949 = vunpack.c.l.b16 %v783
    %v950 = vunpack.c.h.b16 %v783
    %v951 = vunpack.c.l.b16 %v784
    %v952 = vunpack.c.h.b16 %v784
    %v953 = vunpack.c.l.b16 %v785
    %v954 = vunpack.c.h.b16 %v785
    %v955 = vunpack.c.l.b16 %v786
    %v956 = vunpack.c.h.b16 %v786
    %v957 = vunpack.c.l.b16 %v787
    %v958 = vunpack.c.h.b16 %v787
    %v959 = vunpack.c.l.b16 %v788
    %v960 = vunpack.c.h.b16 %v788
    %v961 = vunpack.c.l.b16 %v789
    %v962 = vunpack.c.h.b16 %v789
    %v963 = vunpack.c.l.b16 %v790
    %v964 = vunpack.c.h.b16 %v790
    %v965 = vunpack.c.l.b16 %v791
    %v966 = vunpack.c.h.b16 %v791
    %v967 = vunpack.c.l.b16 %v792
    %v968 = vunpack.c.h.b16 %v792
    %v969 = vunpack.c.l.b16 %v793
    %v970 = vunpack.c.h.b16 %v793
    %v971 = vunpack.c.l.b16 %v794
    %v972 = vunpack.c.h.b16 %v794
    %v973 = vunpack.c.l.b16 %v795
    %v974 = vunpack.c.h.b16 %v795
    %v975 = vunpack.c.l.b16 %v796
    %v976 = vunpack.c.h.b16 %v796
    %v977 = vunpack.c.l.b16 %v797
    %v978 = vunpack.c.h.b16 %v797
    %v979 = vunpack.c.l.b16 %v798
    %v980 = vunpack.c.h.b16 %v798
    %v981 = vunpack.c.l.b16 %v799
    %v982 = vunpack.c.h.b16 %v799
    %v983 = vunpack.c.l.b16 %v800
    %v984 = vunpack.c.h.b16 %v800
    %v985 = vunpack.c.l.b16 %v801
    %v986 = vunpack.c.h.b16 %v801
    %v987 = vunpack.c.l.b16 %v802
    %v988 = vunpack.c.h.b16 %v802
    %v989 = vunpack.c.l.b16 %v803
    %v990 = vunpack.c.h.b16 %v803
    %v991 = vunpack.c.l.b16 %v804
    %v992 = vunpack.c.h.b16 %v804
    %v993 = vunpack.c.l.b16 %v805
    %v994 = vunpack.c.h.b16 %v805
    %v995 = vunpack.c.l.b16 %v806
    %v996 = vunpack.c.h.b16 %v806
    %v997 = vunpack.c.l.b16 %v807
    %v998 = vunpack.c.h.b16 %v807
    %v999 = vunpack.c.l.b16 %v808
    %v1000 = vunpack.c.h.b16 %v808
    %v1001 = vpack.c.b16 %v877, %v873
    %v1002 = vpack.c.b16 %v878, %v874
    %v1003 = vpack.c.b16 %v879, %v875
    %v1004 = vpack.c.b16 %v880, %v876
    %v1005 = vpack.c.b16 %v885, %v881
    %v1006 = vpack.c.b16 %v886, %v882
    %v1007 = vpack.c.b16 %v887, %v883
    %v1008 = vpack.c.b16 %v888, %v884
    %v1009 = vpack.c.b16 %v893, %v889
    %v1010 = vpack.c.b16 %v894, %v890
    %v1011 = vpack.c.b16 %v895, %v891
    %v1012 = vpack.c.b16 %v896, %v892
    %v1013 = vpack.c.b16 %v901, %v897
    %v1014 = vpack.c.b16 %v902, %v898
    %v1015 = vpack.c.b16 %v903, %v899
    %v1016 = vpack.c.b16 %v904, %v900
    %v1017 = vpack.c.b16 %v909, %v905
    %v1018 = vpack.c.b16 %v910, %v906
    %v1019 = vpack.c.b16 %v911, %v907
    %v1020 = vpack.c.b16 %v912, %v908
    %v1021 = vpack.c.b16 %v917, %v913
    %v1022 = vpack.c.b16 %v918, %v914
    %v1023 = vpack.c.b16 %v919, %v915
    %v1024 = vpack.c.b16 %v920, %v916
    %v1025 = vpack.c.b16 %v925, %v921
    %v1026 = vpack.c.b16 %v926, %v922
    %v1027 = vpack.c.b16 %v927, %v923
    %v1028 = vpack.c.b16 %v928, %v924
    %v1029 = vpack.c.b16 %v933, %v929
    %v1030 = vpack.c.b16 %v934, %v930
    %v1031 = vpack.c.b16 %v935, %v931
    %v1032 = vpack.c.b16 %v936, %v932
    %v1033 = vpack.c.b16 %v941, %v937
    %v1034 = vpack.c.b16 %v942, %v938
    %v1035 = vpack.c.b16 %v943, %v939
    %v1036 = vpack.c.b16 %v944, %v940
    %v1037 = vpack.c.b16 %v949, %v945
    %v1038 = vpack.c.b16 %v950, %v946
    %v1039 = vpack.c.b16 %v951, %v947
    %v1040 = vpack.c.b16 %v952, %v948
    %v1041 = vpack.c.b16 %v957, %v953
    %v1042 = vpack.c.b16 %v958, %v954
    %v1043 = vpack.c.b16 %v959, %v955
    %v1044 = vpack.c.b16 %v960, %v956
    %v1045 = vpack.c.b16 %v965, %v961
    %v1046 = vpack.c.b16 %v966, %v962
    %v1047 = vpack.c.b16 %v967, %v963
    %v1048 = vpack.c.b16 %v968, %v964
    %v1049 = vpack.c.b16 %v973, %v969
    %v1050 = vpack.c.b16 %v974, %v970
    %v1051 = vpack.c.b16 %v975, %v971
    %v1052 = vpack.c.b16 %v976, %v972
    %v1053 = vpack.c.b16 %v981, %v977
    %v1054 = vpack.c.b16 %v982, %v978
    %v1055 = vpack.c.b16 %v983, %v979
    %v1056 = vpack.c.b16 %v984, %v980
    %v1057 = vpack.c.b16 %v989, %v985
    %v1058 = vpack.c.b16 %v990, %v986
    %v1059 = vpack.c.b16 %v991, %v987
    %v1060 = vpack.c.b16 %v992, %v988
    %v1061 = vpack.c.b16 %v997, %v993
    %v1062 = vpack.c.b16 %v998, %v994
    %v1063 = vpack.c.b16 %v999, %v995
    %v1064 = vpack.c.b16 %v1000, %v996
    %1129 = vmatpush.bf16.msra.mxu0 %v1029
    %1130 = vmatpush.bf16.msra.mxu0 %v1025
    %1131 = vmatpush.bf16.msra.mxu0 %v1021
    %1132 = vmatpush.bf16.msra.mxu0 %v1017
    %1133 = vmatpush.bf16.msra.mxu0 %v1013
    %1134 = vmatpush.bf16.msra.mxu0 %v1009
    %1135 = vmatpush.bf16.msra.mxu0 %v1005
    %1136 = vmatpush.bf16.msra.mxu0 %v1001
    %1137 = vmatmul.bf16.gmra.mxu0 %v743
    %v1138 = vpop.f32.mrf.mxu0
    %v1139 = vadd.f32 0.0, %v1138
    %v1140 = vpop.f32.mrf.mxu0
    %1141 = vdwg.mxu0
    %1142 = vmatpush.bf16.msra.mxu0 %v1061
    %1143 = vmatpush.bf16.msra.mxu0 %v1057
    %1144 = vmatpush.bf16.msra.mxu0 %v1053
    %1145 = vmatpush.bf16.msra.mxu0 %v1049
    %1146 = vmatpush.bf16.msra.mxu0 %v1045
    %1147 = vmatpush.bf16.msra.mxu0 %v1041
    %1148 = vmatpush.bf16.msra.mxu0 %v1037
    %1149 = vmatpush.bf16.msra.mxu0 %v1033
    %1150 = vmatmul.bf16.gmra.mxu0 %v744
    %v1151 = vpop.f32.mrf.mxu0
    %v1152 = vadd.f32 %v1139, %v1151
    %v1153 = vpop.f32.mrf.mxu0
    %1154 = vdwg.mxu0
    %1155 = vmatpush.bf16.msra.mxu0 %v1030
    %1156 = vmatpush.bf16.msra.mxu0 %v1026
    %1157 = vmatpush.bf16.msra.mxu0 %v1022
    %1158 = vmatpush.bf16.msra.mxu0 %v1018
    %1159 = vmatpush.bf16.msra.mxu0 %v1014
    %1160 = vmatpush.bf16.msra.mxu0 %v1010
    %1161 = vmatpush.bf16.msra.mxu0 %v1006
    %1162 = vmatpush.bf16.msra.mxu0 %v1002
    %1163 = vmatmul.bf16.gmra.mxu0 %v743
    %v1164 = vpop.f32.mrf.mxu0
    %v1165 = vadd.f32 0.0, %v1164
    %v1166 = vpop.f32.mrf.mxu0
    %1167 = vdwg.mxu0
    %1168 = vmatpush.bf16.msra.mxu0 %v1062
    %1169 = vmatpush.bf16.msra.mxu0 %v1058
    %1170 = vmatpush.bf16.msra.mxu0 %v1054
    %1171 = vmatpush.bf16.msra.mxu0 %v1050
    %1172 = vmatpush.bf16.msra.mxu0 %v1046
    %1173 = vmatpush.bf16.msra.mxu0 %v1042
    %1174 = vmatpush.bf16.msra.mxu0 %v1038
    %1175 = vmatpush.bf16.msra.mxu0 %v1034
    %1176 = vmatmul.bf16.gmra.mxu0 %v744
    %v1177 = vpop.f32.mrf.mxu0
    %v1178 = vadd.f32 %v1165, %v1177
    %v1179 = vpop.f32.mrf.mxu0
    %1180 = vdwg.mxu0
    %1181 = vmatpush.bf16.msra.mxu0 %v1031
    %1182 = vmatpush.bf16.msra.mxu0 %v1027
    %1183 = vmatpush.bf16.msra.mxu0 %v1023
    %1184 = vmatpush.bf16.msra.mxu0 %v1019
    %1185 = vmatpush.bf16.msra.mxu0 %v1015
    %1186 = vmatpush.bf16.msra.mxu0 %v1011
    %1187 = vmatpush.bf16.msra.mxu0 %v1007
    %1188 = vmatpush.bf16.msra.mxu0 %v1003
    %1189 = vmatmul.bf16.gmra.mxu0 %v743
    %v1190 = vpop.f32.mrf.mxu0
    %v1191 = vadd.f32 0.0, %v1190
    %v1192 = vpop.f32.mrf.mxu0
    %1193 = vdwg.mxu0
    %1194 = vmatpush.bf16.msra.mxu0 %v1063
    %1195 = vmatpush.bf16.msra.mxu0 %v1059
    %1196 = vmatpush.bf16.msra.mxu0 %v1055
    %1197 = vmatpush.bf16.msra.mxu0 %v1051
    %1198 = vmatpush.bf16.msra.mxu0 %v1047
    %1199 = vmatpush.bf16.msra.mxu0 %v1043
    %1200 = vmatpush.bf16.msra.mxu0 %v1039
    %1201 = vmatpush.bf16.msra.mxu0 %v1035
    %1202 = vmatmul.bf16.gmra.mxu0 %v744
    %v1203 = vpop.f32.mrf.mxu0
    %v1204 = vadd.f32 %v1191, %v1203
    %v1205 = vpop.f32.mrf.mxu0
    %1206 = vdwg.mxu0
    %1207 = vmatpush.bf16.msra.mxu0 %v1032
    %1208 = vmatpush.bf16.msra.mxu0 %v1028
    %1209 = vmatpush.bf16.msra.mxu0 %v1024
    %1210 = vmatpush.bf16.msra.mxu0 %v1020
    %1211 = vmatpush.bf16.msra.mxu0 %v1016
    %1212 = vmatpush.bf16.msra.mxu0 %v1012
    %1213 = vmatpush.bf16.msra.mxu0 %v1008
    %1214 = vmatpush.bf16.msra.mxu0 %v1004
    %1215 = vmatmul.bf16.gmra.mxu0 %v743
    %v1216 = vpop.f32.mrf.mxu0
    %v1217 = vadd.f32 0.0, %v1216
    %v1218 = vpop.f32.mrf.mxu0
    %1219 = vdwg.mxu0
    %1220 = vmatpush.bf16.msra.mxu0 %v1064
    %1221 = vmatpush.bf16.msra.mxu0 %v1060
    %1222 = vmatpush.bf16.msra.mxu0 %v1056
    %1223 = vmatpush.bf16.msra.mxu0 %v1052
    %1224 = vmatpush.bf16.msra.mxu0 %v1048
    %1225 = vmatpush.bf16.msra.mxu0 %v1044
    %1226 = vmatpush.bf16.msra.mxu0 %v1040
    %1227 = vmatpush.bf16.msra.mxu0 %v1036
    %1228 = vmatmul.bf16.gmra.mxu0 %v744
    %v1229 = vpop.f32.mrf.mxu0
    %v1230 = vadd.f32 %v1217, %v1229
    %v1231 = vpop.f32.mrf.mxu0
    %1232 = vdwg.mxu0
    %1233 = vst [vmem:[#allocation3] sm:$0xff] %v1152
    %1234 = vst [vmem:[#allocation3 + $0x8] sm:$0xff] %v1178
    %1235 = vst [vmem:[#allocation3 + $0x10] sm:$0xff] %v1204
    %1236 = vst [vmem:[#allocation3 + $0x18] sm:$0xff] %v1230
    %v1237 = vld [vmem:[#allocation3] sm:$0xff]
    %v1238 = vld [vmem:[#allocation3 + $0x8] sm:$0xff]
    %v1239 = vld [vmem:[#allocation3 + $0x10] sm:$0xff]
    %v1240 = vld [vmem:[#allocation3 + $0x18] sm:$0xff]
    %v1241 = vld [vmem:[#allocation21 + $0x4] sm:$0x1]
    %v1242 = vld [vmem:[#allocation21 + $0x5] sm:$0x1]
    %v1243 = vadd.f32 %v1237, %v1238
    %v1244 = vadd.f32 %v1243, %v1239
    %v1245 = vadd.f32 %v1244, %v1240
    %v1246 = vrot.slane %v1245, 4
    %v1247 = vadd.f32 %v1245, %v1246
    %v1248 = vrot.slane %v1247, 2
    %v1249 = vadd.f32 %v1247, %v1248
    %v1250 = vrot.slane %v1249, 1
    %v1251 = vadd.f32 %v1249, %v1250
    %v1252 = vmul.f32 %v1251, 0.03125
    %v1253 = vsub.f32 %v1237, %v1252
    %v1254 = vsub.f32 %v1238, %v1252
    %v1255 = vsub.f32 %v1239, %v1252
    %v1256 = vsub.f32 %v1240, %v1252
    %v1257 = vmul.f32 %v1253, %v1253
    %v1258 = vmul.f32 %v1254, %v1254
    %v1259 = vmul.f32 %v1255, %v1255
    %v1260 = vmul.f32 %v1256, %v1256
    %v1261 = vadd.f32 %v1257, %v1258
    %v1262 = vadd.f32 %v1261, %v1259
    %v1263 = vadd.f32 %v1262, %v1260
    %v1264 = vrot.slane %v1263, 4
    %v1265 = vadd.f32 %v1263, %v1264
    %v1266 = vrot.slane %v1265, 2
    %v1267 = vadd.f32 %v1265, %v1266
    %v1268 = vrot.slane %v1267, 1
    %v1269 = vadd.f32 %v1267, %v1268
    %v1270 = vmul.f32 %v1269, 0.03125
    %v1271 = vadd.f32 %v1270, 1e-05
    %v1272 = vrsqrt.pop %v1271
    %v1273 = vmul.f32 %v1272, %v1271
    %v1274 = vmul.f32 %v1273, %v1272
    %v1275 = vmul.f32 0.5, %v1274
    %v1276 = vsub.f32 1.5, %v1275
    %v1277 = vmul.f32 %v1272, %v1276
    %vm1278 = vweird.f32 %v1271
    %vm1279 = vweird.f32 %v1272
    %vm1280 = vmor %vm1278, %vm1279
    %v1281 = vsel %vm1280, %v1272, %v1277
    %v1282 = vmul.f32 %v1253, %v1281
    %v1283 = vmul.f32 %v1254, %v1281
    %v1284 = vmul.f32 %v1255, %v1281
    %v1285 = vmul.f32 %v1256, %v1281
    %v1286 = vperm.slane %v1241, 0
    %v1287 = vmul.f32 %v1282, %v1286
    %v1288 = vmul.f32 %v1283, %v1286
    %v1289 = vmul.f32 %v1284, %v1286
    %v1290 = vmul.f32 %v1285, %v1286
    %v1291 = vperm.slane %v1242, 0
    %v1292 = vadd.f32 %v1287, %v1291
    %v1293 = vadd.f32 %v1288, %v1291
    %v1294 = vadd.f32 %v1289, %v1291
    %v1295 = vadd.f32 %v1290, %v1291
    %v1296 = vmax.f32 %v1292, 0.0
    %v1297 = vmax.f32 %v1293, 0.0
    %v1298 = vmax.f32 %v1294, 0.0
    %v1299 = vmax.f32 %v1295, 0.0
    %v1300 = vpack.c.bf16 %v1297, %v1296
    %v1301 = vpack.c.bf16 %v1299, %v1298
    %v1302 = vld [vmem:[#allocation15] sm:$0xff]
    %v1303 = vld [vmem:[#allocation15 + $0x8] sm:$0xff]
    %v1304 = vld [vmem:[#allocation15 + $0x10] sm:$0xff]
    %v1305 = vld [vmem:[#allocation15 + $0x18] sm:$0xff]
    %v1306 = vld [vmem:[#allocation15 + $0x20] sm:$0xff]
    %v1307 = vld [vmem:[#allocation15 + $0x28] sm:$0xff]
    %v1308 = vld [vmem:[#allocation15 + $0x30] sm:$0xff]
    %v1309 = vld [vmem:[#allocation15 + $0x38] sm:$0xff]
    %v1310 = vld [vmem:[#allocation15 + $0x40] sm:$0xff]
    %v1311 = vld [vmem:[#allocation15 + $0x48] sm:$0xff]
    %v1312 = vld [vmem:[#allocation15 + $0x50] sm:$0xff]
    %v1313 = vld [vmem:[#allocation15 + $0x58] sm:$0xff]
    %v1314 = vld [vmem:[#allocation15 + $0x60] sm:$0xff]
    %v1315 = vld [vmem:[#allocation15 + $0x68] sm:$0xff]
    %v1316 = vld [vmem:[#allocation15 + $0x70] sm:$0xff]
    %v1317 = vld [vmem:[#allocation15 + $0x78] sm:$0xff]
    %v1318 = vld [vmem:[#allocation15 + $0x80] sm:$0xff]
    %v1319 = vld [vmem:[#allocation15 + $0x88] sm:$0xff]
    %v1320 = vld [vmem:[#allocation15 + $0x90] sm:$0xff]
    %v1321 = vld [vmem:[#allocation15 + $0x98] sm:$0xff]
    %v1322 = vld [vmem:[#allocation15 + $0xa0] sm:$0xff]
    %v1323 = vld [vmem:[#allocation15 + $0xa8] sm:$0xff]
    %v1324 = vld [vmem:[#allocation15 + $0xb0] sm:$0xff]
    %v1325 = vld [vmem:[#allocation15 + $0xb8] sm:$0xff]
    %v1326 = vld [vmem:[#allocation15 + $0xc0] sm:$0xff]
    %v1327 = vld [vmem:[#allocation15 + $0xc8] sm:$0xff]
    %v1328 = vld [vmem:[#allocation15 + $0xd0] sm:$0xff]
    %v1329 = vld [vmem:[#allocation15 + $0xd8] sm:$0xff]
    %v1330 = vld [vmem:[#allocation15 + $0xe0] sm:$0xff]
    %v1331 = vld [vmem:[#allocation15 + $0xe8] sm:$0xff]
    %v1332 = vld [vmem:[#allocation15 + $0xf0] sm:$0xff]
    %v1333 = vld [vmem:[#allocation15 + $0xf8] sm:$0xff]
    %v1366 = vunpack.c.l.b16 %v1302
    %v1367 = vunpack.c.h.b16 %v1302
    %v1368 = vunpack.c.l.b16 %v1303
    %v1369 = vunpack.c.h.b16 %v1303
    %v1370 = vunpack.c.l.b16 %v1304
    %v1371 = vunpack.c.h.b16 %v1304
    %v1372 = vunpack.c.l.b16 %v1305
    %v1373 = vunpack.c.h.b16 %v1305
    %v1374 = vunpack.c.l.b16 %v1306
    %v1375 = vunpack.c.h.b16 %v1306
    %v1376 = vunpack.c.l.b16 %v1307
    %v1377 = vunpack.c.h.b16 %v1307
    %v1378 = vunpack.c.l.b16 %v1308
    %v1379 = vunpack.c.h.b16 %v1308
    %v1380 = vunpack.c.l.b16 %v1309
    %v1381 = vunpack.c.h.b16 %v1309
    %v1382 = vunpack.c.l.b16 %v1310
    %v1383 = vunpack.c.h.b16 %v1310
    %v1384 = vunpack.c.l.b16 %v1311
    %v1385 = vunpack.c.h.b16 %v1311
    %v1386 = vunpack.c.l.b16 %v1312
    %v1387 = vunpack.c.h.b16 %v1312
    %v1388 = vunpack.c.l.b16 %v1313
    %v1389 = vunpack.c.h.b16 %v1313
    %v1390 = vunpack.c.l.b16 %v1314
    %v1391 = vunpack.c.h.b16 %v1314
    %v1392 = vunpack.c.l.b16 %v1315
    %v1393 = vunpack.c.h.b16 %v1315
    %v1394 = vunpack.c.l.b16 %v1316
    %v1395 = vunpack.c.h.b16 %v1316
    %v1396 = vunpack.c.l.b16 %v1317
    %v1397 = vunpack.c.h.b16 %v1317
    %v1398 = vunpack.c.l.b16 %v1318
    %v1399 = vunpack.c.h.b16 %v1318
    %v1400 = vunpack.c.l.b16 %v1319
    %v1401 = vunpack.c.h.b16 %v1319
    %v1402 = vunpack.c.l.b16 %v1320
    %v1403 = vunpack.c.h.b16 %v1320
    %v1404 = vunpack.c.l.b16 %v1321
    %v1405 = vunpack.c.h.b16 %v1321
    %v1406 = vunpack.c.l.b16 %v1322
    %v1407 = vunpack.c.h.b16 %v1322
    %v1408 = vunpack.c.l.b16 %v1323
    %v1409 = vunpack.c.h.b16 %v1323
    %v1410 = vunpack.c.l.b16 %v1324
    %v1411 = vunpack.c.h.b16 %v1324
    %v1412 = vunpack.c.l.b16 %v1325
    %v1413 = vunpack.c.h.b16 %v1325
    %v1414 = vunpack.c.l.b16 %v1326
    %v1415 = vunpack.c.h.b16 %v1326
    %v1416 = vunpack.c.l.b16 %v1327
    %v1417 = vunpack.c.h.b16 %v1327
    %v1418 = vunpack.c.l.b16 %v1328
    %v1419 = vunpack.c.h.b16 %v1328
    %v1420 = vunpack.c.l.b16 %v1329
    %v1421 = vunpack.c.h.b16 %v1329
    %v1422 = vunpack.c.l.b16 %v1330
    %v1423 = vunpack.c.h.b16 %v1330
    %v1424 = vunpack.c.l.b16 %v1331
    %v1425 = vunpack.c.h.b16 %v1331
    %v1426 = vunpack.c.l.b16 %v1332
    %v1427 = vunpack.c.h.b16 %v1332
    %v1428 = vunpack.c.l.b16 %v1333
    %v1429 = vunpack.c.h.b16 %v1333
    %v1430 = vpack.c.b16 %v1370, %v1366
    %v1431 = vpack.c.b16 %v1371, %v1367
    %v1432 = vpack.c.b16 %v1372, %v1368
    %v1433 = vpack.c.b16 %v1373, %v1369
    %v1434 = vpack.c.b16 %v1378, %v1374
    %v1435 = vpack.c.b16 %v1379, %v1375
    %v1436 = vpack.c.b16 %v1380, %v1376
    %v1437 = vpack.c.b16 %v1381, %v1377
    %v1438 = vpack.c.b16 %v1386, %v1382
    %v1439 = vpack.c.b16 %v1387, %v1383
    %v1440 = vpack.c.b16 %v1388, %v1384
    %v1441 = vpack.c.b16 %v1389, %v1385
    %v1442 = vpack.c.b16 %v1394, %v1390
    %v1443 = vpack.c.b16 %v1395, %v1391
    %v1444 = vpack.c.b16 %v1396, %v1392
    %v1445 = vpack.c.b16 %v1397, %v1393
    %v1446 = vpack.c.b16 %v1402, %v1398
    %v1447 = vpack.c.b16 %v1403, %v1399
    %v1448 = vpack.c.b16 %v1404, %v1400
    %v1449 = vpack.c.b16 %v1405, %v1401
    %v1450 = vpack.c.b16 %v1410, %v1406
    %v1451 = vpack.c.b16 %v1411, %v1407
    %v1452 = vpack.c.b16 %v1412, %v1408
    %v1453 = vpack.c.b16 %v1413, %v1409
    %v1454 = vpack.c.b16 %v1418, %v1414
    %v1455 = vpack.c.b16 %v1419, %v1415
    %v1456 = vpack.c.b16 %v1420, %v1416
    %v1457 = vpack.c.b16 %v1421, %v1417
    %v1458 = vpack.c.b16 %v1426, %v1422
    %v1459 = vpack.c.b16 %v1427, %v1423
    %v1460 = vpack.c.b16 %v1428, %v1424
    %v1461 = vpack.c.b16 %v1429, %v1425
    %1494 = vmatpush.bf16.msra.mxu0 %v1458
    %1495 = vmatpush.bf16.msra.mxu0 %v1454
    %1496 = vmatpush.bf16.msra.mxu0 %v1450
    %1497 = vmatpush.bf16.msra.mxu0 %v1446
    %1498 = vmatpush.bf16.msra.mxu0 %v1442
    %1499 = vmatpush.bf16.msra.mxu0 %v1438
    %1500 = vmatpush.bf16.msra.mxu0 %v1434
    %1501 = vmatpush.bf16.msra.mxu0 %v1430
    %1502 = vmatmul.bf16.gmra.mxu0 %v1300
    %v1503 = vpop.f32.mrf.mxu0
    %v1504 = vadd.f32 0.0, %v1503
    %v1505 = vpop.f32.mrf.mxu0
    %v1506 = vadd.f32 0.0, %v1505
    %1507 = vmatmul.bf16.gmra.mxu0 %v1301
    %v1508 = vpop.f32.mrf.mxu0
    %v1509 = vadd.f32 0.0, %v1508
    %v1510 = vpop.f32.mrf.mxu0
    %v1511 = vadd.f32 0.0, %v1510
    %1512 = vdwg.mxu0
    %1513 = vmatpush.bf16.msra.mxu0 %v1459
    %1514 = vmatpush.bf16.msra.mxu0 %v1455
    %1515 = vmatpush.bf16.msra.mxu0 %v1451
    %1516 = vmatpush.bf16.msra.mxu0 %v1447
    %1517 = vmatpush.bf16.msra.mxu0 %v1443
    %1518 = vmatpush.bf16.msra.mxu0 %v1439
    %1519 = vmatpush.bf16.msra.mxu0 %v1435
    %1520 = vmatpush.bf16.msra.mxu0 %v1431
    %1521 = vmatmul.bf16.gmra.mxu0 %v1300
    %v1522 = vpop.f32.mrf.mxu0
    %v1523 = vadd.f32 0.0, %v1522
    %v1524 = vpop.f32.mrf.mxu0
    %v1525 = vadd.f32 0.0, %v1524
    %1526 = vmatmul.bf16.gmra.mxu0 %v1301
    %v1527 = vpop.f32.mrf.mxu0
    %v1528 = vadd.f32 0.0, %v1527
    %v1529 = vpop.f32.mrf.mxu0
    %v1530 = vadd.f32 0.0, %v1529
    %1531 = vdwg.mxu0
    %1532 = vmatpush.bf16.msra.mxu0 %v1460
    %1533 = vmatpush.bf16.msra.mxu0 %v1456
    %1534 = vmatpush.bf16.msra.mxu0 %v1452
    %1535 = vmatpush.bf16.msra.mxu0 %v1448
    %1536 = vmatpush.bf16.msra.mxu0 %v1444
    %1537 = vmatpush.bf16.msra.mxu0 %v1440
    %1538 = vmatpush.bf16.msra.mxu0 %v1436
    %1539 = vmatpush.bf16.msra.mxu0 %v1432
    %1540 = vmatmul.bf16.gmra.mxu0 %v1300
    %v1541 = vpop.f32.mrf.mxu0
    %v1542 = vadd.f32 0.0, %v1541
    %v1543 = vpop.f32.mrf.mxu0
    %v1544 = vadd.f32 0.0, %v1543
    %1545 = vmatmul.bf16.gmra.mxu0 %v1301
    %v1546 = vpop.f32.mrf.mxu0
    %v1547 = vadd.f32 0.0, %v1546
    %v1548 = vpop.f32.mrf.mxu0
    %v1549 = vadd.f32 0.0, %v1548
    %1550 = vdwg.mxu0
    %1551 = vmatpush.bf16.msra.mxu0 %v1461
    %1552 = vmatpush.bf16.msra.mxu0 %v1457
    %1553 = vmatpush.bf16.msra.mxu0 %v1453
    %1554 = vmatpush.bf16.msra.mxu0 %v1449
    %1555 = vmatpush.bf16.msra.mxu0 %v1445
    %1556 = vmatpush.bf16.msra.mxu0 %v1441
    %1557 = vmatpush.bf16.msra.mxu0 %v1437
    %1558 = vmatpush.bf16.msra.mxu0 %v1433
    %1559 = vmatmul.bf16.gmra.mxu0 %v1300
    %v1560 = vpop.f32.mrf.mxu0
    %v1561 = vadd.f32 0.0, %v1560
    %v1562 = vpop.f32.mrf.mxu0
    %v1563 = vadd.f32 0.0, %v1562
    %1564 = vmatmul.bf16.gmra.mxu0 %v1301
    %v1565 = vpop.f32.mrf.mxu0
    %v1566 = vadd.f32 0.0, %v1565
    %v1567 = vpop.f32.mrf.mxu0
    %v1568 = vadd.f32 0.0, %v1567
    %1569 = vdwg.mxu0
    %1570 = vst [vmem:[#allocation4] sm:$0xff] %v1504
    %1571 = vst [vmem:[#allocation4 + $0x8] sm:$0xff] %v1506
    %1572 = vst [vmem:[#allocation4 + $0x10] sm:$0xff] %v1509
    %1573 = vst [vmem:[#allocation4 + $0x18] sm:$0xff] %v1511
    %1574 = vst [vmem:[#allocation4 + $0x20] sm:$0xff] %v1523
    %1575 = vst [vmem:[#allocation4 + $0x28] sm:$0xff] %v1525
    %1576 = vst [vmem:[#allocation4 + $0x30] sm:$0xff] %v1528
    %1577 = vst [vmem:[#allocation4 + $0x38] sm:$0xff] %v1530
    %1578 = vst [vmem:[#allocation4 + $0x40] sm:$0xff] %v1542
    %1579 = vst [vmem:[#allocation4 + $0x48] sm:$0xff] %v1544
    %1580 = vst [vmem:[#allocation4 + $0x50] sm:$0xff] %v1547
    %1581 = vst [vmem:[#allocation4 + $0x58] sm:$0xff] %v1549
    %1582 = vst [vmem:[#allocation4 + $0x60] sm:$0xff] %v1561
    %1583 = vst [vmem:[#allocation4 + $0x68] sm:$0xff] %v1563
    %1584 = vst [vmem:[#allocation4 + $0x70] sm:$0xff] %v1566
    %1585 = vst [vmem:[#allocation4 + $0x78] sm:$0xff] %v1568
    %v1586 = vld [vmem:[#allocation4] sm:$0xff]
    %v1587 = vld [vmem:[#allocation4 + $0x8] sm:$0xff]
    %v1588 = vld [vmem:[#allocation4 + $0x10] sm:$0xff]
    %v1589 = vld [vmem:[#allocation4 + $0x18] sm:$0xff]
    %v1590 = vld [vmem:[#allocation4 + $0x20] sm:$0xff]
    %v1591 = vld [vmem:[#allocation4 + $0x28] sm:$0xff]
    %v1592 = vld [vmem:[#allocation4 + $0x30] sm:$0xff]
    %v1593 = vld [vmem:[#allocation4 + $0x38] sm:$0xff]
    %v1594 = vld [vmem:[#allocation4 + $0x40] sm:$0xff]
    %v1595 = vld [vmem:[#allocation4 + $0x48] sm:$0xff]
    %v1596 = vld [vmem:[#allocation4 + $0x50] sm:$0xff]
    %v1597 = vld [vmem:[#allocation4 + $0x58] sm:$0xff]
    %v1598 = vld [vmem:[#allocation4 + $0x60] sm:$0xff]
    %v1599 = vld [vmem:[#allocation4 + $0x68] sm:$0xff]
    %v1600 = vld [vmem:[#allocation4 + $0x70] sm:$0xff]
    %v1601 = vld [vmem:[#allocation4 + $0x78] sm:$0xff]
    %v1602 = vld [vmem:[#allocation21 + $0x6] sm:$0x1]
    %v1603 = vld [vmem:[#allocation21 + $0x7] sm:$0x1]
    %v1604 = vadd.f32 %v1586, %v1587
    %v1605 = vadd.f32 %v1604, %v1588
    %v1606 = vadd.f32 %v1605, %v1589
    %v1607 = vadd.f32 %v1606, %v1590
    %v1608 = vadd.f32 %v1607, %v1591
    %v1609 = vadd.f32 %v1608, %v1592
    %v1610 = vadd.f32 %v1609, %v1593
    %v1611 = vadd.f32 %v1610, %v1594
    %v1612 = vadd.f32 %v1611, %v1595
    %v1613 = vadd.f32 %v1612, %v1596
    %v1614 = vadd.f32 %v1613, %v1597
    %v1615 = vadd.f32 %v1614, %v1598
    %v1616 = vadd.f32 %v1615, %v1599
    %v1617 = vadd.f32 %v1616, %v1600
    %v1618 = vadd.f32 %v1617, %v1601
    %v1619 = vrot.slane %v1618, 4
    %v1620 = vadd.f32 %v1618, %v1619
    %v1621 = vrot.slane %v1620, 2
    %v1622 = vadd.f32 %v1620, %v1621
    %v1623 = vrot.slane %v1622, 1
    %v1624 = vadd.f32 %v1622, %v1623
    %v1625 = vmul.f32 %v1624, 0.0078125
    %v1626 = vsub.f32 %v1586, %v1625
    %v1627 = vsub.f32 %v1587, %v1625
    %v1628 = vsub.f32 %v1588, %v1625
    %v1629 = vsub.f32 %v1589, %v1625
    %v1630 = vsub.f32 %v1590, %v1625
    %v1631 = vsub.f32 %v1591, %v1625
    %v1632 = vsub.f32 %v1592, %v1625
    %v1633 = vsub.f32 %v1593, %v1625
    %v1634 = vsub.f32 %v1594, %v1625
    %v1635 = vsub.f32 %v1595, %v1625
    %v1636 = vsub.f32 %v1596, %v1625
    %v1637 = vsub.f32 %v1597, %v1625
    %v1638 = vsub.f32 %v1598, %v1625
    %v1639 = vsub.f32 %v1599, %v1625
    %v1640 = vsub.f32 %v1600, %v1625
    %v1641 = vsub.f32 %v1601, %v1625
    %v1642 = vmul.f32 %v1626, %v1626
    %v1643 = vmul.f32 %v1627, %v1627
    %v1644 = vmul.f32 %v1628, %v1628
    %v1645 = vmul.f32 %v1629, %v1629
    %v1646 = vmul.f32 %v1630, %v1630
    %v1647 = vmul.f32 %v1631, %v1631
    %v1648 = vmul.f32 %v1632, %v1632
    %v1649 = vmul.f32 %v1633, %v1633
    %v1650 = vmul.f32 %v1634, %v1634
    %v1651 = vmul.f32 %v1635, %v1635
    %v1652 = vmul.f32 %v1636, %v1636
    %v1653 = vmul.f32 %v1637, %v1637
    %v1654 = vmul.f32 %v1638, %v1638
    %v1655 = vmul.f32 %v1639, %v1639
    %v1656 = vmul.f32 %v1640, %v1640
    %v1657 = vmul.f32 %v1641, %v1641
    %v1658 = vadd.f32 %v1642, %v1643
    %v1659 = vadd.f32 %v1658, %v1644
    %v1660 = vadd.f32 %v1659, %v1645
    %v1661 = vadd.f32 %v1660, %v1646
    %v1662 = vadd.f32 %v1661, %v1647
    %v1663 = vadd.f32 %v1662, %v1648
    %v1664 = vadd.f32 %v1663, %v1649
    %v1665 = vadd.f32 %v1664, %v1650
    %v1666 = vadd.f32 %v1665, %v1651
    %v1667 = vadd.f32 %v1666, %v1652
    %v1668 = vadd.f32 %v1667, %v1653
    %v1669 = vadd.f32 %v1668, %v1654
    %v1670 = vadd.f32 %v1669, %v1655
    %v1671 = vadd.f32 %v1670, %v1656
    %v1672 = vadd.f32 %v1671, %v1657
    %v1673 = vrot.slane %v1672, 4
    %v1674 = vadd.f32 %v1672, %v1673
    %v1675 = vrot.slane %v1674, 2
    %v1676 = vadd.f32 %v1674, %v1675
    %v1677 = vrot.slane %v1676, 1
    %v1678 = vadd.f32 %v1676, %v1677
    %v1679 = vmul.f32 %v1678, 0.0078125
    %v1680 = vadd.f32 %v1679, 1e-05
    %v1681 = vrsqrt.pop %v1680
    %v1682 = vmul.f32 %v1681, %v1680
    %v1683 = vmul.f32 %v1682, %v1681
    %v1684 = vmul.f32 0.5, %v1683
    %v1685 = vsub.f32 1.5, %v1684
    %v1686 = vmul.f32 %v1681, %v1685
    %vm1687 = vweird.f32 %v1680
    %vm1688 = vweird.f32 %v1681
    %vm1689 = vmor %vm1687, %vm1688
    %v1690 = vsel %vm1689, %v1681, %v1686
    %v1691 = vmul.f32 %v1626, %v1690
    %v1692 = vmul.f32 %v1627, %v1690
    %v1693 = vmul.f32 %v1628, %v1690
    %v1694 = vmul.f32 %v1629, %v1690
    %v1695 = vmul.f32 %v1630, %v1690
    %v1696 = vmul.f32 %v1631, %v1690
    %v1697 = vmul.f32 %v1632, %v1690
    %v1698 = vmul.f32 %v1633, %v1690
    %v1699 = vmul.f32 %v1634, %v1690
    %v1700 = vmul.f32 %v1635, %v1690
    %v1701 = vmul.f32 %v1636, %v1690
    %v1702 = vmul.f32 %v1637, %v1690
    %v1703 = vmul.f32 %v1638, %v1690
    %v1704 = vmul.f32 %v1639, %v1690
    %v1705 = vmul.f32 %v1640, %v1690
    %v1706 = vmul.f32 %v1641, %v1690
    %v1707 = vperm.slane %v1602, 0
    %v1708 = vmul.f32 %v1691, %v1707
    %v1709 = vmul.f32 %v1692, %v1707
    %v1710 = vmul.f32 %v1693, %v1707
    %v1711 = vmul.f32 %v1694, %v1707
    %v1712 = vmul.f32 %v1695, %v1707
    %v1713 = vmul.f32 %v1696, %v1707
    %v1714 = vmul.f32 %v1697, %v1707
    %v1715 = vmul.f32 %v1698, %v1707
    %v1716 = vmul.f32 %v1699, %v1707
    %v1717 = vmul.f32 %v1700, %v1707
    %v1718 = vmul.f32 %v1701, %v1707
    %v1719 = vmul.f32 %v1702, %v1707
    %v1720 = vmul.f32 %v1703, %v1707
    %v1721 = vmul.f32 %v1704, %v1707
    %v1722 = vmul.f32 %v1705, %v1707
    %v1723 = vmul.f32 %v1706, %v1707
    %v1724 = vperm.slane %v1603, 0
    %v1725 = vadd.f32 %v1708, %v1724
    %v1726 = vadd.f32 %v1709, %v1724
    %v1727 = vadd.f32 %v1710, %v1724
    %v1728 = vadd.f32 %v1711, %v1724
    %v1729 = vadd.f32 %v1712, %v1724
    %v1730 = vadd.f32 %v1713, %v1724
    %v1731 = vadd.f32 %v1714, %v1724
    %v1732 = vadd.f32 %v1715, %v1724
    %v1733 = vadd.f32 %v1716, %v1724
    %v1734 = vadd.f32 %v1717, %v1724
    %v1735 = vadd.f32 %v1718, %v1724
    %v1736 = vadd.f32 %v1719, %v1724
    %v1737 = vadd.f32 %v1720, %v1724
    %v1738 = vadd.f32 %v1721, %v1724
    %v1739 = vadd.f32 %v1722, %v1724
    %v1740 = vadd.f32 %v1723, %v1724
    %v1741 = vmax.f32 %v1725, 0.0
    %v1742 = vmax.f32 %v1726, 0.0
    %v1743 = vmax.f32 %v1727, 0.0
    %v1744 = vmax.f32 %v1728, 0.0
    %v1745 = vmax.f32 %v1729, 0.0
    %v1746 = vmax.f32 %v1730, 0.0
    %v1747 = vmax.f32 %v1731, 0.0
    %v1748 = vmax.f32 %v1732, 0.0
    %v1749 = vmax.f32 %v1733, 0.0
    %v1750 = vmax.f32 %v1734, 0.0
    %v1751 = vmax.f32 %v1735, 0.0
    %v1752 = vmax.f32 %v1736, 0.0
    %v1753 = vmax.f32 %v1737, 0.0
    %v1754 = vmax.f32 %v1738, 0.0
    %v1755 = vmax.f32 %v1739, 0.0
    %v1756 = vmax.f32 %v1740, 0.0
    %v1757 = vpack.c.bf16 %v1742, %v1741
    %v1758 = vpack.c.bf16 %v1744, %v1743
    %v1759 = vpack.c.bf16 %v1746, %v1745
    %v1760 = vpack.c.bf16 %v1748, %v1747
    %v1761 = vpack.c.bf16 %v1750, %v1749
    %v1762 = vpack.c.bf16 %v1752, %v1751
    %v1763 = vpack.c.bf16 %v1754, %v1753
    %v1764 = vpack.c.bf16 %v1756, %v1755
    %v1765 = vld [vmem:[#allocation17] sm:$0xff]
    %v1766 = vld [vmem:[#allocation17 + $0x8] sm:$0xf]
    %v1767 = vld [vmem:[#allocation17 + $0xc] sm:$0xff]
    %v1768 = vld [vmem:[#allocation17 + $0x14] sm:$0xf]
    %v1769 = vld [vmem:[#allocation17 + $0x18] sm:$0xff]
    %v1770 = vld [vmem:[#allocation17 + $0x20] sm:$0xf]
    %v1771 = vld [vmem:[#allocation17 + $0x24] sm:$0xff]
    %v1772 = vld [vmem:[#allocation17 + $0x2c] sm:$0xf]
    %v1773 = vld [vmem:[#allocation17 + $0x30] sm:$0xff]
    %v1774 = vld [vmem:[#allocation17 + $0x38] sm:$0xf]
    %v1775 = vld [vmem:[#allocation17 + $0x3c] sm:$0xff]
    %v1776 = vld [vmem:[#allocation17 + $0x44] sm:$0xf]
    %v1777 = vld [vmem:[#allocation17 + $0x48] sm:$0xff]
    %v1778 = vld [vmem:[#allocation17 + $0x50] sm:$0xf]
    %v1779 = vld [vmem:[#allocation17 + $0x54] sm:$0xff]
    %v1780 = vld [vmem:[#allocation17 + $0x5c] sm:$0xf]
    %v1781 = vld [vmem:[#allocation17 + $0x60] sm:$0xff]
    %v1782 = vld [vmem:[#allocation17 + $0x68] sm:$0xf]
    %v1783 = vld [vmem:[#allocation17 + $0x6c] sm:$0xff]
    %v1784 = vld [vmem:[#allocation17 + $0x74] sm:$0xf]
    %v1785 = vld [vmem:[#allocation17 + $0x78] sm:$0xff]
    %v1786 = vld [vmem:[#allocation17 + $0x80] sm:$0xf]
    %v1787 = vld [vmem:[#allocation17 + $0x84] sm:$0xff]
    %v1788 = vld [vmem:[#allocation17 + $0x8c] sm:$0xf]
    %v1789 = vld [vmem:[#allocation17 + $0x90] sm:$0xff]
    %v1790 = vld [vmem:[#allocation17 + $0x98] sm:$0xf]
    %v1791 = vld [vmem:[#allocation17 + $0x9c] sm:$0xff]
    %v1792 = vld [vmem:[#allocation17 + $0xa4] sm:$0xf]
    %v1793 = vld [vmem:[#allocation17 + $0xa8] sm:$0xff]
    %v1794 = vld [vmem:[#allocation17 + $0xb0] sm:$0xf]
    %v1795 = vld [vmem:[#allocation17 + $0xb4] sm:$0xff]
    %v1796 = vld [vmem:[#allocation17 + $0xbc] sm:$0xf]
    %v1829 = vunpack.c.l.b16 %v1765
    %v1830 = vunpack.c.h.b16 %v1765
    %v1831 = vunpack.c.l.b16 %v1766
    %v1832 = vunpack.c.l.b16 %v1767
    %v1833 = vunpack.c.h.b16 %v1767
    %v1834 = vunpack.c.l.b16 %v1768
    %v1835 = vunpack.c.l.b16 %v1769
    %v1836 = vunpack.c.h.b16 %v1769
    %v1837 = vunpack.c.l.b16 %v1770
    %v1838 = vunpack.c.l.b16 %v1771
    %v1839 = vunpack.c.h.b16 %v1771
    %v1840 = vunpack.c.l.b16 %v1772
    %v1841 = vunpack.c.l.b16 %v1773
    %v1842 = vunpack.c.h.b16 %v1773
    %v1843 = vunpack.c.l.b16 %v1774
    %v1844 = vunpack.c.l.b16 %v1775
    %v1845 = vunpack.c.h.b16 %v1775
    %v1846 = vunpack.c.l.b16 %v1776
    %v1847 = vunpack.c.l.b16 %v1777
    %v1848 = vunpack.c.h.b16 %v1777
    %v1849 = vunpack.c.l.b16 %v1778
    %v1850 = vunpack.c.l.b16 %v1779
    %v1851 = vunpack.c.h.b16 %v1779
    %v1852 = vunpack.c.l.b16 %v1780
    %v1853 = vunpack.c.l.b16 %v1781
    %v1854 = vunpack.c.h.b16 %v1781
    %v1855 = vunpack.c.l.b16 %v1782
    %v1856 = vunpack.c.l.b16 %v1783
    %v1857 = vunpack.c.h.b16 %v1783
    %v1858 = vunpack.c.l.b16 %v1784
    %v1859 = vunpack.c.l.b16 %v1785
    %v1860 = vunpack.c.h.b16 %v1785
    %v1861 = vunpack.c.l.b16 %v1786
    %v1862 = vunpack.c.l.b16 %v1787
    %v1863 = vunpack.c.h.b16 %v1787
    %v1864 = vunpack.c.l.b16 %v1788
    %v1865 = vunpack.c.l.b16 %v1789
    %v1866 = vunpack.c.h.b16 %v1789
    %v1867 = vunpack.c.l.b16 %v1790
    %v1868 = vunpack.c.l.b16 %v1791
    %v1869 = vunpack.c.h.b16 %v1791
    %v1870 = vunpack.c.l.b16 %v1792
    %v1871 = vunpack.c.l.b16 %v1793
    %v1872 = vunpack.c.h.b16 %v1793
    %v1873 = vunpack.c.l.b16 %v1794
    %v1874 = vunpack.c.l.b16 %v1795
    %v1875 = vunpack.c.h.b16 %v1795
    %v1876 = vunpack.c.l.b16 %v1796
    %v1877 = vpack.c.b16 %v1832, %v1829
    %v1878 = vpack.c.b16 %v1833, %v1830
    %v1879 = vpack.c.b16 %v1834, %v1831
    %v1880 = vpack.c.b16 %v1838, %v1835
    %v1881 = vpack.c.b16 %v1839, %v1836
    %v1882 = vpack.c.b16 %v1840, %v1837
    %v1883 = vpack.c.b16 %v1844, %v1841
    %v1884 = vpack.c.b16 %v1845, %v1842
    %v1885 = vpack.c.b16 %v1846, %v1843
    %v1886 = vpack.c.b16 %v1850, %v1847
    %v1887 = vpack.c.b16 %v1851, %v1848
    %v1888 = vpack.c.b16 %v1852, %v1849
    %v1889 = vpack.c.b16 %v1856, %v1853
    %v1890 = vpack.c.b16 %v1857, %v1854
    %v1891 = vpack.c.b16 %v1858, %v1855
    %v1892 = vpack.c.b16 %v1862, %v1859
    %v1893 = vpack.c.b16 %v1863, %v1860
    %v1894 = vpack.c.b16 %v1864, %v1861
    %v1895 = vpack.c.b16 %v1868, %v1865
    %v1896 = vpack.c.b16 %v1869, %v1866
    %v1897 = vpack.c.b16 %v1870, %v1867
    %v1898 = vpack.c.b16 %v1874, %v1871
    %v1899 = vpack.c.b16 %v1875, %v1872
    %v1900 = vpack.c.b16 %v1876, %v1873
    %1925 = vmatpush.bf16.msra.mxu0 %v1898
    %1926 = vmatpush.bf16.msra.mxu0 %v1895
    %1927 = vmatpush.bf16.msra.mxu0 %v1892
    %1928 = vmatpush.bf16.msra.mxu0 %v1889
    %1929 = vmatpush.bf16.msra.mxu0 %v1886
    %1930 = vmatpush.bf16.msra.mxu0 %v1883
    %1931 = vmatpush.bf16.msra.mxu0 %v1880
    %1932 = vmatpush.bf16.msra.mxu0 %v1877
    %1933 = vmatmul.bf16.gmra.mxu0 %v1757
    %v1934 = vpop.f32.mrf.mxu0
    %v1935 = vadd.f32 0.0, %v1934
    %v1936 = vpop.f32.mrf.mxu0
    %v1937 = vadd.f32 0.0, %v1936
    %1938 = vmatmul.bf16.gmra.mxu0 %v1758
    %v1939 = vpop.f32.mrf.mxu0
    %v1940 = vadd.f32 0.0, %v1939
    %v1941 = vpop.f32.mrf.mxu0
    %v1942 = vadd.f32 0.0, %v1941
    %1943 = vmatmul.bf16.gmra.mxu0 %v1759
    %v1944 = vpop.f32.mrf.mxu0
    %v1945 = vadd.f32 0.0, %v1944
    %v1946 = vpop.f32.mrf.mxu0
    %v1947 = vadd.f32 0.0, %v1946
    %1948 = vmatmul.bf16.gmra.mxu0 %v1760
    %v1949 = vpop.f32.mrf.mxu0
    %v1950 = vadd.f32 0.0, %v1949
    %v1951 = vpop.f32.mrf.mxu0
    %v1952 = vadd.f32 0.0, %v1951
    %1953 = vmatmul.bf16.gmra.mxu0 %v1761
    %v1954 = vpop.f32.mrf.mxu0
    %v1955 = vadd.f32 0.0, %v1954
    %v1956 = vpop.f32.mrf.mxu0
    %v1957 = vadd.f32 0.0, %v1956
    %1958 = vmatmul.bf16.gmra.mxu0 %v1762
    %v1959 = vpop.f32.mrf.mxu0
    %v1960 = vadd.f32 0.0, %v1959
    %v1961 = vpop.f32.mrf.mxu0
    %v1962 = vadd.f32 0.0, %v1961
    %1963 = vmatmul.bf16.gmra.mxu0 %v1763
    %v1964 = vpop.f32.mrf.mxu0
    %v1965 = vadd.f32 0.0, %v1964
    %v1966 = vpop.f32.mrf.mxu0
    %v1967 = vadd.f32 0.0, %v1966
    %1968 = vmatmul.bf16.gmra.mxu0 %v1764
    %v1969 = vpop.f32.mrf.mxu0
    %v1970 = vadd.f32 0.0, %v1969
    %v1971 = vpop.f32.mrf.mxu0
    %v1972 = vadd.f32 0.0, %v1971
    %1973 = vdwg.mxu0
    %1974 = vmatpush.bf16.msra.mxu0 %v1899
    %1975 = vmatpush.bf16.msra.mxu0 %v1896
    %1976 = vmatpush.bf16.msra.mxu0 %v1893
    %1977 = vmatpush.bf16.msra.mxu0 %v1890
    %1978 = vmatpush.bf16.msra.mxu0 %v1887
    %1979 = vmatpush.bf16.msra.mxu0 %v1884
    %1980 = vmatpush.bf16.msra.mxu0 %v1881
    %1981 = vmatpush.bf16.msra.mxu0 %v1878
    %1982 = vmatmul.bf16.gmra.mxu0 %v1757
    %v1983 = vpop.f32.mrf.mxu0
    %v1984 = vadd.f32 0.0, %v1983
    %v1985 = vpop.f32.mrf.mxu0
    %v1986 = vadd.f32 0.0, %v1985
    %1987 = vmatmul.bf16.gmra.mxu0 %v1758
    %v1988 = vpop.f32.mrf.mxu0
    %v1989 = vadd.f32 0.0, %v1988
    %v1990 = vpop.f32.mrf.mxu0
    %v1991 = vadd.f32 0.0, %v1990
    %1992 = vmatmul.bf16.gmra.mxu0 %v1759
    %v1993 = vpop.f32.mrf.mxu0
    %v1994 = vadd.f32 0.0, %v1993
    %v1995 = vpop.f32.mrf.mxu0
    %v1996 = vadd.f32 0.0, %v1995
    %1997 = vmatmul.bf16.gmra.mxu0 %v1760
    %v1998 = vpop.f32.mrf.mxu0
    %v1999 = vadd.f32 0.0, %v1998
    %v2000 = vpop.f32.mrf.mxu0
    %v2001 = vadd.f32 0.0, %v2000
    %2002 = vmatmul.bf16.gmra.mxu0 %v1761
    %v2003 = vpop.f32.mrf.mxu0
    %v2004 = vadd.f32 0.0, %v2003
    %v2005 = vpop.f32.mrf.mxu0
    %v2006 = vadd.f32 0.0, %v2005
    %2007 = vmatmul.bf16.gmra.mxu0 %v1762
    %v2008 = vpop.f32.mrf.mxu0
    %v2009 = vadd.f32 0.0, %v2008
    %v2010 = vpop.f32.mrf.mxu0
    %v2011 = vadd.f32 0.0, %v2010
    %2012 = vmatmul.bf16.gmra.mxu0 %v1763
    %v2013 = vpop.f32.mrf.mxu0
    %v2014 = vadd.f32 0.0, %v2013
    %v2015 = vpop.f32.mrf.mxu0
    %v2016 = vadd.f32 0.0, %v2015
    %2017 = vmatmul.bf16.gmra.mxu0 %v1764
    %v2018 = vpop.f32.mrf.mxu0
    %v2019 = vadd.f32 0.0, %v2018
    %v2020 = vpop.f32.mrf.mxu0
    %v2021 = vadd.f32 0.0, %v2020
    %2022 = vdwg.mxu0
    %2023 = vmatpush.bf16.msra.mxu0 %v1900
    %2024 = vmatpush.bf16.msra.mxu0 %v1897
    %2025 = vmatpush.bf16.msra.mxu0 %v1894
    %2026 = vmatpush.bf16.msra.mxu0 %v1891
    %2027 = vmatpush.bf16.msra.mxu0 %v1888
    %2028 = vmatpush.bf16.msra.mxu0 %v1885
    %2029 = vmatpush.bf16.msra.mxu0 %v1882
    %2030 = vmatpush.bf16.msra.mxu0 %v1879
    %2031 = vmatmul.bf16.gmra.mxu0 %v1757
    %v2032 = vpop.f32.mrf.mxu0
    %v2033 = vadd.f32 0.0, %v2032
    %v2034 = vpop.f32.mrf.mxu0
    %v2035 = vadd.f32 0.0, %v2034
    %2036 = vmatmul.bf16.gmra.mxu0 %v1758
    %v2037 = vpop.f32.mrf.mxu0
    %v2038 = vadd.f32 0.0, %v2037
    %v2039 = vpop.f32.mrf.mxu0
    %v2040 = vadd.f32 0.0, %v2039
    %2041 = vmatmul.bf16.gmra.mxu0 %v1759
    %v2042 = vpop.f32.mrf.mxu0
    %v2043 = vadd.f32 0.0, %v2042
    %v2044 = vpop.f32.mrf.mxu0
    %v2045 = vadd.f32 0.0, %v2044
    %2046 = vmatmul.bf16.gmra.mxu0 %v1760
    %v2047 = vpop.f32.mrf.mxu0
    %v2048 = vadd.f32 0.0, %v2047
    %v2049 = vpop.f32.mrf.mxu0
    %v2050 = vadd.f32 0.0, %v2049
    %2051 = vmatmul.bf16.gmra.mxu0 %v1761
    %v2052 = vpop.f32.mrf.mxu0
    %v2053 = vadd.f32 0.0, %v2052
    %v2054 = vpop.f32.mrf.mxu0
    %v2055 = vadd.f32 0.0, %v2054
    %2056 = vmatmul.bf16.gmra.mxu0 %v1762
    %v2057 = vpop.f32.mrf.mxu0
    %v2058 = vadd.f32 0.0, %v2057
    %v2059 = vpop.f32.mrf.mxu0
    %v2060 = vadd.f32 0.0, %v2059
    %2061 = vmatmul.bf16.gmra.mxu0 %v1763
    %v2062 = vpop.f32.mrf.mxu0
    %v2063 = vadd.f32 0.0, %v2062
    %v2064 = vpop.f32.mrf.mxu0
    %v2065 = vadd.f32 0.0, %v2064
    %2066 = vmatmul.bf16.gmra.mxu0 %v1764
    %v2067 = vpop.f32.mrf.mxu0
    %v2068 = vadd.f32 0.0, %v2067
    %v2069 = vpop.f32.mrf.mxu0
    %v2070 = vadd.f32 0.0, %v2069
    %2071 = vdwg.mxu0
    %2072 = vst [vmem:[#allocation5] sm:$0xff] 0.0
    %2073 = vst [vmem:[#allocation5 + $0x8] sm:$0xff] 0.0
    %2074 = vst [vmem:[#allocation5 + $0x10] sm:$0xff] 0.0
    %2075 = vst [vmem:[#allocation5 + $0x18] sm:$0xff] 0.0
    %2076 = vst [vmem:[#allocation5 + $0x20] sm:$0xff] 0.0
    %2077 = vst [vmem:[#allocation5 + $0x28] sm:$0xff] 0.0
    %2078 = vst [vmem:[#allocation5 + $0x30] sm:$0xff] 0.0
    %2079 = vst [vmem:[#allocation5 + $0x38] sm:$0xff] 0.0
    %2080 = vst [vmem:[#allocation5 + $0x40] sm:$0xff] 0.0
    %2081 = vst [vmem:[#allocation5 + $0x48] sm:$0xff] 0.0
    %2082 = vst [vmem:[#allocation5 + $0x50] sm:$0xff] 0.0
    %2083 = vst [vmem:[#allocation5 + $0x58] sm:$0xff] 0.0
    %2084 = vst [vmem:[#allocation5 + $0x60] sm:$0xff] 0.0
    %2085 = vst [vmem:[#allocation5 + $0x68] sm:$0xff] 0.0
    %2086 = vst [vmem:[#allocation5 + $0x70] sm:$0xff] 0.0
    %2087 = vst [vmem:[#allocation5 + $0x78] sm:$0xff] 0.0
    %2088 = vst [vmem:[#allocation5 + $0x80] sm:$0xff] 0.0
    %2089 = vst [vmem:[#allocation5 + $0x88] sm:$0xff] 0.0
    %2090 = vst [vmem:[#allocation5 + $0x90] sm:$0xff] 0.0
    %2091 = vst [vmem:[#allocation5 + $0x98] sm:$0xff] 0.0
    %2092 = vst [vmem:[#allocation5 + $0xa0] sm:$0xff] 0.0
    %2093 = vst [vmem:[#allocation5 + $0xa8] sm:$0xff] 0.0
    %2094 = vst [vmem:[#allocation5 + $0xb0] sm:$0xff] 0.0
    %2095 = vst [vmem:[#allocation5 + $0xb8] sm:$0xff] 0.0
    %v2096 = vld [vmem:[#allocation5] sm:$0xff]
    %v2097 = vld [vmem:[#allocation5 + $0x8] sm:$0xff]
    %v2098 = vld [vmem:[#allocation5 + $0x10] sm:$0xff]
    %v2099 = vld [vmem:[#allocation5 + $0x18] sm:$0xff]
    %v2100 = vld [vmem:[#allocation5 + $0x20] sm:$0xff]
    %v2101 = vld [vmem:[#allocation5 + $0x28] sm:$0xff]
    %v2102 = vld [vmem:[#allocation5 + $0x30] sm:$0xff]
    %v2103 = vld [vmem:[#allocation5 + $0x38] sm:$0xff]
    %v2104 = vld [vmem:[#allocation5 + $0x40] sm:$0xff]
    %v2105 = vld [vmem:[#allocation5 + $0x48] sm:$0xff]
    %v2106 = vld [vmem:[#allocation5 + $0x50] sm:$0xff]
    %v2107 = vld [vmem:[#allocation5 + $0x58] sm:$0xff]
    %v2108 = vld [vmem:[#allocation5 + $0x60] sm:$0xff]
    %v2109 = vld [vmem:[#allocation5 + $0x68] sm:$0xff]
    %v2110 = vld [vmem:[#allocation5 + $0x70] sm:$0xff]
    %v2111 = vld [vmem:[#allocation5 + $0x78] sm:$0xff]
    %v2112 = vadd.f32 %v2096, %v1935
    %v2113 = vadd.f32 %v2097, %v1937
    %v2114 = vadd.f32 %v2098, %v1940
    %v2115 = vadd.f32 %v2099, %v1942
    %v2116 = vadd.f32 %v2100, %v1945
    %v2117 = vadd.f32 %v2101, %v1947
    %v2118 = vadd.f32 %v2102, %v1950
    %v2119 = vadd.f32 %v2103, %v1952
    %v2120 = vadd.f32 %v2104, %v1955
    %v2121 = vadd.f32 %v2105, %v1957
    %v2122 = vadd.f32 %v2106, %v1960
    %v2123 = vadd.f32 %v2107, %v1962
    %v2124 = vadd.f32 %v2108, %v1965
    %v2125 = vadd.f32 %v2109, %v1967
    %v2126 = vadd.f32 %v2110, %v1970
    %v2127 = vadd.f32 %v2111, %v1972
    %2128 = vst [vmem:[#allocation5] sm:$0xff] %v2112
    %2129 = vst [vmem:[#allocation5 + $0x8] sm:$0xff] %v2113
    %2130 = vst [vmem:[#allocation5 + $0x10] sm:$0xff] %v2114
    %2131 = vst [vmem:[#allocation5 + $0x18] sm:$0xff] %v2115
    %2132 = vst [vmem:[#allocation5 + $0x20] sm:$0xff] %v2116
    %2133 = vst [vmem:[#allocation5 + $0x28] sm:$0xff] %v2117
    %2134 = vst [vmem:[#allocation5 + $0x30] sm:$0xff] %v2118
    %2135 = vst [vmem:[#allocation5 + $0x38] sm:$0xff] %v2119
    %2136 = vst [vmem:[#allocation5 + $0x40] sm:$0xff] %v2120
    %2137 = vst [vmem:[#allocation5 + $0x48] sm:$0xff] %v2121
    %2138 = vst [vmem:[#allocation5 + $0x50] sm:$0xff] %v2122
    %2139 = vst [vmem:[#allocation5 + $0x58] sm:$0xff] %v2123
    %2140 = vst [vmem:[#allocation5 + $0x60] sm:$0xff] %v2124
    %2141 = vst [vmem:[#allocation5 + $0x68] sm:$0xff] %v2125
    %2142 = vst [vmem:[#allocation5 + $0x70] sm:$0xff] %v2126
    %2143 = vst [vmem:[#allocation5 + $0x78] sm:$0xff] %v2127
    %v2144 = vld [vmem:[#allocation5 + $0x20] sm:$0xff]
    %v2145 = vld [vmem:[#allocation5 + $0x28] sm:$0xff]
    %v2146 = vld [vmem:[#allocation5 + $0x30] sm:$0xff]
    %v2147 = vld [vmem:[#allocation5 + $0x38] sm:$0xff]
    %v2148 = vld [vmem:[#allocation5 + $0x40] sm:$0xff]
    %v2149 = vld [vmem:[#allocation5 + $0x48] sm:$0xff]
    %v2150 = vld [vmem:[#allocation5 + $0x50] sm:$0xff]
    %v2151 = vld [vmem:[#allocation5 + $0x58] sm:$0xff]
    %v2152 = vld [vmem:[#allocation5 + $0x60] sm:$0xff]
    %v2153 = vld [vmem:[#allocation5 + $0x68] sm:$0xff]
    %v2154 = vld [vmem:[#allocation5 + $0x70] sm:$0xff]
    %v2155 = vld [vmem:[#allocation5 + $0x78] sm:$0xff]
    %v2156 = vld [vmem:[#allocation5 + $0x80] sm:$0xff]
    %v2157 = vld [vmem:[#allocation5 + $0x88] sm:$0xff]
    %v2158 = vld [vmem:[#allocation5 + $0x90] sm:$0xff]
    %v2159 = vld [vmem:[#allocation5 + $0x98] sm:$0xff]
    %v2160 = vadd.f32 %v2144, %v1984
    %v2161 = vadd.f32 %v2145, %v1986
    %v2162 = vadd.f32 %v2146, %v1989
    %v2163 = vadd.f32 %v2147, %v1991
    %v2164 = vadd.f32 %v2148, %v1994
    %v2165 = vadd.f32 %v2149, %v1996
    %v2166 = vadd.f32 %v2150, %v1999
    %v2167 = vadd.f32 %v2151, %v2001
    %v2168 = vadd.f32 %v2152, %v2004
    %v2169 = vadd.f32 %v2153, %v2006
    %v2170 = vadd.f32 %v2154, %v2009
    %v2171 = vadd.f32 %v2155, %v2011
    %v2172 = vadd.f32 %v2156, %v2014
    %v2173 = vadd.f32 %v2157, %v2016
    %v2174 = vadd.f32 %v2158, %v2019
    %v2175 = vadd.f32 %v2159, %v2021
    %2176 = vst [vmem:[#allocation5 + $0x20] sm:$0xff] %v2160
    %2177 = vst [vmem:[#allocation5 + $0x28] sm:$0xff] %v2161
    %2178 = vst [vmem:[#allocation5 + $0x30] sm:$0xff] %v2162
    %2179 = vst [vmem:[#allocation5 + $0x38] sm:$0xff] %v2163
    %2180 = vst [vmem:[#allocation5 + $0x40] sm:$0xff] %v2164
    %2181 = vst [vmem:[#allocation5 + $0x48] sm:$0xff] %v2165
    %2182 = vst [vmem:[#allocation5 + $0x50] sm:$0xff] %v2166
    %2183 = vst [vmem:[#allocation5 + $0x58] sm:$0xff] %v2167
    %2184 = vst [vmem:[#allocation5 + $0x60] sm:$0xff] %v2168
    %2185 = vst [vmem:[#allocation5 + $0x68] sm:$0xff] %v2169
    %2186 = vst [vmem:[#allocation5 + $0x70] sm:$0xff] %v2170
    %2187 = vst [vmem:[#allocation5 + $0x78] sm:$0xff] %v2171
    %2188 = vst [vmem:[#allocation5 + $0x80] sm:$0xff] %v2172
    %2189 = vst [vmem:[#allocation5 + $0x88] sm:$0xff] %v2173
    %2190 = vst [vmem:[#allocation5 + $0x90] sm:$0xff] %v2174
    %2191 = vst [vmem:[#allocation5 + $0x98] sm:$0xff] %v2175
    %v2192 = vld [vmem:[#allocation5 + $0x40] sm:$0xff]
    %v2193 = vld [vmem:[#allocation5 + $0x48] sm:$0xff]
    %v2194 = vld [vmem:[#allocation5 + $0x50] sm:$0xff]
    %v2195 = vld [vmem:[#allocation5 + $0x58] sm:$0xff]
    %v2196 = vld [vmem:[#allocation5 + $0x60] sm:$0xff]
    %v2197 = vld [vmem:[#allocation5 + $0x68] sm:$0xff]
    %v2198 = vld [vmem:[#allocation5 + $0x70] sm:$0xff]
    %v2199 = vld [vmem:[#allocation5 + $0x78] sm:$0xff]
    %v2200 = vld [vmem:[#allocation5 + $0x80] sm:$0xff]
    %v2201 = vld [vmem:[#allocation5 + $0x88] sm:$0xff]
    %v2202 = vld [vmem:[#allocation5 + $0x90] sm:$0xff]
    %v2203 = vld [vmem:[#allocation5 + $0x98] sm:$0xff]
    %v2204 = vld [vmem:[#allocation5 + $0xa0] sm:$0xff]
    %v2205 = vld [vmem:[#allocation5 + $0xa8] sm:$0xff]
    %v2206 = vld [vmem:[#allocation5 + $0xb0] sm:$0xff]
    %v2207 = vld [vmem:[#allocation5 + $0xb8] sm:$0xff]
    %v2208 = vadd.f32 %v2192, %v2033
    %v2209 = vadd.f32 %v2193, %v2035
    %v2210 = vadd.f32 %v2194, %v2038
    %v2211 = vadd.f32 %v2195, %v2040
    %v2212 = vadd.f32 %v2196, %v2043
    %v2213 = vadd.f32 %v2197, %v2045
    %v2214 = vadd.f32 %v2198, %v2048
    %v2215 = vadd.f32 %v2199, %v2050
    %v2216 = vadd.f32 %v2200, %v2053
    %v2217 = vadd.f32 %v2201, %v2055
    %v2218 = vadd.f32 %v2202, %v2058
    %v2219 = vadd.f32 %v2203, %v2060
    %v2220 = vadd.f32 %v2204, %v2063
    %v2221 = vadd.f32 %v2205, %v2065
    %v2222 = vadd.f32 %v2206, %v2068
    %v2223 = vadd.f32 %v2207, %v2070
    %2224 = vst [vmem:[#allocation5 + $0x40] sm:$0xff] %v2208
    %2225 = vst [vmem:[#allocation5 + $0x48] sm:$0xff] %v2209
    %2226 = vst [vmem:[#allocation5 + $0x50] sm:$0xff] %v2210
    %2227 = vst [vmem:[#allocation5 + $0x58] sm:$0xff] %v2211
    %2228 = vst [vmem:[#allocation5 + $0x60] sm:$0xff] %v2212
    %2229 = vst [vmem:[#allocation5 + $0x68] sm:$0xff] %v2213
    %2230 = vst [vmem:[#allocation5 + $0x70] sm:$0xff] %v2214
    %2231 = vst [vmem:[#allocation5 + $0x78] sm:$0xff] %v2215
    %2232 = vst [vmem:[#allocation5 + $0x80] sm:$0xff] %v2216
    %2233 = vst [vmem:[#allocation5 + $0x88] sm:$0xff] %v2217
    %2234 = vst [vmem:[#allocation5 + $0x90] sm:$0xff] %v2218
    %2235 = vst [vmem:[#allocation5 + $0x98] sm:$0xff] %v2219
    %2236 = vst [vmem:[#allocation5 + $0xa0] sm:$0xff] %v2220
    %2237 = vst [vmem:[#allocation5 + $0xa8] sm:$0xff] %v2221
    %2238 = vst [vmem:[#allocation5 + $0xb0] sm:$0xff] %v2222
    %2239 = vst [vmem:[#allocation5 + $0xb8] sm:$0xff] %v2223
    %v2240 = vld [vmem:[#allocation5] sm:$0xff]
    %v2241 = vld [vmem:[#allocation5 + $0x8] sm:$0xff]
    %v2242 = vld [vmem:[#allocation5 + $0x10] sm:$0xff]
    %v2243 = vld [vmem:[#allocation5 + $0x18] sm:$0xff]
    %v2244 = vld [vmem:[#allocation5 + $0x20] sm:$0xff]
    %v2245 = vld [vmem:[#allocation5 + $0x28] sm:$0xff]
    %v2246 = vld [vmem:[#allocation5 + $0x30] sm:$0xff]
    %v2247 = vld [vmem:[#allocation5 + $0x38] sm:$0xff]
    %v2248 = vld [vmem:[#allocation5 + $0x40] sm:$0xff]
    %v2249 = vld [vmem:[#allocation5 + $0x48] sm:$0xff]
    %v2250 = vld [vmem:[#allocation5 + $0x50] sm:$0xff]
    %v2251 = vld [vmem:[#allocation5 + $0x58] sm:$0xff]
    %v2252 = vld [vmem:[#allocation5 + $0x60] sm:$0xff]
    %v2253 = vld [vmem:[#allocation5 + $0x68] sm:$0xff]
    %v2254 = vld [vmem:[#allocation5 + $0x70] sm:$0xff]
    %v2255 = vld [vmem:[#allocation5 + $0x78] sm:$0xff]
    %v2256 = vld [vmem:[#allocation5 + $0x80] sm:$0xff]
    %v2257 = vld [vmem:[#allocation5 + $0x88] sm:$0xff]
    %v2258 = vld [vmem:[#allocation5 + $0x90] sm:$0xff]
    %v2259 = vld [vmem:[#allocation5 + $0x98] sm:$0xff]
    %v2260 = vld [vmem:[#allocation5 + $0xa0] sm:$0xff]
    %v2261 = vld [vmem:[#allocation5 + $0xa8] sm:$0xff]
    %v2262 = vld [vmem:[#allocation5 + $0xb0] sm:$0xff]
    %v2263 = vld [vmem:[#allocation5 + $0xb8] sm:$0xff]
    %v2264 = vld [vmem:[#allocation21 + $0x8] sm:$0x1]
    %v2265 = vld [vmem:[#allocation21 + $0x9] sm:$0x1]
    %v2266 = vadd.f32 %v2240, %v2241
    %v2267 = vadd.f32 %v2266, %v2242
    %v2268 = vadd.f32 %v2267, %v2243
    %v2269 = vadd.f32 %v2268, %v2244
    %v2270 = vadd.f32 %v2269, %v2245
    %v2271 = vadd.f32 %v2270, %v2246
    %v2272 = vadd.f32 %v2271, %v2247
    %v2273 = vadd.f32 %v2272, %v2248
    %v2274 = vadd.f32 %v2273, %v2249
    %v2275 = vadd.f32 %v2274, %v2250
    %v2276 = vadd.f32 %v2275, %v2251
    %v2277 = vadd.f32 %v2276, %v2252
    %v2278 = vadd.f32 %v2277, %v2253
    %v2279 = vadd.f32 %v2278, %v2254
    %v2280 = vadd.f32 %v2279, %v2255
    %v2281 = vadd.f32 %v2280, %v2256
    %v2282 = vadd.f32 %v2281, %v2257
    %v2283 = vadd.f32 %v2282, %v2258
    %v2284 = vadd.f32 %v2283, %v2259
    %v2285 = vadd.f32 %v2284, %v2260
    %v2286 = vadd.f32 %v2285, %v2261
    %v2287 = vadd.f32 %v2286, %v2262
    %v2288 = vadd.f32 %v2287, %v2263
    %v2289 = vrot.slane %v2288, 4
    %v2290 = vadd.f32 %v2288, %v2289
    %v2291 = vrot.slane %v2290, 2
    %v2292 = vadd.f32 %v2290, %v2291
    %v2293 = vrot.slane %v2292, 1
    %v2294 = vadd.f32 %v2292, %v2293
    %v2295 = vmul.f32 %v2294, 0.0052083335
    %v2296 = vsub.f32 %v2240, %v2295
    %v2297 = vsub.f32 %v2241, %v2295
    %v2298 = vsub.f32 %v2242, %v2295
    %v2299 = vsub.f32 %v2243, %v2295
    %v2300 = vsub.f32 %v2244, %v2295
    %v2301 = vsub.f32 %v2245, %v2295
    %v2302 = vsub.f32 %v2246, %v2295
    %v2303 = vsub.f32 %v2247, %v2295
    %v2304 = vsub.f32 %v2248, %v2295
    %v2305 = vsub.f32 %v2249, %v2295
    %v2306 = vsub.f32 %v2250, %v2295
    %v2307 = vsub.f32 %v2251, %v2295
    %v2308 = vsub.f32 %v2252, %v2295
    %v2309 = vsub.f32 %v2253, %v2295
    %v2310 = vsub.f32 %v2254, %v2295
    %v2311 = vsub.f32 %v2255, %v2295
    %v2312 = vsub.f32 %v2256, %v2295
    %v2313 = vsub.f32 %v2257, %v2295
    %v2314 = vsub.f32 %v2258, %v2295
    %v2315 = vsub.f32 %v2259, %v2295
    %v2316 = vsub.f32 %v2260, %v2295
    %v2317 = vsub.f32 %v2261, %v2295
    %v2318 = vsub.f32 %v2262, %v2295
    %v2319 = vsub.f32 %v2263, %v2295
    %v2320 = vmul.f32 %v2296, %v2296
    %v2321 = vmul.f32 %v2297, %v2297
    %v2322 = vmul.f32 %v2298, %v2298
    %v2323 = vmul.f32 %v2299, %v2299
    %v2324 = vmul.f32 %v2300, %v2300
    %v2325 = vmul.f32 %v2301, %v2301
    %v2326 = vmul.f32 %v2302, %v2302
    %v2327 = vmul.f32 %v2303, %v2303
    %v2328 = vmul.f32 %v2304, %v2304
    %v2329 = vmul.f32 %v2305, %v2305
    %v2330 = vmul.f32 %v2306, %v2306
    %v2331 = vmul.f32 %v2307, %v2307
    %v2332 = vmul.f32 %v2308, %v2308
    %v2333 = vmul.f32 %v2309, %v2309
    %v2334 = vmul.f32 %v2310, %v2310
    %v2335 = vmul.f32 %v2311, %v2311
    %v2336 = vmul.f32 %v2312, %v2312
    %v2337 = vmul.f32 %v2313, %v2313
    %v2338 = vmul.f32 %v2314, %v2314
    %v2339 = vmul.f32 %v2315, %v2315
    %v2340 = vmul.f32 %v2316, %v2316
    %v2341 = vmul.f32 %v2317, %v2317
    %v2342 = vmul.f32 %v2318, %v2318
    %v2343 = vmul.f32 %v2319, %v2319
    %v2344 = vadd.f32 %v2320, %v2321
    %v2345 = vadd.f32 %v2344, %v2322
    %v2346 = vadd.f32 %v2345, %v2323
    %v2347 = vadd.f32 %v2346, %v2324
    %v2348 = vadd.f32 %v2347, %v2325
    %v2349 = vadd.f32 %v2348, %v2326
    %v2350 = vadd.f32 %v2349, %v2327
    %v2351 = vadd.f32 %v2350, %v2328
    %v2352 = vadd.f32 %v2351, %v2329
    %v2353 = vadd.f32 %v2352, %v2330
    %v2354 = vadd.f32 %v2353, %v2331
    %v2355 = vadd.f32 %v2354, %v2332
    %v2356 = vadd.f32 %v2355, %v2333
    %v2357 = vadd.f32 %v2356, %v2334
    %v2358 = vadd.f32 %v2357, %v2335
    %v2359 = vadd.f32 %v2358, %v2336
    %v2360 = vadd.f32 %v2359, %v2337
    %v2361 = vadd.f32 %v2360, %v2338
    %v2362 = vadd.f32 %v2361, %v2339
    %v2363 = vadd.f32 %v2362, %v2340
    %v2364 = vadd.f32 %v2363, %v2341
    %v2365 = vadd.f32 %v2364, %v2342
    %v2366 = vadd.f32 %v2365, %v2343
    %v2367 = vrot.slane %v2366, 4
    %v2368 = vadd.f32 %v2366, %v2367
    %v2369 = vrot.slane %v2368, 2
    %v2370 = vadd.f32 %v2368, %v2369
    %v2371 = vrot.slane %v2370, 1
    %v2372 = vadd.f32 %v2370, %v2371
    %v2373 = vmul.f32 %v2372, 0.0052083335
    %v2374 = vadd.f32 %v2373, 1e-05
    %v2375 = vrsqrt.pop %v2374
    %v2376 = vmul.f32 %v2375, %v2374
    %v2377 = vmul.f32 %v2376, %v2375
    %v2378 = vmul.f32 0.5, %v2377
    %v2379 = vsub.f32 1.5, %v2378
    %v2380 = vmul.f32 %v2375, %v2379
    %vm2381 = vweird.f32 %v2374
    %vm2382 = vweird.f32 %v2375
    %vm2383 = vmor %vm2381, %vm2382
    %v2384 = vsel %vm2383, %v2375, %v2380
    %v2385 = vmul.f32 %v2296, %v2384
    %v2386 = vmul.f32 %v2297, %v2384
    %v2387 = vmul.f32 %v2298, %v2384
    %v2388 = vmul.f32 %v2299, %v2384
    %v2389 = vmul.f32 %v2300, %v2384
    %v2390 = vmul.f32 %v2301, %v2384
    %v2391 = vmul.f32 %v2302, %v2384
    %v2392 = vmul.f32 %v2303, %v2384
    %v2393 = vmul.f32 %v2304, %v2384
    %v2394 = vmul.f32 %v2305, %v2384
    %v2395 = vmul.f32 %v2306, %v2384
    %v2396 = vmul.f32 %v2307, %v2384
    %v2397 = vmul.f32 %v2308, %v2384
    %v2398 = vmul.f32 %v2309, %v2384
    %v2399 = vmul.f32 %v2310, %v2384
    %v2400 = vmul.f32 %v2311, %v2384
    %v2401 = vmul.f32 %v2312, %v2384
    %v2402 = vmul.f32 %v2313, %v2384
    %v2403 = vmul.f32 %v2314, %v2384
    %v2404 = vmul.f32 %v2315, %v2384
    %v2405 = vmul.f32 %v2316, %v2384
    %v2406 = vmul.f32 %v2317, %v2384
    %v2407 = vmul.f32 %v2318, %v2384
    %v2408 = vmul.f32 %v2319, %v2384
    %v2409 = vperm.slane %v2264, 0
    %v2410 = vmul.f32 %v2385, %v2409
    %v2411 = vmul.f32 %v2386, %v2409
    %v2412 = vmul.f32 %v2387, %v2409
    %v2413 = vmul.f32 %v2388, %v2409
    %v2414 = vmul.f32 %v2389, %v2409
    %v2415 = vmul.f32 %v2390, %v2409
    %v2416 = vmul.f32 %v2391, %v2409
    %v2417 = vmul.f32 %v2392, %v2409
    %v2418 = vmul.f32 %v2393, %v2409
    %v2419 = vmul.f32 %v2394, %v2409
    %v2420 = vmul.f32 %v2395, %v2409
    %v2421 = vmul.f32 %v2396, %v2409
    %v2422 = vmul.f32 %v2397, %v2409
    %v2423 = vmul.f32 %v2398, %v2409
    %v2424 = vmul.f32 %v2399, %v2409
    %v2425 = vmul.f32 %v2400, %v2409
    %v2426 = vmul.f32 %v2401, %v2409
    %v2427 = vmul.f32 %v2402, %v2409
    %v2428 = vmul.f32 %v2403, %v2409
    %v2429 = vmul.f32 %v2404, %v2409
    %v2430 = vmul.f32 %v2405, %v2409
    %v2431 = vmul.f32 %v2406, %v2409
    %v2432 = vmul.f32 %v2407, %v2409
    %v2433 = vmul.f32 %v2408, %v2409
    %v2434 = vperm.slane %v2265, 0
    %v2435 = vadd.f32 %v2410, %v2434
    %v2436 = vadd.f32 %v2411, %v2434
    %v2437 = vadd.f32 %v2412, %v2434
    %v2438 = vadd.f32 %v2413, %v2434
    %v2439 = vadd.f32 %v2414, %v2434
    %v2440 = vadd.f32 %v2415, %v2434
    %v2441 = vadd.f32 %v2416, %v2434
    %v2442 = vadd.f32 %v2417, %v2434
    %v2443 = vadd.f32 %v2418, %v2434
    %v2444 = vadd.f32 %v2419, %v2434
    %v2445 = vadd.f32 %v2420, %v2434
    %v2446 = vadd.f32 %v2421, %v2434
    %v2447 = vadd.f32 %v2422, %v2434
    %v2448 = vadd.f32 %v2423, %v2434
    %v2449 = vadd.f32 %v2424, %v2434
    %v2450 = vadd.f32 %v2425, %v2434
    %v2451 = vadd.f32 %v2426, %v2434
    %v2452 = vadd.f32 %v2427, %v2434
    %v2453 = vadd.f32 %v2428, %v2434
    %v2454 = vadd.f32 %v2429, %v2434
    %v2455 = vadd.f32 %v2430, %v2434
    %v2456 = vadd.f32 %v2431, %v2434
    %v2457 = vadd.f32 %v2432, %v2434
    %v2458 = vadd.f32 %v2433, %v2434
    %v2459 = vmax.f32 %v2435, 0.0
    %v2460 = vmax.f32 %v2436, 0.0
    %v2461 = vmax.f32 %v2437, 0.0
    %v2462 = vmax.f32 %v2438, 0.0
    %v2463 = vmax.f32 %v2439, 0.0
    %v2464 = vmax.f32 %v2440, 0.0
    %v2465 = vmax.f32 %v2441, 0.0
    %v2466 = vmax.f32 %v2442, 0.0
    %v2467 = vmax.f32 %v2443, 0.0
    %v2468 = vmax.f32 %v2444, 0.0
    %v2469 = vmax.f32 %v2445, 0.0
    %v2470 = vmax.f32 %v2446, 0.0
    %v2471 = vmax.f32 %v2447, 0.0
    %v2472 = vmax.f32 %v2448, 0.0
    %v2473 = vmax.f32 %v2449, 0.0
    %v2474 = vmax.f32 %v2450, 0.0
    %v2475 = vmax.f32 %v2451, 0.0
    %v2476 = vmax.f32 %v2452, 0.0
    %v2477 = vmax.f32 %v2453, 0.0
    %v2478 = vmax.f32 %v2454, 0.0
    %v2479 = vmax.f32 %v2455, 0.0
    %v2480 = vmax.f32 %v2456, 0.0
    %v2481 = vmax.f32 %v2457, 0.0
    %v2482 = vmax.f32 %v2458, 0.0
    %2483 = vst [vmem:[#allocation6] sm:$0xff] %v2459
    %2484 = vst [vmem:[#allocation6 + $0x30] sm:$0xff] %v2460
    %2485 = vst [vmem:[#allocation6 + $0x60] sm:$0xff] %v2461
    %2486 = vst [vmem:[#allocation6 + $0x90] sm:$0xff] %v2462
    %2487 = vst [vmem:[#allocation6 + $0x8] sm:$0xff] %v2463
    %2488 = vst [vmem:[#allocation6 + $0x38] sm:$0xff] %v2464
    %2489 = vst [vmem:[#allocation6 + $0x68] sm:$0xff] %v2465
    %2490 = vst [vmem:[#allocation6 + $0x98] sm:$0xff] %v2466
    %2491 = vst [vmem:[#allocation6 + $0x10] sm:$0xff] %v2467
    %2492 = vst [vmem:[#allocation6 + $0x40] sm:$0xff] %v2468
    %2493 = vst [vmem:[#allocation6 + $0x70] sm:$0xff] %v2469
    %2494 = vst [vmem:[#allocation6 + $0xa0] sm:$0xff] %v2470
    %2495 = vst [vmem:[#allocation6 + $0x18] sm:$0xff] %v2471
    %2496 = vst [vmem:[#allocation6 + $0x48] sm:$0xff] %v2472
    %2497 = vst [vmem:[#allocation6 + $0x78] sm:$0xff] %v2473
    %2498 = vst [vmem:[#allocation6 + $0xa8] sm:$0xff] %v2474
    %2499 = vst [vmem:[#allocation6 + $0x20] sm:$0xff] %v2475
    %2500 = vst [vmem:[#allocation6 + $0x50] sm:$0xff] %v2476
    %2501 = vst [vmem:[#allocation6 + $0x80] sm:$0xff] %v2477
    %2502 = vst [vmem:[#allocation6 + $0xb0] sm:$0xff] %v2478
    %2503 = vst [vmem:[#allocation6 + $0x28] sm:$0xff] %v2479
    %2504 = vst [vmem:[#allocation6 + $0x58] sm:$0xff] %v2480
    %2505 = vst [vmem:[#allocation6 + $0x88] sm:$0xff] %v2481
    %2506 = vst [vmem:[#allocation6 + $0xb8] sm:$0xff] %v2482
    %v2507 = vld [vmem:[#allocation6] sm:$0xff]
    %v2508 = vld [vmem:[#allocation6 + $0x8] sm:$0xff]
    %v2509 = vld [vmem:[#allocation6 + $0x10] sm:$0xff]
    %v2510 = vld [vmem:[#allocation6 + $0x18] sm:$0xff]
    %v2511 = vld [vmem:[#allocation6 + $0x20] sm:$0xff]
    %v2512 = vld [vmem:[#allocation6 + $0x28] sm:$0xff]
    %v2513 = vld [vmem:[#allocation6 + $0x30] sm:$0xff]
    %v2514 = vld [vmem:[#allocation6 + $0x38] sm:$0xff]
    %v2515 = vld [vmem:[#allocation6 + $0x40] sm:$0xff]
    %v2516 = vld [vmem:[#allocation6 + $0x48] sm:$0xff]
    %v2517 = vld [vmem:[#allocation6 + $0x50] sm:$0xff]
    %v2518 = vld [vmem:[#allocation6 + $0x58] sm:$0xff]
    %v2519 = vld [vmem:[#allocation6 + $0x60] sm:$0xff]
    %v2520 = vld [vmem:[#allocation6 + $0x68] sm:$0xff]
    %v2521 = vld [vmem:[#allocation6 + $0x70] sm:$0xff]
    %v2522 = vld [vmem:[#allocation6 + $0x78] sm:$0xff]
    %v2523 = vld [vmem:[#allocation6 + $0x80] sm:$0xff]
    %v2524 = vld [vmem:[#allocation6 + $0x88] sm:$0xff]
    %v2525 = vld [vmem:[#allocation6 + $0x90] sm:$0xff]
    %v2526 = vld [vmem:[#allocation6 + $0x98] sm:$0xff]
    %v2527 = vld [vmem:[#allocation6 + $0xa0] sm:$0xff]
    %v2528 = vld [vmem:[#allocation6 + $0xa8] sm:$0xff]
    %v2529 = vld [vmem:[#allocation6 + $0xb0] sm:$0xff]
    %v2530 = vld [vmem:[#allocation6 + $0xb8] sm:$0xff]
    %v2531 = vpack.c.bf16 %v2513, %v2507
    %v2532 = vpack.c.bf16 %v2514, %v2508
    %v2533 = vpack.c.bf16 %v2515, %v2509
    %v2534 = vpack.c.bf16 %v2516, %v2510
    %v2535 = vpack.c.bf16 %v2517, %v2511
    %v2536 = vpack.c.bf16 %v2518, %v2512
    %v2537 = vpack.c.bf16 %v2525, %v2519
    %v2538 = vpack.c.bf16 %v2526, %v2520
    %v2539 = vpack.c.bf16 %v2527, %v2521
    %v2540 = vpack.c.bf16 %v2528, %v2522
    %v2541 = vpack.c.bf16 %v2529, %v2523
    %v2542 = vpack.c.bf16 %v2530, %v2524
    %v2543 = vld [vmem:[#allocation18] sm:$0xff]
    %v2544 = vld [vmem:[#allocation18 + $0x8] sm:$0xff]
    %v2545 = vld [vmem:[#allocation18 + $0x10] sm:$0xff]
    %v2546 = vld [vmem:[#allocation18 + $0x18] sm:$0xff]
    %v2547 = vld [vmem:[#allocation18 + $0x20] sm:$0xff]
    %v2548 = vld [vmem:[#allocation18 + $0x28] sm:$0xff]
    %v2549 = vld [vmem:[#allocation18 + $0x30] sm:$0xff]
    %v2550 = vld [vmem:[#allocation18 + $0x38] sm:$0xff]
    %v2551 = vld [vmem:[#allocation18 + $0x40] sm:$0xff]
    %v2552 = vld [vmem:[#allocation18 + $0x48] sm:$0xff]
    %v2553 = vld [vmem:[#allocation18 + $0x50] sm:$0xff]
    %v2554 = vld [vmem:[#allocation18 + $0x58] sm:$0xff]
    %v2555 = vld [vmem:[#allocation18 + $0x60] sm:$0xff]
    %v2556 = vld [vmem:[#allocation18 + $0x68] sm:$0xff]
    %v2557 = vld [vmem:[#allocation18 + $0x70] sm:$0xff]
    %v2558 = vld [vmem:[#allocation18 + $0x78] sm:$0xff]
    %v2559 = vld [vmem:[#allocation18 + $0x80] sm:$0xff]
    %v2560 = vld [vmem:[#allocation18 + $0x88] sm:$0xff]
    %v2561 = vld [vmem:[#allocation18 + $0x90] sm:$0xff]
    %v2562 = vld [vmem:[#allocation18 + $0x98] sm:$0xff]
    %v2563 = vld [vmem:[#allocation18 + $0xa0] sm:$0xff]
    %v2564 = vld [vmem:[#allocation18 + $0xa8] sm:$0xff]
    %v2565 = vld [vmem:[#allocation18 + $0xb0] sm:$0xff]
    %v2566 = vld [vmem:[#allocation18 + $0xb8] sm:$0xff]
    %v2567 = vld [vmem:[#allocation18 + $0xc0] sm:$0xff]
    %v2568 = vld [vmem:[#allocation18 + $0xc8] sm:$0xff]
    %v2569 = vld [vmem:[#allocation18 + $0xd0] sm:$0xff]
    %v2570 = vld [vmem:[#allocation18 + $0xd8] sm:$0xff]
    %v2571 = vld [vmem:[#allocation18 + $0xe0] sm:$0xff]
    %v2572 = vld [vmem:[#allocation18 + $0xe8] sm:$0xff]
    %v2573 = vld [vmem:[#allocation18 + $0xf0] sm:$0xff]
    %v2574 = vld [vmem:[#allocation18 + $0xf8] sm:$0xff]
    %v2575 = vld [vmem:[#allocation18 + $0x100] sm:$0xff]
    %v2576 = vld [vmem:[#allocation18 + $0x108] sm:$0xff]
    %v2577 = vld [vmem:[#allocation18 + $0x110] sm:$0xff]
    %v2578 = vld [vmem:[#allocation18 + $0x118] sm:$0xff]
    %v2579 = vld [vmem:[#allocation18 + $0x120] sm:$0xff]
    %v2580 = vld [vmem:[#allocation18 + $0x128] sm:$0xff]
    %v2581 = vld [vmem:[#allocation18 + $0x130] sm:$0xff]
    %v2582 = vld [vmem:[#allocation18 + $0x138] sm:$0xff]
    %v2583 = vld [vmem:[#allocation18 + $0x140] sm:$0xff]
    %v2584 = vld [vmem:[#allocation18 + $0x148] sm:$0xff]
    %v2585 = vld [vmem:[#allocation18 + $0x150] sm:$0xff]
    %v2586 = vld [vmem:[#allocation18 + $0x158] sm:$0xff]
    %v2587 = vld [vmem:[#allocation18 + $0x160] sm:$0xff]
    %v2588 = vld [vmem:[#allocation18 + $0x168] sm:$0xff]
    %v2589 = vld [vmem:[#allocation18 + $0x170] sm:$0xff]
    %v2590 = vld [vmem:[#allocation18 + $0x178] sm:$0xff]
    %v2591 = vld [vmem:[#allocation18 + $0x180] sm:$0xff]
    %v2592 = vld [vmem:[#allocation18 + $0x188] sm:$0xff]
    %v2593 = vld [vmem:[#allocation18 + $0x190] sm:$0xff]
    %v2594 = vld [vmem:[#allocation18 + $0x198] sm:$0xff]
    %v2595 = vld [vmem:[#allocation18 + $0x1a0] sm:$0xff]
    %v2596 = vld [vmem:[#allocation18 + $0x1a8] sm:$0xff]
    %v2597 = vld [vmem:[#allocation18 + $0x1b0] sm:$0xff]
    %v2598 = vld [vmem:[#allocation18 + $0x1b8] sm:$0xff]
    %v2599 = vld [vmem:[#allocation18 + $0x1c0] sm:$0xff]
    %v2600 = vld [vmem:[#allocation18 + $0x1c8] sm:$0xff]
    %v2601 = vld [vmem:[#allocation18 + $0x1d0] sm:$0xff]
    %v2602 = vld [vmem:[#allocation18 + $0x1d8] sm:$0xff]
    %v2603 = vld [vmem:[#allocation18 + $0x1e0] sm:$0xff]
    %v2604 = vld [vmem:[#allocation18 + $0x1e8] sm:$0xff]
    %v2605 = vld [vmem:[#allocation18 + $0x1f0] sm:$0xff]
    %v2606 = vld [vmem:[#allocation18 + $0x1f8] sm:$0xff]
    %v2607 = vld [vmem:[#allocation18 + $0x200] sm:$0xff]
    %v2608 = vld [vmem:[#allocation18 + $0x208] sm:$0xff]
    %v2609 = vld [vmem:[#allocation18 + $0x210] sm:$0xff]
    %v2610 = vld [vmem:[#allocation18 + $0x218] sm:$0xff]
    %v2611 = vld [vmem:[#allocation18 + $0x220] sm:$0xff]
    %v2612 = vld [vmem:[#allocation18 + $0x228] sm:$0xff]
    %v2613 = vld [vmem:[#allocation18 + $0x230] sm:$0xff]
    %v2614 = vld [vmem:[#allocation18 + $0x238] sm:$0xff]
    %v2615 = vld [vmem:[#allocation18 + $0x240] sm:$0xff]
    %v2616 = vld [vmem:[#allocation18 + $0x248] sm:$0xff]
    %v2617 = vld [vmem:[#allocation18 + $0x250] sm:$0xff]
    %v2618 = vld [vmem:[#allocation18 + $0x258] sm:$0xff]
    %v2619 = vld [vmem:[#allocation18 + $0x260] sm:$0xff]
    %v2620 = vld [vmem:[#allocation18 + $0x268] sm:$0xff]
    %v2621 = vld [vmem:[#allocation18 + $0x270] sm:$0xff]
    %v2622 = vld [vmem:[#allocation18 + $0x278] sm:$0xff]
    %v2623 = vld [vmem:[#allocation18 + $0x280] sm:$0xff]
    %v2624 = vld [vmem:[#allocation18 + $0x288] sm:$0xff]
    %v2625 = vld [vmem:[#allocation18 + $0x290] sm:$0xff]
    %v2626 = vld [vmem:[#allocation18 + $0x298] sm:$0xff]
    %v2627 = vld [vmem:[#allocation18 + $0x2a0] sm:$0xff]
    %v2628 = vld [vmem:[#allocation18 + $0x2a8] sm:$0xff]
    %v2629 = vld [vmem:[#allocation18 + $0x2b0] sm:$0xff]
    %v2630 = vld [vmem:[#allocation18 + $0x2b8] sm:$0xff]
    %v2631 = vld [vmem:[#allocation18 + $0x2c0] sm:$0xff]
    %v2632 = vld [vmem:[#allocation18 + $0x2c8] sm:$0xff]
    %v2633 = vld [vmem:[#allocation18 + $0x2d0] sm:$0xff]
    %v2634 = vld [vmem:[#allocation18 + $0x2d8] sm:$0xff]
    %v2635 = vld [vmem:[#allocation18 + $0x2e0] sm:$0xff]
    %v2636 = vld [vmem:[#allocation18 + $0x2e8] sm:$0xff]
    %v2637 = vld [vmem:[#allocation18 + $0x2f0] sm:$0xff]
    %v2638 = vld [vmem:[#allocation18 + $0x2f8] sm:$0xff]
    %v2639 = vld [vmem:[#allocation18 + $0x300] sm:$0xff]
    %v2640 = vld [vmem:[#allocation18 + $0x308] sm:$0xff]
    %v2641 = vld [vmem:[#allocation18 + $0x310] sm:$0xff]
    %v2642 = vld [vmem:[#allocation18 + $0x318] sm:$0xff]
    %v2643 = vld [vmem:[#allocation18 + $0x320] sm:$0xff]
    %v2644 = vld [vmem:[#allocation18 + $0x328] sm:$0xff]
    %v2645 = vld [vmem:[#allocation18 + $0x330] sm:$0xff]
    %v2646 = vld [vmem:[#allocation18 + $0x338] sm:$0xff]
    %v2647 = vld [vmem:[#allocation18 + $0x340] sm:$0xff]
    %v2648 = vld [vmem:[#allocation18 + $0x348] sm:$0xff]
    %v2649 = vld [vmem:[#allocation18 + $0x350] sm:$0xff]
    %v2650 = vld [vmem:[#allocation18 + $0x358] sm:$0xff]
    %v2651 = vld [vmem:[#allocation18 + $0x360] sm:$0xff]
    %v2652 = vld [vmem:[#allocation18 + $0x368] sm:$0xff]
    %v2653 = vld [vmem:[#allocation18 + $0x370] sm:$0xff]
    %v2654 = vld [vmem:[#allocation18 + $0x378] sm:$0xff]
    %v2655 = vld [vmem:[#allocation18 + $0x380] sm:$0xff]
    %v2656 = vld [vmem:[#allocation18 + $0x388] sm:$0xff]
    %v2657 = vld [vmem:[#allocation18 + $0x390] sm:$0xff]
    %v2658 = vld [vmem:[#allocation18 + $0x398] sm:$0xff]
    %v2659 = vld [vmem:[#allocation18 + $0x3a0] sm:$0xff]
    %v2660 = vld [vmem:[#allocation18 + $0x3a8] sm:$0xff]
    %v2661 = vld [vmem:[#allocation18 + $0x3b0] sm:$0xff]
    %v2662 = vld [vmem:[#allocation18 + $0x3b8] sm:$0xff]
    %v2663 = vld [vmem:[#allocation18 + $0x3c0] sm:$0xff]
    %v2664 = vld [vmem:[#allocation18 + $0x3c8] sm:$0xff]
    %v2665 = vld [vmem:[#allocation18 + $0x3d0] sm:$0xff]
    %v2666 = vld [vmem:[#allocation18 + $0x3d8] sm:$0xff]
    %v2667 = vld [vmem:[#allocation18 + $0x3e0] sm:$0xff]
    %v2668 = vld [vmem:[#allocation18 + $0x3e8] sm:$0xff]
    %v2669 = vld [vmem:[#allocation18 + $0x3f0] sm:$0xff]
    %v2670 = vld [vmem:[#allocation18 + $0x3f8] sm:$0xff]
    %v2671 = vld [vmem:[#allocation18 + $0x400] sm:$0xff]
    %v2672 = vld [vmem:[#allocation18 + $0x408] sm:$0xff]
    %v2673 = vld [vmem:[#allocation18 + $0x410] sm:$0xff]
    %v2674 = vld [vmem:[#allocation18 + $0x418] sm:$0xff]
    %v2675 = vld [vmem:[#allocation18 + $0x420] sm:$0xff]
    %v2676 = vld [vmem:[#allocation18 + $0x428] sm:$0xff]
    %v2677 = vld [vmem:[#allocation18 + $0x430] sm:$0xff]
    %v2678 = vld [vmem:[#allocation18 + $0x438] sm:$0xff]
    %v2679 = vld [vmem:[#allocation18 + $0x440] sm:$0xff]
    %v2680 = vld [vmem:[#allocation18 + $0x448] sm:$0xff]
    %v2681 = vld [vmem:[#allocation18 + $0x450] sm:$0xff]
    %v2682 = vld [vmem:[#allocation18 + $0x458] sm:$0xff]
    %v2683 = vld [vmem:[#allocation18 + $0x460] sm:$0xff]
    %v2684 = vld [vmem:[#allocation18 + $0x468] sm:$0xff]
    %v2685 = vld [vmem:[#allocation18 + $0x470] sm:$0xff]
    %v2686 = vld [vmem:[#allocation18 + $0x478] sm:$0xff]
    %v2687 = vld [vmem:[#allocation18 + $0x480] sm:$0xff]
    %v2688 = vld [vmem:[#allocation18 + $0x488] sm:$0xff]
    %v2689 = vld [vmem:[#allocation18 + $0x490] sm:$0xff]
    %v2690 = vld [vmem:[#allocation18 + $0x498] sm:$0xff]
    %v2691 = vld [vmem:[#allocation18 + $0x4a0] sm:$0xff]
    %v2692 = vld [vmem:[#allocation18 + $0x4a8] sm:$0xff]
    %v2693 = vld [vmem:[#allocation18 + $0x4b0] sm:$0xff]
    %v2694 = vld [vmem:[#allocation18 + $0x4b8] sm:$0xff]
    %v2695 = vld [vmem:[#allocation18 + $0x4c0] sm:$0xff]
    %v2696 = vld [vmem:[#allocation18 + $0x4c8] sm:$0xff]
    %v2697 = vld [vmem:[#allocation18 + $0x4d0] sm:$0xff]
    %v2698 = vld [vmem:[#allocation18 + $0x4d8] sm:$0xff]
    %v2699 = vld [vmem:[#allocation18 + $0x4e0] sm:$0xff]
    %v2700 = vld [vmem:[#allocation18 + $0x4e8] sm:$0xff]
    %v2701 = vld [vmem:[#allocation18 + $0x4f0] sm:$0xff]
    %v2702 = vld [vmem:[#allocation18 + $0x4f8] sm:$0xff]
    %v2703 = vld [vmem:[#allocation18 + $0x500] sm:$0xff]
    %v2704 = vld [vmem:[#allocation18 + $0x508] sm:$0xff]
    %v2705 = vld [vmem:[#allocation18 + $0x510] sm:$0xff]
    %v2706 = vld [vmem:[#allocation18 + $0x518] sm:$0xff]
    %v2707 = vld [vmem:[#allocation18 + $0x520] sm:$0xff]
    %v2708 = vld [vmem:[#allocation18 + $0x528] sm:$0xff]
    %v2709 = vld [vmem:[#allocation18 + $0x530] sm:$0xff]
    %v2710 = vld [vmem:[#allocation18 + $0x538] sm:$0xff]
    %v2711 = vld [vmem:[#allocation18 + $0x540] sm:$0xff]
    %v2712 = vld [vmem:[#allocation18 + $0x548] sm:$0xff]
    %v2713 = vld [vmem:[#allocation18 + $0x550] sm:$0xff]
    %v2714 = vld [vmem:[#allocation18 + $0x558] sm:$0xff]
    %v2715 = vld [vmem:[#allocation18 + $0x560] sm:$0xff]
    %v2716 = vld [vmem:[#allocation18 + $0x568] sm:$0xff]
    %v2717 = vld [vmem:[#allocation18 + $0x570] sm:$0xff]
    %v2718 = vld [vmem:[#allocation18 + $0x578] sm:$0xff]
    %v2719 = vld [vmem:[#allocation18 + $0x580] sm:$0xff]
    %v2720 = vld [vmem:[#allocation18 + $0x588] sm:$0xff]
    %v2721 = vld [vmem:[#allocation18 + $0x590] sm:$0xff]
    %v2722 = vld [vmem:[#allocation18 + $0x598] sm:$0xff]
    %v2723 = vld [vmem:[#allocation18 + $0x5a0] sm:$0xff]
    %v2724 = vld [vmem:[#allocation18 + $0x5a8] sm:$0xff]
    %v2725 = vld [vmem:[#allocation18 + $0x5b0] sm:$0xff]
    %v2726 = vld [vmem:[#allocation18 + $0x5b8] sm:$0xff]
    %v2727 = vld [vmem:[#allocation18 + $0x5c0] sm:$0xff]
    %v2728 = vld [vmem:[#allocation18 + $0x5c8] sm:$0xff]
    %v2729 = vld [vmem:[#allocation18 + $0x5d0] sm:$0xff]
    %v2730 = vld [vmem:[#allocation18 + $0x5d8] sm:$0xff]
    %v2731 = vld [vmem:[#allocation18 + $0x5e0] sm:$0xff]
    %v2732 = vld [vmem:[#allocation18 + $0x5e8] sm:$0xff]
    %v2733 = vld [vmem:[#allocation18 + $0x5f0] sm:$0xff]
    %v2734 = vld [vmem:[#allocation18 + $0x5f8] sm:$0xff]
    %v2735 = vld [vmem:[#allocation18 + $0x600] sm:$0xff]
    %v2736 = vld [vmem:[#allocation18 + $0x608] sm:$0xff]
    %v2737 = vld [vmem:[#allocation18 + $0x610] sm:$0xff]
    %v2738 = vld [vmem:[#allocation18 + $0x618] sm:$0xff]
    %v2739 = vld [vmem:[#allocation18 + $0x620] sm:$0xff]
    %v2740 = vld [vmem:[#allocation18 + $0x628] sm:$0xff]
    %v2741 = vld [vmem:[#allocation18 + $0x630] sm:$0xff]
    %v2742 = vld [vmem:[#allocation18 + $0x638] sm:$0xff]
    %v2743 = vld [vmem:[#allocation18 + $0x640] sm:$0xff]
    %v2744 = vld [vmem:[#allocation18 + $0x648] sm:$0xff]
    %v2745 = vld [vmem:[#allocation18 + $0x650] sm:$0xff]
    %v2746 = vld [vmem:[#allocation18 + $0x658] sm:$0xff]
    %v2747 = vld [vmem:[#allocation18 + $0x660] sm:$0xff]
    %v2748 = vld [vmem:[#allocation18 + $0x668] sm:$0xff]
    %v2749 = vld [vmem:[#allocation18 + $0x670] sm:$0xff]
    %v2750 = vld [vmem:[#allocation18 + $0x678] sm:$0xff]
    %v2751 = vld [vmem:[#allocation18 + $0x680] sm:$0xff]
    %v2752 = vld [vmem:[#allocation18 + $0x688] sm:$0xff]
    %v2753 = vld [vmem:[#allocation18 + $0x690] sm:$0xff]
    %v2754 = vld [vmem:[#allocation18 + $0x698] sm:$0xff]
    %v2755 = vld [vmem:[#allocation18 + $0x6a0] sm:$0xff]
    %v2756 = vld [vmem:[#allocation18 + $0x6a8] sm:$0xff]
    %v2757 = vld [vmem:[#allocation18 + $0x6b0] sm:$0xff]
    %v2758 = vld [vmem:[#allocation18 + $0x6b8] sm:$0xff]
    %v2759 = vld [vmem:[#allocation18 + $0x6c0] sm:$0xff]
    %v2760 = vld [vmem:[#allocation18 + $0x6c8] sm:$0xff]
    %v2761 = vld [vmem:[#allocation18 + $0x6d0] sm:$0xff]
    %v2762 = vld [vmem:[#allocation18 + $0x6d8] sm:$0xff]
    %v2763 = vld [vmem:[#allocation18 + $0x6e0] sm:$0xff]
    %v2764 = vld [vmem:[#allocation18 + $0x6e8] sm:$0xff]
    %v2765 = vld [vmem:[#allocation18 + $0x6f0] sm:$0xff]
    %v2766 = vld [vmem:[#allocation18 + $0x6f8] sm:$0xff]
    %v2767 = vld [vmem:[#allocation18 + $0x700] sm:$0xff]
    %v2768 = vld [vmem:[#allocation18 + $0x708] sm:$0xff]
    %v2769 = vld [vmem:[#allocation18 + $0x710] sm:$0xff]
    %v2770 = vld [vmem:[#allocation18 + $0x718] sm:$0xff]
    %v2771 = vld [vmem:[#allocation18 + $0x720] sm:$0xff]
    %v2772 = vld [vmem:[#allocation18 + $0x728] sm:$0xff]
    %v2773 = vld [vmem:[#allocation18 + $0x730] sm:$0xff]
    %v2774 = vld [vmem:[#allocation18 + $0x738] sm:$0xff]
    %v2775 = vld [vmem:[#allocation18 + $0x740] sm:$0xff]
    %v2776 = vld [vmem:[#allocation18 + $0x748] sm:$0xff]
    %v2777 = vld [vmem:[#allocation18 + $0x750] sm:$0xff]
    %v2778 = vld [vmem:[#allocation18 + $0x758] sm:$0xff]
    %v2779 = vld [vmem:[#allocation18 + $0x760] sm:$0xff]
    %v2780 = vld [vmem:[#allocation18 + $0x768] sm:$0xff]
    %v2781 = vld [vmem:[#allocation18 + $0x770] sm:$0xff]
    %v2782 = vld [vmem:[#allocation18 + $0x778] sm:$0xff]
    %v2783 = vld [vmem:[#allocation18 + $0x780] sm:$0xff]
    %v2784 = vld [vmem:[#allocation18 + $0x788] sm:$0xff]
    %v2785 = vld [vmem:[#allocation18 + $0x790] sm:$0xff]
    %v2786 = vld [vmem:[#allocation18 + $0x798] sm:$0xff]
    %v2787 = vld [vmem:[#allocation18 + $0x7a0] sm:$0xff]
    %v2788 = vld [vmem:[#allocation18 + $0x7a8] sm:$0xff]
    %v2789 = vld [vmem:[#allocation18 + $0x7b0] sm:$0xff]
    %v2790 = vld [vmem:[#allocation18 + $0x7b8] sm:$0xff]
    %v2791 = vld [vmem:[#allocation18 + $0x7c0] sm:$0xff]
    %v2792 = vld [vmem:[#allocation18 + $0x7c8] sm:$0xff]
    %v2793 = vld [vmem:[#allocation18 + $0x7d0] sm:$0xff]
    %v2794 = vld [vmem:[#allocation18 + $0x7d8] sm:$0xff]
    %v2795 = vld [vmem:[#allocation18 + $0x7e0] sm:$0xff]
    %v2796 = vld [vmem:[#allocation18 + $0x7e8] sm:$0xff]
    %v2797 = vld [vmem:[#allocation18 + $0x7f0] sm:$0xff]
    %v2798 = vld [vmem:[#allocation18 + $0x7f8] sm:$0xff]
    %v2799 = vld [vmem:[#allocation18 + $0x800] sm:$0xff]
    %v2800 = vld [vmem:[#allocation18 + $0x808] sm:$0xff]
    %v2801 = vld [vmem:[#allocation18 + $0x810] sm:$0xff]
    %v2802 = vld [vmem:[#allocation18 + $0x818] sm:$0xff]
    %v2803 = vld [vmem:[#allocation18 + $0x820] sm:$0xff]
    %v2804 = vld [vmem:[#allocation18 + $0x828] sm:$0xff]
    %v2805 = vld [vmem:[#allocation18 + $0x830] sm:$0xff]
    %v2806 = vld [vmem:[#allocation18 + $0x838] sm:$0xff]
    %v2807 = vld [vmem:[#allocation18 + $0x840] sm:$0xff]
    %v2808 = vld [vmem:[#allocation18 + $0x848] sm:$0xff]
    %v2809 = vld [vmem:[#allocation18 + $0x850] sm:$0xff]
    %v2810 = vld [vmem:[#allocation18 + $0x858] sm:$0xff]
    %v2811 = vld [vmem:[#allocation18 + $0x860] sm:$0xff]
    %v2812 = vld [vmem:[#allocation18 + $0x868] sm:$0xff]
    %v2813 = vld [vmem:[#allocation18 + $0x870] sm:$0xff]
    %v2814 = vld [vmem:[#allocation18 + $0x878] sm:$0xff]
    %v2815 = vld [vmem:[#allocation18 + $0x880] sm:$0xff]
    %v2816 = vld [vmem:[#allocation18 + $0x888] sm:$0xff]
    %v2817 = vld [vmem:[#allocation18 + $0x890] sm:$0xff]
    %v2818 = vld [vmem:[#allocation18 + $0x898] sm:$0xff]
    %v2819 = vld [vmem:[#allocation18 + $0x8a0] sm:$0xff]
    %v2820 = vld [vmem:[#allocation18 + $0x8a8] sm:$0xff]
    %v2821 = vld [vmem:[#allocation18 + $0x8b0] sm:$0xff]
    %v2822 = vld [vmem:[#allocation18 + $0x8b8] sm:$0xff]
    %v2823 = vld [vmem:[#allocation18 + $0x8c0] sm:$0xff]
    %v2824 = vld [vmem:[#allocation18 + $0x8c8] sm:$0xff]
    %v2825 = vld [vmem:[#allocation18 + $0x8d0] sm:$0xff]
    %v2826 = vld [vmem:[#allocation18 + $0x8d8] sm:$0xff]
    %v2827 = vld [vmem:[#allocation18 + $0x8e0] sm:$0xff]
    %v2828 = vld [vmem:[#allocation18 + $0x8e8] sm:$0xff]
    %v2829 = vld [vmem:[#allocation18 + $0x8f0] sm:$0xff]
    %v2830 = vld [vmem:[#allocation18 + $0x8f8] sm:$0xff]
    %v2831 = vld [vmem:[#allocation18 + $0x900] sm:$0xff]
    %v2832 = vld [vmem:[#allocation18 + $0x908] sm:$0xff]
    %v2833 = vld [vmem:[#allocation18 + $0x910] sm:$0xff]
    %v2834 = vld [vmem:[#allocation18 + $0x918] sm:$0xff]
    %v2835 = vld [vmem:[#allocation18 + $0x920] sm:$0xff]
    %v2836 = vld [vmem:[#allocation18 + $0x928] sm:$0xff]
    %v2837 = vld [vmem:[#allocation18 + $0x930] sm:$0xff]
    %v2838 = vld [vmem:[#allocation18 + $0x938] sm:$0xff]
    %v2839 = vld [vmem:[#allocation18 + $0x940] sm:$0xff]
    %v2840 = vld [vmem:[#allocation18 + $0x948] sm:$0xff]
    %v2841 = vld [vmem:[#allocation18 + $0x950] sm:$0xff]
    %v2842 = vld [vmem:[#allocation18 + $0x958] sm:$0xff]
    %v2843 = vld [vmem:[#allocation18 + $0x960] sm:$0xff]
    %v2844 = vld [vmem:[#allocation18 + $0x968] sm:$0xff]
    %v2845 = vld [vmem:[#allocation18 + $0x970] sm:$0xff]
    %v2846 = vld [vmem:[#allocation18 + $0x978] sm:$0xff]
    %v2847 = vld [vmem:[#allocation18 + $0x980] sm:$0xff]
    %v2848 = vld [vmem:[#allocation18 + $0x988] sm:$0xff]
    %v2849 = vld [vmem:[#allocation18 + $0x990] sm:$0xff]
    %v2850 = vld [vmem:[#allocation18 + $0x998] sm:$0xff]
    %v2851 = vld [vmem:[#allocation18 + $0x9a0] sm:$0xff]
    %v2852 = vld [vmem:[#allocation18 + $0x9a8] sm:$0xff]
    %v2853 = vld [vmem:[#allocation18 + $0x9b0] sm:$0xff]
    %v2854 = vld [vmem:[#allocation18 + $0x9b8] sm:$0xff]
    %v2855 = vld [vmem:[#allocation18 + $0x9c0] sm:$0xff]
    %v2856 = vld [vmem:[#allocation18 + $0x9c8] sm:$0xff]
    %v2857 = vld [vmem:[#allocation18 + $0x9d0] sm:$0xff]
    %v2858 = vld [vmem:[#allocation18 + $0x9d8] sm:$0xff]
    %v2859 = vld [vmem:[#allocation18 + $0x9e0] sm:$0xff]
    %v2860 = vld [vmem:[#allocation18 + $0x9e8] sm:$0xff]
    %v2861 = vld [vmem:[#allocation18 + $0x9f0] sm:$0xff]
    %v2862 = vld [vmem:[#allocation18 + $0x9f8] sm:$0xff]
    %v2863 = vld [vmem:[#allocation18 + $0xa00] sm:$0xff]
    %v2864 = vld [vmem:[#allocation18 + $0xa08] sm:$0xff]
    %v2865 = vld [vmem:[#allocation18 + $0xa10] sm:$0xff]
    %v2866 = vld [vmem:[#allocation18 + $0xa18] sm:$0xff]
    %v2867 = vld [vmem:[#allocation18 + $0xa20] sm:$0xff]
    %v2868 = vld [vmem:[#allocation18 + $0xa28] sm:$0xff]
    %v2869 = vld [vmem:[#allocation18 + $0xa30] sm:$0xff]
    %v2870 = vld [vmem:[#allocation18 + $0xa38] sm:$0xff]
    %v2871 = vld [vmem:[#allocation18 + $0xa40] sm:$0xff]
    %v2872 = vld [vmem:[#allocation18 + $0xa48] sm:$0xff]
    %v2873 = vld [vmem:[#allocation18 + $0xa50] sm:$0xff]
    %v2874 = vld [vmem:[#allocation18 + $0xa58] sm:$0xff]
    %v2875 = vld [vmem:[#allocation18 + $0xa60] sm:$0xff]
    %v2876 = vld [vmem:[#allocation18 + $0xa68] sm:$0xff]
    %v2877 = vld [vmem:[#allocation18 + $0xa70] sm:$0xff]
    %v2878 = vld [vmem:[#allocation18 + $0xa78] sm:$0xff]
    %v2879 = vld [vmem:[#allocation18 + $0xa80] sm:$0xff]
    %v2880 = vld [vmem:[#allocation18 + $0xa88] sm:$0xff]
    %v2881 = vld [vmem:[#allocation18 + $0xa90] sm:$0xff]
    %v2882 = vld [vmem:[#allocation18 + $0xa98] sm:$0xff]
    %v2883 = vld [vmem:[#allocation18 + $0xaa0] sm:$0xff]
    %v2884 = vld [vmem:[#allocation18 + $0xaa8] sm:$0xff]
    %v2885 = vld [vmem:[#allocation18 + $0xab0] sm:$0xff]
    %v2886 = vld [vmem:[#allocation18 + $0xab8] sm:$0xff]
    %v2887 = vld [vmem:[#allocation18 + $0xac0] sm:$0xff]
    %v2888 = vld [vmem:[#allocation18 + $0xac8] sm:$0xff]
    %v2889 = vld [vmem:[#allocation18 + $0xad0] sm:$0xff]
    %v2890 = vld [vmem:[#allocation18 + $0xad8] sm:$0xff]
    %v2891 = vld [vmem:[#allocation18 + $0xae0] sm:$0xff]
    %v2892 = vld [vmem:[#allocation18 + $0xae8] sm:$0xff]
    %v2893 = vld [vmem:[#allocation18 + $0xaf0] sm:$0xff]
    %v2894 = vld [vmem:[#allocation18 + $0xaf8] sm:$0xff]
    %v2895 = vld [vmem:[#allocation18 + $0xb00] sm:$0xff]
    %v2896 = vld [vmem:[#allocation18 + $0xb08] sm:$0xff]
    %v2897 = vld [vmem:[#allocation18 + $0xb10] sm:$0xff]
    %v2898 = vld [vmem:[#allocation18 + $0xb18] sm:$0xff]
    %v2899 = vld [vmem:[#allocation18 + $0xb20] sm:$0xff]
    %v2900 = vld [vmem:[#allocation18 + $0xb28] sm:$0xff]
    %v2901 = vld [vmem:[#allocation18 + $0xb30] sm:$0xff]
    %v2902 = vld [vmem:[#allocation18 + $0xb38] sm:$0xff]
    %v2903 = vld [vmem:[#allocation18 + $0xb40] sm:$0xff]
    %v2904 = vld [vmem:[#allocation18 + $0xb48] sm:$0xff]
    %v2905 = vld [vmem:[#allocation18 + $0xb50] sm:$0xff]
    %v2906 = vld [vmem:[#allocation18 + $0xb58] sm:$0xff]
    %v2907 = vld [vmem:[#allocation18 + $0xb60] sm:$0xff]
    %v2908 = vld [vmem:[#allocation18 + $0xb68] sm:$0xff]
    %v2909 = vld [vmem:[#allocation18 + $0xb70] sm:$0xff]
    %v2910 = vld [vmem:[#allocation18 + $0xb78] sm:$0xff]
    %v2911 = vld [vmem:[#allocation18 + $0xb80] sm:$0xff]
    %v2912 = vld [vmem:[#allocation18 + $0xb88] sm:$0xff]
    %v2913 = vld [vmem:[#allocation18 + $0xb90] sm:$0xff]
    %v2914 = vld [vmem:[#allocation18 + $0xb98] sm:$0xff]
    %v2915 = vld [vmem:[#allocation18 + $0xba0] sm:$0xff]
    %v2916 = vld [vmem:[#allocation18 + $0xba8] sm:$0xff]
    %v2917 = vld [vmem:[#allocation18 + $0xbb0] sm:$0xff]
    %v2918 = vld [vmem:[#allocation18 + $0xbb8] sm:$0xff]
    %v2919 = vld [vmem:[#allocation18 + $0xbc0] sm:$0xff]
    %v2920 = vld [vmem:[#allocation18 + $0xbc8] sm:$0xff]
    %v2921 = vld [vmem:[#allocation18 + $0xbd0] sm:$0xff]
    %v2922 = vld [vmem:[#allocation18 + $0xbd8] sm:$0xff]
    %v2923 = vld [vmem:[#allocation18 + $0xbe0] sm:$0xff]
    %v2924 = vld [vmem:[#allocation18 + $0xbe8] sm:$0xff]
    %v2925 = vld [vmem:[#allocation18 + $0xbf0] sm:$0xff]
    %v2926 = vld [vmem:[#allocation18 + $0xbf8] sm:$0xff]
    %v2927 = vld [vmem:[#allocation18 + $0xc00] sm:$0xff]
    %v2928 = vld [vmem:[#allocation18 + $0xc08] sm:$0xff]
    %v2929 = vld [vmem:[#allocation18 + $0xc10] sm:$0xff]
    %v2930 = vld [vmem:[#allocation18 + $0xc18] sm:$0xff]
    %v2931 = vld [vmem:[#allocation18 + $0xc20] sm:$0xff]
    %v2932 = vld [vmem:[#allocation18 + $0xc28] sm:$0xff]
    %v2933 = vld [vmem:[#allocation18 + $0xc30] sm:$0xff]
    %v2934 = vld [vmem:[#allocation18 + $0xc38] sm:$0xff]
    %v2935 = vld [vmem:[#allocation18 + $0xc40] sm:$0xff]
    %v2936 = vld [vmem:[#allocation18 + $0xc48] sm:$0xff]
    %v2937 = vld [vmem:[#allocation18 + $0xc50] sm:$0xff]
    %v2938 = vld [vmem:[#allocation18 + $0xc58] sm:$0xff]
    %v2939 = vld [vmem:[#allocation18 + $0xc60] sm:$0xff]
    %v2940 = vld [vmem:[#allocation18 + $0xc68] sm:$0xff]
    %v2941 = vld [vmem:[#allocation18 + $0xc70] sm:$0xff]
    %v2942 = vld [vmem:[#allocation18 + $0xc78] sm:$0xff]
    %v2943 = vld [vmem:[#allocation18 + $0xc80] sm:$0xff]
    %v2944 = vld [vmem:[#allocation18 + $0xc88] sm:$0xff]
    %v2945 = vld [vmem:[#allocation18 + $0xc90] sm:$0xff]
    %v2946 = vld [vmem:[#allocation18 + $0xc98] sm:$0xff]
    %v2947 = vld [vmem:[#allocation18 + $0xca0] sm:$0xff]
    %v2948 = vld [vmem:[#allocation18 + $0xca8] sm:$0xff]
    %v2949 = vld [vmem:[#allocation18 + $0xcb0] sm:$0xff]
    %v2950 = vld [vmem:[#allocation18 + $0xcb8] sm:$0xff]
    %v2951 = vld [vmem:[#allocation18 + $0xcc0] sm:$0xff]
    %v2952 = vld [vmem:[#allocation18 + $0xcc8] sm:$0xff]
    %v2953 = vld [vmem:[#allocation18 + $0xcd0] sm:$0xff]
    %v2954 = vld [vmem:[#allocation18 + $0xcd8] sm:$0xff]
    %v2955 = vld [vmem:[#allocation18 + $0xce0] sm:$0xff]
    %v2956 = vld [vmem:[#allocation18 + $0xce8] sm:$0xff]
    %v2957 = vld [vmem:[#allocation18 + $0xcf0] sm:$0xff]
    %v2958 = vld [vmem:[#allocation18 + $0xcf8] sm:$0xff]
    %v2959 = vld [vmem:[#allocation18 + $0xd00] sm:$0xff]
    %v2960 = vld [vmem:[#allocation18 + $0xd08] sm:$0xff]
    %v2961 = vld [vmem:[#allocation18 + $0xd10] sm:$0xff]
    %v2962 = vld [vmem:[#allocation18 + $0xd18] sm:$0xff]
    %v2963 = vld [vmem:[#allocation18 + $0xd20] sm:$0xff]
    %v2964 = vld [vmem:[#allocation18 + $0xd28] sm:$0xff]
    %v2965 = vld [vmem:[#allocation18 + $0xd30] sm:$0xff]
    %v2966 = vld [vmem:[#allocation18 + $0xd38] sm:$0xff]
    %v2967 = vld [vmem:[#allocation18 + $0xd40] sm:$0xff]
    %v2968 = vld [vmem:[#allocation18 + $0xd48] sm:$0xff]
    %v2969 = vld [vmem:[#allocation18 + $0xd50] sm:$0xff]
    %v2970 = vld [vmem:[#allocation18 + $0xd58] sm:$0xff]
    %v2971 = vld [vmem:[#allocation18 + $0xd60] sm:$0xff]
    %v2972 = vld [vmem:[#allocation18 + $0xd68] sm:$0xff]
    %v2973 = vld [vmem:[#allocation18 + $0xd70] sm:$0xff]
    %v2974 = vld [vmem:[#allocation18 + $0xd78] sm:$0xff]
    %v2975 = vld [vmem:[#allocation18 + $0xd80] sm:$0xff]
    %v2976 = vld [vmem:[#allocation18 + $0xd88] sm:$0xff]
    %v2977 = vld [vmem:[#allocation18 + $0xd90] sm:$0xff]
    %v2978 = vld [vmem:[#allocation18 + $0xd98] sm:$0xff]
    %v2979 = vld [vmem:[#allocation18 + $0xda0] sm:$0xff]
    %v2980 = vld [vmem:[#allocation18 + $0xda8] sm:$0xff]
    %v2981 = vld [vmem:[#allocation18 + $0xdb0] sm:$0xff]
    %v2982 = vld [vmem:[#allocation18 + $0xdb8] sm:$0xff]
    %v2983 = vld [vmem:[#allocation18 + $0xdc0] sm:$0xff]
    %v2984 = vld [vmem:[#allocation18 + $0xdc8] sm:$0xff]
    %v2985 = vld [vmem:[#allocation18 + $0xdd0] sm:$0xff]
    %v2986 = vld [vmem:[#allocation18 + $0xdd8] sm:$0xff]
    %v2987 = vld [vmem:[#allocation18 + $0xde0] sm:$0xff]
    %v2988 = vld [vmem:[#allocation18 + $0xde8] sm:$0xff]
    %v2989 = vld [vmem:[#allocation18 + $0xdf0] sm:$0xff]
    %v2990 = vld [vmem:[#allocation18 + $0xdf8] sm:$0xff]
    %v2991 = vld [vmem:[#allocation18 + $0xe00] sm:$0xff]
    %v2992 = vld [vmem:[#allocation18 + $0xe08] sm:$0xff]
    %v2993 = vld [vmem:[#allocation18 + $0xe10] sm:$0xff]
    %v2994 = vld [vmem:[#allocation18 + $0xe18] sm:$0xff]
    %v2995 = vld [vmem:[#allocation18 + $0xe20] sm:$0xff]
    %v2996 = vld [vmem:[#allocation18 + $0xe28] sm:$0xff]
    %v2997 = vld [vmem:[#allocation18 + $0xe30] sm:$0xff]
    %v2998 = vld [vmem:[#allocation18 + $0xe38] sm:$0xff]
    %v2999 = vld [vmem:[#allocation18 + $0xe40] sm:$0xff]
    %v3000 = vld [vmem:[#allocation18 + $0xe48] sm:$0xff]
    %v3001 = vld [vmem:[#allocation18 + $0xe50] sm:$0xff]
    %v3002 = vld [vmem:[#allocation18 + $0xe58] sm:$0xff]
    %v3003 = vld [vmem:[#allocation18 + $0xe60] sm:$0xff]
    %v3004 = vld [vmem:[#allocation18 + $0xe68] sm:$0xff]
    %v3005 = vld [vmem:[#allocation18 + $0xe70] sm:$0xff]
    %v3006 = vld [vmem:[#allocation18 + $0xe78] sm:$0xff]
    %v3007 = vld [vmem:[#allocation18 + $0xe80] sm:$0xff]
    %v3008 = vld [vmem:[#allocation18 + $0xe88] sm:$0xff]
    %v3009 = vld [vmem:[#allocation18 + $0xe90] sm:$0xff]
    %v3010 = vld [vmem:[#allocation18 + $0xe98] sm:$0xff]
    %v3011 = vld [vmem:[#allocation18 + $0xea0] sm:$0xff]
    %v3012 = vld [vmem:[#allocation18 + $0xea8] sm:$0xff]
    %v3013 = vld [vmem:[#allocation18 + $0xeb0] sm:$0xff]
    %v3014 = vld [vmem:[#allocation18 + $0xeb8] sm:$0xff]
    %v3015 = vld [vmem:[#allocation18 + $0xec0] sm:$0xff]
    %v3016 = vld [vmem:[#allocation18 + $0xec8] sm:$0xff]
    %v3017 = vld [vmem:[#allocation18 + $0xed0] sm:$0xff]
    %v3018 = vld [vmem:[#allocation18 + $0xed8] sm:$0xff]
    %v3019 = vld [vmem:[#allocation18 + $0xee0] sm:$0xff]
    %v3020 = vld [vmem:[#allocation18 + $0xee8] sm:$0xff]
    %v3021 = vld [vmem:[#allocation18 + $0xef0] sm:$0xff]
    %v3022 = vld [vmem:[#allocation18 + $0xef8] sm:$0xff]
    %v3023 = vld [vmem:[#allocation18 + $0xf00] sm:$0xff]
    %v3024 = vld [vmem:[#allocation18 + $0xf08] sm:$0xff]
    %v3025 = vld [vmem:[#allocation18 + $0xf10] sm:$0xff]
    %v3026 = vld [vmem:[#allocation18 + $0xf18] sm:$0xff]
    %v3027 = vld [vmem:[#allocation18 + $0xf20] sm:$0xff]
    %v3028 = vld [vmem:[#allocation18 + $0xf28] sm:$0xff]
    %v3029 = vld [vmem:[#allocation18 + $0xf30] sm:$0xff]
    %v3030 = vld [vmem:[#allocation18 + $0xf38] sm:$0xff]
    %v3031 = vld [vmem:[#allocation18 + $0xf40] sm:$0xff]
    %v3032 = vld [vmem:[#allocation18 + $0xf48] sm:$0xff]
    %v3033 = vld [vmem:[#allocation18 + $0xf50] sm:$0xff]
    %v3034 = vld [vmem:[#allocation18 + $0xf58] sm:$0xff]
    %v3035 = vld [vmem:[#allocation18 + $0xf60] sm:$0xff]
    %v3036 = vld [vmem:[#allocation18 + $0xf68] sm:$0xff]
    %v3037 = vld [vmem:[#allocation18 + $0xf70] sm:$0xff]
    %v3038 = vld [vmem:[#allocation18 + $0xf78] sm:$0xff]
    %v3039 = vld [vmem:[#allocation18 + $0xf80] sm:$0xff]
    %v3040 = vld [vmem:[#allocation18 + $0xf88] sm:$0xff]
    %v3041 = vld [vmem:[#allocation18 + $0xf90] sm:$0xff]
    %v3042 = vld [vmem:[#allocation18 + $0xf98] sm:$0xff]
    %v3043 = vld [vmem:[#allocation18 + $0xfa0] sm:$0xff]
    %v3044 = vld [vmem:[#allocation18 + $0xfa8] sm:$0xff]
    %v3045 = vld [vmem:[#allocation18 + $0xfb0] sm:$0xff]
    %v3046 = vld [vmem:[#allocation18 + $0xfb8] sm:$0xff]
    %v3047 = vld [vmem:[#allocation18 + $0xfc0] sm:$0xff]
    %v3048 = vld [vmem:[#allocation18 + $0xfc8] sm:$0xff]
    %v3049 = vld [vmem:[#allocation18 + $0xfd0] sm:$0xff]
    %v3050 = vld [vmem:[#allocation18 + $0xfd8] sm:$0xff]
    %v3051 = vld [vmem:[#allocation18 + $0xfe0] sm:$0xff]
    %v3052 = vld [vmem:[#allocation18 + $0xfe8] sm:$0xff]
    %v3053 = vld [vmem:[#allocation18 + $0xff0] sm:$0xff]
    %v3054 = vld [vmem:[#allocation18 + $0xff8] sm:$0xff]
    %v3055 = vld [vmem:[#allocation18 + $0x1000] sm:$0xff]
    %v3056 = vld [vmem:[#allocation18 + $0x1008] sm:$0xff]
    %v3057 = vld [vmem:[#allocation18 + $0x1010] sm:$0xff]
    %v3058 = vld [vmem:[#allocation18 + $0x1018] sm:$0xff]
    %v3059 = vld [vmem:[#allocation18 + $0x1020] sm:$0xff]
    %v3060 = vld [vmem:[#allocation18 + $0x1028] sm:$0xff]
    %v3061 = vld [vmem:[#allocation18 + $0x1030] sm:$0xff]
    %v3062 = vld [vmem:[#allocation18 + $0x1038] sm:$0xff]
    %v3063 = vld [vmem:[#allocation18 + $0x1040] sm:$0xff]
    %v3064 = vld [vmem:[#allocation18 + $0x1048] sm:$0xff]
    %v3065 = vld [vmem:[#allocation18 + $0x1050] sm:$0xff]
    %v3066 = vld [vmem:[#allocation18 + $0x1058] sm:$0xff]
    %v3067 = vld [vmem:[#allocation18 + $0x1060] sm:$0xff]
    %v3068 = vld [vmem:[#allocation18 + $0x1068] sm:$0xff]
    %v3069 = vld [vmem:[#allocation18 + $0x1070] sm:$0xff]
    %v3070 = vld [vmem:[#allocation18 + $0x1078] sm:$0xff]
    %v3071 = vld [vmem:[#allocation18 + $0x1080] sm:$0xff]
    %v3072 = vld [vmem:[#allocation18 + $0x1088] sm:$0xff]
    %v3073 = vld [vmem:[#allocation18 + $0x1090] sm:$0xff]
    %v3074 = vld [vmem:[#allocation18 + $0x1098] sm:$0xff]
    %v3075 = vld [vmem:[#allocation18 + $0x10a0] sm:$0xff]
    %v3076 = vld [vmem:[#allocation18 + $0x10a8] sm:$0xff]
    %v3077 = vld [vmem:[#allocation18 + $0x10b0] sm:$0xff]
    %v3078 = vld [vmem:[#allocation18 + $0x10b8] sm:$0xff]
    %v3079 = vld [vmem:[#allocation18 + $0x10c0] sm:$0xff]
    %v3080 = vld [vmem:[#allocation18 + $0x10c8] sm:$0xff]
    %v3081 = vld [vmem:[#allocation18 + $0x10d0] sm:$0xff]
    %v3082 = vld [vmem:[#allocation18 + $0x10d8] sm:$0xff]
    %v3083 = vld [vmem:[#allocation18 + $0x10e0] sm:$0xff]
    %v3084 = vld [vmem:[#allocation18 + $0x10e8] sm:$0xff]
    %v3085 = vld [vmem:[#allocation18 + $0x10f0] sm:$0xff]
    %v3086 = vld [vmem:[#allocation18 + $0x10f8] sm:$0xff]
    %v3087 = vld [vmem:[#allocation18 + $0x1100] sm:$0xff]
    %v3088 = vld [vmem:[#allocation18 + $0x1108] sm:$0xff]
    %v3089 = vld [vmem:[#allocation18 + $0x1110] sm:$0xff]
    %v3090 = vld [vmem:[#allocation18 + $0x1118] sm:$0xff]
    %v3091 = vld [vmem:[#allocation18 + $0x1120] sm:$0xff]
    %v3092 = vld [vmem:[#allocation18 + $0x1128] sm:$0xff]
    %v3093 = vld [vmem:[#allocation18 + $0x1130] sm:$0xff]
    %v3094 = vld [vmem:[#allocation18 + $0x1138] sm:$0xff]
    %v3095 = vld [vmem:[#allocation18 + $0x1140] sm:$0xff]
    %v3096 = vld [vmem:[#allocation18 + $0x1148] sm:$0xff]
    %v3097 = vld [vmem:[#allocation18 + $0x1150] sm:$0xff]
    %v3098 = vld [vmem:[#allocation18 + $0x1158] sm:$0xff]
    %v3099 = vld [vmem:[#allocation18 + $0x1160] sm:$0xff]
    %v3100 = vld [vmem:[#allocation18 + $0x1168] sm:$0xff]
    %v3101 = vld [vmem:[#allocation18 + $0x1170] sm:$0xff]
    %v3102 = vld [vmem:[#allocation18 + $0x1178] sm:$0xff]
    %v3103 = vld [vmem:[#allocation18 + $0x1180] sm:$0xff]
    %v3104 = vld [vmem:[#allocation18 + $0x1188] sm:$0xff]
    %v3105 = vld [vmem:[#allocation18 + $0x1190] sm:$0xff]
    %v3106 = vld [vmem:[#allocation18 + $0x1198] sm:$0xff]
    %v3107 = vld [vmem:[#allocation18 + $0x11a0] sm:$0xff]
    %v3108 = vld [vmem:[#allocation18 + $0x11a8] sm:$0xff]
    %v3109 = vld [vmem:[#allocation18 + $0x11b0] sm:$0xff]
    %v3110 = vld [vmem:[#allocation18 + $0x11b8] sm:$0xff]
    %v3111 = vld [vmem:[#allocation18 + $0x11c0] sm:$0xff]
    %v3112 = vld [vmem:[#allocation18 + $0x11c8] sm:$0xff]
    %v3113 = vld [vmem:[#allocation18 + $0x11d0] sm:$0xff]
    %v3114 = vld [vmem:[#allocation18 + $0x11d8] sm:$0xff]
    %v3115 = vld [vmem:[#allocation18 + $0x11e0] sm:$0xff]
    %v3116 = vld [vmem:[#allocation18 + $0x11e8] sm:$0xff]
    %v3117 = vld [vmem:[#allocation18 + $0x11f0] sm:$0xff]
    %v3118 = vld [vmem:[#allocation18 + $0x11f8] sm:$0xff]
    %v3119 = vld [vmem:[#allocation18 + $0x1200] sm:$0xff]
    %v3120 = vld [vmem:[#allocation18 + $0x1208] sm:$0xff]
    %v3121 = vld [vmem:[#allocation18 + $0x1210] sm:$0xff]
    %v3122 = vld [vmem:[#allocation18 + $0x1218] sm:$0xff]
    %v3123 = vld [vmem:[#allocation18 + $0x1220] sm:$0xff]
    %v3124 = vld [vmem:[#allocation18 + $0x1228] sm:$0xff]
    %v3125 = vld [vmem:[#allocation18 + $0x1230] sm:$0xff]
    %v3126 = vld [vmem:[#allocation18 + $0x1238] sm:$0xff]
    %v3127 = vld [vmem:[#allocation18 + $0x1240] sm:$0xff]
    %v3128 = vld [vmem:[#allocation18 + $0x1248] sm:$0xff]
    %v3129 = vld [vmem:[#allocation18 + $0x1250] sm:$0xff]
    %v3130 = vld [vmem:[#allocation18 + $0x1258] sm:$0xff]
    %v3131 = vld [vmem:[#allocation18 + $0x1260] sm:$0xff]
    %v3132 = vld [vmem:[#allocation18 + $0x1268] sm:$0xff]
    %v3133 = vld [vmem:[#allocation18 + $0x1270] sm:$0xff]
    %v3134 = vld [vmem:[#allocation18 + $0x1278] sm:$0xff]
    %v3135 = vld [vmem:[#allocation18 + $0x1280] sm:$0xff]
    %v3136 = vld [vmem:[#allocation18 + $0x1288] sm:$0xff]
    %v3137 = vld [vmem:[#allocation18 + $0x1290] sm:$0xff]
    %v3138 = vld [vmem:[#allocation18 + $0x1298] sm:$0xff]
    %v3139 = vld [vmem:[#allocation18 + $0x12a0] sm:$0xff]
    %v3140 = vld [vmem:[#allocation18 + $0x12a8] sm:$0xff]
    %v3141 = vld [vmem:[#allocation18 + $0x12b0] sm:$0xff]
    %v3142 = vld [vmem:[#allocation18 + $0x12b8] sm:$0xff]
    %v3143 = vld [vmem:[#allocation18 + $0x12c0] sm:$0xff]
    %v3144 = vld [vmem:[#allocation18 + $0x12c8] sm:$0xff]
    %v3145 = vld [vmem:[#allocation18 + $0x12d0] sm:$0xff]
    %v3146 = vld [vmem:[#allocation18 + $0x12d8] sm:$0xff]
    %v3147 = vld [vmem:[#allocation18 + $0x12e0] sm:$0xff]
    %v3148 = vld [vmem:[#allocation18 + $0x12e8] sm:$0xff]
    %v3149 = vld [vmem:[#allocation18 + $0x12f0] sm:$0xff]
    %v3150 = vld [vmem:[#allocation18 + $0x12f8] sm:$0xff]
    %v3151 = vld [vmem:[#allocation18 + $0x1300] sm:$0xff]
    %v3152 = vld [vmem:[#allocation18 + $0x1308] sm:$0xff]
    %v3153 = vld [vmem:[#allocation18 + $0x1310] sm:$0xff]
    %v3154 = vld [vmem:[#allocation18 + $0x1318] sm:$0xff]
    %v3155 = vld [vmem:[#allocation18 + $0x1320] sm:$0xff]
    %v3156 = vld [vmem:[#allocation18 + $0x1328] sm:$0xff]
    %v3157 = vld [vmem:[#allocation18 + $0x1330] sm:$0xff]
    %v3158 = vld [vmem:[#allocation18 + $0x1338] sm:$0xff]
    %v3159 = vld [vmem:[#allocation18 + $0x1340] sm:$0xff]
    %v3160 = vld [vmem:[#allocation18 + $0x1348] sm:$0xff]
    %v3161 = vld [vmem:[#allocation18 + $0x1350] sm:$0xff]
    %v3162 = vld [vmem:[#allocation18 + $0x1358] sm:$0xff]
    %v3163 = vld [vmem:[#allocation18 + $0x1360] sm:$0xff]
    %v3164 = vld [vmem:[#allocation18 + $0x1368] sm:$0xff]
    %v3165 = vld [vmem:[#allocation18 + $0x1370] sm:$0xff]
    %v3166 = vld [vmem:[#allocation18 + $0x1378] sm:$0xff]
    %v3167 = vld [vmem:[#allocation18 + $0x1380] sm:$0xff]
    %v3168 = vld [vmem:[#allocation18 + $0x1388] sm:$0xff]
    %v3169 = vld [vmem:[#allocation18 + $0x1390] sm:$0xff]
    %v3170 = vld [vmem:[#allocation18 + $0x1398] sm:$0xff]
    %v3171 = vld [vmem:[#allocation18 + $0x13a0] sm:$0xff]
    %v3172 = vld [vmem:[#allocation18 + $0x13a8] sm:$0xff]
    %v3173 = vld [vmem:[#allocation18 + $0x13b0] sm:$0xff]
    %v3174 = vld [vmem:[#allocation18 + $0x13b8] sm:$0xff]
    %v3175 = vld [vmem:[#allocation18 + $0x13c0] sm:$0xff]
    %v3176 = vld [vmem:[#allocation18 + $0x13c8] sm:$0xff]
    %v3177 = vld [vmem:[#allocation18 + $0x13d0] sm:$0xff]
    %v3178 = vld [vmem:[#allocation18 + $0x13d8] sm:$0xff]
    %v3179 = vld [vmem:[#allocation18 + $0x13e0] sm:$0xff]
    %v3180 = vld [vmem:[#allocation18 + $0x13e8] sm:$0xff]
    %v3181 = vld [vmem:[#allocation18 + $0x13f0] sm:$0xff]
    %v3182 = vld [vmem:[#allocation18 + $0x13f8] sm:$0xff]
    %v3183 = vld [vmem:[#allocation18 + $0x1400] sm:$0xff]
    %v3184 = vld [vmem:[#allocation18 + $0x1408] sm:$0xff]
    %v3185 = vld [vmem:[#allocation18 + $0x1410] sm:$0xff]
    %v3186 = vld [vmem:[#allocation18 + $0x1418] sm:$0xff]
    %v3187 = vld [vmem:[#allocation18 + $0x1420] sm:$0xff]
    %v3188 = vld [vmem:[#allocation18 + $0x1428] sm:$0xff]
    %v3189 = vld [vmem:[#allocation18 + $0x1430] sm:$0xff]
    %v3190 = vld [vmem:[#allocation18 + $0x1438] sm:$0xff]
    %v3191 = vld [vmem:[#allocation18 + $0x1440] sm:$0xff]
    %v3192 = vld [vmem:[#allocation18 + $0x1448] sm:$0xff]
    %v3193 = vld [vmem:[#allocation18 + $0x1450] sm:$0xff]
    %v3194 = vld [vmem:[#allocation18 + $0x1458] sm:$0xff]
    %v3195 = vld [vmem:[#allocation18 + $0x1460] sm:$0xff]
    %v3196 = vld [vmem:[#allocation18 + $0x1468] sm:$0xff]
    %v3197 = vld [vmem:[#allocation18 + $0x1470] sm:$0xff]
    %v3198 = vld [vmem:[#allocation18 + $0x1478] sm:$0xff]
    %v3199 = vld [vmem:[#allocation18 + $0x1480] sm:$0xff]
    %v3200 = vld [vmem:[#allocation18 + $0x1488] sm:$0xff]
    %v3201 = vld [vmem:[#allocation18 + $0x1490] sm:$0xff]
    %v3202 = vld [vmem:[#allocation18 + $0x1498] sm:$0xff]
    %v3203 = vld [vmem:[#allocation18 + $0x14a0] sm:$0xff]
    %v3204 = vld [vmem:[#allocation18 + $0x14a8] sm:$0xff]
    %v3205 = vld [vmem:[#allocation18 + $0x14b0] sm:$0xff]
    %v3206 = vld [vmem:[#allocation18 + $0x14b8] sm:$0xff]
    %v3207 = vld [vmem:[#allocation18 + $0x14c0] sm:$0xff]
    %v3208 = vld [vmem:[#allocation18 + $0x14c8] sm:$0xff]
    %v3209 = vld [vmem:[#allocation18 + $0x14d0] sm:$0xff]
    %v3210 = vld [vmem:[#allocation18 + $0x14d8] sm:$0xff]
    %v3211 = vld [vmem:[#allocation18 + $0x14e0] sm:$0xff]
    %v3212 = vld [vmem:[#allocation18 + $0x14e8] sm:$0xff]
    %v3213 = vld [vmem:[#allocation18 + $0x14f0] sm:$0xff]
    %v3214 = vld [vmem:[#allocation18 + $0x14f8] sm:$0xff]
    %v3215 = vld [vmem:[#allocation18 + $0x1500] sm:$0xff]
    %v3216 = vld [vmem:[#allocation18 + $0x1508] sm:$0xff]
    %v3217 = vld [vmem:[#allocation18 + $0x1510] sm:$0xff]
    %v3218 = vld [vmem:[#allocation18 + $0x1518] sm:$0xff]
    %v3219 = vld [vmem:[#allocation18 + $0x1520] sm:$0xff]
    %v3220 = vld [vmem:[#allocation18 + $0x1528] sm:$0xff]
    %v3221 = vld [vmem:[#allocation18 + $0x1530] sm:$0xff]
    %v3222 = vld [vmem:[#allocation18 + $0x1538] sm:$0xff]
    %v3223 = vld [vmem:[#allocation18 + $0x1540] sm:$0xff]
    %v3224 = vld [vmem:[#allocation18 + $0x1548] sm:$0xff]
    %v3225 = vld [vmem:[#allocation18 + $0x1550] sm:$0xff]
    %v3226 = vld [vmem:[#allocation18 + $0x1558] sm:$0xff]
    %v3227 = vld [vmem:[#allocation18 + $0x1560] sm:$0xff]
    %v3228 = vld [vmem:[#allocation18 + $0x1568] sm:$0xff]
    %v3229 = vld [vmem:[#allocation18 + $0x1570] sm:$0xff]
    %v3230 = vld [vmem:[#allocation18 + $0x1578] sm:$0xff]
    %v3231 = vld [vmem:[#allocation18 + $0x1580] sm:$0xff]
    %v3232 = vld [vmem:[#allocation18 + $0x1588] sm:$0xff]
    %v3233 = vld [vmem:[#allocation18 + $0x1590] sm:$0xff]
    %v3234 = vld [vmem:[#allocation18 + $0x1598] sm:$0xff]
    %v3235 = vld [vmem:[#allocation18 + $0x15a0] sm:$0xff]
    %v3236 = vld [vmem:[#allocation18 + $0x15a8] sm:$0xff]
    %v3237 = vld [vmem:[#allocation18 + $0x15b0] sm:$0xff]
    %v3238 = vld [vmem:[#allocation18 + $0x15b8] sm:$0xff]
    %v3239 = vld [vmem:[#allocation18 + $0x15c0] sm:$0xff]
    %v3240 = vld [vmem:[#allocation18 + $0x15c8] sm:$0xff]
    %v3241 = vld [vmem:[#allocation18 + $0x15d0] sm:$0xff]
    %v3242 = vld [vmem:[#allocation18 + $0x15d8] sm:$0xff]
    %v3243 = vld [vmem:[#allocation18 + $0x15e0] sm:$0xff]
    %v3244 = vld [vmem:[#allocation18 + $0x15e8] sm:$0xff]
    %v3245 = vld [vmem:[#allocation18 + $0x15f0] sm:$0xff]
    %v3246 = vld [vmem:[#allocation18 + $0x15f8] sm:$0xff]
    %v3247 = vld [vmem:[#allocation18 + $0x1600] sm:$0xff]
    %v3248 = vld [vmem:[#allocation18 + $0x1608] sm:$0xff]
    %v3249 = vld [vmem:[#allocation18 + $0x1610] sm:$0xff]
    %v3250 = vld [vmem:[#allocation18 + $0x1618] sm:$0xff]
    %v3251 = vld [vmem:[#allocation18 + $0x1620] sm:$0xff]
    %v3252 = vld [vmem:[#allocation18 + $0x1628] sm:$0xff]
    %v3253 = vld [vmem:[#allocation18 + $0x1630] sm:$0xff]
    %v3254 = vld [vmem:[#allocation18 + $0x1638] sm:$0xff]
    %v3255 = vld [vmem:[#allocation18 + $0x1640] sm:$0xff]
    %v3256 = vld [vmem:[#allocation18 + $0x1648] sm:$0xff]
    %v3257 = vld [vmem:[#allocation18 + $0x1650] sm:$0xff]
    %v3258 = vld [vmem:[#allocation18 + $0x1658] sm:$0xff]
    %v3259 = vld [vmem:[#allocation18 + $0x1660] sm:$0xff]
    %v3260 = vld [vmem:[#allocation18 + $0x1668] sm:$0xff]
    %v3261 = vld [vmem:[#allocation18 + $0x1670] sm:$0xff]
    %v3262 = vld [vmem:[#allocation18 + $0x1678] sm:$0xff]
    %v3263 = vld [vmem:[#allocation18 + $0x1680] sm:$0xff]
    %v3264 = vld [vmem:[#allocation18 + $0x1688] sm:$0xff]
    %v3265 = vld [vmem:[#allocation18 + $0x1690] sm:$0xff]
    %v3266 = vld [vmem:[#allocation18 + $0x1698] sm:$0xff]
    %v3267 = vld [vmem:[#allocation18 + $0x16a0] sm:$0xff]
    %v3268 = vld [vmem:[#allocation18 + $0x16a8] sm:$0xff]
    %v3269 = vld [vmem:[#allocation18 + $0x16b0] sm:$0xff]
    %v3270 = vld [vmem:[#allocation18 + $0x16b8] sm:$0xff]
    %v3271 = vld [vmem:[#allocation18 + $0x16c0] sm:$0xff]
    %v3272 = vld [vmem:[#allocation18 + $0x16c8] sm:$0xff]
    %v3273 = vld [vmem:[#allocation18 + $0x16d0] sm:$0xff]
    %v3274 = vld [vmem:[#allocation18 + $0x16d8] sm:$0xff]
    %v3275 = vld [vmem:[#allocation18 + $0x16e0] sm:$0xff]
    %v3276 = vld [vmem:[#allocation18 + $0x16e8] sm:$0xff]
    %v3277 = vld [vmem:[#allocation18 + $0x16f0] sm:$0xff]
    %v3278 = vld [vmem:[#allocation18 + $0x16f8] sm:$0xff]
    %v3279 = vld [vmem:[#allocation18 + $0x1700] sm:$0xff]
    %v3280 = vld [vmem:[#allocation18 + $0x1708] sm:$0xff]
    %v3281 = vld [vmem:[#allocation18 + $0x1710] sm:$0xff]
    %v3282 = vld [vmem:[#allocation18 + $0x1718] sm:$0xff]
    %v3283 = vld [vmem:[#allocation18 + $0x1720] sm:$0xff]
    %v3284 = vld [vmem:[#allocation18 + $0x1728] sm:$0xff]
    %v3285 = vld [vmem:[#allocation18 + $0x1730] sm:$0xff]
    %v3286 = vld [vmem:[#allocation18 + $0x1738] sm:$0xff]
    %v3287 = vld [vmem:[#allocation18 + $0x1740] sm:$0xff]
    %v3288 = vld [vmem:[#allocation18 + $0x1748] sm:$0xff]
    %v3289 = vld [vmem:[#allocation18 + $0x1750] sm:$0xff]
    %v3290 = vld [vmem:[#allocation18 + $0x1758] sm:$0xff]
    %v3291 = vld [vmem:[#allocation18 + $0x1760] sm:$0xff]
    %v3292 = vld [vmem:[#allocation18 + $0x1768] sm:$0xff]
    %v3293 = vld [vmem:[#allocation18 + $0x1770] sm:$0xff]
    %v3294 = vld [vmem:[#allocation18 + $0x1778] sm:$0xff]
    %v3295 = vld [vmem:[#allocation18 + $0x1780] sm:$0xff]
    %v3296 = vld [vmem:[#allocation18 + $0x1788] sm:$0xff]
    %v3297 = vld [vmem:[#allocation18 + $0x1790] sm:$0xff]
    %v3298 = vld [vmem:[#allocation18 + $0x1798] sm:$0xff]
    %v3299 = vld [vmem:[#allocation18 + $0x17a0] sm:$0xff]
    %v3300 = vld [vmem:[#allocation18 + $0x17a8] sm:$0xff]
    %v3301 = vld [vmem:[#allocation18 + $0x17b0] sm:$0xff]
    %v3302 = vld [vmem:[#allocation18 + $0x17b8] sm:$0xff]
    %v3303 = vld [vmem:[#allocation18 + $0x17c0] sm:$0xff]
    %v3304 = vld [vmem:[#allocation18 + $0x17c8] sm:$0xff]
    %v3305 = vld [vmem:[#allocation18 + $0x17d0] sm:$0xff]
    %v3306 = vld [vmem:[#allocation18 + $0x17d8] sm:$0xff]
    %v3307 = vld [vmem:[#allocation18 + $0x17e0] sm:$0xff]
    %v3308 = vld [vmem:[#allocation18 + $0x17e8] sm:$0xff]
    %v3309 = vld [vmem:[#allocation18 + $0x17f0] sm:$0xff]
    %v3310 = vld [vmem:[#allocation18 + $0x17f8] sm:$0xff]
    %v4079 = vunpack.c.l.b16 %v2543
    %v4080 = vunpack.c.h.b16 %v2543
    %v4081 = vunpack.c.l.b16 %v2544
    %v4082 = vunpack.c.h.b16 %v2544
    %v4083 = vunpack.c.l.b16 %v2545
    %v4084 = vunpack.c.h.b16 %v2545
    %v4085 = vunpack.c.l.b16 %v2546
    %v4086 = vunpack.c.h.b16 %v2546
    %v4087 = vunpack.c.l.b16 %v2547
    %v4088 = vunpack.c.h.b16 %v2547
    %v4089 = vunpack.c.l.b16 %v2548
    %v4090 = vunpack.c.h.b16 %v2548
    %v4091 = vunpack.c.l.b16 %v2549
    %v4092 = vunpack.c.h.b16 %v2549
    %v4093 = vunpack.c.l.b16 %v2550
    %v4094 = vunpack.c.h.b16 %v2550
    %v4095 = vunpack.c.l.b16 %v2551
    %v4096 = vunpack.c.h.b16 %v2551
    %v4097 = vunpack.c.l.b16 %v2552
    %v4098 = vunpack.c.h.b16 %v2552
    %v4099 = vunpack.c.l.b16 %v2553
    %v4100 = vunpack.c.h.b16 %v2553
    %v4101 = vunpack.c.l.b16 %v2554
    %v4102 = vunpack.c.h.b16 %v2554
    %v4103 = vunpack.c.l.b16 %v2555
    %v4104 = vunpack.c.h.b16 %v2555
    %v4105 = vunpack.c.l.b16 %v2556
    %v4106 = vunpack.c.h.b16 %v2556
    %v4107 = vunpack.c.l.b16 %v2557
    %v4108 = vunpack.c.h.b16 %v2557
    %v4109 = vunpack.c.l.b16 %v2558
    %v4110 = vunpack.c.h.b16 %v2558
    %v4111 = vunpack.c.l.b16 %v2559
    %v4112 = vunpack.c.h.b16 %v2559
    %v4113 = vunpack.c.l.b16 %v2560
    %v4114 = vunpack.c.h.b16 %v2560
    %v4115 = vunpack.c.l.b16 %v2561
    %v4116 = vunpack.c.h.b16 %v2561
    %v4117 = vunpack.c.l.b16 %v2562
    %v4118 = vunpack.c.h.b16 %v2562
    %v4119 = vunpack.c.l.b16 %v2563
    %v4120 = vunpack.c.h.b16 %v2563
    %v4121 = vunpack.c.l.b16 %v2564
    %v4122 = vunpack.c.h.b16 %v2564
    %v4123 = vunpack.c.l.b16 %v2565
    %v4124 = vunpack.c.h.b16 %v2565
    %v4125 = vunpack.c.l.b16 %v2566
    %v4126 = vunpack.c.h.b16 %v2566
    %v4127 = vunpack.c.l.b16 %v2567
    %v4128 = vunpack.c.h.b16 %v2567
    %v4129 = vunpack.c.l.b16 %v2568
    %v4130 = vunpack.c.h.b16 %v2568
    %v4131 = vunpack.c.l.b16 %v2569
    %v4132 = vunpack.c.h.b16 %v2569
    %v4133 = vunpack.c.l.b16 %v2570
    %v4134 = vunpack.c.h.b16 %v2570
    %v4135 = vunpack.c.l.b16 %v2571
    %v4136 = vunpack.c.h.b16 %v2571
    %v4137 = vunpack.c.l.b16 %v2572
    %v4138 = vunpack.c.h.b16 %v2572
    %v4139 = vunpack.c.l.b16 %v2573
    %v4140 = vunpack.c.h.b16 %v2573
    %v4141 = vunpack.c.l.b16 %v2574
    %v4142 = vunpack.c.h.b16 %v2574
    %v4143 = vunpack.c.l.b16 %v2575
    %v4144 = vunpack.c.h.b16 %v2575
    %v4145 = vunpack.c.l.b16 %v2576
    %v4146 = vunpack.c.h.b16 %v2576
    %v4147 = vunpack.c.l.b16 %v2577
    %v4148 = vunpack.c.h.b16 %v2577
    %v4149 = vunpack.c.l.b16 %v2578
    %v4150 = vunpack.c.h.b16 %v2578
    %v4151 = vunpack.c.l.b16 %v2579
    %v4152 = vunpack.c.h.b16 %v2579
    %v4153 = vunpack.c.l.b16 %v2580
    %v4154 = vunpack.c.h.b16 %v2580
    %v4155 = vunpack.c.l.b16 %v2581
    %v4156 = vunpack.c.h.b16 %v2581
    %v4157 = vunpack.c.l.b16 %v2582
    %v4158 = vunpack.c.h.b16 %v2582
    %v4159 = vunpack.c.l.b16 %v2583
    %v4160 = vunpack.c.h.b16 %v2583
    %v4161 = vunpack.c.l.b16 %v2584
    %v4162 = vunpack.c.h.b16 %v2584
    %v4163 = vunpack.c.l.b16 %v2585
    %v4164 = vunpack.c.h.b16 %v2585
    %v4165 = vunpack.c.l.b16 %v2586
    %v4166 = vunpack.c.h.b16 %v2586
    %v4167 = vunpack.c.l.b16 %v2587
    %v4168 = vunpack.c.h.b16 %v2587
    %v4169 = vunpack.c.l.b16 %v2588
    %v4170 = vunpack.c.h.b16 %v2588
    %v4171 = vunpack.c.l.b16 %v2589
    %v4172 = vunpack.c.h.b16 %v2589
    %v4173 = vunpack.c.l.b16 %v2590
    %v4174 = vunpack.c.h.b16 %v2590
    %v4175 = vunpack.c.l.b16 %v2591
    %v4176 = vunpack.c.h.b16 %v2591
    %v4177 = vunpack.c.l.b16 %v2592
    %v4178 = vunpack.c.h.b16 %v2592
    %v4179 = vunpack.c.l.b16 %v2593
    %v4180 = vunpack.c.h.b16 %v2593
    %v4181 = vunpack.c.l.b16 %v2594
    %v4182 = vunpack.c.h.b16 %v2594
    %v4183 = vunpack.c.l.b16 %v2595
    %v4184 = vunpack.c.h.b16 %v2595
    %v4185 = vunpack.c.l.b16 %v2596
    %v4186 = vunpack.c.h.b16 %v2596
    %v4187 = vunpack.c.l.b16 %v2597
    %v4188 = vunpack.c.h.b16 %v2597
    %v4189 = vunpack.c.l.b16 %v2598
    %v4190 = vunpack.c.h.b16 %v2598
    %v4191 = vunpack.c.l.b16 %v2599
    %v4192 = vunpack.c.h.b16 %v2599
    %v4193 = vunpack.c.l.b16 %v2600
    %v4194 = vunpack.c.h.b16 %v2600
    %v4195 = vunpack.c.l.b16 %v2601
    %v4196 = vunpack.c.h.b16 %v2601
    %v4197 = vunpack.c.l.b16 %v2602
    %v4198 = vunpack.c.h.b16 %v2602
    %v4199 = vunpack.c.l.b16 %v2603
    %v4200 = vunpack.c.h.b16 %v2603
    %v4201 = vunpack.c.l.b16 %v2604
    %v4202 = vunpack.c.h.b16 %v2604
    %v4203 = vunpack.c.l.b16 %v2605
    %v4204 = vunpack.c.h.b16 %v2605
    %v4205 = vunpack.c.l.b16 %v2606
    %v4206 = vunpack.c.h.b16 %v2606
    %v4207 = vunpack.c.l.b16 %v2607
    %v4208 = vunpack.c.h.b16 %v2607
    %v4209 = vunpack.c.l.b16 %v2608
    %v4210 = vunpack.c.h.b16 %v2608
    %v4211 = vunpack.c.l.b16 %v2609
    %v4212 = vunpack.c.h.b16 %v2609
    %v4213 = vunpack.c.l.b16 %v2610
    %v4214 = vunpack.c.h.b16 %v2610
    %v4215 = vunpack.c.l.b16 %v2611
    %v4216 = vunpack.c.h.b16 %v2611
    %v4217 = vunpack.c.l.b16 %v2612
    %v4218 = vunpack.c.h.b16 %v2612
    %v4219 = vunpack.c.l.b16 %v2613
    %v4220 = vunpack.c.h.b16 %v2613
    %v4221 = vunpack.c.l.b16 %v2614
    %v4222 = vunpack.c.h.b16 %v2614
    %v4223 = vunpack.c.l.b16 %v2615
    %v4224 = vunpack.c.h.b16 %v2615
    %v4225 = vunpack.c.l.b16 %v2616
    %v4226 = vunpack.c.h.b16 %v2616
    %v4227 = vunpack.c.l.b16 %v2617
    %v4228 = vunpack.c.h.b16 %v2617
    %v4229 = vunpack.c.l.b16 %v2618
    %v4230 = vunpack.c.h.b16 %v2618
    %v4231 = vunpack.c.l.b16 %v2619
    %v4232 = vunpack.c.h.b16 %v2619
    %v4233 = vunpack.c.l.b16 %v2620
    %v4234 = vunpack.c.h.b16 %v2620
    %v4235 = vunpack.c.l.b16 %v2621
    %v4236 = vunpack.c.h.b16 %v2621
    %v4237 = vunpack.c.l.b16 %v2622
    %v4238 = vunpack.c.h.b16 %v2622
    %v4239 = vunpack.c.l.b16 %v2623
    %v4240 = vunpack.c.h.b16 %v2623
    %v4241 = vunpack.c.l.b16 %v2624
    %v4242 = vunpack.c.h.b16 %v2624
    %v4243 = vunpack.c.l.b16 %v2625
    %v4244 = vunpack.c.h.b16 %v2625
    %v4245 = vunpack.c.l.b16 %v2626
    %v4246 = vunpack.c.h.b16 %v2626
    %v4247 = vunpack.c.l.b16 %v2627
    %v4248 = vunpack.c.h.b16 %v2627
    %v4249 = vunpack.c.l.b16 %v2628
    %v4250 = vunpack.c.h.b16 %v2628
    %v4251 = vunpack.c.l.b16 %v2629
    %v4252 = vunpack.c.h.b16 %v2629
    %v4253 = vunpack.c.l.b16 %v2630
    %v4254 = vunpack.c.h.b16 %v2630
    %v4255 = vunpack.c.l.b16 %v2631
    %v4256 = vunpack.c.h.b16 %v2631
    %v4257 = vunpack.c.l.b16 %v2632
    %v4258 = vunpack.c.h.b16 %v2632
    %v4259 = vunpack.c.l.b16 %v2633
    %v4260 = vunpack.c.h.b16 %v2633
    %v4261 = vunpack.c.l.b16 %v2634
    %v4262 = vunpack.c.h.b16 %v2634
    %v4263 = vunpack.c.l.b16 %v2635
    %v4264 = vunpack.c.h.b16 %v2635
    %v4265 = vunpack.c.l.b16 %v2636
    %v4266 = vunpack.c.h.b16 %v2636
    %v4267 = vunpack.c.l.b16 %v2637
    %v4268 = vunpack.c.h.b16 %v2637
    %v4269 = vunpack.c.l.b16 %v2638
    %v4270 = vunpack.c.h.b16 %v2638
    %v4271 = vunpack.c.l.b16 %v2639
    %v4272 = vunpack.c.h.b16 %v2639
    %v4273 = vunpack.c.l.b16 %v2640
    %v4274 = vunpack.c.h.b16 %v2640
    %v4275 = vunpack.c.l.b16 %v2641
    %v4276 = vunpack.c.h.b16 %v2641
    %v4277 = vunpack.c.l.b16 %v2642
    %v4278 = vunpack.c.h.b16 %v2642
    %v4279 = vunpack.c.l.b16 %v2643
    %v4280 = vunpack.c.h.b16 %v2643
    %v4281 = vunpack.c.l.b16 %v2644
    %v4282 = vunpack.c.h.b16 %v2644
    %v4283 = vunpack.c.l.b16 %v2645
    %v4284 = vunpack.c.h.b16 %v2645
    %v4285 = vunpack.c.l.b16 %v2646
    %v4286 = vunpack.c.h.b16 %v2646
    %v4287 = vunpack.c.l.b16 %v2647
    %v4288 = vunpack.c.h.b16 %v2647
    %v4289 = vunpack.c.l.b16 %v2648
    %v4290 = vunpack.c.h.b16 %v2648
    %v4291 = vunpack.c.l.b16 %v2649
    %v4292 = vunpack.c.h.b16 %v2649
    %v4293 = vunpack.c.l.b16 %v2650
    %v4294 = vunpack.c.h.b16 %v2650
    %v4295 = vunpack.c.l.b16 %v2651
    %v4296 = vunpack.c.h.b16 %v2651
    %v4297 = vunpack.c.l.b16 %v2652
    %v4298 = vunpack.c.h.b16 %v2652
    %v4299 = vunpack.c.l.b16 %v2653
    %v4300 = vunpack.c.h.b16 %v2653
    %v4301 = vunpack.c.l.b16 %v2654
    %v4302 = vunpack.c.h.b16 %v2654
    %v4303 = vunpack.c.l.b16 %v2655
    %v4304 = vunpack.c.h.b16 %v2655
    %v4305 = vunpack.c.l.b16 %v2656
    %v4306 = vunpack.c.h.b16 %v2656
    %v4307 = vunpack.c.l.b16 %v2657
    %v4308 = vunpack.c.h.b16 %v2657
    %v4309 = vunpack.c.l.b16 %v2658
    %v4310 = vunpack.c.h.b16 %v2658
    %v4311 = vunpack.c.l.b16 %v2659
    %v4312 = vunpack.c.h.b16 %v2659
    %v4313 = vunpack.c.l.b16 %v2660
    %v4314 = vunpack.c.h.b16 %v2660
    %v4315 = vunpack.c.l.b16 %v2661
    %v4316 = vunpack.c.h.b16 %v2661
    %v4317 = vunpack.c.l.b16 %v2662
    %v4318 = vunpack.c.h.b16 %v2662
    %v4319 = vunpack.c.l.b16 %v2663
    %v4320 = vunpack.c.h.b16 %v2663
    %v4321 = vunpack.c.l.b16 %v2664
    %v4322 = vunpack.c.h.b16 %v2664
    %v4323 = vunpack.c.l.b16 %v2665
    %v4324 = vunpack.c.h.b16 %v2665
    %v4325 = vunpack.c.l.b16 %v2666
    %v4326 = vunpack.c.h.b16 %v2666
    %v4327 = vunpack.c.l.b16 %v2667
    %v4328 = vunpack.c.h.b16 %v2667
    %v4329 = vunpack.c.l.b16 %v2668
    %v4330 = vunpack.c.h.b16 %v2668
    %v4331 = vunpack.c.l.b16 %v2669
    %v4332 = vunpack.c.h.b16 %v2669
    %v4333 = vunpack.c.l.b16 %v2670
    %v4334 = vunpack.c.h.b16 %v2670
    %v4335 = vunpack.c.l.b16 %v2671
    %v4336 = vunpack.c.h.b16 %v2671
    %v4337 = vunpack.c.l.b16 %v2672
    %v4338 = vunpack.c.h.b16 %v2672
    %v4339 = vunpack.c.l.b16 %v2673
    %v4340 = vunpack.c.h.b16 %v2673
    %v4341 = vunpack.c.l.b16 %v2674
    %v4342 = vunpack.c.h.b16 %v2674
    %v4343 = vunpack.c.l.b16 %v2675
    %v4344 = vunpack.c.h.b16 %v2675
    %v4345 = vunpack.c.l.b16 %v2676
    %v4346 = vunpack.c.h.b16 %v2676
    %v4347 = vunpack.c.l.b16 %v2677
    %v4348 = vunpack.c.h.b16 %v2677
    %v4349 = vunpack.c.l.b16 %v2678
    %v4350 = vunpack.c.h.b16 %v2678
    %v4351 = vunpack.c.l.b16 %v2679
    %v4352 = vunpack.c.h.b16 %v2679
    %v4353 = vunpack.c.l.b16 %v2680
    %v4354 = vunpack.c.h.b16 %v2680
    %v4355 = vunpack.c.l.b16 %v2681
    %v4356 = vunpack.c.h.b16 %v2681
    %v4357 = vunpack.c.l.b16 %v2682
    %v4358 = vunpack.c.h.b16 %v2682
    %v4359 = vunpack.c.l.b16 %v2683
    %v4360 = vunpack.c.h.b16 %v2683
    %v4361 = vunpack.c.l.b16 %v2684
    %v4362 = vunpack.c.h.b16 %v2684
    %v4363 = vunpack.c.l.b16 %v2685
    %v4364 = vunpack.c.h.b16 %v2685
    %v4365 = vunpack.c.l.b16 %v2686
    %v4366 = vunpack.c.h.b16 %v2686
    %v4367 = vunpack.c.l.b16 %v2687
    %v4368 = vunpack.c.h.b16 %v2687
    %v4369 = vunpack.c.l.b16 %v2688
    %v4370 = vunpack.c.h.b16 %v2688
    %v4371 = vunpack.c.l.b16 %v2689
    %v4372 = vunpack.c.h.b16 %v2689
    %v4373 = vunpack.c.l.b16 %v2690
    %v4374 = vunpack.c.h.b16 %v2690
    %v4375 = vunpack.c.l.b16 %v2691
    %v4376 = vunpack.c.h.b16 %v2691
    %v4377 = vunpack.c.l.b16 %v2692
    %v4378 = vunpack.c.h.b16 %v2692
    %v4379 = vunpack.c.l.b16 %v2693
    %v4380 = vunpack.c.h.b16 %v2693
    %v4381 = vunpack.c.l.b16 %v2694
    %v4382 = vunpack.c.h.b16 %v2694
    %v4383 = vunpack.c.l.b16 %v2695
    %v4384 = vunpack.c.h.b16 %v2695
    %v4385 = vunpack.c.l.b16 %v2696
    %v4386 = vunpack.c.h.b16 %v2696
    %v4387 = vunpack.c.l.b16 %v2697
    %v4388 = vunpack.c.h.b16 %v2697
    %v4389 = vunpack.c.l.b16 %v2698
    %v4390 = vunpack.c.h.b16 %v2698
    %v4391 = vunpack.c.l.b16 %v2699
    %v4392 = vunpack.c.h.b16 %v2699
    %v4393 = vunpack.c.l.b16 %v2700
    %v4394 = vunpack.c.h.b16 %v2700
    %v4395 = vunpack.c.l.b16 %v2701
    %v4396 = vunpack.c.h.b16 %v2701
    %v4397 = vunpack.c.l.b16 %v2702
    %v4398 = vunpack.c.h.b16 %v2702
    %v4399 = vunpack.c.l.b16 %v2703
    %v4400 = vunpack.c.h.b16 %v2703
    %v4401 = vunpack.c.l.b16 %v2704
    %v4402 = vunpack.c.h.b16 %v2704
    %v4403 = vunpack.c.l.b16 %v2705
    %v4404 = vunpack.c.h.b16 %v2705
    %v4405 = vunpack.c.l.b16 %v2706
    %v4406 = vunpack.c.h.b16 %v2706
    %v4407 = vunpack.c.l.b16 %v2707
    %v4408 = vunpack.c.h.b16 %v2707
    %v4409 = vunpack.c.l.b16 %v2708
    %v4410 = vunpack.c.h.b16 %v2708
    %v4411 = vunpack.c.l.b16 %v2709
    %v4412 = vunpack.c.h.b16 %v2709
    %v4413 = vunpack.c.l.b16 %v2710
    %v4414 = vunpack.c.h.b16 %v2710
    %v4415 = vunpack.c.l.b16 %v2711
    %v4416 = vunpack.c.h.b16 %v2711
    %v4417 = vunpack.c.l.b16 %v2712
    %v4418 = vunpack.c.h.b16 %v2712
    %v4419 = vunpack.c.l.b16 %v2713
    %v4420 = vunpack.c.h.b16 %v2713
    %v4421 = vunpack.c.l.b16 %v2714
    %v4422 = vunpack.c.h.b16 %v2714
    %v4423 = vunpack.c.l.b16 %v2715
    %v4424 = vunpack.c.h.b16 %v2715
    %v4425 = vunpack.c.l.b16 %v2716
    %v4426 = vunpack.c.h.b16 %v2716
    %v4427 = vunpack.c.l.b16 %v2717
    %v4428 = vunpack.c.h.b16 %v2717
    %v4429 = vunpack.c.l.b16 %v2718
    %v4430 = vunpack.c.h.b16 %v2718
    %v4431 = vunpack.c.l.b16 %v2719
    %v4432 = vunpack.c.h.b16 %v2719
    %v4433 = vunpack.c.l.b16 %v2720
    %v4434 = vunpack.c.h.b16 %v2720
    %v4435 = vunpack.c.l.b16 %v2721
    %v4436 = vunpack.c.h.b16 %v2721
    %v4437 = vunpack.c.l.b16 %v2722
    %v4438 = vunpack.c.h.b16 %v2722
    %v4439 = vunpack.c.l.b16 %v2723
    %v4440 = vunpack.c.h.b16 %v2723
    %v4441 = vunpack.c.l.b16 %v2724
    %v4442 = vunpack.c.h.b16 %v2724
    %v4443 = vunpack.c.l.b16 %v2725
    %v4444 = vunpack.c.h.b16 %v2725
    %v4445 = vunpack.c.l.b16 %v2726
    %v4446 = vunpack.c.h.b16 %v2726
    %v4447 = vunpack.c.l.b16 %v2727
    %v4448 = vunpack.c.h.b16 %v2727
    %v4449 = vunpack.c.l.b16 %v2728
    %v4450 = vunpack.c.h.b16 %v2728
    %v4451 = vunpack.c.l.b16 %v2729
    %v4452 = vunpack.c.h.b16 %v2729
    %v4453 = vunpack.c.l.b16 %v2730
    %v4454 = vunpack.c.h.b16 %v2730
    %v4455 = vunpack.c.l.b16 %v2731
    %v4456 = vunpack.c.h.b16 %v2731
    %v4457 = vunpack.c.l.b16 %v2732
    %v4458 = vunpack.c.h.b16 %v2732
    %v4459 = vunpack.c.l.b16 %v2733
    %v4460 = vunpack.c.h.b16 %v2733
    %v4461 = vunpack.c.l.b16 %v2734
    %v4462 = vunpack.c.h.b16 %v2734
    %v4463 = vunpack.c.l.b16 %v2735
    %v4464 = vunpack.c.h.b16 %v2735
    %v4465 = vunpack.c.l.b16 %v2736
    %v4466 = vunpack.c.h.b16 %v2736
    %v4467 = vunpack.c.l.b16 %v2737
    %v4468 = vunpack.c.h.b16 %v2737
    %v4469 = vunpack.c.l.b16 %v2738
    %v4470 = vunpack.c.h.b16 %v2738
    %v4471 = vunpack.c.l.b16 %v2739
    %v4472 = vunpack.c.h.b16 %v2739
    %v4473 = vunpack.c.l.b16 %v2740
    %v4474 = vunpack.c.h.b16 %v2740
    %v4475 = vunpack.c.l.b16 %v2741
    %v4476 = vunpack.c.h.b16 %v2741
    %v4477 = vunpack.c.l.b16 %v2742
    %v4478 = vunpack.c.h.b16 %v2742
    %v4479 = vunpack.c.l.b16 %v2743
    %v4480 = vunpack.c.h.b16 %v2743
    %v4481 = vunpack.c.l.b16 %v2744
    %v4482 = vunpack.c.h.b16 %v2744
    %v4483 = vunpack.c.l.b16 %v2745
    %v4484 = vunpack.c.h.b16 %v2745
    %v4485 = vunpack.c.l.b16 %v2746
    %v4486 = vunpack.c.h.b16 %v2746
    %v4487 = vunpack.c.l.b16 %v2747
    %v4488 = vunpack.c.h.b16 %v2747
    %v4489 = vunpack.c.l.b16 %v2748
    %v4490 = vunpack.c.h.b16 %v2748
    %v4491 = vunpack.c.l.b16 %v2749
    %v4492 = vunpack.c.h.b16 %v2749
    %v4493 = vunpack.c.l.b16 %v2750
    %v4494 = vunpack.c.h.b16 %v2750
    %v4495 = vunpack.c.l.b16 %v2751
    %v4496 = vunpack.c.h.b16 %v2751
    %v4497 = vunpack.c.l.b16 %v2752
    %v4498 = vunpack.c.h.b16 %v2752
    %v4499 = vunpack.c.l.b16 %v2753
    %v4500 = vunpack.c.h.b16 %v2753
    %v4501 = vunpack.c.l.b16 %v2754
    %v4502 = vunpack.c.h.b16 %v2754
    %v4503 = vunpack.c.l.b16 %v2755
    %v4504 = vunpack.c.h.b16 %v2755
    %v4505 = vunpack.c.l.b16 %v2756
    %v4506 = vunpack.c.h.b16 %v2756
    %v4507 = vunpack.c.l.b16 %v2757
    %v4508 = vunpack.c.h.b16 %v2757
    %v4509 = vunpack.c.l.b16 %v2758
    %v4510 = vunpack.c.h.b16 %v2758
    %v4511 = vunpack.c.l.b16 %v2759
    %v4512 = vunpack.c.h.b16 %v2759
    %v4513 = vunpack.c.l.b16 %v2760
    %v4514 = vunpack.c.h.b16 %v2760
    %v4515 = vunpack.c.l.b16 %v2761
    %v4516 = vunpack.c.h.b16 %v2761
    %v4517 = vunpack.c.l.b16 %v2762
    %v4518 = vunpack.c.h.b16 %v2762
    %v4519 = vunpack.c.l.b16 %v2763
    %v4520 = vunpack.c.h.b16 %v2763
    %v4521 = vunpack.c.l.b16 %v2764
    %v4522 = vunpack.c.h.b16 %v2764
    %v4523 = vunpack.c.l.b16 %v2765
    %v4524 = vunpack.c.h.b16 %v2765
    %v4525 = vunpack.c.l.b16 %v2766
    %v4526 = vunpack.c.h.b16 %v2766
    %v4527 = vunpack.c.l.b16 %v2767
    %v4528 = vunpack.c.h.b16 %v2767
    %v4529 = vunpack.c.l.b16 %v2768
    %v4530 = vunpack.c.h.b16 %v2768
    %v4531 = vunpack.c.l.b16 %v2769
    %v4532 = vunpack.c.h.b16 %v2769
    %v4533 = vunpack.c.l.b16 %v2770
    %v4534 = vunpack.c.h.b16 %v2770
    %v4535 = vunpack.c.l.b16 %v2771
    %v4536 = vunpack.c.h.b16 %v2771
    %v4537 = vunpack.c.l.b16 %v2772
    %v4538 = vunpack.c.h.b16 %v2772
    %v4539 = vunpack.c.l.b16 %v2773
    %v4540 = vunpack.c.h.b16 %v2773
    %v4541 = vunpack.c.l.b16 %v2774
    %v4542 = vunpack.c.h.b16 %v2774
    %v4543 = vunpack.c.l.b16 %v2775
    %v4544 = vunpack.c.h.b16 %v2775
    %v4545 = vunpack.c.l.b16 %v2776
    %v4546 = vunpack.c.h.b16 %v2776
    %v4547 = vunpack.c.l.b16 %v2777
    %v4548 = vunpack.c.h.b16 %v2777
    %v4549 = vunpack.c.l.b16 %v2778
    %v4550 = vunpack.c.h.b16 %v2778
    %v4551 = vunpack.c.l.b16 %v2779
    %v4552 = vunpack.c.h.b16 %v2779
    %v4553 = vunpack.c.l.b16 %v2780
    %v4554 = vunpack.c.h.b16 %v2780
    %v4555 = vunpack.c.l.b16 %v2781
    %v4556 = vunpack.c.h.b16 %v2781
    %v4557 = vunpack.c.l.b16 %v2782
    %v4558 = vunpack.c.h.b16 %v2782
    %v4559 = vunpack.c.l.b16 %v2783
    %v4560 = vunpack.c.h.b16 %v2783
    %v4561 = vunpack.c.l.b16 %v2784
    %v4562 = vunpack.c.h.b16 %v2784
    %v4563 = vunpack.c.l.b16 %v2785
    %v4564 = vunpack.c.h.b16 %v2785
    %v4565 = vunpack.c.l.b16 %v2786
    %v4566 = vunpack.c.h.b16 %v2786
    %v4567 = vunpack.c.l.b16 %v2787
    %v4568 = vunpack.c.h.b16 %v2787
    %v4569 = vunpack.c.l.b16 %v2788
    %v4570 = vunpack.c.h.b16 %v2788
    %v4571 = vunpack.c.l.b16 %v2789
    %v4572 = vunpack.c.h.b16 %v2789
    %v4573 = vunpack.c.l.b16 %v2790
    %v4574 = vunpack.c.h.b16 %v2790
    %v4575 = vunpack.c.l.b16 %v2791
    %v4576 = vunpack.c.h.b16 %v2791
    %v4577 = vunpack.c.l.b16 %v2792
    %v4578 = vunpack.c.h.b16 %v2792
    %v4579 = vunpack.c.l.b16 %v2793
    %v4580 = vunpack.c.h.b16 %v2793
    %v4581 = vunpack.c.l.b16 %v2794
    %v4582 = vunpack.c.h.b16 %v2794
    %v4583 = vunpack.c.l.b16 %v2795
    %v4584 = vunpack.c.h.b16 %v2795
    %v4585 = vunpack.c.l.b16 %v2796
    %v4586 = vunpack.c.h.b16 %v2796
    %v4587 = vunpack.c.l.b16 %v2797
    %v4588 = vunpack.c.h.b16 %v2797
    %v4589 = vunpack.c.l.b16 %v2798
    %v4590 = vunpack.c.h.b16 %v2798
    %v4591 = vunpack.c.l.b16 %v2799
    %v4592 = vunpack.c.h.b16 %v2799
    %v4593 = vunpack.c.l.b16 %v2800
    %v4594 = vunpack.c.h.b16 %v2800
    %v4595 = vunpack.c.l.b16 %v2801
    %v4596 = vunpack.c.h.b16 %v2801
    %v4597 = vunpack.c.l.b16 %v2802
    %v4598 = vunpack.c.h.b16 %v2802
    %v4599 = vunpack.c.l.b16 %v2803
    %v4600 = vunpack.c.h.b16 %v2803
    %v4601 = vunpack.c.l.b16 %v2804
    %v4602 = vunpack.c.h.b16 %v2804
    %v4603 = vunpack.c.l.b16 %v2805
    %v4604 = vunpack.c.h.b16 %v2805
    %v4605 = vunpack.c.l.b16 %v2806
    %v4606 = vunpack.c.h.b16 %v2806
    %v4607 = vunpack.c.l.b16 %v2807
    %v4608 = vunpack.c.h.b16 %v2807
    %v4609 = vunpack.c.l.b16 %v2808
    %v4610 = vunpack.c.h.b16 %v2808
    %v4611 = vunpack.c.l.b16 %v2809
    %v4612 = vunpack.c.h.b16 %v2809
    %v4613 = vunpack.c.l.b16 %v2810
    %v4614 = vunpack.c.h.b16 %v2810
    %v4615 = vunpack.c.l.b16 %v2811
    %v4616 = vunpack.c.h.b16 %v2811
    %v4617 = vunpack.c.l.b16 %v2812
    %v4618 = vunpack.c.h.b16 %v2812
    %v4619 = vunpack.c.l.b16 %v2813
    %v4620 = vunpack.c.h.b16 %v2813
    %v4621 = vunpack.c.l.b16 %v2814
    %v4622 = vunpack.c.h.b16 %v2814
    %v4623 = vunpack.c.l.b16 %v2815
    %v4624 = vunpack.c.h.b16 %v2815
    %v4625 = vunpack.c.l.b16 %v2816
    %v4626 = vunpack.c.h.b16 %v2816
    %v4627 = vunpack.c.l.b16 %v2817
    %v4628 = vunpack.c.h.b16 %v2817
    %v4629 = vunpack.c.l.b16 %v2818
    %v4630 = vunpack.c.h.b16 %v2818
    %v4631 = vunpack.c.l.b16 %v2819
    %v4632 = vunpack.c.h.b16 %v2819
    %v4633 = vunpack.c.l.b16 %v2820
    %v4634 = vunpack.c.h.b16 %v2820
    %v4635 = vunpack.c.l.b16 %v2821
    %v4636 = vunpack.c.h.b16 %v2821
    %v4637 = vunpack.c.l.b16 %v2822
    %v4638 = vunpack.c.h.b16 %v2822
    %v4639 = vunpack.c.l.b16 %v2823
    %v4640 = vunpack.c.h.b16 %v2823
    %v4641 = vunpack.c.l.b16 %v2824
    %v4642 = vunpack.c.h.b16 %v2824
    %v4643 = vunpack.c.l.b16 %v2825
    %v4644 = vunpack.c.h.b16 %v2825
    %v4645 = vunpack.c.l.b16 %v2826
    %v4646 = vunpack.c.h.b16 %v2826
    %v4647 = vunpack.c.l.b16 %v2827
    %v4648 = vunpack.c.h.b16 %v2827
    %v4649 = vunpack.c.l.b16 %v2828
    %v4650 = vunpack.c.h.b16 %v2828
    %v4651 = vunpack.c.l.b16 %v2829
    %v4652 = vunpack.c.h.b16 %v2829
    %v4653 = vunpack.c.l.b16 %v2830
    %v4654 = vunpack.c.h.b16 %v2830
    %v4655 = vunpack.c.l.b16 %v2831
    %v4656 = vunpack.c.h.b16 %v2831
    %v4657 = vunpack.c.l.b16 %v2832
    %v4658 = vunpack.c.h.b16 %v2832
    %v4659 = vunpack.c.l.b16 %v2833
    %v4660 = vunpack.c.h.b16 %v2833
    %v4661 = vunpack.c.l.b16 %v2834
    %v4662 = vunpack.c.h.b16 %v2834
    %v4663 = vunpack.c.l.b16 %v2835
    %v4664 = vunpack.c.h.b16 %v2835
    %v4665 = vunpack.c.l.b16 %v2836
    %v4666 = vunpack.c.h.b16 %v2836
    %v4667 = vunpack.c.l.b16 %v2837
    %v4668 = vunpack.c.h.b16 %v2837
    %v4669 = vunpack.c.l.b16 %v2838
    %v4670 = vunpack.c.h.b16 %v2838
    %v4671 = vunpack.c.l.b16 %v2839
    %v4672 = vunpack.c.h.b16 %v2839
    %v4673 = vunpack.c.l.b16 %v2840
    %v4674 = vunpack.c.h.b16 %v2840
    %v4675 = vunpack.c.l.b16 %v2841
    %v4676 = vunpack.c.h.b16 %v2841
    %v4677 = vunpack.c.l.b16 %v2842
    %v4678 = vunpack.c.h.b16 %v2842
    %v4679 = vunpack.c.l.b16 %v2843
    %v4680 = vunpack.c.h.b16 %v2843
    %v4681 = vunpack.c.l.b16 %v2844
    %v4682 = vunpack.c.h.b16 %v2844
    %v4683 = vunpack.c.l.b16 %v2845
    %v4684 = vunpack.c.h.b16 %v2845
    %v4685 = vunpack.c.l.b16 %v2846
    %v4686 = vunpack.c.h.b16 %v2846
    %v4687 = vunpack.c.l.b16 %v2847
    %v4688 = vunpack.c.h.b16 %v2847
    %v4689 = vunpack.c.l.b16 %v2848
    %v4690 = vunpack.c.h.b16 %v2848
    %v4691 = vunpack.c.l.b16 %v2849
    %v4692 = vunpack.c.h.b16 %v2849
    %v4693 = vunpack.c.l.b16 %v2850
    %v4694 = vunpack.c.h.b16 %v2850
    %v4695 = vunpack.c.l.b16 %v2851
    %v4696 = vunpack.c.h.b16 %v2851
    %v4697 = vunpack.c.l.b16 %v2852
    %v4698 = vunpack.c.h.b16 %v2852
    %v4699 = vunpack.c.l.b16 %v2853
    %v4700 = vunpack.c.h.b16 %v2853
    %v4701 = vunpack.c.l.b16 %v2854
    %v4702 = vunpack.c.h.b16 %v2854
    %v4703 = vunpack.c.l.b16 %v2855
    %v4704 = vunpack.c.h.b16 %v2855
    %v4705 = vunpack.c.l.b16 %v2856
    %v4706 = vunpack.c.h.b16 %v2856
    %v4707 = vunpack.c.l.b16 %v2857
    %v4708 = vunpack.c.h.b16 %v2857
    %v4709 = vunpack.c.l.b16 %v2858
    %v4710 = vunpack.c.h.b16 %v2858
    %v4711 = vunpack.c.l.b16 %v2859
    %v4712 = vunpack.c.h.b16 %v2859
    %v4713 = vunpack.c.l.b16 %v2860
    %v4714 = vunpack.c.h.b16 %v2860
    %v4715 = vunpack.c.l.b16 %v2861
    %v4716 = vunpack.c.h.b16 %v2861
    %v4717 = vunpack.c.l.b16 %v2862
    %v4718 = vunpack.c.h.b16 %v2862
    %v4719 = vunpack.c.l.b16 %v2863
    %v4720 = vunpack.c.h.b16 %v2863
    %v4721 = vunpack.c.l.b16 %v2864
    %v4722 = vunpack.c.h.b16 %v2864
    %v4723 = vunpack.c.l.b16 %v2865
    %v4724 = vunpack.c.h.b16 %v2865
    %v4725 = vunpack.c.l.b16 %v2866
    %v4726 = vunpack.c.h.b16 %v2866
    %v4727 = vunpack.c.l.b16 %v2867
    %v4728 = vunpack.c.h.b16 %v2867
    %v4729 = vunpack.c.l.b16 %v2868
    %v4730 = vunpack.c.h.b16 %v2868
    %v4731 = vunpack.c.l.b16 %v2869
    %v4732 = vunpack.c.h.b16 %v2869
    %v4733 = vunpack.c.l.b16 %v2870
    %v4734 = vunpack.c.h.b16 %v2870
    %v4735 = vunpack.c.l.b16 %v2871
    %v4736 = vunpack.c.h.b16 %v2871
    %v4737 = vunpack.c.l.b16 %v2872
    %v4738 = vunpack.c.h.b16 %v2872
    %v4739 = vunpack.c.l.b16 %v2873
    %v4740 = vunpack.c.h.b16 %v2873
    %v4741 = vunpack.c.l.b16 %v2874
    %v4742 = vunpack.c.h.b16 %v2874
    %v4743 = vunpack.c.l.b16 %v2875
    %v4744 = vunpack.c.h.b16 %v2875
    %v4745 = vunpack.c.l.b16 %v2876
    %v4746 = vunpack.c.h.b16 %v2876
    %v4747 = vunpack.c.l.b16 %v2877
    %v4748 = vunpack.c.h.b16 %v2877
    %v4749 = vunpack.c.l.b16 %v2878
    %v4750 = vunpack.c.h.b16 %v2878
    %v4751 = vunpack.c.l.b16 %v2879
    %v4752 = vunpack.c.h.b16 %v2879
    %v4753 = vunpack.c.l.b16 %v2880
    %v4754 = vunpack.c.h.b16 %v2880
    %v4755 = vunpack.c.l.b16 %v2881
    %v4756 = vunpack.c.h.b16 %v2881
    %v4757 = vunpack.c.l.b16 %v2882
    %v4758 = vunpack.c.h.b16 %v2882
    %v4759 = vunpack.c.l.b16 %v2883
    %v4760 = vunpack.c.h.b16 %v2883
    %v4761 = vunpack.c.l.b16 %v2884
    %v4762 = vunpack.c.h.b16 %v2884
    %v4763 = vunpack.c.l.b16 %v2885
    %v4764 = vunpack.c.h.b16 %v2885
    %v4765 = vunpack.c.l.b16 %v2886
    %v4766 = vunpack.c.h.b16 %v2886
    %v4767 = vunpack.c.l.b16 %v2887
    %v4768 = vunpack.c.h.b16 %v2887
    %v4769 = vunpack.c.l.b16 %v2888
    %v4770 = vunpack.c.h.b16 %v2888
    %v4771 = vunpack.c.l.b16 %v2889
    %v4772 = vunpack.c.h.b16 %v2889
    %v4773 = vunpack.c.l.b16 %v2890
    %v4774 = vunpack.c.h.b16 %v2890
    %v4775 = vunpack.c.l.b16 %v2891
    %v4776 = vunpack.c.h.b16 %v2891
    %v4777 = vunpack.c.l.b16 %v2892
    %v4778 = vunpack.c.h.b16 %v2892
    %v4779 = vunpack.c.l.b16 %v2893
    %v4780 = vunpack.c.h.b16 %v2893
    %v4781 = vunpack.c.l.b16 %v2894
    %v4782 = vunpack.c.h.b16 %v2894
    %v4783 = vunpack.c.l.b16 %v2895
    %v4784 = vunpack.c.h.b16 %v2895
    %v4785 = vunpack.c.l.b16 %v2896
    %v4786 = vunpack.c.h.b16 %v2896
    %v4787 = vunpack.c.l.b16 %v2897
    %v4788 = vunpack.c.h.b16 %v2897
    %v4789 = vunpack.c.l.b16 %v2898
    %v4790 = vunpack.c.h.b16 %v2898
    %v4791 = vunpack.c.l.b16 %v2899
    %v4792 = vunpack.c.h.b16 %v2899
    %v4793 = vunpack.c.l.b16 %v2900
    %v4794 = vunpack.c.h.b16 %v2900
    %v4795 = vunpack.c.l.b16 %v2901
    %v4796 = vunpack.c.h.b16 %v2901
    %v4797 = vunpack.c.l.b16 %v2902
    %v4798 = vunpack.c.h.b16 %v2902
    %v4799 = vunpack.c.l.b16 %v2903
    %v4800 = vunpack.c.h.b16 %v2903
    %v4801 = vunpack.c.l.b16 %v2904
    %v4802 = vunpack.c.h.b16 %v2904
    %v4803 = vunpack.c.l.b16 %v2905
    %v4804 = vunpack.c.h.b16 %v2905
    %v4805 = vunpack.c.l.b16 %v2906
    %v4806 = vunpack.c.h.b16 %v2906
    %v4807 = vunpack.c.l.b16 %v2907
    %v4808 = vunpack.c.h.b16 %v2907
    %v4809 = vunpack.c.l.b16 %v2908
    %v4810 = vunpack.c.h.b16 %v2908
    %v4811 = vunpack.c.l.b16 %v2909
    %v4812 = vunpack.c.h.b16 %v2909
    %v4813 = vunpack.c.l.b16 %v2910
    %v4814 = vunpack.c.h.b16 %v2910
    %v4815 = vunpack.c.l.b16 %v2911
    %v4816 = vunpack.c.h.b16 %v2911
    %v4817 = vunpack.c.l.b16 %v2912
    %v4818 = vunpack.c.h.b16 %v2912
    %v4819 = vunpack.c.l.b16 %v2913
    %v4820 = vunpack.c.h.b16 %v2913
    %v4821 = vunpack.c.l.b16 %v2914
    %v4822 = vunpack.c.h.b16 %v2914
    %v4823 = vunpack.c.l.b16 %v2915
    %v4824 = vunpack.c.h.b16 %v2915
    %v4825 = vunpack.c.l.b16 %v2916
    %v4826 = vunpack.c.h.b16 %v2916
    %v4827 = vunpack.c.l.b16 %v2917
    %v4828 = vunpack.c.h.b16 %v2917
    %v4829 = vunpack.c.l.b16 %v2918
    %v4830 = vunpack.c.h.b16 %v2918
    %v4831 = vunpack.c.l.b16 %v2919
    %v4832 = vunpack.c.h.b16 %v2919
    %v4833 = vunpack.c.l.b16 %v2920
    %v4834 = vunpack.c.h.b16 %v2920
    %v4835 = vunpack.c.l.b16 %v2921
    %v4836 = vunpack.c.h.b16 %v2921
    %v4837 = vunpack.c.l.b16 %v2922
    %v4838 = vunpack.c.h.b16 %v2922
    %v4839 = vunpack.c.l.b16 %v2923
    %v4840 = vunpack.c.h.b16 %v2923
    %v4841 = vunpack.c.l.b16 %v2924
    %v4842 = vunpack.c.h.b16 %v2924
    %v4843 = vunpack.c.l.b16 %v2925
    %v4844 = vunpack.c.h.b16 %v2925
    %v4845 = vunpack.c.l.b16 %v2926
    %v4846 = vunpack.c.h.b16 %v2926
    %v4847 = vunpack.c.l.b16 %v2927
    %v4848 = vunpack.c.h.b16 %v2927
    %v4849 = vunpack.c.l.b16 %v2928
    %v4850 = vunpack.c.h.b16 %v2928
    %v4851 = vunpack.c.l.b16 %v2929
    %v4852 = vunpack.c.h.b16 %v2929
    %v4853 = vunpack.c.l.b16 %v2930
    %v4854 = vunpack.c.h.b16 %v2930
    %v4855 = vunpack.c.l.b16 %v2931
    %v4856 = vunpack.c.h.b16 %v2931
    %v4857 = vunpack.c.l.b16 %v2932
    %v4858 = vunpack.c.h.b16 %v2932
    %v4859 = vunpack.c.l.b16 %v2933
    %v4860 = vunpack.c.h.b16 %v2933
    %v4861 = vunpack.c.l.b16 %v2934
    %v4862 = vunpack.c.h.b16 %v2934
    %v4863 = vunpack.c.l.b16 %v2935
    %v4864 = vunpack.c.h.b16 %v2935
    %v4865 = vunpack.c.l.b16 %v2936
    %v4866 = vunpack.c.h.b16 %v2936
    %v4867 = vunpack.c.l.b16 %v2937
    %v4868 = vunpack.c.h.b16 %v2937
    %v4869 = vunpack.c.l.b16 %v2938
    %v4870 = vunpack.c.h.b16 %v2938
    %v4871 = vunpack.c.l.b16 %v2939
    %v4872 = vunpack.c.h.b16 %v2939
    %v4873 = vunpack.c.l.b16 %v2940
    %v4874 = vunpack.c.h.b16 %v2940
    %v4875 = vunpack.c.l.b16 %v2941
    %v4876 = vunpack.c.h.b16 %v2941
    %v4877 = vunpack.c.l.b16 %v2942
    %v4878 = vunpack.c.h.b16 %v2942
    %v4879 = vunpack.c.l.b16 %v2943
    %v4880 = vunpack.c.h.b16 %v2943
    %v4881 = vunpack.c.l.b16 %v2944
    %v4882 = vunpack.c.h.b16 %v2944
    %v4883 = vunpack.c.l.b16 %v2945
    %v4884 = vunpack.c.h.b16 %v2945
    %v4885 = vunpack.c.l.b16 %v2946
    %v4886 = vunpack.c.h.b16 %v2946
    %v4887 = vunpack.c.l.b16 %v2947
    %v4888 = vunpack.c.h.b16 %v2947
    %v4889 = vunpack.c.l.b16 %v2948
    %v4890 = vunpack.c.h.b16 %v2948
    %v4891 = vunpack.c.l.b16 %v2949
    %v4892 = vunpack.c.h.b16 %v2949
    %v4893 = vunpack.c.l.b16 %v2950
    %v4894 = vunpack.c.h.b16 %v2950
    %v4895 = vunpack.c.l.b16 %v2951
    %v4896 = vunpack.c.h.b16 %v2951
    %v4897 = vunpack.c.l.b16 %v2952
    %v4898 = vunpack.c.h.b16 %v2952
    %v4899 = vunpack.c.l.b16 %v2953
    %v4900 = vunpack.c.h.b16 %v2953
    %v4901 = vunpack.c.l.b16 %v2954
    %v4902 = vunpack.c.h.b16 %v2954
    %v4903 = vunpack.c.l.b16 %v2955
    %v4904 = vunpack.c.h.b16 %v2955
    %v4905 = vunpack.c.l.b16 %v2956
    %v4906 = vunpack.c.h.b16 %v2956
    %v4907 = vunpack.c.l.b16 %v2957
    %v4908 = vunpack.c.h.b16 %v2957
    %v4909 = vunpack.c.l.b16 %v2958
    %v4910 = vunpack.c.h.b16 %v2958
    %v4911 = vunpack.c.l.b16 %v2959
    %v4912 = vunpack.c.h.b16 %v2959
    %v4913 = vunpack.c.l.b16 %v2960
    %v4914 = vunpack.c.h.b16 %v2960
    %v4915 = vunpack.c.l.b16 %v2961
    %v4916 = vunpack.c.h.b16 %v2961
    %v4917 = vunpack.c.l.b16 %v2962
    %v4918 = vunpack.c.h.b16 %v2962
    %v4919 = vunpack.c.l.b16 %v2963
    %v4920 = vunpack.c.h.b16 %v2963
    %v4921 = vunpack.c.l.b16 %v2964
    %v4922 = vunpack.c.h.b16 %v2964
    %v4923 = vunpack.c.l.b16 %v2965
    %v4924 = vunpack.c.h.b16 %v2965
    %v4925 = vunpack.c.l.b16 %v2966
    %v4926 = vunpack.c.h.b16 %v2966
    %v4927 = vunpack.c.l.b16 %v2967
    %v4928 = vunpack.c.h.b16 %v2967
    %v4929 = vunpack.c.l.b16 %v2968
    %v4930 = vunpack.c.h.b16 %v2968
    %v4931 = vunpack.c.l.b16 %v2969
    %v4932 = vunpack.c.h.b16 %v2969
    %v4933 = vunpack.c.l.b16 %v2970
    %v4934 = vunpack.c.h.b16 %v2970
    %v4935 = vunpack.c.l.b16 %v2971
    %v4936 = vunpack.c.h.b16 %v2971
    %v4937 = vunpack.c.l.b16 %v2972
    %v4938 = vunpack.c.h.b16 %v2972
    %v4939 = vunpack.c.l.b16 %v2973
    %v4940 = vunpack.c.h.b16 %v2973
    %v4941 = vunpack.c.l.b16 %v2974
    %v4942 = vunpack.c.h.b16 %v2974
    %v4943 = vunpack.c.l.b16 %v2975
    %v4944 = vunpack.c.h.b16 %v2975
    %v4945 = vunpack.c.l.b16 %v2976
    %v4946 = vunpack.c.h.b16 %v2976
    %v4947 = vunpack.c.l.b16 %v2977
    %v4948 = vunpack.c.h.b16 %v2977
    %v4949 = vunpack.c.l.b16 %v2978
    %v4950 = vunpack.c.h.b16 %v2978
    %v4951 = vunpack.c.l.b16 %v2979
    %v4952 = vunpack.c.h.b16 %v2979
    %v4953 = vunpack.c.l.b16 %v2980
    %v4954 = vunpack.c.h.b16 %v2980
    %v4955 = vunpack.c.l.b16 %v2981
    %v4956 = vunpack.c.h.b16 %v2981
    %v4957 = vunpack.c.l.b16 %v2982
    %v4958 = vunpack.c.h.b16 %v2982
    %v4959 = vunpack.c.l.b16 %v2983
    %v4960 = vunpack.c.h.b16 %v2983
    %v4961 = vunpack.c.l.b16 %v2984
    %v4962 = vunpack.c.h.b16 %v2984
    %v4963 = vunpack.c.l.b16 %v2985
    %v4964 = vunpack.c.h.b16 %v2985
    %v4965 = vunpack.c.l.b16 %v2986
    %v4966 = vunpack.c.h.b16 %v2986
    %v4967 = vunpack.c.l.b16 %v2987
    %v4968 = vunpack.c.h.b16 %v2987
    %v4969 = vunpack.c.l.b16 %v2988
    %v4970 = vunpack.c.h.b16 %v2988
    %v4971 = vunpack.c.l.b16 %v2989
    %v4972 = vunpack.c.h.b16 %v2989
    %v4973 = vunpack.c.l.b16 %v2990
    %v4974 = vunpack.c.h.b16 %v2990
    %v4975 = vunpack.c.l.b16 %v2991
    %v4976 = vunpack.c.h.b16 %v2991
    %v4977 = vunpack.c.l.b16 %v2992
    %v4978 = vunpack.c.h.b16 %v2992
    %v4979 = vunpack.c.l.b16 %v2993
    %v4980 = vunpack.c.h.b16 %v2993
    %v4981 = vunpack.c.l.b16 %v2994
    %v4982 = vunpack.c.h.b16 %v2994
    %v4983 = vunpack.c.l.b16 %v2995
    %v4984 = vunpack.c.h.b16 %v2995
    %v4985 = vunpack.c.l.b16 %v2996
    %v4986 = vunpack.c.h.b16 %v2996
    %v4987 = vunpack.c.l.b16 %v2997
    %v4988 = vunpack.c.h.b16 %v2997
    %v4989 = vunpack.c.l.b16 %v2998
    %v4990 = vunpack.c.h.b16 %v2998
    %v4991 = vunpack.c.l.b16 %v2999
    %v4992 = vunpack.c.h.b16 %v2999
    %v4993 = vunpack.c.l.b16 %v3000
    %v4994 = vunpack.c.h.b16 %v3000
    %v4995 = vunpack.c.l.b16 %v3001
    %v4996 = vunpack.c.h.b16 %v3001
    %v4997 = vunpack.c.l.b16 %v3002
    %v4998 = vunpack.c.h.b16 %v3002
    %v4999 = vunpack.c.l.b16 %v3003
    %v5000 = vunpack.c.h.b16 %v3003
    %v5001 = vunpack.c.l.b16 %v3004
    %v5002 = vunpack.c.h.b16 %v3004
    %v5003 = vunpack.c.l.b16 %v3005
    %v5004 = vunpack.c.h.b16 %v3005
    %v5005 = vunpack.c.l.b16 %v3006
    %v5006 = vunpack.c.h.b16 %v3006
    %v5007 = vunpack.c.l.b16 %v3007
    %v5008 = vunpack.c.h.b16 %v3007
    %v5009 = vunpack.c.l.b16 %v3008
    %v5010 = vunpack.c.h.b16 %v3008
    %v5011 = vunpack.c.l.b16 %v3009
    %v5012 = vunpack.c.h.b16 %v3009
    %v5013 = vunpack.c.l.b16 %v3010
    %v5014 = vunpack.c.h.b16 %v3010
    %v5015 = vunpack.c.l.b16 %v3011
    %v5016 = vunpack.c.h.b16 %v3011
    %v5017 = vunpack.c.l.b16 %v3012
    %v5018 = vunpack.c.h.b16 %v3012
    %v5019 = vunpack.c.l.b16 %v3013
    %v5020 = vunpack.c.h.b16 %v3013
    %v5021 = vunpack.c.l.b16 %v3014
    %v5022 = vunpack.c.h.b16 %v3014
    %v5023 = vunpack.c.l.b16 %v3015
    %v5024 = vunpack.c.h.b16 %v3015
    %v5025 = vunpack.c.l.b16 %v3016
    %v5026 = vunpack.c.h.b16 %v3016
    %v5027 = vunpack.c.l.b16 %v3017
    %v5028 = vunpack.c.h.b16 %v3017
    %v5029 = vunpack.c.l.b16 %v3018
    %v5030 = vunpack.c.h.b16 %v3018
    %v5031 = vunpack.c.l.b16 %v3019
    %v5032 = vunpack.c.h.b16 %v3019
    %v5033 = vunpack.c.l.b16 %v3020
    %v5034 = vunpack.c.h.b16 %v3020
    %v5035 = vunpack.c.l.b16 %v3021
    %v5036 = vunpack.c.h.b16 %v3021
    %v5037 = vunpack.c.l.b16 %v3022
    %v5038 = vunpack.c.h.b16 %v3022
    %v5039 = vunpack.c.l.b16 %v3023
    %v5040 = vunpack.c.h.b16 %v3023
    %v5041 = vunpack.c.l.b16 %v3024
    %v5042 = vunpack.c.h.b16 %v3024
    %v5043 = vunpack.c.l.b16 %v3025
    %v5044 = vunpack.c.h.b16 %v3025
    %v5045 = vunpack.c.l.b16 %v3026
    %v5046 = vunpack.c.h.b16 %v3026
    %v5047 = vunpack.c.l.b16 %v3027
    %v5048 = vunpack.c.h.b16 %v3027
    %v5049 = vunpack.c.l.b16 %v3028
    %v5050 = vunpack.c.h.b16 %v3028
    %v5051 = vunpack.c.l.b16 %v3029
    %v5052 = vunpack.c.h.b16 %v3029
    %v5053 = vunpack.c.l.b16 %v3030
    %v5054 = vunpack.c.h.b16 %v3030
    %v5055 = vunpack.c.l.b16 %v3031
    %v5056 = vunpack.c.h.b16 %v3031
    %v5057 = vunpack.c.l.b16 %v3032
    %v5058 = vunpack.c.h.b16 %v3032
    %v5059 = vunpack.c.l.b16 %v3033
    %v5060 = vunpack.c.h.b16 %v3033
    %v5061 = vunpack.c.l.b16 %v3034
    %v5062 = vunpack.c.h.b16 %v3034
    %v5063 = vunpack.c.l.b16 %v3035
    %v5064 = vunpack.c.h.b16 %v3035
    %v5065 = vunpack.c.l.b16 %v3036
    %v5066 = vunpack.c.h.b16 %v3036
    %v5067 = vunpack.c.l.b16 %v3037
    %v5068 = vunpack.c.h.b16 %v3037
    %v5069 = vunpack.c.l.b16 %v3038
    %v5070 = vunpack.c.h.b16 %v3038
    %v5071 = vunpack.c.l.b16 %v3039
    %v5072 = vunpack.c.h.b16 %v3039
    %v5073 = vunpack.c.l.b16 %v3040
    %v5074 = vunpack.c.h.b16 %v3040
    %v5075 = vunpack.c.l.b16 %v3041
    %v5076 = vunpack.c.h.b16 %v3041
    %v5077 = vunpack.c.l.b16 %v3042
    %v5078 = vunpack.c.h.b16 %v3042
    %v5079 = vunpack.c.l.b16 %v3043
    %v5080 = vunpack.c.h.b16 %v3043
    %v5081 = vunpack.c.l.b16 %v3044
    %v5082 = vunpack.c.h.b16 %v3044
    %v5083 = vunpack.c.l.b16 %v3045
    %v5084 = vunpack.c.h.b16 %v3045
    %v5085 = vunpack.c.l.b16 %v3046
    %v5086 = vunpack.c.h.b16 %v3046
    %v5087 = vunpack.c.l.b16 %v3047
    %v5088 = vunpack.c.h.b16 %v3047
    %v5089 = vunpack.c.l.b16 %v3048
    %v5090 = vunpack.c.h.b16 %v3048
    %v5091 = vunpack.c.l.b16 %v3049
    %v5092 = vunpack.c.h.b16 %v3049
    %v5093 = vunpack.c.l.b16 %v3050
    %v5094 = vunpack.c.h.b16 %v3050
    %v5095 = vunpack.c.l.b16 %v3051
    %v5096 = vunpack.c.h.b16 %v3051
    %v5097 = vunpack.c.l.b16 %v3052
    %v5098 = vunpack.c.h.b16 %v3052
    %v5099 = vunpack.c.l.b16 %v3053
    %v5100 = vunpack.c.h.b16 %v3053
    %v5101 = vunpack.c.l.b16 %v3054
    %v5102 = vunpack.c.h.b16 %v3054
    %v5103 = vunpack.c.l.b16 %v3055
    %v5104 = vunpack.c.h.b16 %v3055
    %v5105 = vunpack.c.l.b16 %v3056
    %v5106 = vunpack.c.h.b16 %v3056
    %v5107 = vunpack.c.l.b16 %v3057
    %v5108 = vunpack.c.h.b16 %v3057
    %v5109 = vunpack.c.l.b16 %v3058
    %v5110 = vunpack.c.h.b16 %v3058
    %v5111 = vunpack.c.l.b16 %v3059
    %v5112 = vunpack.c.h.b16 %v3059
    %v5113 = vunpack.c.l.b16 %v3060
    %v5114 = vunpack.c.h.b16 %v3060
    %v5115 = vunpack.c.l.b16 %v3061
    %v5116 = vunpack.c.h.b16 %v3061
    %v5117 = vunpack.c.l.b16 %v3062
    %v5118 = vunpack.c.h.b16 %v3062
    %v5119 = vunpack.c.l.b16 %v3063
    %v5120 = vunpack.c.h.b16 %v3063
    %v5121 = vunpack.c.l.b16 %v3064
    %v5122 = vunpack.c.h.b16 %v3064
    %v5123 = vunpack.c.l.b16 %v3065
    %v5124 = vunpack.c.h.b16 %v3065
    %v5125 = vunpack.c.l.b16 %v3066
    %v5126 = vunpack.c.h.b16 %v3066
    %v5127 = vunpack.c.l.b16 %v3067
    %v5128 = vunpack.c.h.b16 %v3067
    %v5129 = vunpack.c.l.b16 %v3068
    %v5130 = vunpack.c.h.b16 %v3068
    %v5131 = vunpack.c.l.b16 %v3069
    %v5132 = vunpack.c.h.b16 %v3069
    %v5133 = vunpack.c.l.b16 %v3070
    %v5134 = vunpack.c.h.b16 %v3070
    %v5135 = vunpack.c.l.b16 %v3071
    %v5136 = vunpack.c.h.b16 %v3071
    %v5137 = vunpack.c.l.b16 %v3072
    %v5138 = vunpack.c.h.b16 %v3072
    %v5139 = vunpack.c.l.b16 %v3073
    %v5140 = vunpack.c.h.b16 %v3073
    %v5141 = vunpack.c.l.b16 %v3074
    %v5142 = vunpack.c.h.b16 %v3074
    %v5143 = vunpack.c.l.b16 %v3075
    %v5144 = vunpack.c.h.b16 %v3075
    %v5145 = vunpack.c.l.b16 %v3076
    %v5146 = vunpack.c.h.b16 %v3076
    %v5147 = vunpack.c.l.b16 %v3077
    %v5148 = vunpack.c.h.b16 %v3077
    %v5149 = vunpack.c.l.b16 %v3078
    %v5150 = vunpack.c.h.b16 %v3078
    %v5151 = vunpack.c.l.b16 %v3079
    %v5152 = vunpack.c.h.b16 %v3079
    %v5153 = vunpack.c.l.b16 %v3080
    %v5154 = vunpack.c.h.b16 %v3080
    %v5155 = vunpack.c.l.b16 %v3081
    %v5156 = vunpack.c.h.b16 %v3081
    %v5157 = vunpack.c.l.b16 %v3082
    %v5158 = vunpack.c.h.b16 %v3082
    %v5159 = vunpack.c.l.b16 %v3083
    %v5160 = vunpack.c.h.b16 %v3083
    %v5161 = vunpack.c.l.b16 %v3084
    %v5162 = vunpack.c.h.b16 %v3084
    %v5163 = vunpack.c.l.b16 %v3085
    %v5164 = vunpack.c.h.b16 %v3085
    %v5165 = vunpack.c.l.b16 %v3086
    %v5166 = vunpack.c.h.b16 %v3086
    %v5167 = vunpack.c.l.b16 %v3087
    %v5168 = vunpack.c.h.b16 %v3087
    %v5169 = vunpack.c.l.b16 %v3088
    %v5170 = vunpack.c.h.b16 %v3088
    %v5171 = vunpack.c.l.b16 %v3089
    %v5172 = vunpack.c.h.b16 %v3089
    %v5173 = vunpack.c.l.b16 %v3090
    %v5174 = vunpack.c.h.b16 %v3090
    %v5175 = vunpack.c.l.b16 %v3091
    %v5176 = vunpack.c.h.b16 %v3091
    %v5177 = vunpack.c.l.b16 %v3092
    %v5178 = vunpack.c.h.b16 %v3092
    %v5179 = vunpack.c.l.b16 %v3093
    %v5180 = vunpack.c.h.b16 %v3093
    %v5181 = vunpack.c.l.b16 %v3094
    %v5182 = vunpack.c.h.b16 %v3094
    %v5183 = vunpack.c.l.b16 %v3095
    %v5184 = vunpack.c.h.b16 %v3095
    %v5185 = vunpack.c.l.b16 %v3096
    %v5186 = vunpack.c.h.b16 %v3096
    %v5187 = vunpack.c.l.b16 %v3097
    %v5188 = vunpack.c.h.b16 %v3097
    %v5189 = vunpack.c.l.b16 %v3098
    %v5190 = vunpack.c.h.b16 %v3098
    %v5191 = vunpack.c.l.b16 %v3099
    %v5192 = vunpack.c.h.b16 %v3099
    %v5193 = vunpack.c.l.b16 %v3100
    %v5194 = vunpack.c.h.b16 %v3100
    %v5195 = vunpack.c.l.b16 %v3101
    %v5196 = vunpack.c.h.b16 %v3101
    %v5197 = vunpack.c.l.b16 %v3102
    %v5198 = vunpack.c.h.b16 %v3102
    %v5199 = vunpack.c.l.b16 %v3103
    %v5200 = vunpack.c.h.b16 %v3103
    %v5201 = vunpack.c.l.b16 %v3104
    %v5202 = vunpack.c.h.b16 %v3104
    %v5203 = vunpack.c.l.b16 %v3105
    %v5204 = vunpack.c.h.b16 %v3105
    %v5205 = vunpack.c.l.b16 %v3106
    %v5206 = vunpack.c.h.b16 %v3106
    %v5207 = vunpack.c.l.b16 %v3107
    %v5208 = vunpack.c.h.b16 %v3107
    %v5209 = vunpack.c.l.b16 %v3108
    %v5210 = vunpack.c.h.b16 %v3108
    %v5211 = vunpack.c.l.b16 %v3109
    %v5212 = vunpack.c.h.b16 %v3109
    %v5213 = vunpack.c.l.b16 %v3110
    %v5214 = vunpack.c.h.b16 %v3110
    %v5215 = vunpack.c.l.b16 %v3111
    %v5216 = vunpack.c.h.b16 %v3111
    %v5217 = vunpack.c.l.b16 %v3112
    %v5218 = vunpack.c.h.b16 %v3112
    %v5219 = vunpack.c.l.b16 %v3113
    %v5220 = vunpack.c.h.b16 %v3113
    %v5221 = vunpack.c.l.b16 %v3114
    %v5222 = vunpack.c.h.b16 %v3114
    %v5223 = vunpack.c.l.b16 %v3115
    %v5224 = vunpack.c.h.b16 %v3115
    %v5225 = vunpack.c.l.b16 %v3116
    %v5226 = vunpack.c.h.b16 %v3116
    %v5227 = vunpack.c.l.b16 %v3117
    %v5228 = vunpack.c.h.b16 %v3117
    %v5229 = vunpack.c.l.b16 %v3118
    %v5230 = vunpack.c.h.b16 %v3118
    %v5231 = vunpack.c.l.b16 %v3119
    %v5232 = vunpack.c.h.b16 %v3119
    %v5233 = vunpack.c.l.b16 %v3120
    %v5234 = vunpack.c.h.b16 %v3120
    %v5235 = vunpack.c.l.b16 %v3121
    %v5236 = vunpack.c.h.b16 %v3121
    %v5237 = vunpack.c.l.b16 %v3122
    %v5238 = vunpack.c.h.b16 %v3122
    %v5239 = vunpack.c.l.b16 %v3123
    %v5240 = vunpack.c.h.b16 %v3123
    %v5241 = vunpack.c.l.b16 %v3124
    %v5242 = vunpack.c.h.b16 %v3124
    %v5243 = vunpack.c.l.b16 %v3125
    %v5244 = vunpack.c.h.b16 %v3125
    %v5245 = vunpack.c.l.b16 %v3126
    %v5246 = vunpack.c.h.b16 %v3126
    %v5247 = vunpack.c.l.b16 %v3127
    %v5248 = vunpack.c.h.b16 %v3127
    %v5249 = vunpack.c.l.b16 %v3128
    %v5250 = vunpack.c.h.b16 %v3128
    %v5251 = vunpack.c.l.b16 %v3129
    %v5252 = vunpack.c.h.b16 %v3129
    %v5253 = vunpack.c.l.b16 %v3130
    %v5254 = vunpack.c.h.b16 %v3130
    %v5255 = vunpack.c.l.b16 %v3131
    %v5256 = vunpack.c.h.b16 %v3131
    %v5257 = vunpack.c.l.b16 %v3132
    %v5258 = vunpack.c.h.b16 %v3132
    %v5259 = vunpack.c.l.b16 %v3133
    %v5260 = vunpack.c.h.b16 %v3133
    %v5261 = vunpack.c.l.b16 %v3134
    %v5262 = vunpack.c.h.b16 %v3134
    %v5263 = vunpack.c.l.b16 %v3135
    %v5264 = vunpack.c.h.b16 %v3135
    %v5265 = vunpack.c.l.b16 %v3136
    %v5266 = vunpack.c.h.b16 %v3136
    %v5267 = vunpack.c.l.b16 %v3137
    %v5268 = vunpack.c.h.b16 %v3137
    %v5269 = vunpack.c.l.b16 %v3138
    %v5270 = vunpack.c.h.b16 %v3138
    %v5271 = vunpack.c.l.b16 %v3139
    %v5272 = vunpack.c.h.b16 %v3139
    %v5273 = vunpack.c.l.b16 %v3140
    %v5274 = vunpack.c.h.b16 %v3140
    %v5275 = vunpack.c.l.b16 %v3141
    %v5276 = vunpack.c.h.b16 %v3141
    %v5277 = vunpack.c.l.b16 %v3142
    %v5278 = vunpack.c.h.b16 %v3142
    %v5279 = vunpack.c.l.b16 %v3143
    %v5280 = vunpack.c.h.b16 %v3143
    %v5281 = vunpack.c.l.b16 %v3144
    %v5282 = vunpack.c.h.b16 %v3144
    %v5283 = vunpack.c.l.b16 %v3145
    %v5284 = vunpack.c.h.b16 %v3145
    %v5285 = vunpack.c.l.b16 %v3146
    %v5286 = vunpack.c.h.b16 %v3146
    %v5287 = vunpack.c.l.b16 %v3147
    %v5288 = vunpack.c.h.b16 %v3147
    %v5289 = vunpack.c.l.b16 %v3148
    %v5290 = vunpack.c.h.b16 %v3148
    %v5291 = vunpack.c.l.b16 %v3149
    %v5292 = vunpack.c.h.b16 %v3149
    %v5293 = vunpack.c.l.b16 %v3150
    %v5294 = vunpack.c.h.b16 %v3150
    %v5295 = vunpack.c.l.b16 %v3151
    %v5296 = vunpack.c.h.b16 %v3151
    %v5297 = vunpack.c.l.b16 %v3152
    %v5298 = vunpack.c.h.b16 %v3152
    %v5299 = vunpack.c.l.b16 %v3153
    %v5300 = vunpack.c.h.b16 %v3153
    %v5301 = vunpack.c.l.b16 %v3154
    %v5302 = vunpack.c.h.b16 %v3154
    %v5303 = vunpack.c.l.b16 %v3155
    %v5304 = vunpack.c.h.b16 %v3155
    %v5305 = vunpack.c.l.b16 %v3156
    %v5306 = vunpack.c.h.b16 %v3156
    %v5307 = vunpack.c.l.b16 %v3157
    %v5308 = vunpack.c.h.b16 %v3157
    %v5309 = vunpack.c.l.b16 %v3158
    %v5310 = vunpack.c.h.b16 %v3158
    %v5311 = vunpack.c.l.b16 %v3159
    %v5312 = vunpack.c.h.b16 %v3159
    %v5313 = vunpack.c.l.b16 %v3160
    %v5314 = vunpack.c.h.b16 %v3160
    %v5315 = vunpack.c.l.b16 %v3161
    %v5316 = vunpack.c.h.b16 %v3161
    %v5317 = vunpack.c.l.b16 %v3162
    %v5318 = vunpack.c.h.b16 %v3162
    %v5319 = vunpack.c.l.b16 %v3163
    %v5320 = vunpack.c.h.b16 %v3163
    %v5321 = vunpack.c.l.b16 %v3164
    %v5322 = vunpack.c.h.b16 %v3164
    %v5323 = vunpack.c.l.b16 %v3165
    %v5324 = vunpack.c.h.b16 %v3165
    %v5325 = vunpack.c.l.b16 %v3166
    %v5326 = vunpack.c.h.b16 %v3166
    %v5327 = vunpack.c.l.b16 %v3167
    %v5328 = vunpack.c.h.b16 %v3167
    %v5329 = vunpack.c.l.b16 %v3168
    %v5330 = vunpack.c.h.b16 %v3168
    %v5331 = vunpack.c.l.b16 %v3169
    %v5332 = vunpack.c.h.b16 %v3169
    %v5333 = vunpack.c.l.b16 %v3170
    %v5334 = vunpack.c.h.b16 %v3170
    %v5335 = vunpack.c.l.b16 %v3171
    %v5336 = vunpack.c.h.b16 %v3171
    %v5337 = vunpack.c.l.b16 %v3172
    %v5338 = vunpack.c.h.b16 %v3172
    %v5339 = vunpack.c.l.b16 %v3173
    %v5340 = vunpack.c.h.b16 %v3173
    %v5341 = vunpack.c.l.b16 %v3174
    %v5342 = vunpack.c.h.b16 %v3174
    %v5343 = vunpack.c.l.b16 %v3175
    %v5344 = vunpack.c.h.b16 %v3175
    %v5345 = vunpack.c.l.b16 %v3176
    %v5346 = vunpack.c.h.b16 %v3176
    %v5347 = vunpack.c.l.b16 %v3177
    %v5348 = vunpack.c.h.b16 %v3177
    %v5349 = vunpack.c.l.b16 %v3178
    %v5350 = vunpack.c.h.b16 %v3178
    %v5351 = vunpack.c.l.b16 %v3179
    %v5352 = vunpack.c.h.b16 %v3179
    %v5353 = vunpack.c.l.b16 %v3180
    %v5354 = vunpack.c.h.b16 %v3180
    %v5355 = vunpack.c.l.b16 %v3181
    %v5356 = vunpack.c.h.b16 %v3181
    %v5357 = vunpack.c.l.b16 %v3182
    %v5358 = vunpack.c.h.b16 %v3182
    %v5359 = vunpack.c.l.b16 %v3183
    %v5360 = vunpack.c.h.b16 %v3183
    %v5361 = vunpack.c.l.b16 %v3184
    %v5362 = vunpack.c.h.b16 %v3184
    %v5363 = vunpack.c.l.b16 %v3185
    %v5364 = vunpack.c.h.b16 %v3185
    %v5365 = vunpack.c.l.b16 %v3186
    %v5366 = vunpack.c.h.b16 %v3186
    %v5367 = vunpack.c.l.b16 %v3187
    %v5368 = vunpack.c.h.b16 %v3187
    %v5369 = vunpack.c.l.b16 %v3188
    %v5370 = vunpack.c.h.b16 %v3188
    %v5371 = vunpack.c.l.b16 %v3189
    %v5372 = vunpack.c.h.b16 %v3189
    %v5373 = vunpack.c.l.b16 %v3190
    %v5374 = vunpack.c.h.b16 %v3190
    %v5375 = vunpack.c.l.b16 %v3191
    %v5376 = vunpack.c.h.b16 %v3191
    %v5377 = vunpack.c.l.b16 %v3192
    %v5378 = vunpack.c.h.b16 %v3192
    %v5379 = vunpack.c.l.b16 %v3193
    %v5380 = vunpack.c.h.b16 %v3193
    %v5381 = vunpack.c.l.b16 %v3194
    %v5382 = vunpack.c.h.b16 %v3194
    %v5383 = vunpack.c.l.b16 %v3195
    %v5384 = vunpack.c.h.b16 %v3195
    %v5385 = vunpack.c.l.b16 %v3196
    %v5386 = vunpack.c.h.b16 %v3196
    %v5387 = vunpack.c.l.b16 %v3197
    %v5388 = vunpack.c.h.b16 %v3197
    %v5389 = vunpack.c.l.b16 %v3198
    %v5390 = vunpack.c.h.b16 %v3198
    %v5391 = vunpack.c.l.b16 %v3199
    %v5392 = vunpack.c.h.b16 %v3199
    %v5393 = vunpack.c.l.b16 %v3200
    %v5394 = vunpack.c.h.b16 %v3200
    %v5395 = vunpack.c.l.b16 %v3201
    %v5396 = vunpack.c.h.b16 %v3201
    %v5397 = vunpack.c.l.b16 %v3202
    %v5398 = vunpack.c.h.b16 %v3202
    %v5399 = vunpack.c.l.b16 %v3203
    %v5400 = vunpack.c.h.b16 %v3203
    %v5401 = vunpack.c.l.b16 %v3204
    %v5402 = vunpack.c.h.b16 %v3204
    %v5403 = vunpack.c.l.b16 %v3205
    %v5404 = vunpack.c.h.b16 %v3205
    %v5405 = vunpack.c.l.b16 %v3206
    %v5406 = vunpack.c.h.b16 %v3206
    %v5407 = vunpack.c.l.b16 %v3207
    %v5408 = vunpack.c.h.b16 %v3207
    %v5409 = vunpack.c.l.b16 %v3208
    %v5410 = vunpack.c.h.b16 %v3208
    %v5411 = vunpack.c.l.b16 %v3209
    %v5412 = vunpack.c.h.b16 %v3209
    %v5413 = vunpack.c.l.b16 %v3210
    %v5414 = vunpack.c.h.b16 %v3210
    %v5415 = vunpack.c.l.b16 %v3211
    %v5416 = vunpack.c.h.b16 %v3211
    %v5417 = vunpack.c.l.b16 %v3212
    %v5418 = vunpack.c.h.b16 %v3212
    %v5419 = vunpack.c.l.b16 %v3213
    %v5420 = vunpack.c.h.b16 %v3213
    %v5421 = vunpack.c.l.b16 %v3214
    %v5422 = vunpack.c.h.b16 %v3214
    %v5423 = vunpack.c.l.b16 %v3215
    %v5424 = vunpack.c.h.b16 %v3215
    %v5425 = vunpack.c.l.b16 %v3216
    %v5426 = vunpack.c.h.b16 %v3216
    %v5427 = vunpack.c.l.b16 %v3217
    %v5428 = vunpack.c.h.b16 %v3217
    %v5429 = vunpack.c.l.b16 %v3218
    %v5430 = vunpack.c.h.b16 %v3218
    %v5431 = vunpack.c.l.b16 %v3219
    %v5432 = vunpack.c.h.b16 %v3219
    %v5433 = vunpack.c.l.b16 %v3220
    %v5434 = vunpack.c.h.b16 %v3220
    %v5435 = vunpack.c.l.b16 %v3221
    %v5436 = vunpack.c.h.b16 %v3221
    %v5437 = vunpack.c.l.b16 %v3222
    %v5438 = vunpack.c.h.b16 %v3222
    %v5439 = vunpack.c.l.b16 %v3223
    %v5440 = vunpack.c.h.b16 %v3223
    %v5441 = vunpack.c.l.b16 %v3224
    %v5442 = vunpack.c.h.b16 %v3224
    %v5443 = vunpack.c.l.b16 %v3225
    %v5444 = vunpack.c.h.b16 %v3225
    %v5445 = vunpack.c.l.b16 %v3226
    %v5446 = vunpack.c.h.b16 %v3226
    %v5447 = vunpack.c.l.b16 %v3227
    %v5448 = vunpack.c.h.b16 %v3227
    %v5449 = vunpack.c.l.b16 %v3228
    %v5450 = vunpack.c.h.b16 %v3228
    %v5451 = vunpack.c.l.b16 %v3229
    %v5452 = vunpack.c.h.b16 %v3229
    %v5453 = vunpack.c.l.b16 %v3230
    %v5454 = vunpack.c.h.b16 %v3230
    %v5455 = vunpack.c.l.b16 %v3231
    %v5456 = vunpack.c.h.b16 %v3231
    %v5457 = vunpack.c.l.b16 %v3232
    %v5458 = vunpack.c.h.b16 %v3232
    %v5459 = vunpack.c.l.b16 %v3233
    %v5460 = vunpack.c.h.b16 %v3233
    %v5461 = vunpack.c.l.b16 %v3234
    %v5462 = vunpack.c.h.b16 %v3234
    %v5463 = vunpack.c.l.b16 %v3235
    %v5464 = vunpack.c.h.b16 %v3235
    %v5465 = vunpack.c.l.b16 %v3236
    %v5466 = vunpack.c.h.b16 %v3236
    %v5467 = vunpack.c.l.b16 %v3237
    %v5468 = vunpack.c.h.b16 %v3237
    %v5469 = vunpack.c.l.b16 %v3238
    %v5470 = vunpack.c.h.b16 %v3238
    %v5471 = vunpack.c.l.b16 %v3239
    %v5472 = vunpack.c.h.b16 %v3239
    %v5473 = vunpack.c.l.b16 %v3240
    %v5474 = vunpack.c.h.b16 %v3240
    %v5475 = vunpack.c.l.b16 %v3241
    %v5476 = vunpack.c.h.b16 %v3241
    %v5477 = vunpack.c.l.b16 %v3242
    %v5478 = vunpack.c.h.b16 %v3242
    %v5479 = vunpack.c.l.b16 %v3243
    %v5480 = vunpack.c.h.b16 %v3243
    %v5481 = vunpack.c.l.b16 %v3244
    %v5482 = vunpack.c.h.b16 %v3244
    %v5483 = vunpack.c.l.b16 %v3245
    %v5484 = vunpack.c.h.b16 %v3245
    %v5485 = vunpack.c.l.b16 %v3246
    %v5486 = vunpack.c.h.b16 %v3246
    %v5487 = vunpack.c.l.b16 %v3247
    %v5488 = vunpack.c.h.b16 %v3247
    %v5489 = vunpack.c.l.b16 %v3248
    %v5490 = vunpack.c.h.b16 %v3248
    %v5491 = vunpack.c.l.b16 %v3249
    %v5492 = vunpack.c.h.b16 %v3249
    %v5493 = vunpack.c.l.b16 %v3250
    %v5494 = vunpack.c.h.b16 %v3250
    %v5495 = vunpack.c.l.b16 %v3251
    %v5496 = vunpack.c.h.b16 %v3251
    %v5497 = vunpack.c.l.b16 %v3252
    %v5498 = vunpack.c.h.b16 %v3252
    %v5499 = vunpack.c.l.b16 %v3253
    %v5500 = vunpack.c.h.b16 %v3253
    %v5501 = vunpack.c.l.b16 %v3254
    %v5502 = vunpack.c.h.b16 %v3254
    %v5503 = vunpack.c.l.b16 %v3255
    %v5504 = vunpack.c.h.b16 %v3255
    %v5505 = vunpack.c.l.b16 %v3256
    %v5506 = vunpack.c.h.b16 %v3256
    %v5507 = vunpack.c.l.b16 %v3257
    %v5508 = vunpack.c.h.b16 %v3257
    %v5509 = vunpack.c.l.b16 %v3258
    %v5510 = vunpack.c.h.b16 %v3258
    %v5511 = vunpack.c.l.b16 %v3259
    %v5512 = vunpack.c.h.b16 %v3259
    %v5513 = vunpack.c.l.b16 %v3260
    %v5514 = vunpack.c.h.b16 %v3260
    %v5515 = vunpack.c.l.b16 %v3261
    %v5516 = vunpack.c.h.b16 %v3261
    %v5517 = vunpack.c.l.b16 %v3262
    %v5518 = vunpack.c.h.b16 %v3262
    %v5519 = vunpack.c.l.b16 %v3263
    %v5520 = vunpack.c.h.b16 %v3263
    %v5521 = vunpack.c.l.b16 %v3264
    %v5522 = vunpack.c.h.b16 %v3264
    %v5523 = vunpack.c.l.b16 %v3265
    %v5524 = vunpack.c.h.b16 %v3265
    %v5525 = vunpack.c.l.b16 %v3266
    %v5526 = vunpack.c.h.b16 %v3266
    %v5527 = vunpack.c.l.b16 %v3267
    %v5528 = vunpack.c.h.b16 %v3267
    %v5529 = vunpack.c.l.b16 %v3268
    %v5530 = vunpack.c.h.b16 %v3268
    %v5531 = vunpack.c.l.b16 %v3269
    %v5532 = vunpack.c.h.b16 %v3269
    %v5533 = vunpack.c.l.b16 %v3270
    %v5534 = vunpack.c.h.b16 %v3270
    %v5535 = vunpack.c.l.b16 %v3271
    %v5536 = vunpack.c.h.b16 %v3271
    %v5537 = vunpack.c.l.b16 %v3272
    %v5538 = vunpack.c.h.b16 %v3272
    %v5539 = vunpack.c.l.b16 %v3273
    %v5540 = vunpack.c.h.b16 %v3273
    %v5541 = vunpack.c.l.b16 %v3274
    %v5542 = vunpack.c.h.b16 %v3274
    %v5543 = vunpack.c.l.b16 %v3275
    %v5544 = vunpack.c.h.b16 %v3275
    %v5545 = vunpack.c.l.b16 %v3276
    %v5546 = vunpack.c.h.b16 %v3276
    %v5547 = vunpack.c.l.b16 %v3277
    %v5548 = vunpack.c.h.b16 %v3277
    %v5549 = vunpack.c.l.b16 %v3278
    %v5550 = vunpack.c.h.b16 %v3278
    %v5551 = vunpack.c.l.b16 %v3279
    %v5552 = vunpack.c.h.b16 %v3279
    %v5553 = vunpack.c.l.b16 %v3280
    %v5554 = vunpack.c.h.b16 %v3280
    %v5555 = vunpack.c.l.b16 %v3281
    %v5556 = vunpack.c.h.b16 %v3281
    %v5557 = vunpack.c.l.b16 %v3282
    %v5558 = vunpack.c.h.b16 %v3282
    %v5559 = vunpack.c.l.b16 %v3283
    %v5560 = vunpack.c.h.b16 %v3283
    %v5561 = vunpack.c.l.b16 %v3284
    %v5562 = vunpack.c.h.b16 %v3284
    %v5563 = vunpack.c.l.b16 %v3285
    %v5564 = vunpack.c.h.b16 %v3285
    %v5565 = vunpack.c.l.b16 %v3286
    %v5566 = vunpack.c.h.b16 %v3286
    %v5567 = vunpack.c.l.b16 %v3287
    %v5568 = vunpack.c.h.b16 %v3287
    %v5569 = vunpack.c.l.b16 %v3288
    %v5570 = vunpack.c.h.b16 %v3288
    %v5571 = vunpack.c.l.b16 %v3289
    %v5572 = vunpack.c.h.b16 %v3289
    %v5573 = vunpack.c.l.b16 %v3290
    %v5574 = vunpack.c.h.b16 %v3290
    %v5575 = vunpack.c.l.b16 %v3291
    %v5576 = vunpack.c.h.b16 %v3291
    %v5577 = vunpack.c.l.b16 %v3292
    %v5578 = vunpack.c.h.b16 %v3292
    %v5579 = vunpack.c.l.b16 %v3293
    %v5580 = vunpack.c.h.b16 %v3293
    %v5581 = vunpack.c.l.b16 %v3294
    %v5582 = vunpack.c.h.b16 %v3294
    %v5583 = vunpack.c.l.b16 %v3295
    %v5584 = vunpack.c.h.b16 %v3295
    %v5585 = vunpack.c.l.b16 %v3296
    %v5586 = vunpack.c.h.b16 %v3296
    %v5587 = vunpack.c.l.b16 %v3297
    %v5588 = vunpack.c.h.b16 %v3297
    %v5589 = vunpack.c.l.b16 %v3298
    %v5590 = vunpack.c.h.b16 %v3298
    %v5591 = vunpack.c.l.b16 %v3299
    %v5592 = vunpack.c.h.b16 %v3299
    %v5593 = vunpack.c.l.b16 %v3300
    %v5594 = vunpack.c.h.b16 %v3300
    %v5595 = vunpack.c.l.b16 %v3301
    %v5596 = vunpack.c.h.b16 %v3301
    %v5597 = vunpack.c.l.b16 %v3302
    %v5598 = vunpack.c.h.b16 %v3302
    %v5599 = vunpack.c.l.b16 %v3303
    %v5600 = vunpack.c.h.b16 %v3303
    %v5601 = vunpack.c.l.b16 %v3304
    %v5602 = vunpack.c.h.b16 %v3304
    %v5603 = vunpack.c.l.b16 %v3305
    %v5604 = vunpack.c.h.b16 %v3305
    %v5605 = vunpack.c.l.b16 %v3306
    %v5606 = vunpack.c.h.b16 %v3306
    %v5607 = vunpack.c.l.b16 %v3307
    %v5608 = vunpack.c.h.b16 %v3307
    %v5609 = vunpack.c.l.b16 %v3308
    %v5610 = vunpack.c.h.b16 %v3308
    %v5611 = vunpack.c.l.b16 %v3309
    %v5612 = vunpack.c.h.b16 %v3309
    %v5613 = vunpack.c.l.b16 %v3310
    %v5614 = vunpack.c.h.b16 %v3310
    %v5615 = vpack.c.b16 %v4095, %v4079
    %v5616 = vpack.c.b16 %v4096, %v4080
    %v5617 = vpack.c.b16 %v4097, %v4081
    %v5618 = vpack.c.b16 %v4098, %v4082
    %v5619 = vpack.c.b16 %v4099, %v4083
    %v5620 = vpack.c.b16 %v4100, %v4084
    %v5621 = vpack.c.b16 %v4101, %v4085
    %v5622 = vpack.c.b16 %v4102, %v4086
    %v5623 = vpack.c.b16 %v4103, %v4087
    %v5624 = vpack.c.b16 %v4104, %v4088
    %v5625 = vpack.c.b16 %v4105, %v4089
    %v5626 = vpack.c.b16 %v4106, %v4090
    %v5627 = vpack.c.b16 %v4107, %v4091
    %v5628 = vpack.c.b16 %v4108, %v4092
    %v5629 = vpack.c.b16 %v4109, %v4093
    %v5630 = vpack.c.b16 %v4110, %v4094
    %v5631 = vpack.c.b16 %v4127, %v4111
    %v5632 = vpack.c.b16 %v4128, %v4112
    %v5633 = vpack.c.b16 %v4129, %v4113
    %v5634 = vpack.c.b16 %v4130, %v4114
    %v5635 = vpack.c.b16 %v4131, %v4115
    %v5636 = vpack.c.b16 %v4132, %v4116
    %v5637 = vpack.c.b16 %v4133, %v4117
    %v5638 = vpack.c.b16 %v4134, %v4118
    %v5639 = vpack.c.b16 %v4135, %v4119
    %v5640 = vpack.c.b16 %v4136, %v4120
    %v5641 = vpack.c.b16 %v4137, %v4121
    %v5642 = vpack.c.b16 %v4138, %v4122
    %v5643 = vpack.c.b16 %v4139, %v4123
    %v5644 = vpack.c.b16 %v4140, %v4124
    %v5645 = vpack.c.b16 %v4141, %v4125
    %v5646 = vpack.c.b16 %v4142, %v4126
    %v5647 = vpack.c.b16 %v4159, %v4143
    %v5648 = vpack.c.b16 %v4160, %v4144
    %v5649 = vpack.c.b16 %v4161, %v4145
    %v5650 = vpack.c.b16 %v4162, %v4146
    %v5651 = vpack.c.b16 %v4163, %v4147
    %v5652 = vpack.c.b16 %v4164, %v4148
    %v5653 = vpack.c.b16 %v4165, %v4149
    %v5654 = vpack.c.b16 %v4166, %v4150
    %v5655 = vpack.c.b16 %v4167, %v4151
    %v5656 = vpack.c.b16 %v4168, %v4152
    %v5657 = vpack.c.b16 %v4169, %v4153
    %v5658 = vpack.c.b16 %v4170, %v4154
    %v5659 = vpack.c.b16 %v4171, %v4155
    %v5660 = vpack.c.b16 %v4172, %v4156
    %v5661 = vpack.c.b16 %v4173, %v4157
    %v5662 = vpack.c.b16 %v4174, %v4158
    %v5663 = vpack.c.b16 %v4191, %v4175
    %v5664 = vpack.c.b16 %v4192, %v4176
    %v5665 = vpack.c.b16 %v4193, %v4177
    %v5666 = vpack.c.b16 %v4194, %v4178
    %v5667 = vpack.c.b16 %v4195, %v4179
    %v5668 = vpack.c.b16 %v4196, %v4180
    %v5669 = vpack.c.b16 %v4197, %v4181
    %v5670 = vpack.c.b16 %v4198, %v4182
    %v5671 = vpack.c.b16 %v4199, %v4183
    %v5672 = vpack.c.b16 %v4200, %v4184
    %v5673 = vpack.c.b16 %v4201, %v4185
    %v5674 = vpack.c.b16 %v4202, %v4186
    %v5675 = vpack.c.b16 %v4203, %v4187
    %v5676 = vpack.c.b16 %v4204, %v4188
    %v5677 = vpack.c.b16 %v4205, %v4189
    %v5678 = vpack.c.b16 %v4206, %v4190
    %v5679 = vpack.c.b16 %v4223, %v4207
    %v5680 = vpack.c.b16 %v4224, %v4208
    %v5681 = vpack.c.b16 %v4225, %v4209
    %v5682 = vpack.c.b16 %v4226, %v4210
    %v5683 = vpack.c.b16 %v4227, %v4211
    %v5684 = vpack.c.b16 %v4228, %v4212
    %v5685 = vpack.c.b16 %v4229, %v4213
    %v5686 = vpack.c.b16 %v4230, %v4214
    %v5687 = vpack.c.b16 %v4231, %v4215
    %v5688 = vpack.c.b16 %v4232, %v4216
    %v5689 = vpack.c.b16 %v4233, %v4217
    %v5690 = vpack.c.b16 %v4234, %v4218
    %v5691 = vpack.c.b16 %v4235, %v4219
    %v5692 = vpack.c.b16 %v4236, %v4220
    %v5693 = vpack.c.b16 %v4237, %v4221
    %v5694 = vpack.c.b16 %v4238, %v4222
    %v5695 = vpack.c.b16 %v4255, %v4239
    %v5696 = vpack.c.b16 %v4256, %v4240
    %v5697 = vpack.c.b16 %v4257, %v4241
    %v5698 = vpack.c.b16 %v4258, %v4242
    %v5699 = vpack.c.b16 %v4259, %v4243
    %v5700 = vpack.c.b16 %v4260, %v4244
    %v5701 = vpack.c.b16 %v4261, %v4245
    %v5702 = vpack.c.b16 %v4262, %v4246
    %v5703 = vpack.c.b16 %v4263, %v4247
    %v5704 = vpack.c.b16 %v4264, %v4248
    %v5705 = vpack.c.b16 %v4265, %v4249
    %v5706 = vpack.c.b16 %v4266, %v4250
    %v5707 = vpack.c.b16 %v4267, %v4251
    %v5708 = vpack.c.b16 %v4268, %v4252
    %v5709 = vpack.c.b16 %v4269, %v4253
    %v5710 = vpack.c.b16 %v4270, %v4254
    %v5711 = vpack.c.b16 %v4287, %v4271
    %v5712 = vpack.c.b16 %v4288, %v4272
    %v5713 = vpack.c.b16 %v4289, %v4273
    %v5714 = vpack.c.b16 %v4290, %v4274
    %v5715 = vpack.c.b16 %v4291, %v4275
    %v5716 = vpack.c.b16 %v4292, %v4276
    %v5717 = vpack.c.b16 %v4293, %v4277
    %v5718 = vpack.c.b16 %v4294, %v4278
    %v5719 = vpack.c.b16 %v4295, %v4279
    %v5720 = vpack.c.b16 %v4296, %v4280
    %v5721 = vpack.c.b16 %v4297, %v4281
    %v5722 = vpack.c.b16 %v4298, %v4282
    %v5723 = vpack.c.b16 %v4299, %v4283
    %v5724 = vpack.c.b16 %v4300, %v4284
    %v5725 = vpack.c.b16 %v4301, %v4285
    %v5726 = vpack.c.b16 %v4302, %v4286
    %v5727 = vpack.c.b16 %v4319, %v4303
    %v5728 = vpack.c.b16 %v4320, %v4304
    %v5729 = vpack.c.b16 %v4321, %v4305
    %v5730 = vpack.c.b16 %v4322, %v4306
    %v5731 = vpack.c.b16 %v4323, %v4307
    %v5732 = vpack.c.b16 %v4324, %v4308
    %v5733 = vpack.c.b16 %v4325, %v4309
    %v5734 = vpack.c.b16 %v4326, %v4310
    %v5735 = vpack.c.b16 %v4327, %v4311
    %v5736 = vpack.c.b16 %v4328, %v4312
    %v5737 = vpack.c.b16 %v4329, %v4313
    %v5738 = vpack.c.b16 %v4330, %v4314
    %v5739 = vpack.c.b16 %v4331, %v4315
    %v5740 = vpack.c.b16 %v4332, %v4316
    %v5741 = vpack.c.b16 %v4333, %v4317
    %v5742 = vpack.c.b16 %v4334, %v4318
    %v5743 = vpack.c.b16 %v4351, %v4335
    %v5744 = vpack.c.b16 %v4352, %v4336
    %v5745 = vpack.c.b16 %v4353, %v4337
    %v5746 = vpack.c.b16 %v4354, %v4338
    %v5747 = vpack.c.b16 %v4355, %v4339
    %v5748 = vpack.c.b16 %v4356, %v4340
    %v5749 = vpack.c.b16 %v4357, %v4341
    %v5750 = vpack.c.b16 %v4358, %v4342
    %v5751 = vpack.c.b16 %v4359, %v4343
    %v5752 = vpack.c.b16 %v4360, %v4344
    %v5753 = vpack.c.b16 %v4361, %v4345
    %v5754 = vpack.c.b16 %v4362, %v4346
    %v5755 = vpack.c.b16 %v4363, %v4347
    %v5756 = vpack.c.b16 %v4364, %v4348
    %v5757 = vpack.c.b16 %v4365, %v4349
    %v5758 = vpack.c.b16 %v4366, %v4350
    %v5759 = vpack.c.b16 %v4383, %v4367
    %v5760 = vpack.c.b16 %v4384, %v4368
    %v5761 = vpack.c.b16 %v4385, %v4369
    %v5762 = vpack.c.b16 %v4386, %v4370
    %v5763 = vpack.c.b16 %v4387, %v4371
    %v5764 = vpack.c.b16 %v4388, %v4372
    %v5765 = vpack.c.b16 %v4389, %v4373
    %v5766 = vpack.c.b16 %v4390, %v4374
    %v5767 = vpack.c.b16 %v4391, %v4375
    %v5768 = vpack.c.b16 %v4392, %v4376
    %v5769 = vpack.c.b16 %v4393, %v4377
    %v5770 = vpack.c.b16 %v4394, %v4378
    %v5771 = vpack.c.b16 %v4395, %v4379
    %v5772 = vpack.c.b16 %v4396, %v4380
    %v5773 = vpack.c.b16 %v4397, %v4381
    %v5774 = vpack.c.b16 %v4398, %v4382
    %v5775 = vpack.c.b16 %v4415, %v4399
    %v5776 = vpack.c.b16 %v4416, %v4400
    %v5777 = vpack.c.b16 %v4417, %v4401
    %v5778 = vpack.c.b16 %v4418, %v4402
    %v5779 = vpack.c.b16 %v4419, %v4403
    %v5780 = vpack.c.b16 %v4420, %v4404
    %v5781 = vpack.c.b16 %v4421, %v4405
    %v5782 = vpack.c.b16 %v4422, %v4406
    %v5783 = vpack.c.b16 %v4423, %v4407
    %v5784 = vpack.c.b16 %v4424, %v4408
    %v5785 = vpack.c.b16 %v4425, %v4409
    %v5786 = vpack.c.b16 %v4426, %v4410
    %v5787 = vpack.c.b16 %v4427, %v4411
    %v5788 = vpack.c.b16 %v4428, %v4412
    %v5789 = vpack.c.b16 %v4429, %v4413
    %v5790 = vpack.c.b16 %v4430, %v4414
    %v5791 = vpack.c.b16 %v4447, %v4431
    %v5792 = vpack.c.b16 %v4448, %v4432
    %v5793 = vpack.c.b16 %v4449, %v4433
    %v5794 = vpack.c.b16 %v4450, %v4434
    %v5795 = vpack.c.b16 %v4451, %v4435
    %v5796 = vpack.c.b16 %v4452, %v4436
    %v5797 = vpack.c.b16 %v4453, %v4437
    %v5798 = vpack.c.b16 %v4454, %v4438
    %v5799 = vpack.c.b16 %v4455, %v4439
    %v5800 = vpack.c.b16 %v4456, %v4440
    %v5801 = vpack.c.b16 %v4457, %v4441
    %v5802 = vpack.c.b16 %v4458, %v4442
    %v5803 = vpack.c.b16 %v4459, %v4443
    %v5804 = vpack.c.b16 %v4460, %v4444
    %v5805 = vpack.c.b16 %v4461, %v4445
    %v5806 = vpack.c.b16 %v4462, %v4446
    %v5807 = vpack.c.b16 %v4479, %v4463
    %v5808 = vpack.c.b16 %v4480, %v4464
    %v5809 = vpack.c.b16 %v4481, %v4465
    %v5810 = vpack.c.b16 %v4482, %v4466
    %v5811 = vpack.c.b16 %v4483, %v4467
    %v5812 = vpack.c.b16 %v4484, %v4468
    %v5813 = vpack.c.b16 %v4485, %v4469
    %v5814 = vpack.c.b16 %v4486, %v4470
    %v5815 = vpack.c.b16 %v4487, %v4471
    %v5816 = vpack.c.b16 %v4488, %v4472
    %v5817 = vpack.c.b16 %v4489, %v4473
    %v5818 = vpack.c.b16 %v4490, %v4474
    %v5819 = vpack.c.b16 %v4491, %v4475
    %v5820 = vpack.c.b16 %v4492, %v4476
    %v5821 = vpack.c.b16 %v4493, %v4477
    %v5822 = vpack.c.b16 %v4494, %v4478
    %v5823 = vpack.c.b16 %v4511, %v4495
    %v5824 = vpack.c.b16 %v4512, %v4496
    %v5825 = vpack.c.b16 %v4513, %v4497
    %v5826 = vpack.c.b16 %v4514, %v4498
    %v5827 = vpack.c.b16 %v4515, %v4499
    %v5828 = vpack.c.b16 %v4516, %v4500
    %v5829 = vpack.c.b16 %v4517, %v4501
    %v5830 = vpack.c.b16 %v4518, %v4502
    %v5831 = vpack.c.b16 %v4519, %v4503
    %v5832 = vpack.c.b16 %v4520, %v4504
    %v5833 = vpack.c.b16 %v4521, %v4505
    %v5834 = vpack.c.b16 %v4522, %v4506
    %v5835 = vpack.c.b16 %v4523, %v4507
    %v5836 = vpack.c.b16 %v4524, %v4508
    %v5837 = vpack.c.b16 %v4525, %v4509
    %v5838 = vpack.c.b16 %v4526, %v4510
    %v5839 = vpack.c.b16 %v4543, %v4527
    %v5840 = vpack.c.b16 %v4544, %v4528
    %v5841 = vpack.c.b16 %v4545, %v4529
    %v5842 = vpack.c.b16 %v4546, %v4530
    %v5843 = vpack.c.b16 %v4547, %v4531
    %v5844 = vpack.c.b16 %v4548, %v4532
    %v5845 = vpack.c.b16 %v4549, %v4533
    %v5846 = vpack.c.b16 %v4550, %v4534
    %v5847 = vpack.c.b16 %v4551, %v4535
    %v5848 = vpack.c.b16 %v4552, %v4536
    %v5849 = vpack.c.b16 %v4553, %v4537
    %v5850 = vpack.c.b16 %v4554, %v4538
    %v5851 = vpack.c.b16 %v4555, %v4539
    %v5852 = vpack.c.b16 %v4556, %v4540
    %v5853 = vpack.c.b16 %v4557, %v4541
    %v5854 = vpack.c.b16 %v4558, %v4542
    %v5855 = vpack.c.b16 %v4575, %v4559
    %v5856 = vpack.c.b16 %v4576, %v4560
    %v5857 = vpack.c.b16 %v4577, %v4561
    %v5858 = vpack.c.b16 %v4578, %v4562
    %v5859 = vpack.c.b16 %v4579, %v4563
    %v5860 = vpack.c.b16 %v4580, %v4564
    %v5861 = vpack.c.b16 %v4581, %v4565
    %v5862 = vpack.c.b16 %v4582, %v4566
    %v5863 = vpack.c.b16 %v4583, %v4567
    %v5864 = vpack.c.b16 %v4584, %v4568
    %v5865 = vpack.c.b16 %v4585, %v4569
    %v5866 = vpack.c.b16 %v4586, %v4570
    %v5867 = vpack.c.b16 %v4587, %v4571
    %v5868 = vpack.c.b16 %v4588, %v4572
    %v5869 = vpack.c.b16 %v4589, %v4573
    %v5870 = vpack.c.b16 %v4590, %v4574
    %v5871 = vpack.c.b16 %v4607, %v4591
    %v5872 = vpack.c.b16 %v4608, %v4592
    %v5873 = vpack.c.b16 %v4609, %v4593
    %v5874 = vpack.c.b16 %v4610, %v4594
    %v5875 = vpack.c.b16 %v4611, %v4595
    %v5876 = vpack.c.b16 %v4612, %v4596
    %v5877 = vpack.c.b16 %v4613, %v4597
    %v5878 = vpack.c.b16 %v4614, %v4598
    %v5879 = vpack.c.b16 %v4615, %v4599
    %v5880 = vpack.c.b16 %v4616, %v4600
    %v5881 = vpack.c.b16 %v4617, %v4601
    %v5882 = vpack.c.b16 %v4618, %v4602
    %v5883 = vpack.c.b16 %v4619, %v4603
    %v5884 = vpack.c.b16 %v4620, %v4604
    %v5885 = vpack.c.b16 %v4621, %v4605
    %v5886 = vpack.c.b16 %v4622, %v4606
    %v5887 = vpack.c.b16 %v4639, %v4623
    %v5888 = vpack.c.b16 %v4640, %v4624
    %v5889 = vpack.c.b16 %v4641, %v4625
    %v5890 = vpack.c.b16 %v4642, %v4626
    %v5891 = vpack.c.b16 %v4643, %v4627
    %v5892 = vpack.c.b16 %v4644, %v4628
    %v5893 = vpack.c.b16 %v4645, %v4629
    %v5894 = vpack.c.b16 %v4646, %v4630
    %v5895 = vpack.c.b16 %v4647, %v4631
    %v5896 = vpack.c.b16 %v4648, %v4632
    %v5897 = vpack.c.b16 %v4649, %v4633
    %v5898 = vpack.c.b16 %v4650, %v4634
    %v5899 = vpack.c.b16 %v4651, %v4635
    %v5900 = vpack.c.b16 %v4652, %v4636
    %v5901 = vpack.c.b16 %v4653, %v4637
    %v5902 = vpack.c.b16 %v4654, %v4638
    %v5903 = vpack.c.b16 %v4671, %v4655
    %v5904 = vpack.c.b16 %v4672, %v4656
    %v5905 = vpack.c.b16 %v4673, %v4657
    %v5906 = vpack.c.b16 %v4674, %v4658
    %v5907 = vpack.c.b16 %v4675, %v4659
    %v5908 = vpack.c.b16 %v4676, %v4660
    %v5909 = vpack.c.b16 %v4677, %v4661
    %v5910 = vpack.c.b16 %v4678, %v4662
    %v5911 = vpack.c.b16 %v4679, %v4663
    %v5912 = vpack.c.b16 %v4680, %v4664
    %v5913 = vpack.c.b16 %v4681, %v4665
    %v5914 = vpack.c.b16 %v4682, %v4666
    %v5915 = vpack.c.b16 %v4683, %v4667
    %v5916 = vpack.c.b16 %v4684, %v4668
    %v5917 = vpack.c.b16 %v4685, %v4669
    %v5918 = vpack.c.b16 %v4686, %v4670
    %v5919 = vpack.c.b16 %v4703, %v4687
    %v5920 = vpack.c.b16 %v4704, %v4688
    %v5921 = vpack.c.b16 %v4705, %v4689
    %v5922 = vpack.c.b16 %v4706, %v4690
    %v5923 = vpack.c.b16 %v4707, %v4691
    %v5924 = vpack.c.b16 %v4708, %v4692
    %v5925 = vpack.c.b16 %v4709, %v4693
    %v5926 = vpack.c.b16 %v4710, %v4694
    %v5927 = vpack.c.b16 %v4711, %v4695
    %v5928 = vpack.c.b16 %v4712, %v4696
    %v5929 = vpack.c.b16 %v4713, %v4697
    %v5930 = vpack.c.b16 %v4714, %v4698
    %v5931 = vpack.c.b16 %v4715, %v4699
    %v5932 = vpack.c.b16 %v4716, %v4700
    %v5933 = vpack.c.b16 %v4717, %v4701
    %v5934 = vpack.c.b16 %v4718, %v4702
    %v5935 = vpack.c.b16 %v4735, %v4719
    %v5936 = vpack.c.b16 %v4736, %v4720
    %v5937 = vpack.c.b16 %v4737, %v4721
    %v5938 = vpack.c.b16 %v4738, %v4722
    %v5939 = vpack.c.b16 %v4739, %v4723
    %v5940 = vpack.c.b16 %v4740, %v4724
    %v5941 = vpack.c.b16 %v4741, %v4725
    %v5942 = vpack.c.b16 %v4742, %v4726
    %v5943 = vpack.c.b16 %v4743, %v4727
    %v5944 = vpack.c.b16 %v4744, %v4728
    %v5945 = vpack.c.b16 %v4745, %v4729
    %v5946 = vpack.c.b16 %v4746, %v4730
    %v5947 = vpack.c.b16 %v4747, %v4731
    %v5948 = vpack.c.b16 %v4748, %v4732
    %v5949 = vpack.c.b16 %v4749, %v4733
    %v5950 = vpack.c.b16 %v4750, %v4734
    %v5951 = vpack.c.b16 %v4767, %v4751
    %v5952 = vpack.c.b16 %v4768, %v4752
    %v5953 = vpack.c.b16 %v4769, %v4753
    %v5954 = vpack.c.b16 %v4770, %v4754
    %v5955 = vpack.c.b16 %v4771, %v4755
    %v5956 = vpack.c.b16 %v4772, %v4756
    %v5957 = vpack.c.b16 %v4773, %v4757
    %v5958 = vpack.c.b16 %v4774, %v4758
    %v5959 = vpack.c.b16 %v4775, %v4759
    %v5960 = vpack.c.b16 %v4776, %v4760
    %v5961 = vpack.c.b16 %v4777, %v4761
    %v5962 = vpack.c.b16 %v4778, %v4762
    %v5963 = vpack.c.b16 %v4779, %v4763
    %v5964 = vpack.c.b16 %v4780, %v4764
    %v5965 = vpack.c.b16 %v4781, %v4765
    %v5966 = vpack.c.b16 %v4782, %v4766
    %v5967 = vpack.c.b16 %v4799, %v4783
    %v5968 = vpack.c.b16 %v4800, %v4784
    %v5969 = vpack.c.b16 %v4801, %v4785
    %v5970 = vpack.c.b16 %v4802, %v4786
    %v5971 = vpack.c.b16 %v4803, %v4787
    %v5972 = vpack.c.b16 %v4804, %v4788
    %v5973 = vpack.c.b16 %v4805, %v4789
    %v5974 = vpack.c.b16 %v4806, %v4790
    %v5975 = vpack.c.b16 %v4807, %v4791
    %v5976 = vpack.c.b16 %v4808, %v4792
    %v5977 = vpack.c.b16 %v4809, %v4793
    %v5978 = vpack.c.b16 %v4810, %v4794
    %v5979 = vpack.c.b16 %v4811, %v4795
    %v5980 = vpack.c.b16 %v4812, %v4796
    %v5981 = vpack.c.b16 %v4813, %v4797
    %v5982 = vpack.c.b16 %v4814, %v4798
    %v5983 = vpack.c.b16 %v4831, %v4815
    %v5984 = vpack.c.b16 %v4832, %v4816
    %v5985 = vpack.c.b16 %v4833, %v4817
    %v5986 = vpack.c.b16 %v4834, %v4818
    %v5987 = vpack.c.b16 %v4835, %v4819
    %v5988 = vpack.c.b16 %v4836, %v4820
    %v5989 = vpack.c.b16 %v4837, %v4821
    %v5990 = vpack.c.b16 %v4838, %v4822
    %v5991 = vpack.c.b16 %v4839, %v4823
    %v5992 = vpack.c.b16 %v4840, %v4824
    %v5993 = vpack.c.b16 %v4841, %v4825
    %v5994 = vpack.c.b16 %v4842, %v4826
    %v5995 = vpack.c.b16 %v4843, %v4827
    %v5996 = vpack.c.b16 %v4844, %v4828
    %v5997 = vpack.c.b16 %v4845, %v4829
    %v5998 = vpack.c.b16 %v4846, %v4830
    %v5999 = vpack.c.b16 %v4863, %v4847
    %v6000 = vpack.c.b16 %v4864, %v4848
    %v6001 = vpack.c.b16 %v4865, %v4849
    %v6002 = vpack.c.b16 %v4866, %v4850
    %v6003 = vpack.c.b16 %v4867, %v4851
    %v6004 = vpack.c.b16 %v4868, %v4852
    %v6005 = vpack.c.b16 %v4869, %v4853
    %v6006 = vpack.c.b16 %v4870, %v4854
    %v6007 = vpack.c.b16 %v4871, %v4855
    %v6008 = vpack.c.b16 %v4872, %v4856
    %v6009 = vpack.c.b16 %v4873, %v4857
    %v6010 = vpack.c.b16 %v4874, %v4858
    %v6011 = vpack.c.b16 %v4875, %v4859
    %v6012 = vpack.c.b16 %v4876, %v4860
    %v6013 = vpack.c.b16 %v4877, %v4861
    %v6014 = vpack.c.b16 %v4878, %v4862
    %v6015 = vpack.c.b16 %v4895, %v4879
    %v6016 = vpack.c.b16 %v4896, %v4880
    %v6017 = vpack.c.b16 %v4897, %v4881
    %v6018 = vpack.c.b16 %v4898, %v4882
    %v6019 = vpack.c.b16 %v4899, %v4883
    %v6020 = vpack.c.b16 %v4900, %v4884
    %v6021 = vpack.c.b16 %v4901, %v4885
    %v6022 = vpack.c.b16 %v4902, %v4886
    %v6023 = vpack.c.b16 %v4903, %v4887
    %v6024 = vpack.c.b16 %v4904, %v4888
    %v6025 = vpack.c.b16 %v4905, %v4889
    %v6026 = vpack.c.b16 %v4906, %v4890
    %v6027 = vpack.c.b16 %v4907, %v4891
    %v6028 = vpack.c.b16 %v4908, %v4892
    %v6029 = vpack.c.b16 %v4909, %v4893
    %v6030 = vpack.c.b16 %v4910, %v4894
    %v6031 = vpack.c.b16 %v4927, %v4911
    %v6032 = vpack.c.b16 %v4928, %v4912
    %v6033 = vpack.c.b16 %v4929, %v4913
    %v6034 = vpack.c.b16 %v4930, %v4914
    %v6035 = vpack.c.b16 %v4931, %v4915
    %v6036 = vpack.c.b16 %v4932, %v4916
    %v6037 = vpack.c.b16 %v4933, %v4917
    %v6038 = vpack.c.b16 %v4934, %v4918
    %v6039 = vpack.c.b16 %v4935, %v4919
    %v6040 = vpack.c.b16 %v4936, %v4920
    %v6041 = vpack.c.b16 %v4937, %v4921
    %v6042 = vpack.c.b16 %v4938, %v4922
    %v6043 = vpack.c.b16 %v4939, %v4923
    %v6044 = vpack.c.b16 %v4940, %v4924
    %v6045 = vpack.c.b16 %v4941, %v4925
    %v6046 = vpack.c.b16 %v4942, %v4926
    %v6047 = vpack.c.b16 %v4959, %v4943
    %v6048 = vpack.c.b16 %v4960, %v4944
    %v6049 = vpack.c.b16 %v4961, %v4945
    %v6050 = vpack.c.b16 %v4962, %v4946
    %v6051 = vpack.c.b16 %v4963, %v4947
    %v6052 = vpack.c.b16 %v4964, %v4948
    %v6053 = vpack.c.b16 %v4965, %v4949
    %v6054 = vpack.c.b16 %v4966, %v4950
    %v6055 = vpack.c.b16 %v4967, %v4951
    %v6056 = vpack.c.b16 %v4968, %v4952
    %v6057 = vpack.c.b16 %v4969, %v4953
    %v6058 = vpack.c.b16 %v4970, %v4954
    %v6059 = vpack.c.b16 %v4971, %v4955
    %v6060 = vpack.c.b16 %v4972, %v4956
    %v6061 = vpack.c.b16 %v4973, %v4957
    %v6062 = vpack.c.b16 %v4974, %v4958
    %v6063 = vpack.c.b16 %v4991, %v4975
    %v6064 = vpack.c.b16 %v4992, %v4976
    %v6065 = vpack.c.b16 %v4993, %v4977
    %v6066 = vpack.c.b16 %v4994, %v4978
    %v6067 = vpack.c.b16 %v4995, %v4979
    %v6068 = vpack.c.b16 %v4996, %v4980
    %v6069 = vpack.c.b16 %v4997, %v4981
    %v6070 = vpack.c.b16 %v4998, %v4982
    %v6071 = vpack.c.b16 %v4999, %v4983
    %v6072 = vpack.c.b16 %v5000, %v4984
    %v6073 = vpack.c.b16 %v5001, %v4985
    %v6074 = vpack.c.b16 %v5002, %v4986
    %v6075 = vpack.c.b16 %v5003, %v4987
    %v6076 = vpack.c.b16 %v5004, %v4988
    %v6077 = vpack.c.b16 %v5005, %v4989
    %v6078 = vpack.c.b16 %v5006, %v4990
    %v6079 = vpack.c.b16 %v5023, %v5007
    %v6080 = vpack.c.b16 %v5024, %v5008
    %v6081 = vpack.c.b16 %v5025, %v5009
    %v6082 = vpack.c.b16 %v5026, %v5010
    %v6083 = vpack.c.b16 %v5027, %v5011
    %v6084 = vpack.c.b16 %v5028, %v5012
    %v6085 = vpack.c.b16 %v5029, %v5013
    %v6086 = vpack.c.b16 %v5030, %v5014
    %v6087 = vpack.c.b16 %v5031, %v5015
    %v6088 = vpack.c.b16 %v5032, %v5016
    %v6089 = vpack.c.b16 %v5033, %v5017
    %v6090 = vpack.c.b16 %v5034, %v5018
    %v6091 = vpack.c.b16 %v5035, %v5019
    %v6092 = vpack.c.b16 %v5036, %v5020
    %v6093 = vpack.c.b16 %v5037, %v5021
    %v6094 = vpack.c.b16 %v5038, %v5022
    %v6095 = vpack.c.b16 %v5055, %v5039
    %v6096 = vpack.c.b16 %v5056, %v5040
    %v6097 = vpack.c.b16 %v5057, %v5041
    %v6098 = vpack.c.b16 %v5058, %v5042
    %v6099 = vpack.c.b16 %v5059, %v5043
    %v6100 = vpack.c.b16 %v5060, %v5044
    %v6101 = vpack.c.b16 %v5061, %v5045
    %v6102 = vpack.c.b16 %v5062, %v5046
    %v6103 = vpack.c.b16 %v5063, %v5047
    %v6104 = vpack.c.b16 %v5064, %v5048
    %v6105 = vpack.c.b16 %v5065, %v5049
    %v6106 = vpack.c.b16 %v5066, %v5050
    %v6107 = vpack.c.b16 %v5067, %v5051
    %v6108 = vpack.c.b16 %v5068, %v5052
    %v6109 = vpack.c.b16 %v5069, %v5053
    %v6110 = vpack.c.b16 %v5070, %v5054
    %v6111 = vpack.c.b16 %v5087, %v5071
    %v6112 = vpack.c.b16 %v5088, %v5072
    %v6113 = vpack.c.b16 %v5089, %v5073
    %v6114 = vpack.c.b16 %v5090, %v5074
    %v6115 = vpack.c.b16 %v5091, %v5075
    %v6116 = vpack.c.b16 %v5092, %v5076
    %v6117 = vpack.c.b16 %v5093, %v5077
    %v6118 = vpack.c.b16 %v5094, %v5078
    %v6119 = vpack.c.b16 %v5095, %v5079
    %v6120 = vpack.c.b16 %v5096, %v5080
    %v6121 = vpack.c.b16 %v5097, %v5081
    %v6122 = vpack.c.b16 %v5098, %v5082
    %v6123 = vpack.c.b16 %v5099, %v5083
    %v6124 = vpack.c.b16 %v5100, %v5084
    %v6125 = vpack.c.b16 %v5101, %v5085
    %v6126 = vpack.c.b16 %v5102, %v5086
    %v6127 = vpack.c.b16 %v5119, %v5103
    %v6128 = vpack.c.b16 %v5120, %v5104
    %v6129 = vpack.c.b16 %v5121, %v5105
    %v6130 = vpack.c.b16 %v5122, %v5106
    %v6131 = vpack.c.b16 %v5123, %v5107
    %v6132 = vpack.c.b16 %v5124, %v5108
    %v6133 = vpack.c.b16 %v5125, %v5109
    %v6134 = vpack.c.b16 %v5126, %v5110
    %v6135 = vpack.c.b16 %v5127, %v5111
    %v6136 = vpack.c.b16 %v5128, %v5112
    %v6137 = vpack.c.b16 %v5129, %v5113
    %v6138 = vpack.c.b16 %v5130, %v5114
    %v6139 = vpack.c.b16 %v5131, %v5115
    %v6140 = vpack.c.b16 %v5132, %v5116
    %v6141 = vpack.c.b16 %v5133, %v5117
    %v6142 = vpack.c.b16 %v5134, %v5118
    %v6143 = vpack.c.b16 %v5151, %v5135
    %v6144 = vpack.c.b16 %v5152, %v5136
    %v6145 = vpack.c.b16 %v5153, %v5137
    %v6146 = vpack.c.b16 %v5154, %v5138
    %v6147 = vpack.c.b16 %v5155, %v5139
    %v6148 = vpack.c.b16 %v5156, %v5140
    %v6149 = vpack.c.b16 %v5157, %v5141
    %v6150 = vpack.c.b16 %v5158, %v5142
    %v6151 = vpack.c.b16 %v5159, %v5143
    %v6152 = vpack.c.b16 %v5160, %v5144
    %v6153 = vpack.c.b16 %v5161, %v5145
    %v6154 = vpack.c.b16 %v5162, %v5146
    %v6155 = vpack.c.b16 %v5163, %v5147
    %v6156 = vpack.c.b16 %v5164, %v5148
    %v6157 = vpack.c.b16 %v5165, %v5149
    %v6158 = vpack.c.b16 %v5166, %v5150
    %v6159 = vpack.c.b16 %v5183, %v5167
    %v6160 = vpack.c.b16 %v5184, %v5168
    %v6161 = vpack.c.b16 %v5185, %v5169
    %v6162 = vpack.c.b16 %v5186, %v5170
    %v6163 = vpack.c.b16 %v5187, %v5171
    %v6164 = vpack.c.b16 %v5188, %v5172
    %v6165 = vpack.c.b16 %v5189, %v5173
    %v6166 = vpack.c.b16 %v5190, %v5174
    %v6167 = vpack.c.b16 %v5191, %v5175
    %v6168 = vpack.c.b16 %v5192, %v5176
    %v6169 = vpack.c.b16 %v5193, %v5177
    %v6170 = vpack.c.b16 %v5194, %v5178
    %v6171 = vpack.c.b16 %v5195, %v5179
    %v6172 = vpack.c.b16 %v5196, %v5180
    %v6173 = vpack.c.b16 %v5197, %v5181
    %v6174 = vpack.c.b16 %v5198, %v5182
    %v6175 = vpack.c.b16 %v5215, %v5199
    %v6176 = vpack.c.b16 %v5216, %v5200
    %v6177 = vpack.c.b16 %v5217, %v5201
    %v6178 = vpack.c.b16 %v5218, %v5202
    %v6179 = vpack.c.b16 %v5219, %v5203
    %v6180 = vpack.c.b16 %v5220, %v5204
    %v6181 = vpack.c.b16 %v5221, %v5205
    %v6182 = vpack.c.b16 %v5222, %v5206
    %v6183 = vpack.c.b16 %v5223, %v5207
    %v6184 = vpack.c.b16 %v5224, %v5208
    %v6185 = vpack.c.b16 %v5225, %v5209
    %v6186 = vpack.c.b16 %v5226, %v5210
    %v6187 = vpack.c.b16 %v5227, %v5211
    %v6188 = vpack.c.b16 %v5228, %v5212
    %v6189 = vpack.c.b16 %v5229, %v5213
    %v6190 = vpack.c.b16 %v5230, %v5214
    %v6191 = vpack.c.b16 %v5247, %v5231
    %v6192 = vpack.c.b16 %v5248, %v5232
    %v6193 = vpack.c.b16 %v5249, %v5233
    %v6194 = vpack.c.b16 %v5250, %v5234
    %v6195 = vpack.c.b16 %v5251, %v5235
    %v6196 = vpack.c.b16 %v5252, %v5236
    %v6197 = vpack.c.b16 %v5253, %v5237
    %v6198 = vpack.c.b16 %v5254, %v5238
    %v6199 = vpack.c.b16 %v5255, %v5239
    %v6200 = vpack.c.b16 %v5256, %v5240
    %v6201 = vpack.c.b16 %v5257, %v5241
    %v6202 = vpack.c.b16 %v5258, %v5242
    %v6203 = vpack.c.b16 %v5259, %v5243
    %v6204 = vpack.c.b16 %v5260, %v5244
    %v6205 = vpack.c.b16 %v5261, %v5245
    %v6206 = vpack.c.b16 %v5262, %v5246
    %v6207 = vpack.c.b16 %v5279, %v5263
    %v6208 = vpack.c.b16 %v5280, %v5264
    %v6209 = vpack.c.b16 %v5281, %v5265
    %v6210 = vpack.c.b16 %v5282, %v5266
    %v6211 = vpack.c.b16 %v5283, %v5267
    %v6212 = vpack.c.b16 %v5284, %v5268
    %v6213 = vpack.c.b16 %v5285, %v5269
    %v6214 = vpack.c.b16 %v5286, %v5270
    %v6215 = vpack.c.b16 %v5287, %v5271
    %v6216 = vpack.c.b16 %v5288, %v5272
    %v6217 = vpack.c.b16 %v5289, %v5273
    %v6218 = vpack.c.b16 %v5290, %v5274
    %v6219 = vpack.c.b16 %v5291, %v5275
    %v6220 = vpack.c.b16 %v5292, %v5276
    %v6221 = vpack.c.b16 %v5293, %v5277
    %v6222 = vpack.c.b16 %v5294, %v5278
    %v6223 = vpack.c.b16 %v5311, %v5295
    %v6224 = vpack.c.b16 %v5312, %v5296
    %v6225 = vpack.c.b16 %v5313, %v5297
    %v6226 = vpack.c.b16 %v5314, %v5298
    %v6227 = vpack.c.b16 %v5315, %v5299
    %v6228 = vpack.c.b16 %v5316, %v5300
    %v6229 = vpack.c.b16 %v5317, %v5301
    %v6230 = vpack.c.b16 %v5318, %v5302
    %v6231 = vpack.c.b16 %v5319, %v5303
    %v6232 = vpack.c.b16 %v5320, %v5304
    %v6233 = vpack.c.b16 %v5321, %v5305
    %v6234 = vpack.c.b16 %v5322, %v5306
    %v6235 = vpack.c.b16 %v5323, %v5307
    %v6236 = vpack.c.b16 %v5324, %v5308
    %v6237 = vpack.c.b16 %v5325, %v5309
    %v6238 = vpack.c.b16 %v5326, %v5310
    %v6239 = vpack.c.b16 %v5343, %v5327
    %v6240 = vpack.c.b16 %v5344, %v5328
    %v6241 = vpack.c.b16 %v5345, %v5329
    %v6242 = vpack.c.b16 %v5346, %v5330
    %v6243 = vpack.c.b16 %v5347, %v5331
    %v6244 = vpack.c.b16 %v5348, %v5332
    %v6245 = vpack.c.b16 %v5349, %v5333
    %v6246 = vpack.c.b16 %v5350, %v5334
    %v6247 = vpack.c.b16 %v5351, %v5335
    %v6248 = vpack.c.b16 %v5352, %v5336
    %v6249 = vpack.c.b16 %v5353, %v5337
    %v6250 = vpack.c.b16 %v5354, %v5338
    %v6251 = vpack.c.b16 %v5355, %v5339
    %v6252 = vpack.c.b16 %v5356, %v5340
    %v6253 = vpack.c.b16 %v5357, %v5341
    %v6254 = vpack.c.b16 %v5358, %v5342
    %v6255 = vpack.c.b16 %v5375, %v5359
    %v6256 = vpack.c.b16 %v5376, %v5360
    %v6257 = vpack.c.b16 %v5377, %v5361
    %v6258 = vpack.c.b16 %v5378, %v5362
    %v6259 = vpack.c.b16 %v5379, %v5363
    %v6260 = vpack.c.b16 %v5380, %v5364
    %v6261 = vpack.c.b16 %v5381, %v5365
    %v6262 = vpack.c.b16 %v5382, %v5366
    %v6263 = vpack.c.b16 %v5383, %v5367
    %v6264 = vpack.c.b16 %v5384, %v5368
    %v6265 = vpack.c.b16 %v5385, %v5369
    %v6266 = vpack.c.b16 %v5386, %v5370
    %v6267 = vpack.c.b16 %v5387, %v5371
    %v6268 = vpack.c.b16 %v5388, %v5372
    %v6269 = vpack.c.b16 %v5389, %v5373
    %v6270 = vpack.c.b16 %v5390, %v5374
    %v6271 = vpack.c.b16 %v5407, %v5391
    %v6272 = vpack.c.b16 %v5408, %v5392
    %v6273 = vpack.c.b16 %v5409, %v5393
    %v6274 = vpack.c.b16 %v5410, %v5394
    %v6275 = vpack.c.b16 %v5411, %v5395
    %v6276 = vpack.c.b16 %v5412, %v5396
    %v6277 = vpack.c.b16 %v5413, %v5397
    %v6278 = vpack.c.b16 %v5414, %v5398
    %v6279 = vpack.c.b16 %v5415, %v5399
    %v6280 = vpack.c.b16 %v5416, %v5400
    %v6281 = vpack.c.b16 %v5417, %v5401
    %v6282 = vpack.c.b16 %v5418, %v5402
    %v6283 = vpack.c.b16 %v5419, %v5403
    %v6284 = vpack.c.b16 %v5420, %v5404
    %v6285 = vpack.c.b16 %v5421, %v5405
    %v6286 = vpack.c.b16 %v5422, %v5406
    %v6287 = vpack.c.b16 %v5439, %v5423
    %v6288 = vpack.c.b16 %v5440, %v5424
    %v6289 = vpack.c.b16 %v5441, %v5425
    %v6290 = vpack.c.b16 %v5442, %v5426
    %v6291 = vpack.c.b16 %v5443, %v5427
    %v6292 = vpack.c.b16 %v5444, %v5428
    %v6293 = vpack.c.b16 %v5445, %v5429
    %v6294 = vpack.c.b16 %v5446, %v5430
    %v6295 = vpack.c.b16 %v5447, %v5431
    %v6296 = vpack.c.b16 %v5448, %v5432
    %v6297 = vpack.c.b16 %v5449, %v5433
    %v6298 = vpack.c.b16 %v5450, %v5434
    %v6299 = vpack.c.b16 %v5451, %v5435
    %v6300 = vpack.c.b16 %v5452, %v5436
    %v6301 = vpack.c.b16 %v5453, %v5437
    %v6302 = vpack.c.b16 %v5454, %v5438
    %v6303 = vpack.c.b16 %v5471, %v5455
    %v6304 = vpack.c.b16 %v5472, %v5456
    %v6305 = vpack.c.b16 %v5473, %v5457
    %v6306 = vpack.c.b16 %v5474, %v5458
    %v6307 = vpack.c.b16 %v5475, %v5459
    %v6308 = vpack.c.b16 %v5476, %v5460
    %v6309 = vpack.c.b16 %v5477, %v5461
    %v6310 = vpack.c.b16 %v5478, %v5462
    %v6311 = vpack.c.b16 %v5479, %v5463
    %v6312 = vpack.c.b16 %v5480, %v5464
    %v6313 = vpack.c.b16 %v5481, %v5465
    %v6314 = vpack.c.b16 %v5482, %v5466
    %v6315 = vpack.c.b16 %v5483, %v5467
    %v6316 = vpack.c.b16 %v5484, %v5468
    %v6317 = vpack.c.b16 %v5485, %v5469
    %v6318 = vpack.c.b16 %v5486, %v5470
    %v6319 = vpack.c.b16 %v5503, %v5487
    %v6320 = vpack.c.b16 %v5504, %v5488
    %v6321 = vpack.c.b16 %v5505, %v5489
    %v6322 = vpack.c.b16 %v5506, %v5490
    %v6323 = vpack.c.b16 %v5507, %v5491
    %v6324 = vpack.c.b16 %v5508, %v5492
    %v6325 = vpack.c.b16 %v5509, %v5493
    %v6326 = vpack.c.b16 %v5510, %v5494
    %v6327 = vpack.c.b16 %v5511, %v5495
    %v6328 = vpack.c.b16 %v5512, %v5496
    %v6329 = vpack.c.b16 %v5513, %v5497
    %v6330 = vpack.c.b16 %v5514, %v5498
    %v6331 = vpack.c.b16 %v5515, %v5499
    %v6332 = vpack.c.b16 %v5516, %v5500
    %v6333 = vpack.c.b16 %v5517, %v5501
    %v6334 = vpack.c.b16 %v5518, %v5502
    %v6335 = vpack.c.b16 %v5535, %v5519
    %v6336 = vpack.c.b16 %v5536, %v5520
    %v6337 = vpack.c.b16 %v5537, %v5521
    %v6338 = vpack.c.b16 %v5538, %v5522
    %v6339 = vpack.c.b16 %v5539, %v5523
    %v6340 = vpack.c.b16 %v5540, %v5524
    %v6341 = vpack.c.b16 %v5541, %v5525
    %v6342 = vpack.c.b16 %v5542, %v5526
    %v6343 = vpack.c.b16 %v5543, %v5527
    %v6344 = vpack.c.b16 %v5544, %v5528
    %v6345 = vpack.c.b16 %v5545, %v5529
    %v6346 = vpack.c.b16 %v5546, %v5530
    %v6347 = vpack.c.b16 %v5547, %v5531
    %v6348 = vpack.c.b16 %v5548, %v5532
    %v6349 = vpack.c.b16 %v5549, %v5533
    %v6350 = vpack.c.b16 %v5550, %v5534
    %v6351 = vpack.c.b16 %v5567, %v5551
    %v6352 = vpack.c.b16 %v5568, %v5552
    %v6353 = vpack.c.b16 %v5569, %v5553
    %v6354 = vpack.c.b16 %v5570, %v5554
    %v6355 = vpack.c.b16 %v5571, %v5555
    %v6356 = vpack.c.b16 %v5572, %v5556
    %v6357 = vpack.c.b16 %v5573, %v5557
    %v6358 = vpack.c.b16 %v5574, %v5558
    %v6359 = vpack.c.b16 %v5575, %v5559
    %v6360 = vpack.c.b16 %v5576, %v5560
    %v6361 = vpack.c.b16 %v5577, %v5561
    %v6362 = vpack.c.b16 %v5578, %v5562
    %v6363 = vpack.c.b16 %v5579, %v5563
    %v6364 = vpack.c.b16 %v5580, %v5564
    %v6365 = vpack.c.b16 %v5581, %v5565
    %v6366 = vpack.c.b16 %v5582, %v5566
    %v6367 = vpack.c.b16 %v5599, %v5583
    %v6368 = vpack.c.b16 %v5600, %v5584
    %v6369 = vpack.c.b16 %v5601, %v5585
    %v6370 = vpack.c.b16 %v5602, %v5586
    %v6371 = vpack.c.b16 %v5603, %v5587
    %v6372 = vpack.c.b16 %v5604, %v5588
    %v6373 = vpack.c.b16 %v5605, %v5589
    %v6374 = vpack.c.b16 %v5606, %v5590
    %v6375 = vpack.c.b16 %v5607, %v5591
    %v6376 = vpack.c.b16 %v5608, %v5592
    %v6377 = vpack.c.b16 %v5609, %v5593
    %v6378 = vpack.c.b16 %v5610, %v5594
    %v6379 = vpack.c.b16 %v5611, %v5595
    %v6380 = vpack.c.b16 %v5612, %v5596
    %v6381 = vpack.c.b16 %v5613, %v5597
    %v6382 = vpack.c.b16 %v5614, %v5598
    %7151 = vmatpush.bf16.msra.mxu0 %v5727
    %7152 = vmatpush.bf16.msra.mxu0 %v5711
    %7153 = vmatpush.bf16.msra.mxu0 %v5695
    %7154 = vmatpush.bf16.msra.mxu0 %v5679
    %7155 = vmatpush.bf16.msra.mxu0 %v5663
    %7156 = vmatpush.bf16.msra.mxu0 %v5647
    %7157 = vmatpush.bf16.msra.mxu0 %v5631
    %7158 = vmatpush.bf16.msra.mxu0 %v5615
    %7159 = vmatmul.bf16.gmra.mxu0 %v2531
    %v7160 = vpop.f32.mrf.mxu0
    %v7161 = vadd.f32 0.0, %v7160
    %v7162 = vpop.f32.mrf.mxu0
    %v7163 = vadd.f32 0.0, %v7162
    %7164 = vmatmul.bf16.gmra.mxu0 %v2537
    %v7165 = vpop.f32.mrf.mxu0
    %v7166 = vadd.f32 0.0, %v7165
    %v7167 = vpop.f32.mrf.mxu0
    %v7168 = vadd.f32 0.0, %v7167
    %7169 = vdwg.mxu0
    %7170 = vmatpush.bf16.msra.mxu0 %v5855
    %7171 = vmatpush.bf16.msra.mxu0 %v5839
    %7172 = vmatpush.bf16.msra.mxu0 %v5823
    %7173 = vmatpush.bf16.msra.mxu0 %v5807
    %7174 = vmatpush.bf16.msra.mxu0 %v5791
    %7175 = vmatpush.bf16.msra.mxu0 %v5775
    %7176 = vmatpush.bf16.msra.mxu0 %v5759
    %7177 = vmatpush.bf16.msra.mxu0 %v5743
    %7178 = vmatmul.bf16.gmra.mxu0 %v2532
    %v7179 = vpop.f32.mrf.mxu0
    %v7180 = vadd.f32 %v7161, %v7179
    %v7181 = vpop.f32.mrf.mxu0
    %v7182 = vadd.f32 %v7163, %v7181
    %7183 = vmatmul.bf16.gmra.mxu0 %v2538
    %v7184 = vpop.f32.mrf.mxu0
    %v7185 = vadd.f32 %v7166, %v7184
    %v7186 = vpop.f32.mrf.mxu0
    %v7187 = vadd.f32 %v7168, %v7186
    %7188 = vdwg.mxu0
    %7189 = vmatpush.bf16.msra.mxu0 %v5983
    %7190 = vmatpush.bf16.msra.mxu0 %v5967
    %7191 = vmatpush.bf16.msra.mxu0 %v5951
    %7192 = vmatpush.bf16.msra.mxu0 %v5935
    %7193 = vmatpush.bf16.msra.mxu0 %v5919
    %7194 = vmatpush.bf16.msra.mxu0 %v5903
    %7195 = vmatpush.bf16.msra.mxu0 %v5887
    %7196 = vmatpush.bf16.msra.mxu0 %v5871
    %7197 = vmatmul.bf16.gmra.mxu0 %v2533
    %v7198 = vpop.f32.mrf.mxu0
    %v7199 = vadd.f32 %v7180, %v7198
    %v7200 = vpop.f32.mrf.mxu0
    %v7201 = vadd.f32 %v7182, %v7200
    %7202 = vmatmul.bf16.gmra.mxu0 %v2539
    %v7203 = vpop.f32.mrf.mxu0
    %v7204 = vadd.f32 %v7185, %v7203
    %v7205 = vpop.f32.mrf.mxu0
    %v7206 = vadd.f32 %v7187, %v7205
    %7207 = vdwg.mxu0
    %7208 = vmatpush.bf16.msra.mxu0 %v6111
    %7209 = vmatpush.bf16.msra.mxu0 %v6095
    %7210 = vmatpush.bf16.msra.mxu0 %v6079
    %7211 = vmatpush.bf16.msra.mxu0 %v6063
    %7212 = vmatpush.bf16.msra.mxu0 %v6047
    %7213 = vmatpush.bf16.msra.mxu0 %v6031
    %7214 = vmatpush.bf16.msra.mxu0 %v6015
    %7215 = vmatpush.bf16.msra.mxu0 %v5999
    %7216 = vmatmul.bf16.gmra.mxu0 %v2534
    %v7217 = vpop.f32.mrf.mxu0
    %v7218 = vadd.f32 %v7199, %v7217
    %v7219 = vpop.f32.mrf.mxu0
    %v7220 = vadd.f32 %v7201, %v7219
    %7221 = vmatmul.bf16.gmra.mxu0 %v2540
    %v7222 = vpop.f32.mrf.mxu0
    %v7223 = vadd.f32 %v7204, %v7222
    %v7224 = vpop.f32.mrf.mxu0
    %v7225 = vadd.f32 %v7206, %v7224
    %7226 = vdwg.mxu0
    %7227 = vmatpush.bf16.msra.mxu0 %v6239
    %7228 = vmatpush.bf16.msra.mxu0 %v6223
    %7229 = vmatpush.bf16.msra.mxu0 %v6207
    %7230 = vmatpush.bf16.msra.mxu0 %v6191
    %7231 = vmatpush.bf16.msra.mxu0 %v6175
    %7232 = vmatpush.bf16.msra.mxu0 %v6159
    %7233 = vmatpush.bf16.msra.mxu0 %v6143
    %7234 = vmatpush.bf16.msra.mxu0 %v6127
    %7235 = vmatmul.bf16.gmra.mxu0 %v2535
    %v7236 = vpop.f32.mrf.mxu0
    %v7237 = vadd.f32 %v7218, %v7236
    %v7238 = vpop.f32.mrf.mxu0
    %v7239 = vadd.f32 %v7220, %v7238
    %7240 = vmatmul.bf16.gmra.mxu0 %v2541
    %v7241 = vpop.f32.mrf.mxu0
    %v7242 = vadd.f32 %v7223, %v7241
    %v7243 = vpop.f32.mrf.mxu0
    %v7244 = vadd.f32 %v7225, %v7243
    %7245 = vdwg.mxu0
    %7246 = vmatpush.bf16.msra.mxu0 %v6367
    %7247 = vmatpush.bf16.msra.mxu0 %v6351
    %7248 = vmatpush.bf16.msra.mxu0 %v6335
    %7249 = vmatpush.bf16.msra.mxu0 %v6319
    %7250 = vmatpush.bf16.msra.mxu0 %v6303
    %7251 = vmatpush.bf16.msra.mxu0 %v6287
    %7252 = vmatpush.bf16.msra.mxu0 %v6271
    %7253 = vmatpush.bf16.msra.mxu0 %v6255
    %7254 = vmatmul.bf16.gmra.mxu0 %v2536
    %v7255 = vpop.f32.mrf.mxu0
    %v7256 = vadd.f32 %v7237, %v7255
    %v7257 = vpop.f32.mrf.mxu0
    %v7258 = vadd.f32 %v7239, %v7257
    %7259 = vmatmul.bf16.gmra.mxu0 %v2542
    %v7260 = vpop.f32.mrf.mxu0
    %v7261 = vadd.f32 %v7242, %v7260
    %v7262 = vpop.f32.mrf.mxu0
    %v7263 = vadd.f32 %v7244, %v7262
    %7264 = vdwg.mxu0
    %7265 = vmatpush.bf16.msra.mxu0 %v5728
    %7266 = vmatpush.bf16.msra.mxu0 %v5712
    %7267 = vmatpush.bf16.msra.mxu0 %v5696
    %7268 = vmatpush.bf16.msra.mxu0 %v5680
    %7269 = vmatpush.bf16.msra.mxu0 %v5664
    %7270 = vmatpush.bf16.msra.mxu0 %v5648
    %7271 = vmatpush.bf16.msra.mxu0 %v5632
    %7272 = vmatpush.bf16.msra.mxu0 %v5616
    %7273 = vmatmul.bf16.gmra.mxu0 %v2531
    %v7274 = vpop.f32.mrf.mxu0
    %v7275 = vadd.f32 0.0, %v7274
    %v7276 = vpop.f32.mrf.mxu0
    %v7277 = vadd.f32 0.0, %v7276
    %7278 = vmatmul.bf16.gmra.mxu0 %v2537
    %v7279 = vpop.f32.mrf.mxu0
    %v7280 = vadd.f32 0.0, %v7279
    %v7281 = vpop.f32.mrf.mxu0
    %v7282 = vadd.f32 0.0, %v7281
    %7283 = vdwg.mxu0
    %7284 = vmatpush.bf16.msra.mxu0 %v5856
    %7285 = vmatpush.bf16.msra.mxu0 %v5840
    %7286 = vmatpush.bf16.msra.mxu0 %v5824
    %7287 = vmatpush.bf16.msra.mxu0 %v5808
    %7288 = vmatpush.bf16.msra.mxu0 %v5792
    %7289 = vmatpush.bf16.msra.mxu0 %v5776
    %7290 = vmatpush.bf16.msra.mxu0 %v5760
    %7291 = vmatpush.bf16.msra.mxu0 %v5744
    %7292 = vmatmul.bf16.gmra.mxu0 %v2532
    %v7293 = vpop.f32.mrf.mxu0
    %v7294 = vadd.f32 %v7275, %v7293
    %v7295 = vpop.f32.mrf.mxu0
    %v7296 = vadd.f32 %v7277, %v7295
    %7297 = vmatmul.bf16.gmra.mxu0 %v2538
    %v7298 = vpop.f32.mrf.mxu0
    %v7299 = vadd.f32 %v7280, %v7298
    %v7300 = vpop.f32.mrf.mxu0
    %v7301 = vadd.f32 %v7282, %v7300
    %7302 = vdwg.mxu0
    %7303 = vmatpush.bf16.msra.mxu0 %v5984
    %7304 = vmatpush.bf16.msra.mxu0 %v5968
    %7305 = vmatpush.bf16.msra.mxu0 %v5952
    %7306 = vmatpush.bf16.msra.mxu0 %v5936
    %7307 = vmatpush.bf16.msra.mxu0 %v5920
    %7308 = vmatpush.bf16.msra.mxu0 %v5904
    %7309 = vmatpush.bf16.msra.mxu0 %v5888
    %7310 = vmatpush.bf16.msra.mxu0 %v5872
    %7311 = vmatmul.bf16.gmra.mxu0 %v2533
    %v7312 = vpop.f32.mrf.mxu0
    %v7313 = vadd.f32 %v7294, %v7312
    %v7314 = vpop.f32.mrf.mxu0
    %v7315 = vadd.f32 %v7296, %v7314
    %7316 = vmatmul.bf16.gmra.mxu0 %v2539
    %v7317 = vpop.f32.mrf.mxu0
    %v7318 = vadd.f32 %v7299, %v7317
    %v7319 = vpop.f32.mrf.mxu0
    %v7320 = vadd.f32 %v7301, %v7319
    %7321 = vdwg.mxu0
    %7322 = vmatpush.bf16.msra.mxu0 %v6112
    %7323 = vmatpush.bf16.msra.mxu0 %v6096
    %7324 = vmatpush.bf16.msra.mxu0 %v6080
    %7325 = vmatpush.bf16.msra.mxu0 %v6064
    %7326 = vmatpush.bf16.msra.mxu0 %v6048
    %7327 = vmatpush.bf16.msra.mxu0 %v6032
    %7328 = vmatpush.bf16.msra.mxu0 %v6016
    %7329 = vmatpush.bf16.msra.mxu0 %v6000
    %7330 = vmatmul.bf16.gmra.mxu0 %v2534
    %v7331 = vpop.f32.mrf.mxu0
    %v7332 = vadd.f32 %v7313, %v7331
    %v7333 = vpop.f32.mrf.mxu0
    %v7334 = vadd.f32 %v7315, %v7333
    %7335 = vmatmul.bf16.gmra.mxu0 %v2540
    %v7336 = vpop.f32.mrf.mxu0
    %v7337 = vadd.f32 %v7318, %v7336
    %v7338 = vpop.f32.mrf.mxu0
    %v7339 = vadd.f32 %v7320, %v7338
    %7340 = vdwg.mxu0
    %7341 = vmatpush.bf16.msra.mxu0 %v6240
    %7342 = vmatpush.bf16.msra.mxu0 %v6224
    %7343 = vmatpush.bf16.msra.mxu0 %v6208
    %7344 = vmatpush.bf16.msra.mxu0 %v6192
    %7345 = vmatpush.bf16.msra.mxu0 %v6176
    %7346 = vmatpush.bf16.msra.mxu0 %v6160
    %7347 = vmatpush.bf16.msra.mxu0 %v6144
    %7348 = vmatpush.bf16.msra.mxu0 %v6128
    %7349 = vmatmul.bf16.gmra.mxu0 %v2535
    %v7350 = vpop.f32.mrf.mxu0
    %v7351 = vadd.f32 %v7332, %v7350
    %v7352 = vpop.f32.mrf.mxu0
    %v7353 = vadd.f32 %v7334, %v7352
    %7354 = vmatmul.bf16.gmra.mxu0 %v2541
    %v7355 = vpop.f32.mrf.mxu0
    %v7356 = vadd.f32 %v7337, %v7355
    %v7357 = vpop.f32.mrf.mxu0
    %v7358 = vadd.f32 %v7339, %v7357
    %7359 = vdwg.mxu0
    %7360 = vmatpush.bf16.msra.mxu0 %v6368
    %7361 = vmatpush.bf16.msra.mxu0 %v6352
    %7362 = vmatpush.bf16.msra.mxu0 %v6336
    %7363 = vmatpush.bf16.msra.mxu0 %v6320
    %7364 = vmatpush.bf16.msra.mxu0 %v6304
    %7365 = vmatpush.bf16.msra.mxu0 %v6288
    %7366 = vmatpush.bf16.msra.mxu0 %v6272
    %7367 = vmatpush.bf16.msra.mxu0 %v6256
    %7368 = vmatmul.bf16.gmra.mxu0 %v2536
    %v7369 = vpop.f32.mrf.mxu0
    %v7370 = vadd.f32 %v7351, %v7369
    %v7371 = vpop.f32.mrf.mxu0
    %v7372 = vadd.f32 %v7353, %v7371
    %7373 = vmatmul.bf16.gmra.mxu0 %v2542
    %v7374 = vpop.f32.mrf.mxu0
    %v7375 = vadd.f32 %v7356, %v7374
    %v7376 = vpop.f32.mrf.mxu0
    %v7377 = vadd.f32 %v7358, %v7376
    %7378 = vdwg.mxu0
    %7379 = vmatpush.bf16.msra.mxu0 %v5729
    %7380 = vmatpush.bf16.msra.mxu0 %v5713
    %7381 = vmatpush.bf16.msra.mxu0 %v5697
    %7382 = vmatpush.bf16.msra.mxu0 %v5681
    %7383 = vmatpush.bf16.msra.mxu0 %v5665
    %7384 = vmatpush.bf16.msra.mxu0 %v5649
    %7385 = vmatpush.bf16.msra.mxu0 %v5633
    %7386 = vmatpush.bf16.msra.mxu0 %v5617
    %7387 = vmatmul.bf16.gmra.mxu0 %v2531
    %v7388 = vpop.f32.mrf.mxu0
    %v7389 = vadd.f32 0.0, %v7388
    %v7390 = vpop.f32.mrf.mxu0
    %v7391 = vadd.f32 0.0, %v7390
    %7392 = vmatmul.bf16.gmra.mxu0 %v2537
    %v7393 = vpop.f32.mrf.mxu0
    %v7394 = vadd.f32 0.0, %v7393
    %v7395 = vpop.f32.mrf.mxu0
    %v7396 = vadd.f32 0.0, %v7395
    %7397 = vdwg.mxu0
    %7398 = vmatpush.bf16.msra.mxu0 %v5857
    %7399 = vmatpush.bf16.msra.mxu0 %v5841
    %7400 = vmatpush.bf16.msra.mxu0 %v5825
    %7401 = vmatpush.bf16.msra.mxu0 %v5809
    %7402 = vmatpush.bf16.msra.mxu0 %v5793
    %7403 = vmatpush.bf16.msra.mxu0 %v5777
    %7404 = vmatpush.bf16.msra.mxu0 %v5761
    %7405 = vmatpush.bf16.msra.mxu0 %v5745
    %7406 = vmatmul.bf16.gmra.mxu0 %v2532
    %v7407 = vpop.f32.mrf.mxu0
    %v7408 = vadd.f32 %v7389, %v7407
    %v7409 = vpop.f32.mrf.mxu0
    %v7410 = vadd.f32 %v7391, %v7409
    %7411 = vmatmul.bf16.gmra.mxu0 %v2538
    %v7412 = vpop.f32.mrf.mxu0
    %v7413 = vadd.f32 %v7394, %v7412
    %v7414 = vpop.f32.mrf.mxu0
    %v7415 = vadd.f32 %v7396, %v7414
    %7416 = vdwg.mxu0
    %7417 = vmatpush.bf16.msra.mxu0 %v5985
    %7418 = vmatpush.bf16.msra.mxu0 %v5969
    %7419 = vmatpush.bf16.msra.mxu0 %v5953
    %7420 = vmatpush.bf16.msra.mxu0 %v5937
    %7421 = vmatpush.bf16.msra.mxu0 %v5921
    %7422 = vmatpush.bf16.msra.mxu0 %v5905
    %7423 = vmatpush.bf16.msra.mxu0 %v5889
    %7424 = vmatpush.bf16.msra.mxu0 %v5873
    %7425 = vmatmul.bf16.gmra.mxu0 %v2533
    %v7426 = vpop.f32.mrf.mxu0
    %v7427 = vadd.f32 %v7408, %v7426
    %v7428 = vpop.f32.mrf.mxu0
    %v7429 = vadd.f32 %v7410, %v7428
    %7430 = vmatmul.bf16.gmra.mxu0 %v2539
    %v7431 = vpop.f32.mrf.mxu0
    %v7432 = vadd.f32 %v7413, %v7431
    %v7433 = vpop.f32.mrf.mxu0
    %v7434 = vadd.f32 %v7415, %v7433
    %7435 = vdwg.mxu0
    %7436 = vmatpush.bf16.msra.mxu0 %v6113
    %7437 = vmatpush.bf16.msra.mxu0 %v6097
    %7438 = vmatpush.bf16.msra.mxu0 %v6081
    %7439 = vmatpush.bf16.msra.mxu0 %v6065
    %7440 = vmatpush.bf16.msra.mxu0 %v6049
    %7441 = vmatpush.bf16.msra.mxu0 %v6033
    %7442 = vmatpush.bf16.msra.mxu0 %v6017
    %7443 = vmatpush.bf16.msra.mxu0 %v6001
    %7444 = vmatmul.bf16.gmra.mxu0 %v2534
    %v7445 = vpop.f32.mrf.mxu0
    %v7446 = vadd.f32 %v7427, %v7445
    %v7447 = vpop.f32.mrf.mxu0
    %v7448 = vadd.f32 %v7429, %v7447
    %7449 = vmatmul.bf16.gmra.mxu0 %v2540
    %v7450 = vpop.f32.mrf.mxu0
    %v7451 = vadd.f32 %v7432, %v7450
    %v7452 = vpop.f32.mrf.mxu0
    %v7453 = vadd.f32 %v7434, %v7452
    %7454 = vdwg.mxu0
    %7455 = vmatpush.bf16.msra.mxu0 %v6241
    %7456 = vmatpush.bf16.msra.mxu0 %v6225
    %7457 = vmatpush.bf16.msra.mxu0 %v6209
    %7458 = vmatpush.bf16.msra.mxu0 %v6193
    %7459 = vmatpush.bf16.msra.mxu0 %v6177
    %7460 = vmatpush.bf16.msra.mxu0 %v6161
    %7461 = vmatpush.bf16.msra.mxu0 %v6145
    %7462 = vmatpush.bf16.msra.mxu0 %v6129
    %7463 = vmatmul.bf16.gmra.mxu0 %v2535
    %v7464 = vpop.f32.mrf.mxu0
    %v7465 = vadd.f32 %v7446, %v7464
    %v7466 = vpop.f32.mrf.mxu0
    %v7467 = vadd.f32 %v7448, %v7466
    %7468 = vmatmul.bf16.gmra.mxu0 %v2541
    %v7469 = vpop.f32.mrf.mxu0
    %v7470 = vadd.f32 %v7451, %v7469
    %v7471 = vpop.f32.mrf.mxu0
    %v7472 = vadd.f32 %v7453, %v7471
    %7473 = vdwg.mxu0
    %7474 = vmatpush.bf16.msra.mxu0 %v6369
    %7475 = vmatpush.bf16.msra.mxu0 %v6353
    %7476 = vmatpush.bf16.msra.mxu0 %v6337
    %7477 = vmatpush.bf16.msra.mxu0 %v6321
    %7478 = vmatpush.bf16.msra.mxu0 %v6305
    %7479 = vmatpush.bf16.msra.mxu0 %v6289
    %7480 = vmatpush.bf16.msra.mxu0 %v6273
    %7481 = vmatpush.bf16.msra.mxu0 %v6257
    %7482 = vmatmul.bf16.gmra.mxu0 %v2536
    %v7483 = vpop.f32.mrf.mxu0
    %v7484 = vadd.f32 %v7465, %v7483
    %v7485 = vpop.f32.mrf.mxu0
    %v7486 = vadd.f32 %v7467, %v7485
    %7487 = vmatmul.bf16.gmra.mxu0 %v2542
    %v7488 = vpop.f32.mrf.mxu0
    %v7489 = vadd.f32 %v7470, %v7488
    %v7490 = vpop.f32.mrf.mxu0
    %v7491 = vadd.f32 %v7472, %v7490
    %7492 = vdwg.mxu0
    %7493 = vmatpush.bf16.msra.mxu0 %v5730
    %7494 = vmatpush.bf16.msra.mxu0 %v5714
    %7495 = vmatpush.bf16.msra.mxu0 %v5698
    %7496 = vmatpush.bf16.msra.mxu0 %v5682
    %7497 = vmatpush.bf16.msra.mxu0 %v5666
    %7498 = vmatpush.bf16.msra.mxu0 %v5650
    %7499 = vmatpush.bf16.msra.mxu0 %v5634
    %7500 = vmatpush.bf16.msra.mxu0 %v5618
    %7501 = vmatmul.bf16.gmra.mxu0 %v2531
    %v7502 = vpop.f32.mrf.mxu0
    %v7503 = vadd.f32 0.0, %v7502
    %v7504 = vpop.f32.mrf.mxu0
    %v7505 = vadd.f32 0.0, %v7504
    %7506 = vmatmul.bf16.gmra.mxu0 %v2537
    %v7507 = vpop.f32.mrf.mxu0
    %v7508 = vadd.f32 0.0, %v7507
    %v7509 = vpop.f32.mrf.mxu0
    %v7510 = vadd.f32 0.0, %v7509
    %7511 = vdwg.mxu0
    %7512 = vmatpush.bf16.msra.mxu0 %v5858
    %7513 = vmatpush.bf16.msra.mxu0 %v5842
    %7514 = vmatpush.bf16.msra.mxu0 %v5826
    %7515 = vmatpush.bf16.msra.mxu0 %v5810
    %7516 = vmatpush.bf16.msra.mxu0 %v5794
    %7517 = vmatpush.bf16.msra.mxu0 %v5778
    %7518 = vmatpush.bf16.msra.mxu0 %v5762
    %7519 = vmatpush.bf16.msra.mxu0 %v5746
    %7520 = vmatmul.bf16.gmra.mxu0 %v2532
    %v7521 = vpop.f32.mrf.mxu0
    %v7522 = vadd.f32 %v7503, %v7521
    %v7523 = vpop.f32.mrf.mxu0
    %v7524 = vadd.f32 %v7505, %v7523
    %7525 = vmatmul.bf16.gmra.mxu0 %v2538
    %v7526 = vpop.f32.mrf.mxu0
    %v7527 = vadd.f32 %v7508, %v7526
    %v7528 = vpop.f32.mrf.mxu0
    %v7529 = vadd.f32 %v7510, %v7528
    %7530 = vdwg.mxu0
    %7531 = vmatpush.bf16.msra.mxu0 %v5986
    %7532 = vmatpush.bf16.msra.mxu0 %v5970
    %7533 = vmatpush.bf16.msra.mxu0 %v5954
    %7534 = vmatpush.bf16.msra.mxu0 %v5938
    %7535 = vmatpush.bf16.msra.mxu0 %v5922
    %7536 = vmatpush.bf16.msra.mxu0 %v5906
    %7537 = vmatpush.bf16.msra.mxu0 %v5890
    %7538 = vmatpush.bf16.msra.mxu0 %v5874
    %7539 = vmatmul.bf16.gmra.mxu0 %v2533
    %v7540 = vpop.f32.mrf.mxu0
    %v7541 = vadd.f32 %v7522, %v7540
    %v7542 = vpop.f32.mrf.mxu0
    %v7543 = vadd.f32 %v7524, %v7542
    %7544 = vmatmul.bf16.gmra.mxu0 %v2539
    %v7545 = vpop.f32.mrf.mxu0
    %v7546 = vadd.f32 %v7527, %v7545
    %v7547 = vpop.f32.mrf.mxu0
    %v7548 = vadd.f32 %v7529, %v7547
    %7549 = vdwg.mxu0
    %7550 = vmatpush.bf16.msra.mxu0 %v6114
    %7551 = vmatpush.bf16.msra.mxu0 %v6098
    %7552 = vmatpush.bf16.msra.mxu0 %v6082
    %7553 = vmatpush.bf16.msra.mxu0 %v6066
    %7554 = vmatpush.bf16.msra.mxu0 %v6050
    %7555 = vmatpush.bf16.msra.mxu0 %v6034
    %7556 = vmatpush.bf16.msra.mxu0 %v6018
    %7557 = vmatpush.bf16.msra.mxu0 %v6002
    %7558 = vmatmul.bf16.gmra.mxu0 %v2534
    %v7559 = vpop.f32.mrf.mxu0
    %v7560 = vadd.f32 %v7541, %v7559
    %v7561 = vpop.f32.mrf.mxu0
    %v7562 = vadd.f32 %v7543, %v7561
    %7563 = vmatmul.bf16.gmra.mxu0 %v2540
    %v7564 = vpop.f32.mrf.mxu0
    %v7565 = vadd.f32 %v7546, %v7564
    %v7566 = vpop.f32.mrf.mxu0
    %v7567 = vadd.f32 %v7548, %v7566
    %7568 = vdwg.mxu0
    %7569 = vmatpush.bf16.msra.mxu0 %v6242
    %7570 = vmatpush.bf16.msra.mxu0 %v6226
    %7571 = vmatpush.bf16.msra.mxu0 %v6210
    %7572 = vmatpush.bf16.msra.mxu0 %v6194
    %7573 = vmatpush.bf16.msra.mxu0 %v6178
    %7574 = vmatpush.bf16.msra.mxu0 %v6162
    %7575 = vmatpush.bf16.msra.mxu0 %v6146
    %7576 = vmatpush.bf16.msra.mxu0 %v6130
    %7577 = vmatmul.bf16.gmra.mxu0 %v2535
    %v7578 = vpop.f32.mrf.mxu0
    %v7579 = vadd.f32 %v7560, %v7578
    %v7580 = vpop.f32.mrf.mxu0
    %v7581 = vadd.f32 %v7562, %v7580
    %7582 = vmatmul.bf16.gmra.mxu0 %v2541
    %v7583 = vpop.f32.mrf.mxu0
    %v7584 = vadd.f32 %v7565, %v7583
    %v7585 = vpop.f32.mrf.mxu0
    %v7586 = vadd.f32 %v7567, %v7585
    %7587 = vdwg.mxu0
    %7588 = vmatpush.bf16.msra.mxu0 %v6370
    %7589 = vmatpush.bf16.msra.mxu0 %v6354
    %7590 = vmatpush.bf16.msra.mxu0 %v6338
    %7591 = vmatpush.bf16.msra.mxu0 %v6322
    %7592 = vmatpush.bf16.msra.mxu0 %v6306
    %7593 = vmatpush.bf16.msra.mxu0 %v6290
    %7594 = vmatpush.bf16.msra.mxu0 %v6274
    %7595 = vmatpush.bf16.msra.mxu0 %v6258
    %7596 = vmatmul.bf16.gmra.mxu0 %v2536
    %v7597 = vpop.f32.mrf.mxu0
    %v7598 = vadd.f32 %v7579, %v7597
    %v7599 = vpop.f32.mrf.mxu0
    %v7600 = vadd.f32 %v7581, %v7599
    %7601 = vmatmul.bf16.gmra.mxu0 %v2542
    %v7602 = vpop.f32.mrf.mxu0
    %v7603 = vadd.f32 %v7584, %v7602
    %v7604 = vpop.f32.mrf.mxu0
    %v7605 = vadd.f32 %v7586, %v7604
    %7606 = vdwg.mxu0
    %7607 = vmatpush.bf16.msra.mxu0 %v5731
    %7608 = vmatpush.bf16.msra.mxu0 %v5715
    %7609 = vmatpush.bf16.msra.mxu0 %v5699
    %7610 = vmatpush.bf16.msra.mxu0 %v5683
    %7611 = vmatpush.bf16.msra.mxu0 %v5667
    %7612 = vmatpush.bf16.msra.mxu0 %v5651
    %7613 = vmatpush.bf16.msra.mxu0 %v5635
    %7614 = vmatpush.bf16.msra.mxu0 %v5619
    %7615 = vmatmul.bf16.gmra.mxu0 %v2531
    %v7616 = vpop.f32.mrf.mxu0
    %v7617 = vadd.f32 0.0, %v7616
    %v7618 = vpop.f32.mrf.mxu0
    %v7619 = vadd.f32 0.0, %v7618
    %7620 = vmatmul.bf16.gmra.mxu0 %v2537
    %v7621 = vpop.f32.mrf.mxu0
    %v7622 = vadd.f32 0.0, %v7621
    %v7623 = vpop.f32.mrf.mxu0
    %v7624 = vadd.f32 0.0, %v7623
    %7625 = vdwg.mxu0
    %7626 = vmatpush.bf16.msra.mxu0 %v5859
    %7627 = vmatpush.bf16.msra.mxu0 %v5843
    %7628 = vmatpush.bf16.msra.mxu0 %v5827
    %7629 = vmatpush.bf16.msra.mxu0 %v5811
    %7630 = vmatpush.bf16.msra.mxu0 %v5795
    %7631 = vmatpush.bf16.msra.mxu0 %v5779
    %7632 = vmatpush.bf16.msra.mxu0 %v5763
    %7633 = vmatpush.bf16.msra.mxu0 %v5747
    %7634 = vmatmul.bf16.gmra.mxu0 %v2532
    %v7635 = vpop.f32.mrf.mxu0
    %v7636 = vadd.f32 %v7617, %v7635
    %v7637 = vpop.f32.mrf.mxu0
    %v7638 = vadd.f32 %v7619, %v7637
    %7639 = vmatmul.bf16.gmra.mxu0 %v2538
    %v7640 = vpop.f32.mrf.mxu0
    %v7641 = vadd.f32 %v7622, %v7640
    %v7642 = vpop.f32.mrf.mxu0
    %v7643 = vadd.f32 %v7624, %v7642
    %7644 = vdwg.mxu0
    %7645 = vmatpush.bf16.msra.mxu0 %v5987
    %7646 = vmatpush.bf16.msra.mxu0 %v5971
    %7647 = vmatpush.bf16.msra.mxu0 %v5955
    %7648 = vmatpush.bf16.msra.mxu0 %v5939
    %7649 = vmatpush.bf16.msra.mxu0 %v5923
    %7650 = vmatpush.bf16.msra.mxu0 %v5907
    %7651 = vmatpush.bf16.msra.mxu0 %v5891
    %7652 = vmatpush.bf16.msra.mxu0 %v5875
    %7653 = vmatmul.bf16.gmra.mxu0 %v2533
    %v7654 = vpop.f32.mrf.mxu0
    %v7655 = vadd.f32 %v7636, %v7654
    %v7656 = vpop.f32.mrf.mxu0
    %v7657 = vadd.f32 %v7638, %v7656
    %7658 = vmatmul.bf16.gmra.mxu0 %v2539
    %v7659 = vpop.f32.mrf.mxu0
    %v7660 = vadd.f32 %v7641, %v7659
    %v7661 = vpop.f32.mrf.mxu0
    %v7662 = vadd.f32 %v7643, %v7661
    %7663 = vdwg.mxu0
    %7664 = vmatpush.bf16.msra.mxu0 %v6115
    %7665 = vmatpush.bf16.msra.mxu0 %v6099
    %7666 = vmatpush.bf16.msra.mxu0 %v6083
    %7667 = vmatpush.bf16.msra.mxu0 %v6067
    %7668 = vmatpush.bf16.msra.mxu0 %v6051
    %7669 = vmatpush.bf16.msra.mxu0 %v6035
    %7670 = vmatpush.bf16.msra.mxu0 %v6019
    %7671 = vmatpush.bf16.msra.mxu0 %v6003
    %7672 = vmatmul.bf16.gmra.mxu0 %v2534
    %v7673 = vpop.f32.mrf.mxu0
    %v7674 = vadd.f32 %v7655, %v7673
    %v7675 = vpop.f32.mrf.mxu0
    %v7676 = vadd.f32 %v7657, %v7675
    %7677 = vmatmul.bf16.gmra.mxu0 %v2540
    %v7678 = vpop.f32.mrf.mxu0
    %v7679 = vadd.f32 %v7660, %v7678
    %v7680 = vpop.f32.mrf.mxu0
    %v7681 = vadd.f32 %v7662, %v7680
    %7682 = vdwg.mxu0
    %7683 = vmatpush.bf16.msra.mxu0 %v6243
    %7684 = vmatpush.bf16.msra.mxu0 %v6227
    %7685 = vmatpush.bf16.msra.mxu0 %v6211
    %7686 = vmatpush.bf16.msra.mxu0 %v6195
    %7687 = vmatpush.bf16.msra.mxu0 %v6179
    %7688 = vmatpush.bf16.msra.mxu0 %v6163
    %7689 = vmatpush.bf16.msra.mxu0 %v6147
    %7690 = vmatpush.bf16.msra.mxu0 %v6131
    %7691 = vmatmul.bf16.gmra.mxu0 %v2535
    %v7692 = vpop.f32.mrf.mxu0
    %v7693 = vadd.f32 %v7674, %v7692
    %v7694 = vpop.f32.mrf.mxu0
    %v7695 = vadd.f32 %v7676, %v7694
    %7696 = vmatmul.bf16.gmra.mxu0 %v2541
    %v7697 = vpop.f32.mrf.mxu0
    %v7698 = vadd.f32 %v7679, %v7697
    %v7699 = vpop.f32.mrf.mxu0
    %v7700 = vadd.f32 %v7681, %v7699
    %7701 = vdwg.mxu0
    %7702 = vmatpush.bf16.msra.mxu0 %v6371
    %7703 = vmatpush.bf16.msra.mxu0 %v6355
    %7704 = vmatpush.bf16.msra.mxu0 %v6339
    %7705 = vmatpush.bf16.msra.mxu0 %v6323
    %7706 = vmatpush.bf16.msra.mxu0 %v6307
    %7707 = vmatpush.bf16.msra.mxu0 %v6291
    %7708 = vmatpush.bf16.msra.mxu0 %v6275
    %7709 = vmatpush.bf16.msra.mxu0 %v6259
    %7710 = vmatmul.bf16.gmra.mxu0 %v2536
    %v7711 = vpop.f32.mrf.mxu0
    %v7712 = vadd.f32 %v7693, %v7711
    %v7713 = vpop.f32.mrf.mxu0
    %v7714 = vadd.f32 %v7695, %v7713
    %7715 = vmatmul.bf16.gmra.mxu0 %v2542
    %v7716 = vpop.f32.mrf.mxu0
    %v7717 = vadd.f32 %v7698, %v7716
    %v7718 = vpop.f32.mrf.mxu0
    %v7719 = vadd.f32 %v7700, %v7718
    %7720 = vdwg.mxu0
    %7721 = vmatpush.bf16.msra.mxu0 %v5732
    %7722 = vmatpush.bf16.msra.mxu0 %v5716
    %7723 = vmatpush.bf16.msra.mxu0 %v5700
    %7724 = vmatpush.bf16.msra.mxu0 %v5684
    %7725 = vmatpush.bf16.msra.mxu0 %v5668
    %7726 = vmatpush.bf16.msra.mxu0 %v5652
    %7727 = vmatpush.bf16.msra.mxu0 %v5636
    %7728 = vmatpush.bf16.msra.mxu0 %v5620
    %7729 = vmatmul.bf16.gmra.mxu0 %v2531
    %v7730 = vpop.f32.mrf.mxu0
    %v7731 = vadd.f32 0.0, %v7730
    %v7732 = vpop.f32.mrf.mxu0
    %v7733 = vadd.f32 0.0, %v7732
    %7734 = vmatmul.bf16.gmra.mxu0 %v2537
    %v7735 = vpop.f32.mrf.mxu0
    %v7736 = vadd.f32 0.0, %v7735
    %v7737 = vpop.f32.mrf.mxu0
    %v7738 = vadd.f32 0.0, %v7737
    %7739 = vdwg.mxu0
    %7740 = vmatpush.bf16.msra.mxu0 %v5860
    %7741 = vmatpush.bf16.msra.mxu0 %v5844
    %7742 = vmatpush.bf16.msra.mxu0 %v5828
    %7743 = vmatpush.bf16.msra.mxu0 %v5812
    %7744 = vmatpush.bf16.msra.mxu0 %v5796
    %7745 = vmatpush.bf16.msra.mxu0 %v5780
    %7746 = vmatpush.bf16.msra.mxu0 %v5764
    %7747 = vmatpush.bf16.msra.mxu0 %v5748
    %7748 = vmatmul.bf16.gmra.mxu0 %v2532
    %v7749 = vpop.f32.mrf.mxu0
    %v7750 = vadd.f32 %v7731, %v7749
    %v7751 = vpop.f32.mrf.mxu0
    %v7752 = vadd.f32 %v7733, %v7751
    %7753 = vmatmul.bf16.gmra.mxu0 %v2538
    %v7754 = vpop.f32.mrf.mxu0
    %v7755 = vadd.f32 %v7736, %v7754
    %v7756 = vpop.f32.mrf.mxu0
    %v7757 = vadd.f32 %v7738, %v7756
    %7758 = vdwg.mxu0
    %7759 = vmatpush.bf16.msra.mxu0 %v5988
    %7760 = vmatpush.bf16.msra.mxu0 %v5972
    %7761 = vmatpush.bf16.msra.mxu0 %v5956
    %7762 = vmatpush.bf16.msra.mxu0 %v5940
    %7763 = vmatpush.bf16.msra.mxu0 %v5924
    %7764 = vmatpush.bf16.msra.mxu0 %v5908
    %7765 = vmatpush.bf16.msra.mxu0 %v5892
    %7766 = vmatpush.bf16.msra.mxu0 %v5876
    %7767 = vmatmul.bf16.gmra.mxu0 %v2533
    %v7768 = vpop.f32.mrf.mxu0
    %v7769 = vadd.f32 %v7750, %v7768
    %v7770 = vpop.f32.mrf.mxu0
    %v7771 = vadd.f32 %v7752, %v7770
    %7772 = vmatmul.bf16.gmra.mxu0 %v2539
    %v7773 = vpop.f32.mrf.mxu0
    %v7774 = vadd.f32 %v7755, %v7773
    %v7775 = vpop.f32.mrf.mxu0
    %v7776 = vadd.f32 %v7757, %v7775
    %7777 = vdwg.mxu0
    %7778 = vmatpush.bf16.msra.mxu0 %v6116
    %7779 = vmatpush.bf16.msra.mxu0 %v6100
    %7780 = vmatpush.bf16.msra.mxu0 %v6084
    %7781 = vmatpush.bf16.msra.mxu0 %v6068
    %7782 = vmatpush.bf16.msra.mxu0 %v6052
    %7783 = vmatpush.bf16.msra.mxu0 %v6036
    %7784 = vmatpush.bf16.msra.mxu0 %v6020
    %7785 = vmatpush.bf16.msra.mxu0 %v6004
    %7786 = vmatmul.bf16.gmra.mxu0 %v2534
    %v7787 = vpop.f32.mrf.mxu0
    %v7788 = vadd.f32 %v7769, %v7787
    %v7789 = vpop.f32.mrf.mxu0
    %v7790 = vadd.f32 %v7771, %v7789
    %7791 = vmatmul.bf16.gmra.mxu0 %v2540
    %v7792 = vpop.f32.mrf.mxu0
    %v7793 = vadd.f32 %v7774, %v7792
    %v7794 = vpop.f32.mrf.mxu0
    %v7795 = vadd.f32 %v7776, %v7794
    %7796 = vdwg.mxu0
    %7797 = vmatpush.bf16.msra.mxu0 %v6244
    %7798 = vmatpush.bf16.msra.mxu0 %v6228
    %7799 = vmatpush.bf16.msra.mxu0 %v6212
    %7800 = vmatpush.bf16.msra.mxu0 %v6196
    %7801 = vmatpush.bf16.msra.mxu0 %v6180
    %7802 = vmatpush.bf16.msra.mxu0 %v6164
    %7803 = vmatpush.bf16.msra.mxu0 %v6148
    %7804 = vmatpush.bf16.msra.mxu0 %v6132
    %7805 = vmatmul.bf16.gmra.mxu0 %v2535
    %v7806 = vpop.f32.mrf.mxu0
    %v7807 = vadd.f32 %v7788, %v7806
    %v7808 = vpop.f32.mrf.mxu0
    %v7809 = vadd.f32 %v7790, %v7808
    %7810 = vmatmul.bf16.gmra.mxu0 %v2541
    %v7811 = vpop.f32.mrf.mxu0
    %v7812 = vadd.f32 %v7793, %v7811
    %v7813 = vpop.f32.mrf.mxu0
    %v7814 = vadd.f32 %v7795, %v7813
    %7815 = vdwg.mxu0
    %7816 = vmatpush.bf16.msra.mxu0 %v6372
    %7817 = vmatpush.bf16.msra.mxu0 %v6356
    %7818 = vmatpush.bf16.msra.mxu0 %v6340
    %7819 = vmatpush.bf16.msra.mxu0 %v6324
    %7820 = vmatpush.bf16.msra.mxu0 %v6308
    %7821 = vmatpush.bf16.msra.mxu0 %v6292
    %7822 = vmatpush.bf16.msra.mxu0 %v6276
    %7823 = vmatpush.bf16.msra.mxu0 %v6260
    %7824 = vmatmul.bf16.gmra.mxu0 %v2536
    %v7825 = vpop.f32.mrf.mxu0
    %v7826 = vadd.f32 %v7807, %v7825
    %v7827 = vpop.f32.mrf.mxu0
    %v7828 = vadd.f32 %v7809, %v7827
    %7829 = vmatmul.bf16.gmra.mxu0 %v2542
    %v7830 = vpop.f32.mrf.mxu0
    %v7831 = vadd.f32 %v7812, %v7830
    %v7832 = vpop.f32.mrf.mxu0
    %v7833 = vadd.f32 %v7814, %v7832
    %7834 = vdwg.mxu0
    %7835 = vmatpush.bf16.msra.mxu0 %v5733
    %7836 = vmatpush.bf16.msra.mxu0 %v5717
    %7837 = vmatpush.bf16.msra.mxu0 %v5701
    %7838 = vmatpush.bf16.msra.mxu0 %v5685
    %7839 = vmatpush.bf16.msra.mxu0 %v5669
    %7840 = vmatpush.bf16.msra.mxu0 %v5653
    %7841 = vmatpush.bf16.msra.mxu0 %v5637
    %7842 = vmatpush.bf16.msra.mxu0 %v5621
    %7843 = vmatmul.bf16.gmra.mxu0 %v2531
    %v7844 = vpop.f32.mrf.mxu0
    %v7845 = vadd.f32 0.0, %v7844
    %v7846 = vpop.f32.mrf.mxu0
    %v7847 = vadd.f32 0.0, %v7846
    %7848 = vmatmul.bf16.gmra.mxu0 %v2537
    %v7849 = vpop.f32.mrf.mxu0
    %v7850 = vadd.f32 0.0, %v7849
    %v7851 = vpop.f32.mrf.mxu0
    %v7852 = vadd.f32 0.0, %v7851
    %7853 = vdwg.mxu0
    %7854 = vmatpush.bf16.msra.mxu0 %v5861
    %7855 = vmatpush.bf16.msra.mxu0 %v5845
    %7856 = vmatpush.bf16.msra.mxu0 %v5829
    %7857 = vmatpush.bf16.msra.mxu0 %v5813
    %7858 = vmatpush.bf16.msra.mxu0 %v5797
    %7859 = vmatpush.bf16.msra.mxu0 %v5781
    %7860 = vmatpush.bf16.msra.mxu0 %v5765
    %7861 = vmatpush.bf16.msra.mxu0 %v5749
    %7862 = vmatmul.bf16.gmra.mxu0 %v2532
    %v7863 = vpop.f32.mrf.mxu0
    %v7864 = vadd.f32 %v7845, %v7863
    %v7865 = vpop.f32.mrf.mxu0
    %v7866 = vadd.f32 %v7847, %v7865
    %7867 = vmatmul.bf16.gmra.mxu0 %v2538
    %v7868 = vpop.f32.mrf.mxu0
    %v7869 = vadd.f32 %v7850, %v7868
    %v7870 = vpop.f32.mrf.mxu0
    %v7871 = vadd.f32 %v7852, %v7870
    %7872 = vdwg.mxu0
    %7873 = vmatpush.bf16.msra.mxu0 %v5989
    %7874 = vmatpush.bf16.msra.mxu0 %v5973
    %7875 = vmatpush.bf16.msra.mxu0 %v5957
    %7876 = vmatpush.bf16.msra.mxu0 %v5941
    %7877 = vmatpush.bf16.msra.mxu0 %v5925
    %7878 = vmatpush.bf16.msra.mxu0 %v5909
    %7879 = vmatpush.bf16.msra.mxu0 %v5893
    %7880 = vmatpush.bf16.msra.mxu0 %v5877
    %7881 = vmatmul.bf16.gmra.mxu0 %v2533
    %v7882 = vpop.f32.mrf.mxu0
    %v7883 = vadd.f32 %v7864, %v7882
    %v7884 = vpop.f32.mrf.mxu0
    %v7885 = vadd.f32 %v7866, %v7884
    %7886 = vmatmul.bf16.gmra.mxu0 %v2539
    %v7887 = vpop.f32.mrf.mxu0
    %v7888 = vadd.f32 %v7869, %v7887
    %v7889 = vpop.f32.mrf.mxu0
    %v7890 = vadd.f32 %v7871, %v7889
    %7891 = vdwg.mxu0
    %7892 = vmatpush.bf16.msra.mxu0 %v6117
    %7893 = vmatpush.bf16.msra.mxu0 %v6101
    %7894 = vmatpush.bf16.msra.mxu0 %v6085
    %7895 = vmatpush.bf16.msra.mxu0 %v6069
    %7896 = vmatpush.bf16.msra.mxu0 %v6053
    %7897 = vmatpush.bf16.msra.mxu0 %v6037
    %7898 = vmatpush.bf16.msra.mxu0 %v6021
    %7899 = vmatpush.bf16.msra.mxu0 %v6005
    %7900 = vmatmul.bf16.gmra.mxu0 %v2534
    %v7901 = vpop.f32.mrf.mxu0
    %v7902 = vadd.f32 %v7883, %v7901
    %v7903 = vpop.f32.mrf.mxu0
    %v7904 = vadd.f32 %v7885, %v7903
    %7905 = vmatmul.bf16.gmra.mxu0 %v2540
    %v7906 = vpop.f32.mrf.mxu0
    %v7907 = vadd.f32 %v7888, %v7906
    %v7908 = vpop.f32.mrf.mxu0
    %v7909 = vadd.f32 %v7890, %v7908
    %7910 = vdwg.mxu0
    %7911 = vmatpush.bf16.msra.mxu0 %v6245
    %7912 = vmatpush.bf16.msra.mxu0 %v6229
    %7913 = vmatpush.bf16.msra.mxu0 %v6213
    %7914 = vmatpush.bf16.msra.mxu0 %v6197
    %7915 = vmatpush.bf16.msra.mxu0 %v6181
    %7916 = vmatpush.bf16.msra.mxu0 %v6165
    %7917 = vmatpush.bf16.msra.mxu0 %v6149
    %7918 = vmatpush.bf16.msra.mxu0 %v6133
    %7919 = vmatmul.bf16.gmra.mxu0 %v2535
    %v7920 = vpop.f32.mrf.mxu0
    %v7921 = vadd.f32 %v7902, %v7920
    %v7922 = vpop.f32.mrf.mxu0
    %v7923 = vadd.f32 %v7904, %v7922
    %7924 = vmatmul.bf16.gmra.mxu0 %v2541
    %v7925 = vpop.f32.mrf.mxu0
    %v7926 = vadd.f32 %v7907, %v7925
    %v7927 = vpop.f32.mrf.mxu0
    %v7928 = vadd.f32 %v7909, %v7927
    %7929 = vdwg.mxu0
    %7930 = vmatpush.bf16.msra.mxu0 %v6373
    %7931 = vmatpush.bf16.msra.mxu0 %v6357
    %7932 = vmatpush.bf16.msra.mxu0 %v6341
    %7933 = vmatpush.bf16.msra.mxu0 %v6325
    %7934 = vmatpush.bf16.msra.mxu0 %v6309
    %7935 = vmatpush.bf16.msra.mxu0 %v6293
    %7936 = vmatpush.bf16.msra.mxu0 %v6277
    %7937 = vmatpush.bf16.msra.mxu0 %v6261
    %7938 = vmatmul.bf16.gmra.mxu0 %v2536
    %v7939 = vpop.f32.mrf.mxu0
    %v7940 = vadd.f32 %v7921, %v7939
    %v7941 = vpop.f32.mrf.mxu0
    %v7942 = vadd.f32 %v7923, %v7941
    %7943 = vmatmul.bf16.gmra.mxu0 %v2542
    %v7944 = vpop.f32.mrf.mxu0
    %v7945 = vadd.f32 %v7926, %v7944
    %v7946 = vpop.f32.mrf.mxu0
    %v7947 = vadd.f32 %v7928, %v7946
    %7948 = vdwg.mxu0
    %7949 = vmatpush.bf16.msra.mxu0 %v5734
    %7950 = vmatpush.bf16.msra.mxu0 %v5718
    %7951 = vmatpush.bf16.msra.mxu0 %v5702
    %7952 = vmatpush.bf16.msra.mxu0 %v5686
    %7953 = vmatpush.bf16.msra.mxu0 %v5670
    %7954 = vmatpush.bf16.msra.mxu0 %v5654
    %7955 = vmatpush.bf16.msra.mxu0 %v5638
    %7956 = vmatpush.bf16.msra.mxu0 %v5622
    %7957 = vmatmul.bf16.gmra.mxu0 %v2531
    %v7958 = vpop.f32.mrf.mxu0
    %v7959 = vadd.f32 0.0, %v7958
    %v7960 = vpop.f32.mrf.mxu0
    %v7961 = vadd.f32 0.0, %v7960
    %7962 = vmatmul.bf16.gmra.mxu0 %v2537
    %v7963 = vpop.f32.mrf.mxu0
    %v7964 = vadd.f32 0.0, %v7963
    %v7965 = vpop.f32.mrf.mxu0
    %v7966 = vadd.f32 0.0, %v7965
    %7967 = vdwg.mxu0
    %7968 = vmatpush.bf16.msra.mxu0 %v5862
    %7969 = vmatpush.bf16.msra.mxu0 %v5846
    %7970 = vmatpush.bf16.msra.mxu0 %v5830
    %7971 = vmatpush.bf16.msra.mxu0 %v5814
    %7972 = vmatpush.bf16.msra.mxu0 %v5798
    %7973 = vmatpush.bf16.msra.mxu0 %v5782
    %7974 = vmatpush.bf16.msra.mxu0 %v5766
    %7975 = vmatpush.bf16.msra.mxu0 %v5750
    %7976 = vmatmul.bf16.gmra.mxu0 %v2532
    %v7977 = vpop.f32.mrf.mxu0
    %v7978 = vadd.f32 %v7959, %v7977
    %v7979 = vpop.f32.mrf.mxu0
    %v7980 = vadd.f32 %v7961, %v7979
    %7981 = vmatmul.bf16.gmra.mxu0 %v2538
    %v7982 = vpop.f32.mrf.mxu0
    %v7983 = vadd.f32 %v7964, %v7982
    %v7984 = vpop.f32.mrf.mxu0
    %v7985 = vadd.f32 %v7966, %v7984
    %7986 = vdwg.mxu0
    %7987 = vmatpush.bf16.msra.mxu0 %v5990
    %7988 = vmatpush.bf16.msra.mxu0 %v5974
    %7989 = vmatpush.bf16.msra.mxu0 %v5958
    %7990 = vmatpush.bf16.msra.mxu0 %v5942
    %7991 = vmatpush.bf16.msra.mxu0 %v5926
    %7992 = vmatpush.bf16.msra.mxu0 %v5910
    %7993 = vmatpush.bf16.msra.mxu0 %v5894
    %7994 = vmatpush.bf16.msra.mxu0 %v5878
    %7995 = vmatmul.bf16.gmra.mxu0 %v2533
    %v7996 = vpop.f32.mrf.mxu0
    %v7997 = vadd.f32 %v7978, %v7996
    %v7998 = vpop.f32.mrf.mxu0
    %v7999 = vadd.f32 %v7980, %v7998
    %8000 = vmatmul.bf16.gmra.mxu0 %v2539
    %v8001 = vpop.f32.mrf.mxu0
    %v8002 = vadd.f32 %v7983, %v8001
    %v8003 = vpop.f32.mrf.mxu0
    %v8004 = vadd.f32 %v7985, %v8003
    %8005 = vdwg.mxu0
    %8006 = vmatpush.bf16.msra.mxu0 %v6118
    %8007 = vmatpush.bf16.msra.mxu0 %v6102
    %8008 = vmatpush.bf16.msra.mxu0 %v6086
    %8009 = vmatpush.bf16.msra.mxu0 %v6070
    %8010 = vmatpush.bf16.msra.mxu0 %v6054
    %8011 = vmatpush.bf16.msra.mxu0 %v6038
    %8012 = vmatpush.bf16.msra.mxu0 %v6022
    %8013 = vmatpush.bf16.msra.mxu0 %v6006
    %8014 = vmatmul.bf16.gmra.mxu0 %v2534
    %v8015 = vpop.f32.mrf.mxu0
    %v8016 = vadd.f32 %v7997, %v8015
    %v8017 = vpop.f32.mrf.mxu0
    %v8018 = vadd.f32 %v7999, %v8017
    %8019 = vmatmul.bf16.gmra.mxu0 %v2540
    %v8020 = vpop.f32.mrf.mxu0
    %v8021 = vadd.f32 %v8002, %v8020
    %v8022 = vpop.f32.mrf.mxu0
    %v8023 = vadd.f32 %v8004, %v8022
    %8024 = vdwg.mxu0
    %8025 = vmatpush.bf16.msra.mxu0 %v6246
    %8026 = vmatpush.bf16.msra.mxu0 %v6230
    %8027 = vmatpush.bf16.msra.mxu0 %v6214
    %8028 = vmatpush.bf16.msra.mxu0 %v6198
    %8029 = vmatpush.bf16.msra.mxu0 %v6182
    %8030 = vmatpush.bf16.msra.mxu0 %v6166
    %8031 = vmatpush.bf16.msra.mxu0 %v6150
    %8032 = vmatpush.bf16.msra.mxu0 %v6134
    %8033 = vmatmul.bf16.gmra.mxu0 %v2535
    %v8034 = vpop.f32.mrf.mxu0
    %v8035 = vadd.f32 %v8016, %v8034
    %v8036 = vpop.f32.mrf.mxu0
    %v8037 = vadd.f32 %v8018, %v8036
    %8038 = vmatmul.bf16.gmra.mxu0 %v2541
    %v8039 = vpop.f32.mrf.mxu0
    %v8040 = vadd.f32 %v8021, %v8039
    %v8041 = vpop.f32.mrf.mxu0
    %v8042 = vadd.f32 %v8023, %v8041
    %8043 = vdwg.mxu0
    %8044 = vmatpush.bf16.msra.mxu0 %v6374
    %8045 = vmatpush.bf16.msra.mxu0 %v6358
    %8046 = vmatpush.bf16.msra.mxu0 %v6342
    %8047 = vmatpush.bf16.msra.mxu0 %v6326
    %8048 = vmatpush.bf16.msra.mxu0 %v6310
    %8049 = vmatpush.bf16.msra.mxu0 %v6294
    %8050 = vmatpush.bf16.msra.mxu0 %v6278
    %8051 = vmatpush.bf16.msra.mxu0 %v6262
    %8052 = vmatmul.bf16.gmra.mxu0 %v2536
    %v8053 = vpop.f32.mrf.mxu0
    %v8054 = vadd.f32 %v8035, %v8053
    %v8055 = vpop.f32.mrf.mxu0
    %v8056 = vadd.f32 %v8037, %v8055
    %8057 = vmatmul.bf16.gmra.mxu0 %v2542
    %v8058 = vpop.f32.mrf.mxu0
    %v8059 = vadd.f32 %v8040, %v8058
    %v8060 = vpop.f32.mrf.mxu0
    %v8061 = vadd.f32 %v8042, %v8060
    %8062 = vdwg.mxu0
    %8063 = vmatpush.bf16.msra.mxu0 %v5735
    %8064 = vmatpush.bf16.msra.mxu0 %v5719
    %8065 = vmatpush.bf16.msra.mxu0 %v5703
    %8066 = vmatpush.bf16.msra.mxu0 %v5687
    %8067 = vmatpush.bf16.msra.mxu0 %v5671
    %8068 = vmatpush.bf16.msra.mxu0 %v5655
    %8069 = vmatpush.bf16.msra.mxu0 %v5639
    %8070 = vmatpush.bf16.msra.mxu0 %v5623
    %8071 = vmatmul.bf16.gmra.mxu0 %v2531
    %v8072 = vpop.f32.mrf.mxu0
    %v8073 = vadd.f32 0.0, %v8072
    %v8074 = vpop.f32.mrf.mxu0
    %v8075 = vadd.f32 0.0, %v8074
    %8076 = vmatmul.bf16.gmra.mxu0 %v2537
    %v8077 = vpop.f32.mrf.mxu0
    %v8078 = vadd.f32 0.0, %v8077
    %v8079 = vpop.f32.mrf.mxu0
    %v8080 = vadd.f32 0.0, %v8079
    %8081 = vdwg.mxu0
    %8082 = vmatpush.bf16.msra.mxu0 %v5863
    %8083 = vmatpush.bf16.msra.mxu0 %v5847
    %8084 = vmatpush.bf16.msra.mxu0 %v5831
    %8085 = vmatpush.bf16.msra.mxu0 %v5815
    %8086 = vmatpush.bf16.msra.mxu0 %v5799
    %8087 = vmatpush.bf16.msra.mxu0 %v5783
    %8088 = vmatpush.bf16.msra.mxu0 %v5767
    %8089 = vmatpush.bf16.msra.mxu0 %v5751
    %8090 = vmatmul.bf16.gmra.mxu0 %v2532
    %v8091 = vpop.f32.mrf.mxu0
    %v8092 = vadd.f32 %v8073, %v8091
    %v8093 = vpop.f32.mrf.mxu0
    %v8094 = vadd.f32 %v8075, %v8093
    %8095 = vmatmul.bf16.gmra.mxu0 %v2538
    %v8096 = vpop.f32.mrf.mxu0
    %v8097 = vadd.f32 %v8078, %v8096
    %v8098 = vpop.f32.mrf.mxu0
    %v8099 = vadd.f32 %v8080, %v8098
    %8100 = vdwg.mxu0
    %8101 = vmatpush.bf16.msra.mxu0 %v5991
    %8102 = vmatpush.bf16.msra.mxu0 %v5975
    %8103 = vmatpush.bf16.msra.mxu0 %v5959
    %8104 = vmatpush.bf16.msra.mxu0 %v5943
    %8105 = vmatpush.bf16.msra.mxu0 %v5927
    %8106 = vmatpush.bf16.msra.mxu0 %v5911
    %8107 = vmatpush.bf16.msra.mxu0 %v5895
    %8108 = vmatpush.bf16.msra.mxu0 %v5879
    %8109 = vmatmul.bf16.gmra.mxu0 %v2533
    %v8110 = vpop.f32.mrf.mxu0
    %v8111 = vadd.f32 %v8092, %v8110
    %v8112 = vpop.f32.mrf.mxu0
    %v8113 = vadd.f32 %v8094, %v8112
    %8114 = vmatmul.bf16.gmra.mxu0 %v2539
    %v8115 = vpop.f32.mrf.mxu0
    %v8116 = vadd.f32 %v8097, %v8115
    %v8117 = vpop.f32.mrf.mxu0
    %v8118 = vadd.f32 %v8099, %v8117
    %8119 = vdwg.mxu0
    %8120 = vmatpush.bf16.msra.mxu0 %v6119
    %8121 = vmatpush.bf16.msra.mxu0 %v6103
    %8122 = vmatpush.bf16.msra.mxu0 %v6087
    %8123 = vmatpush.bf16.msra.mxu0 %v6071
    %8124 = vmatpush.bf16.msra.mxu0 %v6055
    %8125 = vmatpush.bf16.msra.mxu0 %v6039
    %8126 = vmatpush.bf16.msra.mxu0 %v6023
    %8127 = vmatpush.bf16.msra.mxu0 %v6007
    %8128 = vmatmul.bf16.gmra.mxu0 %v2534
    %v8129 = vpop.f32.mrf.mxu0
    %v8130 = vadd.f32 %v8111, %v8129
    %v8131 = vpop.f32.mrf.mxu0
    %v8132 = vadd.f32 %v8113, %v8131
    %8133 = vmatmul.bf16.gmra.mxu0 %v2540
    %v8134 = vpop.f32.mrf.mxu0
    %v8135 = vadd.f32 %v8116, %v8134
    %v8136 = vpop.f32.mrf.mxu0
    %v8137 = vadd.f32 %v8118, %v8136
    %8138 = vdwg.mxu0
    %8139 = vmatpush.bf16.msra.mxu0 %v6247
    %8140 = vmatpush.bf16.msra.mxu0 %v6231
    %8141 = vmatpush.bf16.msra.mxu0 %v6215
    %8142 = vmatpush.bf16.msra.mxu0 %v6199
    %8143 = vmatpush.bf16.msra.mxu0 %v6183
    %8144 = vmatpush.bf16.msra.mxu0 %v6167
    %8145 = vmatpush.bf16.msra.mxu0 %v6151
    %8146 = vmatpush.bf16.msra.mxu0 %v6135
    %8147 = vmatmul.bf16.gmra.mxu0 %v2535
    %v8148 = vpop.f32.mrf.mxu0
    %v8149 = vadd.f32 %v8130, %v8148
    %v8150 = vpop.f32.mrf.mxu0
    %v8151 = vadd.f32 %v8132, %v8150
    %8152 = vmatmul.bf16.gmra.mxu0 %v2541
    %v8153 = vpop.f32.mrf.mxu0
    %v8154 = vadd.f32 %v8135, %v8153
    %v8155 = vpop.f32.mrf.mxu0
    %v8156 = vadd.f32 %v8137, %v8155
    %8157 = vdwg.mxu0
    %8158 = vmatpush.bf16.msra.mxu0 %v6375
    %8159 = vmatpush.bf16.msra.mxu0 %v6359
    %8160 = vmatpush.bf16.msra.mxu0 %v6343
    %8161 = vmatpush.bf16.msra.mxu0 %v6327
    %8162 = vmatpush.bf16.msra.mxu0 %v6311
    %8163 = vmatpush.bf16.msra.mxu0 %v6295
    %8164 = vmatpush.bf16.msra.mxu0 %v6279
    %8165 = vmatpush.bf16.msra.mxu0 %v6263
    %8166 = vmatmul.bf16.gmra.mxu0 %v2536
    %v8167 = vpop.f32.mrf.mxu0
    %v8168 = vadd.f32 %v8149, %v8167
    %v8169 = vpop.f32.mrf.mxu0
    %v8170 = vadd.f32 %v8151, %v8169
    %8171 = vmatmul.bf16.gmra.mxu0 %v2542
    %v8172 = vpop.f32.mrf.mxu0
    %v8173 = vadd.f32 %v8154, %v8172
    %v8174 = vpop.f32.mrf.mxu0
    %v8175 = vadd.f32 %v8156, %v8174
    %8176 = vdwg.mxu0
    %8177 = vmatpush.bf16.msra.mxu0 %v5736
    %8178 = vmatpush.bf16.msra.mxu0 %v5720
    %8179 = vmatpush.bf16.msra.mxu0 %v5704
    %8180 = vmatpush.bf16.msra.mxu0 %v5688
    %8181 = vmatpush.bf16.msra.mxu0 %v5672
    %8182 = vmatpush.bf16.msra.mxu0 %v5656
    %8183 = vmatpush.bf16.msra.mxu0 %v5640
    %8184 = vmatpush.bf16.msra.mxu0 %v5624
    %8185 = vmatmul.bf16.gmra.mxu0 %v2531
    %v8186 = vpop.f32.mrf.mxu0
    %v8187 = vadd.f32 0.0, %v8186
    %v8188 = vpop.f32.mrf.mxu0
    %v8189 = vadd.f32 0.0, %v8188
    %8190 = vmatmul.bf16.gmra.mxu0 %v2537
    %v8191 = vpop.f32.mrf.mxu0
    %v8192 = vadd.f32 0.0, %v8191
    %v8193 = vpop.f32.mrf.mxu0
    %v8194 = vadd.f32 0.0, %v8193
    %8195 = vdwg.mxu0
    %8196 = vmatpush.bf16.msra.mxu0 %v5864
    %8197 = vmatpush.bf16.msra.mxu0 %v5848
    %8198 = vmatpush.bf16.msra.mxu0 %v5832
    %8199 = vmatpush.bf16.msra.mxu0 %v5816
    %8200 = vmatpush.bf16.msra.mxu0 %v5800
    %8201 = vmatpush.bf16.msra.mxu0 %v5784
    %8202 = vmatpush.bf16.msra.mxu0 %v5768
    %8203 = vmatpush.bf16.msra.mxu0 %v5752
    %8204 = vmatmul.bf16.gmra.mxu0 %v2532
    %v8205 = vpop.f32.mrf.mxu0
    %v8206 = vadd.f32 %v8187, %v8205
    %v8207 = vpop.f32.mrf.mxu0
    %v8208 = vadd.f32 %v8189, %v8207
    %8209 = vmatmul.bf16.gmra.mxu0 %v2538
    %v8210 = vpop.f32.mrf.mxu0
    %v8211 = vadd.f32 %v8192, %v8210
    %v8212 = vpop.f32.mrf.mxu0
    %v8213 = vadd.f32 %v8194, %v8212
    %8214 = vdwg.mxu0
    %8215 = vmatpush.bf16.msra.mxu0 %v5992
    %8216 = vmatpush.bf16.msra.mxu0 %v5976
    %8217 = vmatpush.bf16.msra.mxu0 %v5960
    %8218 = vmatpush.bf16.msra.mxu0 %v5944
    %8219 = vmatpush.bf16.msra.mxu0 %v5928
    %8220 = vmatpush.bf16.msra.mxu0 %v5912
    %8221 = vmatpush.bf16.msra.mxu0 %v5896
    %8222 = vmatpush.bf16.msra.mxu0 %v5880
    %8223 = vmatmul.bf16.gmra.mxu0 %v2533
    %v8224 = vpop.f32.mrf.mxu0
    %v8225 = vadd.f32 %v8206, %v8224
    %v8226 = vpop.f32.mrf.mxu0
    %v8227 = vadd.f32 %v8208, %v8226
    %8228 = vmatmul.bf16.gmra.mxu0 %v2539
    %v8229 = vpop.f32.mrf.mxu0
    %v8230 = vadd.f32 %v8211, %v8229
    %v8231 = vpop.f32.mrf.mxu0
    %v8232 = vadd.f32 %v8213, %v8231
    %8233 = vdwg.mxu0
    %8234 = vmatpush.bf16.msra.mxu0 %v6120
    %8235 = vmatpush.bf16.msra.mxu0 %v6104
    %8236 = vmatpush.bf16.msra.mxu0 %v6088
    %8237 = vmatpush.bf16.msra.mxu0 %v6072
    %8238 = vmatpush.bf16.msra.mxu0 %v6056
    %8239 = vmatpush.bf16.msra.mxu0 %v6040
    %8240 = vmatpush.bf16.msra.mxu0 %v6024
    %8241 = vmatpush.bf16.msra.mxu0 %v6008
    %8242 = vmatmul.bf16.gmra.mxu0 %v2534
    %v8243 = vpop.f32.mrf.mxu0
    %v8244 = vadd.f32 %v8225, %v8243
    %v8245 = vpop.f32.mrf.mxu0
    %v8246 = vadd.f32 %v8227, %v8245
    %8247 = vmatmul.bf16.gmra.mxu0 %v2540
    %v8248 = vpop.f32.mrf.mxu0
    %v8249 = vadd.f32 %v8230, %v8248
    %v8250 = vpop.f32.mrf.mxu0
    %v8251 = vadd.f32 %v8232, %v8250
    %8252 = vdwg.mxu0
    %8253 = vmatpush.bf16.msra.mxu0 %v6248
    %8254 = vmatpush.bf16.msra.mxu0 %v6232
    %8255 = vmatpush.bf16.msra.mxu0 %v6216
    %8256 = vmatpush.bf16.msra.mxu0 %v6200
    %8257 = vmatpush.bf16.msra.mxu0 %v6184
    %8258 = vmatpush.bf16.msra.mxu0 %v6168
    %8259 = vmatpush.bf16.msra.mxu0 %v6152
    %8260 = vmatpush.bf16.msra.mxu0 %v6136
    %8261 = vmatmul.bf16.gmra.mxu0 %v2535
    %v8262 = vpop.f32.mrf.mxu0
    %v8263 = vadd.f32 %v8244, %v8262
    %v8264 = vpop.f32.mrf.mxu0
    %v8265 = vadd.f32 %v8246, %v8264
    %8266 = vmatmul.bf16.gmra.mxu0 %v2541
    %v8267 = vpop.f32.mrf.mxu0
    %v8268 = vadd.f32 %v8249, %v8267
    %v8269 = vpop.f32.mrf.mxu0
    %v8270 = vadd.f32 %v8251, %v8269
    %8271 = vdwg.mxu0
    %8272 = vmatpush.bf16.msra.mxu0 %v6376
    %8273 = vmatpush.bf16.msra.mxu0 %v6360
    %8274 = vmatpush.bf16.msra.mxu0 %v6344
    %8275 = vmatpush.bf16.msra.mxu0 %v6328
    %8276 = vmatpush.bf16.msra.mxu0 %v6312
    %8277 = vmatpush.bf16.msra.mxu0 %v6296
    %8278 = vmatpush.bf16.msra.mxu0 %v6280
    %8279 = vmatpush.bf16.msra.mxu0 %v6264
    %8280 = vmatmul.bf16.gmra.mxu0 %v2536
    %v8281 = vpop.f32.mrf.mxu0
    %v8282 = vadd.f32 %v8263, %v8281
    %v8283 = vpop.f32.mrf.mxu0
    %v8284 = vadd.f32 %v8265, %v8283
    %8285 = vmatmul.bf16.gmra.mxu0 %v2542
    %v8286 = vpop.f32.mrf.mxu0
    %v8287 = vadd.f32 %v8268, %v8286
    %v8288 = vpop.f32.mrf.mxu0
    %v8289 = vadd.f32 %v8270, %v8288
    %8290 = vdwg.mxu0
    %8291 = vmatpush.bf16.msra.mxu0 %v5737
    %8292 = vmatpush.bf16.msra.mxu0 %v5721
    %8293 = vmatpush.bf16.msra.mxu0 %v5705
    %8294 = vmatpush.bf16.msra.mxu0 %v5689
    %8295 = vmatpush.bf16.msra.mxu0 %v5673
    %8296 = vmatpush.bf16.msra.mxu0 %v5657
    %8297 = vmatpush.bf16.msra.mxu0 %v5641
    %8298 = vmatpush.bf16.msra.mxu0 %v5625
    %8299 = vmatmul.bf16.gmra.mxu0 %v2531
    %v8300 = vpop.f32.mrf.mxu0
    %v8301 = vadd.f32 0.0, %v8300
    %v8302 = vpop.f32.mrf.mxu0
    %v8303 = vadd.f32 0.0, %v8302
    %8304 = vmatmul.bf16.gmra.mxu0 %v2537
    %v8305 = vpop.f32.mrf.mxu0
    %v8306 = vadd.f32 0.0, %v8305
    %v8307 = vpop.f32.mrf.mxu0
    %v8308 = vadd.f32 0.0, %v8307
    %8309 = vdwg.mxu0
    %8310 = vmatpush.bf16.msra.mxu0 %v5865
    %8311 = vmatpush.bf16.msra.mxu0 %v5849
    %8312 = vmatpush.bf16.msra.mxu0 %v5833
    %8313 = vmatpush.bf16.msra.mxu0 %v5817
    %8314 = vmatpush.bf16.msra.mxu0 %v5801
    %8315 = vmatpush.bf16.msra.mxu0 %v5785
    %8316 = vmatpush.bf16.msra.mxu0 %v5769
    %8317 = vmatpush.bf16.msra.mxu0 %v5753
    %8318 = vmatmul.bf16.gmra.mxu0 %v2532
    %v8319 = vpop.f32.mrf.mxu0
    %v8320 = vadd.f32 %v8301, %v8319
    %v8321 = vpop.f32.mrf.mxu0
    %v8322 = vadd.f32 %v8303, %v8321
    %8323 = vmatmul.bf16.gmra.mxu0 %v2538
    %v8324 = vpop.f32.mrf.mxu0
    %v8325 = vadd.f32 %v8306, %v8324
    %v8326 = vpop.f32.mrf.mxu0
    %v8327 = vadd.f32 %v8308, %v8326
    %8328 = vdwg.mxu0
    %8329 = vmatpush.bf16.msra.mxu0 %v5993
    %8330 = vmatpush.bf16.msra.mxu0 %v5977
    %8331 = vmatpush.bf16.msra.mxu0 %v5961
    %8332 = vmatpush.bf16.msra.mxu0 %v5945
    %8333 = vmatpush.bf16.msra.mxu0 %v5929
    %8334 = vmatpush.bf16.msra.mxu0 %v5913
    %8335 = vmatpush.bf16.msra.mxu0 %v5897
    %8336 = vmatpush.bf16.msra.mxu0 %v5881
    %8337 = vmatmul.bf16.gmra.mxu0 %v2533
    %v8338 = vpop.f32.mrf.mxu0
    %v8339 = vadd.f32 %v8320, %v8338
    %v8340 = vpop.f32.mrf.mxu0
    %v8341 = vadd.f32 %v8322, %v8340
    %8342 = vmatmul.bf16.gmra.mxu0 %v2539
    %v8343 = vpop.f32.mrf.mxu0
    %v8344 = vadd.f32 %v8325, %v8343
    %v8345 = vpop.f32.mrf.mxu0
    %v8346 = vadd.f32 %v8327, %v8345
    %8347 = vdwg.mxu0
    %8348 = vmatpush.bf16.msra.mxu0 %v6121
    %8349 = vmatpush.bf16.msra.mxu0 %v6105
    %8350 = vmatpush.bf16.msra.mxu0 %v6089
    %8351 = vmatpush.bf16.msra.mxu0 %v6073
    %8352 = vmatpush.bf16.msra.mxu0 %v6057
    %8353 = vmatpush.bf16.msra.mxu0 %v6041
    %8354 = vmatpush.bf16.msra.mxu0 %v6025
    %8355 = vmatpush.bf16.msra.mxu0 %v6009
    %8356 = vmatmul.bf16.gmra.mxu0 %v2534
    %v8357 = vpop.f32.mrf.mxu0
    %v8358 = vadd.f32 %v8339, %v8357
    %v8359 = vpop.f32.mrf.mxu0
    %v8360 = vadd.f32 %v8341, %v8359
    %8361 = vmatmul.bf16.gmra.mxu0 %v2540
    %v8362 = vpop.f32.mrf.mxu0
    %v8363 = vadd.f32 %v8344, %v8362
    %v8364 = vpop.f32.mrf.mxu0
    %v8365 = vadd.f32 %v8346, %v8364
    %8366 = vdwg.mxu0
    %8367 = vmatpush.bf16.msra.mxu0 %v6249
    %8368 = vmatpush.bf16.msra.mxu0 %v6233
    %8369 = vmatpush.bf16.msra.mxu0 %v6217
    %8370 = vmatpush.bf16.msra.mxu0 %v6201
    %8371 = vmatpush.bf16.msra.mxu0 %v6185
    %8372 = vmatpush.bf16.msra.mxu0 %v6169
    %8373 = vmatpush.bf16.msra.mxu0 %v6153
    %8374 = vmatpush.bf16.msra.mxu0 %v6137
    %8375 = vmatmul.bf16.gmra.mxu0 %v2535
    %v8376 = vpop.f32.mrf.mxu0
    %v8377 = vadd.f32 %v8358, %v8376
    %v8378 = vpop.f32.mrf.mxu0
    %v8379 = vadd.f32 %v8360, %v8378
    %8380 = vmatmul.bf16.gmra.mxu0 %v2541
    %v8381 = vpop.f32.mrf.mxu0
    %v8382 = vadd.f32 %v8363, %v8381
    %v8383 = vpop.f32.mrf.mxu0
    %v8384 = vadd.f32 %v8365, %v8383
    %8385 = vdwg.mxu0
    %8386 = vmatpush.bf16.msra.mxu0 %v6377
    %8387 = vmatpush.bf16.msra.mxu0 %v6361
    %8388 = vmatpush.bf16.msra.mxu0 %v6345
    %8389 = vmatpush.bf16.msra.mxu0 %v6329
    %8390 = vmatpush.bf16.msra.mxu0 %v6313
    %8391 = vmatpush.bf16.msra.mxu0 %v6297
    %8392 = vmatpush.bf16.msra.mxu0 %v6281
    %8393 = vmatpush.bf16.msra.mxu0 %v6265
    %8394 = vmatmul.bf16.gmra.mxu0 %v2536
    %v8395 = vpop.f32.mrf.mxu0
    %v8396 = vadd.f32 %v8377, %v8395
    %v8397 = vpop.f32.mrf.mxu0
    %v8398 = vadd.f32 %v8379, %v8397
    %8399 = vmatmul.bf16.gmra.mxu0 %v2542
    %v8400 = vpop.f32.mrf.mxu0
    %v8401 = vadd.f32 %v8382, %v8400
    %v8402 = vpop.f32.mrf.mxu0
    %v8403 = vadd.f32 %v8384, %v8402
    %8404 = vdwg.mxu0
    %8405 = vmatpush.bf16.msra.mxu0 %v5738
    %8406 = vmatpush.bf16.msra.mxu0 %v5722
    %8407 = vmatpush.bf16.msra.mxu0 %v5706
    %8408 = vmatpush.bf16.msra.mxu0 %v5690
    %8409 = vmatpush.bf16.msra.mxu0 %v5674
    %8410 = vmatpush.bf16.msra.mxu0 %v5658
    %8411 = vmatpush.bf16.msra.mxu0 %v5642
    %8412 = vmatpush.bf16.msra.mxu0 %v5626
    %8413 = vmatmul.bf16.gmra.mxu0 %v2531
    %v8414 = vpop.f32.mrf.mxu0
    %v8415 = vadd.f32 0.0, %v8414
    %v8416 = vpop.f32.mrf.mxu0
    %v8417 = vadd.f32 0.0, %v8416
    %8418 = vmatmul.bf16.gmra.mxu0 %v2537
    %v8419 = vpop.f32.mrf.mxu0
    %v8420 = vadd.f32 0.0, %v8419
    %v8421 = vpop.f32.mrf.mxu0
    %v8422 = vadd.f32 0.0, %v8421
    %8423 = vdwg.mxu0
    %8424 = vmatpush.bf16.msra.mxu0 %v5866
    %8425 = vmatpush.bf16.msra.mxu0 %v5850
    %8426 = vmatpush.bf16.msra.mxu0 %v5834
    %8427 = vmatpush.bf16.msra.mxu0 %v5818
    %8428 = vmatpush.bf16.msra.mxu0 %v5802
    %8429 = vmatpush.bf16.msra.mxu0 %v5786
    %8430 = vmatpush.bf16.msra.mxu0 %v5770
    %8431 = vmatpush.bf16.msra.mxu0 %v5754
    %8432 = vmatmul.bf16.gmra.mxu0 %v2532
    %v8433 = vpop.f32.mrf.mxu0
    %v8434 = vadd.f32 %v8415, %v8433
    %v8435 = vpop.f32.mrf.mxu0
    %v8436 = vadd.f32 %v8417, %v8435
    %8437 = vmatmul.bf16.gmra.mxu0 %v2538
    %v8438 = vpop.f32.mrf.mxu0
    %v8439 = vadd.f32 %v8420, %v8438
    %v8440 = vpop.f32.mrf.mxu0
    %v8441 = vadd.f32 %v8422, %v8440
    %8442 = vdwg.mxu0
    %8443 = vmatpush.bf16.msra.mxu0 %v5994
    %8444 = vmatpush.bf16.msra.mxu0 %v5978
    %8445 = vmatpush.bf16.msra.mxu0 %v5962
    %8446 = vmatpush.bf16.msra.mxu0 %v5946
    %8447 = vmatpush.bf16.msra.mxu0 %v5930
    %8448 = vmatpush.bf16.msra.mxu0 %v5914
    %8449 = vmatpush.bf16.msra.mxu0 %v5898
    %8450 = vmatpush.bf16.msra.mxu0 %v5882
    %8451 = vmatmul.bf16.gmra.mxu0 %v2533
    %v8452 = vpop.f32.mrf.mxu0
    %v8453 = vadd.f32 %v8434, %v8452
    %v8454 = vpop.f32.mrf.mxu0
    %v8455 = vadd.f32 %v8436, %v8454
    %8456 = vmatmul.bf16.gmra.mxu0 %v2539
    %v8457 = vpop.f32.mrf.mxu0
    %v8458 = vadd.f32 %v8439, %v8457
    %v8459 = vpop.f32.mrf.mxu0
    %v8460 = vadd.f32 %v8441, %v8459
    %8461 = vdwg.mxu0
    %8462 = vmatpush.bf16.msra.mxu0 %v6122
    %8463 = vmatpush.bf16.msra.mxu0 %v6106
    %8464 = vmatpush.bf16.msra.mxu0 %v6090
    %8465 = vmatpush.bf16.msra.mxu0 %v6074
    %8466 = vmatpush.bf16.msra.mxu0 %v6058
    %8467 = vmatpush.bf16.msra.mxu0 %v6042
    %8468 = vmatpush.bf16.msra.mxu0 %v6026
    %8469 = vmatpush.bf16.msra.mxu0 %v6010
    %8470 = vmatmul.bf16.gmra.mxu0 %v2534
    %v8471 = vpop.f32.mrf.mxu0
    %v8472 = vadd.f32 %v8453, %v8471
    %v8473 = vpop.f32.mrf.mxu0
    %v8474 = vadd.f32 %v8455, %v8473
    %8475 = vmatmul.bf16.gmra.mxu0 %v2540
    %v8476 = vpop.f32.mrf.mxu0
    %v8477 = vadd.f32 %v8458, %v8476
    %v8478 = vpop.f32.mrf.mxu0
    %v8479 = vadd.f32 %v8460, %v8478
    %8480 = vdwg.mxu0
    %8481 = vmatpush.bf16.msra.mxu0 %v6250
    %8482 = vmatpush.bf16.msra.mxu0 %v6234
    %8483 = vmatpush.bf16.msra.mxu0 %v6218
    %8484 = vmatpush.bf16.msra.mxu0 %v6202
    %8485 = vmatpush.bf16.msra.mxu0 %v6186
    %8486 = vmatpush.bf16.msra.mxu0 %v6170
    %8487 = vmatpush.bf16.msra.mxu0 %v6154
    %8488 = vmatpush.bf16.msra.mxu0 %v6138
    %8489 = vmatmul.bf16.gmra.mxu0 %v2535
    %v8490 = vpop.f32.mrf.mxu0
    %v8491 = vadd.f32 %v8472, %v8490
    %v8492 = vpop.f32.mrf.mxu0
    %v8493 = vadd.f32 %v8474, %v8492
    %8494 = vmatmul.bf16.gmra.mxu0 %v2541
    %v8495 = vpop.f32.mrf.mxu0
    %v8496 = vadd.f32 %v8477, %v8495
    %v8497 = vpop.f32.mrf.mxu0
    %v8498 = vadd.f32 %v8479, %v8497
    %8499 = vdwg.mxu0
    %8500 = vmatpush.bf16.msra.mxu0 %v6378
    %8501 = vmatpush.bf16.msra.mxu0 %v6362
    %8502 = vmatpush.bf16.msra.mxu0 %v6346
    %8503 = vmatpush.bf16.msra.mxu0 %v6330
    %8504 = vmatpush.bf16.msra.mxu0 %v6314
    %8505 = vmatpush.bf16.msra.mxu0 %v6298
    %8506 = vmatpush.bf16.msra.mxu0 %v6282
    %8507 = vmatpush.bf16.msra.mxu0 %v6266
    %8508 = vmatmul.bf16.gmra.mxu0 %v2536
    %v8509 = vpop.f32.mrf.mxu0
    %v8510 = vadd.f32 %v8491, %v8509
    %v8511 = vpop.f32.mrf.mxu0
    %v8512 = vadd.f32 %v8493, %v8511
    %8513 = vmatmul.bf16.gmra.mxu0 %v2542
    %v8514 = vpop.f32.mrf.mxu0
    %v8515 = vadd.f32 %v8496, %v8514
    %v8516 = vpop.f32.mrf.mxu0
    %v8517 = vadd.f32 %v8498, %v8516
    %8518 = vdwg.mxu0
    %8519 = vmatpush.bf16.msra.mxu0 %v5739
    %8520 = vmatpush.bf16.msra.mxu0 %v5723
    %8521 = vmatpush.bf16.msra.mxu0 %v5707
    %8522 = vmatpush.bf16.msra.mxu0 %v5691
    %8523 = vmatpush.bf16.msra.mxu0 %v5675
    %8524 = vmatpush.bf16.msra.mxu0 %v5659
    %8525 = vmatpush.bf16.msra.mxu0 %v5643
    %8526 = vmatpush.bf16.msra.mxu0 %v5627
    %8527 = vmatmul.bf16.gmra.mxu0 %v2531
    %v8528 = vpop.f32.mrf.mxu0
    %v8529 = vadd.f32 0.0, %v8528
    %v8530 = vpop.f32.mrf.mxu0
    %v8531 = vadd.f32 0.0, %v8530
    %8532 = vmatmul.bf16.gmra.mxu0 %v2537
    %v8533 = vpop.f32.mrf.mxu0
    %v8534 = vadd.f32 0.0, %v8533
    %v8535 = vpop.f32.mrf.mxu0
    %v8536 = vadd.f32 0.0, %v8535
    %8537 = vdwg.mxu0
    %8538 = vmatpush.bf16.msra.mxu0 %v5867
    %8539 = vmatpush.bf16.msra.mxu0 %v5851
    %8540 = vmatpush.bf16.msra.mxu0 %v5835
    %8541 = vmatpush.bf16.msra.mxu0 %v5819
    %8542 = vmatpush.bf16.msra.mxu0 %v5803
    %8543 = vmatpush.bf16.msra.mxu0 %v5787
    %8544 = vmatpush.bf16.msra.mxu0 %v5771
    %8545 = vmatpush.bf16.msra.mxu0 %v5755
    %8546 = vmatmul.bf16.gmra.mxu0 %v2532
    %v8547 = vpop.f32.mrf.mxu0
    %v8548 = vadd.f32 %v8529, %v8547
    %v8549 = vpop.f32.mrf.mxu0
    %v8550 = vadd.f32 %v8531, %v8549
    %8551 = vmatmul.bf16.gmra.mxu0 %v2538
    %v8552 = vpop.f32.mrf.mxu0
    %v8553 = vadd.f32 %v8534, %v8552
    %v8554 = vpop.f32.mrf.mxu0
    %v8555 = vadd.f32 %v8536, %v8554
    %8556 = vdwg.mxu0
    %8557 = vmatpush.bf16.msra.mxu0 %v5995
    %8558 = vmatpush.bf16.msra.mxu0 %v5979
    %8559 = vmatpush.bf16.msra.mxu0 %v5963
    %8560 = vmatpush.bf16.msra.mxu0 %v5947
    %8561 = vmatpush.bf16.msra.mxu0 %v5931
    %8562 = vmatpush.bf16.msra.mxu0 %v5915
    %8563 = vmatpush.bf16.msra.mxu0 %v5899
    %8564 = vmatpush.bf16.msra.mxu0 %v5883
    %8565 = vmatmul.bf16.gmra.mxu0 %v2533
    %v8566 = vpop.f32.mrf.mxu0
    %v8567 = vadd.f32 %v8548, %v8566
    %v8568 = vpop.f32.mrf.mxu0
    %v8569 = vadd.f32 %v8550, %v8568
    %8570 = vmatmul.bf16.gmra.mxu0 %v2539
    %v8571 = vpop.f32.mrf.mxu0
    %v8572 = vadd.f32 %v8553, %v8571
    %v8573 = vpop.f32.mrf.mxu0
    %v8574 = vadd.f32 %v8555, %v8573
    %8575 = vdwg.mxu0
    %8576 = vmatpush.bf16.msra.mxu0 %v6123
    %8577 = vmatpush.bf16.msra.mxu0 %v6107
    %8578 = vmatpush.bf16.msra.mxu0 %v6091
    %8579 = vmatpush.bf16.msra.mxu0 %v6075
    %8580 = vmatpush.bf16.msra.mxu0 %v6059
    %8581 = vmatpush.bf16.msra.mxu0 %v6043
    %8582 = vmatpush.bf16.msra.mxu0 %v6027
    %8583 = vmatpush.bf16.msra.mxu0 %v6011
    %8584 = vmatmul.bf16.gmra.mxu0 %v2534
    %v8585 = vpop.f32.mrf.mxu0
    %v8586 = vadd.f32 %v8567, %v8585
    %v8587 = vpop.f32.mrf.mxu0
    %v8588 = vadd.f32 %v8569, %v8587
    %8589 = vmatmul.bf16.gmra.mxu0 %v2540
    %v8590 = vpop.f32.mrf.mxu0
    %v8591 = vadd.f32 %v8572, %v8590
    %v8592 = vpop.f32.mrf.mxu0
    %v8593 = vadd.f32 %v8574, %v8592
    %8594 = vdwg.mxu0
    %8595 = vmatpush.bf16.msra.mxu0 %v6251
    %8596 = vmatpush.bf16.msra.mxu0 %v6235
    %8597 = vmatpush.bf16.msra.mxu0 %v6219
    %8598 = vmatpush.bf16.msra.mxu0 %v6203
    %8599 = vmatpush.bf16.msra.mxu0 %v6187
    %8600 = vmatpush.bf16.msra.mxu0 %v6171
    %8601 = vmatpush.bf16.msra.mxu0 %v6155
    %8602 = vmatpush.bf16.msra.mxu0 %v6139
    %8603 = vmatmul.bf16.gmra.mxu0 %v2535
    %v8604 = vpop.f32.mrf.mxu0
    %v8605 = vadd.f32 %v8586, %v8604
    %v8606 = vpop.f32.mrf.mxu0
    %v8607 = vadd.f32 %v8588, %v8606
    %8608 = vmatmul.bf16.gmra.mxu0 %v2541
    %v8609 = vpop.f32.mrf.mxu0
    %v8610 = vadd.f32 %v8591, %v8609
    %v8611 = vpop.f32.mrf.mxu0
    %v8612 = vadd.f32 %v8593, %v8611
    %8613 = vdwg.mxu0
    %8614 = vmatpush.bf16.msra.mxu0 %v6379
    %8615 = vmatpush.bf16.msra.mxu0 %v6363
    %8616 = vmatpush.bf16.msra.mxu0 %v6347
    %8617 = vmatpush.bf16.msra.mxu0 %v6331
    %8618 = vmatpush.bf16.msra.mxu0 %v6315
    %8619 = vmatpush.bf16.msra.mxu0 %v6299
    %8620 = vmatpush.bf16.msra.mxu0 %v6283
    %8621 = vmatpush.bf16.msra.mxu0 %v6267
    %8622 = vmatmul.bf16.gmra.mxu0 %v2536
    %v8623 = vpop.f32.mrf.mxu0
    %v8624 = vadd.f32 %v8605, %v8623
    %v8625 = vpop.f32.mrf.mxu0
    %v8626 = vadd.f32 %v8607, %v8625
    %8627 = vmatmul.bf16.gmra.mxu0 %v2542
    %v8628 = vpop.f32.mrf.mxu0
    %v8629 = vadd.f32 %v8610, %v8628
    %v8630 = vpop.f32.mrf.mxu0
    %v8631 = vadd.f32 %v8612, %v8630
    %8632 = vdwg.mxu0
    %8633 = vmatpush.bf16.msra.mxu0 %v5740
    %8634 = vmatpush.bf16.msra.mxu0 %v5724
    %8635 = vmatpush.bf16.msra.mxu0 %v5708
    %8636 = vmatpush.bf16.msra.mxu0 %v5692
    %8637 = vmatpush.bf16.msra.mxu0 %v5676
    %8638 = vmatpush.bf16.msra.mxu0 %v5660
    %8639 = vmatpush.bf16.msra.mxu0 %v5644
    %8640 = vmatpush.bf16.msra.mxu0 %v5628
    %8641 = vmatmul.bf16.gmra.mxu0 %v2531
    %v8642 = vpop.f32.mrf.mxu0
    %v8643 = vadd.f32 0.0, %v8642
    %v8644 = vpop.f32.mrf.mxu0
    %v8645 = vadd.f32 0.0, %v8644
    %8646 = vmatmul.bf16.gmra.mxu0 %v2537
    %v8647 = vpop.f32.mrf.mxu0
    %v8648 = vadd.f32 0.0, %v8647
    %v8649 = vpop.f32.mrf.mxu0
    %v8650 = vadd.f32 0.0, %v8649
    %8651 = vdwg.mxu0
    %8652 = vmatpush.bf16.msra.mxu0 %v5868
    %8653 = vmatpush.bf16.msra.mxu0 %v5852
    %8654 = vmatpush.bf16.msra.mxu0 %v5836
    %8655 = vmatpush.bf16.msra.mxu0 %v5820
    %8656 = vmatpush.bf16.msra.mxu0 %v5804
    %8657 = vmatpush.bf16.msra.mxu0 %v5788
    %8658 = vmatpush.bf16.msra.mxu0 %v5772
    %8659 = vmatpush.bf16.msra.mxu0 %v5756
    %8660 = vmatmul.bf16.gmra.mxu0 %v2532
    %v8661 = vpop.f32.mrf.mxu0
    %v8662 = vadd.f32 %v8643, %v8661
    %v8663 = vpop.f32.mrf.mxu0
    %v8664 = vadd.f32 %v8645, %v8663
    %8665 = vmatmul.bf16.gmra.mxu0 %v2538
    %v8666 = vpop.f32.mrf.mxu0
    %v8667 = vadd.f32 %v8648, %v8666
    %v8668 = vpop.f32.mrf.mxu0
    %v8669 = vadd.f32 %v8650, %v8668
    %8670 = vdwg.mxu0
    %8671 = vmatpush.bf16.msra.mxu0 %v5996
    %8672 = vmatpush.bf16.msra.mxu0 %v5980
    %8673 = vmatpush.bf16.msra.mxu0 %v5964
    %8674 = vmatpush.bf16.msra.mxu0 %v5948
    %8675 = vmatpush.bf16.msra.mxu0 %v5932
    %8676 = vmatpush.bf16.msra.mxu0 %v5916
    %8677 = vmatpush.bf16.msra.mxu0 %v5900
    %8678 = vmatpush.bf16.msra.mxu0 %v5884
    %8679 = vmatmul.bf16.gmra.mxu0 %v2533
    %v8680 = vpop.f32.mrf.mxu0
    %v8681 = vadd.f32 %v8662, %v8680
    %v8682 = vpop.f32.mrf.mxu0
    %v8683 = vadd.f32 %v8664, %v8682
    %8684 = vmatmul.bf16.gmra.mxu0 %v2539
    %v8685 = vpop.f32.mrf.mxu0
    %v8686 = vadd.f32 %v8667, %v8685
    %v8687 = vpop.f32.mrf.mxu0
    %v8688 = vadd.f32 %v8669, %v8687
    %8689 = vdwg.mxu0
    %8690 = vmatpush.bf16.msra.mxu0 %v6124
    %8691 = vmatpush.bf16.msra.mxu0 %v6108
    %8692 = vmatpush.bf16.msra.mxu0 %v6092
    %8693 = vmatpush.bf16.msra.mxu0 %v6076
    %8694 = vmatpush.bf16.msra.mxu0 %v6060
    %8695 = vmatpush.bf16.msra.mxu0 %v6044
    %8696 = vmatpush.bf16.msra.mxu0 %v6028
    %8697 = vmatpush.bf16.msra.mxu0 %v6012
    %8698 = vmatmul.bf16.gmra.mxu0 %v2534
    %v8699 = vpop.f32.mrf.mxu0
    %v8700 = vadd.f32 %v8681, %v8699
    %v8701 = vpop.f32.mrf.mxu0
    %v8702 = vadd.f32 %v8683, %v8701
    %8703 = vmatmul.bf16.gmra.mxu0 %v2540
    %v8704 = vpop.f32.mrf.mxu0
    %v8705 = vadd.f32 %v8686, %v8704
    %v8706 = vpop.f32.mrf.mxu0
    %v8707 = vadd.f32 %v8688, %v8706
    %8708 = vdwg.mxu0
    %8709 = vmatpush.bf16.msra.mxu0 %v6252
    %8710 = vmatpush.bf16.msra.mxu0 %v6236
    %8711 = vmatpush.bf16.msra.mxu0 %v6220
    %8712 = vmatpush.bf16.msra.mxu0 %v6204
    %8713 = vmatpush.bf16.msra.mxu0 %v6188
    %8714 = vmatpush.bf16.msra.mxu0 %v6172
    %8715 = vmatpush.bf16.msra.mxu0 %v6156
    %8716 = vmatpush.bf16.msra.mxu0 %v6140
    %8717 = vmatmul.bf16.gmra.mxu0 %v2535
    %v8718 = vpop.f32.mrf.mxu0
    %v8719 = vadd.f32 %v8700, %v8718
    %v8720 = vpop.f32.mrf.mxu0
    %v8721 = vadd.f32 %v8702, %v8720
    %8722 = vmatmul.bf16.gmra.mxu0 %v2541
    %v8723 = vpop.f32.mrf.mxu0
    %v8724 = vadd.f32 %v8705, %v8723
    %v8725 = vpop.f32.mrf.mxu0
    %v8726 = vadd.f32 %v8707, %v8725
    %8727 = vdwg.mxu0
    %8728 = vmatpush.bf16.msra.mxu0 %v6380
    %8729 = vmatpush.bf16.msra.mxu0 %v6364
    %8730 = vmatpush.bf16.msra.mxu0 %v6348
    %8731 = vmatpush.bf16.msra.mxu0 %v6332
    %8732 = vmatpush.bf16.msra.mxu0 %v6316
    %8733 = vmatpush.bf16.msra.mxu0 %v6300
    %8734 = vmatpush.bf16.msra.mxu0 %v6284
    %8735 = vmatpush.bf16.msra.mxu0 %v6268
    %8736 = vmatmul.bf16.gmra.mxu0 %v2536
    %v8737 = vpop.f32.mrf.mxu0
    %v8738 = vadd.f32 %v8719, %v8737
    %v8739 = vpop.f32.mrf.mxu0
    %v8740 = vadd.f32 %v8721, %v8739
    %8741 = vmatmul.bf16.gmra.mxu0 %v2542
    %v8742 = vpop.f32.mrf.mxu0
    %v8743 = vadd.f32 %v8724, %v8742
    %v8744 = vpop.f32.mrf.mxu0
    %v8745 = vadd.f32 %v8726, %v8744
    %8746 = vdwg.mxu0
    %8747 = vmatpush.bf16.msra.mxu0 %v5741
    %8748 = vmatpush.bf16.msra.mxu0 %v5725
    %8749 = vmatpush.bf16.msra.mxu0 %v5709
    %8750 = vmatpush.bf16.msra.mxu0 %v5693
    %8751 = vmatpush.bf16.msra.mxu0 %v5677
    %8752 = vmatpush.bf16.msra.mxu0 %v5661
    %8753 = vmatpush.bf16.msra.mxu0 %v5645
    %8754 = vmatpush.bf16.msra.mxu0 %v5629
    %8755 = vmatmul.bf16.gmra.mxu0 %v2531
    %v8756 = vpop.f32.mrf.mxu0
    %v8757 = vadd.f32 0.0, %v8756
    %v8758 = vpop.f32.mrf.mxu0
    %v8759 = vadd.f32 0.0, %v8758
    %8760 = vmatmul.bf16.gmra.mxu0 %v2537
    %v8761 = vpop.f32.mrf.mxu0
    %v8762 = vadd.f32 0.0, %v8761
    %v8763 = vpop.f32.mrf.mxu0
    %v8764 = vadd.f32 0.0, %v8763
    %8765 = vdwg.mxu0
    %8766 = vmatpush.bf16.msra.mxu0 %v5869
    %8767 = vmatpush.bf16.msra.mxu0 %v5853
    %8768 = vmatpush.bf16.msra.mxu0 %v5837
    %8769 = vmatpush.bf16.msra.mxu0 %v5821
    %8770 = vmatpush.bf16.msra.mxu0 %v5805
    %8771 = vmatpush.bf16.msra.mxu0 %v5789
    %8772 = vmatpush.bf16.msra.mxu0 %v5773
    %8773 = vmatpush.bf16.msra.mxu0 %v5757
    %8774 = vmatmul.bf16.gmra.mxu0 %v2532
    %v8775 = vpop.f32.mrf.mxu0
    %v8776 = vadd.f32 %v8757, %v8775
    %v8777 = vpop.f32.mrf.mxu0
    %v8778 = vadd.f32 %v8759, %v8777
    %8779 = vmatmul.bf16.gmra.mxu0 %v2538
    %v8780 = vpop.f32.mrf.mxu0
    %v8781 = vadd.f32 %v8762, %v8780
    %v8782 = vpop.f32.mrf.mxu0
    %v8783 = vadd.f32 %v8764, %v8782
    %8784 = vdwg.mxu0
    %8785 = vmatpush.bf16.msra.mxu0 %v5997
    %8786 = vmatpush.bf16.msra.mxu0 %v5981
    %8787 = vmatpush.bf16.msra.mxu0 %v5965
    %8788 = vmatpush.bf16.msra.mxu0 %v5949
    %8789 = vmatpush.bf16.msra.mxu0 %v5933
    %8790 = vmatpush.bf16.msra.mxu0 %v5917
    %8791 = vmatpush.bf16.msra.mxu0 %v5901
    %8792 = vmatpush.bf16.msra.mxu0 %v5885
    %8793 = vmatmul.bf16.gmra.mxu0 %v2533
    %v8794 = vpop.f32.mrf.mxu0
    %v8795 = vadd.f32 %v8776, %v8794
    %v8796 = vpop.f32.mrf.mxu0
    %v8797 = vadd.f32 %v8778, %v8796
    %8798 = vmatmul.bf16.gmra.mxu0 %v2539
    %v8799 = vpop.f32.mrf.mxu0
    %v8800 = vadd.f32 %v8781, %v8799
    %v8801 = vpop.f32.mrf.mxu0
    %v8802 = vadd.f32 %v8783, %v8801
    %8803 = vdwg.mxu0
    %8804 = vmatpush.bf16.msra.mxu0 %v6125
    %8805 = vmatpush.bf16.msra.mxu0 %v6109
    %8806 = vmatpush.bf16.msra.mxu0 %v6093
    %8807 = vmatpush.bf16.msra.mxu0 %v6077
    %8808 = vmatpush.bf16.msra.mxu0 %v6061
    %8809 = vmatpush.bf16.msra.mxu0 %v6045
    %8810 = vmatpush.bf16.msra.mxu0 %v6029
    %8811 = vmatpush.bf16.msra.mxu0 %v6013
    %8812 = vmatmul.bf16.gmra.mxu0 %v2534
    %v8813 = vpop.f32.mrf.mxu0
    %v8814 = vadd.f32 %v8795, %v8813
    %v8815 = vpop.f32.mrf.mxu0
    %v8816 = vadd.f32 %v8797, %v8815
    %8817 = vmatmul.bf16.gmra.mxu0 %v2540
    %v8818 = vpop.f32.mrf.mxu0
    %v8819 = vadd.f32 %v8800, %v8818
    %v8820 = vpop.f32.mrf.mxu0
    %v8821 = vadd.f32 %v8802, %v8820
    %8822 = vdwg.mxu0
    %8823 = vmatpush.bf16.msra.mxu0 %v6253
    %8824 = vmatpush.bf16.msra.mxu0 %v6237
    %8825 = vmatpush.bf16.msra.mxu0 %v6221
    %8826 = vmatpush.bf16.msra.mxu0 %v6205
    %8827 = vmatpush.bf16.msra.mxu0 %v6189
    %8828 = vmatpush.bf16.msra.mxu0 %v6173
    %8829 = vmatpush.bf16.msra.mxu0 %v6157
    %8830 = vmatpush.bf16.msra.mxu0 %v6141
    %8831 = vmatmul.bf16.gmra.mxu0 %v2535
    %v8832 = vpop.f32.mrf.mxu0
    %v8833 = vadd.f32 %v8814, %v8832
    %v8834 = vpop.f32.mrf.mxu0
    %v8835 = vadd.f32 %v8816, %v8834
    %8836 = vmatmul.bf16.gmra.mxu0 %v2541
    %v8837 = vpop.f32.mrf.mxu0
    %v8838 = vadd.f32 %v8819, %v8837
    %v8839 = vpop.f32.mrf.mxu0
    %v8840 = vadd.f32 %v8821, %v8839
    %8841 = vdwg.mxu0
    %8842 = vmatpush.bf16.msra.mxu0 %v6381
    %8843 = vmatpush.bf16.msra.mxu0 %v6365
    %8844 = vmatpush.bf16.msra.mxu0 %v6349
    %8845 = vmatpush.bf16.msra.mxu0 %v6333
    %8846 = vmatpush.bf16.msra.mxu0 %v6317
    %8847 = vmatpush.bf16.msra.mxu0 %v6301
    %8848 = vmatpush.bf16.msra.mxu0 %v6285
    %8849 = vmatpush.bf16.msra.mxu0 %v6269
    %8850 = vmatmul.bf16.gmra.mxu0 %v2536
    %v8851 = vpop.f32.mrf.mxu0
    %v8852 = vadd.f32 %v8833, %v8851
    %v8853 = vpop.f32.mrf.mxu0
    %v8854 = vadd.f32 %v8835, %v8853
    %8855 = vmatmul.bf16.gmra.mxu0 %v2542
    %v8856 = vpop.f32.mrf.mxu0
    %v8857 = vadd.f32 %v8838, %v8856
    %v8858 = vpop.f32.mrf.mxu0
    %v8859 = vadd.f32 %v8840, %v8858
    %8860 = vdwg.mxu0
    %8861 = vmatpush.bf16.msra.mxu0 %v5742
    %8862 = vmatpush.bf16.msra.mxu0 %v5726
    %8863 = vmatpush.bf16.msra.mxu0 %v5710
    %8864 = vmatpush.bf16.msra.mxu0 %v5694
    %8865 = vmatpush.bf16.msra.mxu0 %v5678
    %8866 = vmatpush.bf16.msra.mxu0 %v5662
    %8867 = vmatpush.bf16.msra.mxu0 %v5646
    %8868 = vmatpush.bf16.msra.mxu0 %v5630
    %8869 = vmatmul.bf16.gmra.mxu0 %v2531
    %v8870 = vpop.f32.mrf.mxu0
    %v8871 = vadd.f32 0.0, %v8870
    %v8872 = vpop.f32.mrf.mxu0
    %v8873 = vadd.f32 0.0, %v8872
    %8874 = vmatmul.bf16.gmra.mxu0 %v2537
    %v8875 = vpop.f32.mrf.mxu0
    %v8876 = vadd.f32 0.0, %v8875
    %v8877 = vpop.f32.mrf.mxu0
    %v8878 = vadd.f32 0.0, %v8877
    %8879 = vdwg.mxu0
    %8880 = vmatpush.bf16.msra.mxu0 %v5870
    %8881 = vmatpush.bf16.msra.mxu0 %v5854
    %8882 = vmatpush.bf16.msra.mxu0 %v5838
    %8883 = vmatpush.bf16.msra.mxu0 %v5822
    %8884 = vmatpush.bf16.msra.mxu0 %v5806
    %8885 = vmatpush.bf16.msra.mxu0 %v5790
    %8886 = vmatpush.bf16.msra.mxu0 %v5774
    %8887 = vmatpush.bf16.msra.mxu0 %v5758
    %8888 = vmatmul.bf16.gmra.mxu0 %v2532
    %v8889 = vpop.f32.mrf.mxu0
    %v8890 = vadd.f32 %v8871, %v8889
    %v8891 = vpop.f32.mrf.mxu0
    %v8892 = vadd.f32 %v8873, %v8891
    %8893 = vmatmul.bf16.gmra.mxu0 %v2538
    %v8894 = vpop.f32.mrf.mxu0
    %v8895 = vadd.f32 %v8876, %v8894
    %v8896 = vpop.f32.mrf.mxu0
    %v8897 = vadd.f32 %v8878, %v8896
    %8898 = vdwg.mxu0
    %8899 = vmatpush.bf16.msra.mxu0 %v5998
    %8900 = vmatpush.bf16.msra.mxu0 %v5982
    %8901 = vmatpush.bf16.msra.mxu0 %v5966
    %8902 = vmatpush.bf16.msra.mxu0 %v5950
    %8903 = vmatpush.bf16.msra.mxu0 %v5934
    %8904 = vmatpush.bf16.msra.mxu0 %v5918
    %8905 = vmatpush.bf16.msra.mxu0 %v5902
    %8906 = vmatpush.bf16.msra.mxu0 %v5886
    %8907 = vmatmul.bf16.gmra.mxu0 %v2533
    %v8908 = vpop.f32.mrf.mxu0
    %v8909 = vadd.f32 %v8890, %v8908
    %v8910 = vpop.f32.mrf.mxu0
    %v8911 = vadd.f32 %v8892, %v8910
    %8912 = vmatmul.bf16.gmra.mxu0 %v2539
    %v8913 = vpop.f32.mrf.mxu0
    %v8914 = vadd.f32 %v8895, %v8913
    %v8915 = vpop.f32.mrf.mxu0
    %v8916 = vadd.f32 %v8897, %v8915
    %8917 = vdwg.mxu0
    %8918 = vmatpush.bf16.msra.mxu0 %v6126
    %8919 = vmatpush.bf16.msra.mxu0 %v6110
    %8920 = vmatpush.bf16.msra.mxu0 %v6094
    %8921 = vmatpush.bf16.msra.mxu0 %v6078
    %8922 = vmatpush.bf16.msra.mxu0 %v6062
    %8923 = vmatpush.bf16.msra.mxu0 %v6046
    %8924 = vmatpush.bf16.msra.mxu0 %v6030
    %8925 = vmatpush.bf16.msra.mxu0 %v6014
    %8926 = vmatmul.bf16.gmra.mxu0 %v2534
    %v8927 = vpop.f32.mrf.mxu0
    %v8928 = vadd.f32 %v8909, %v8927
    %v8929 = vpop.f32.mrf.mxu0
    %v8930 = vadd.f32 %v8911, %v8929
    %8931 = vmatmul.bf16.gmra.mxu0 %v2540
    %v8932 = vpop.f32.mrf.mxu0
    %v8933 = vadd.f32 %v8914, %v8932
    %v8934 = vpop.f32.mrf.mxu0
    %v8935 = vadd.f32 %v8916, %v8934
    %8936 = vdwg.mxu0
    %8937 = vmatpush.bf16.msra.mxu0 %v6254
    %8938 = vmatpush.bf16.msra.mxu0 %v6238
    %8939 = vmatpush.bf16.msra.mxu0 %v6222
    %8940 = vmatpush.bf16.msra.mxu0 %v6206
    %8941 = vmatpush.bf16.msra.mxu0 %v6190
    %8942 = vmatpush.bf16.msra.mxu0 %v6174
    %8943 = vmatpush.bf16.msra.mxu0 %v6158
    %8944 = vmatpush.bf16.msra.mxu0 %v6142
    %8945 = vmatmul.bf16.gmra.mxu0 %v2535
    %v8946 = vpop.f32.mrf.mxu0
    %v8947 = vadd.f32 %v8928, %v8946
    %v8948 = vpop.f32.mrf.mxu0
    %v8949 = vadd.f32 %v8930, %v8948
    %8950 = vmatmul.bf16.gmra.mxu0 %v2541
    %v8951 = vpop.f32.mrf.mxu0
    %v8952 = vadd.f32 %v8933, %v8951
    %v8953 = vpop.f32.mrf.mxu0
    %v8954 = vadd.f32 %v8935, %v8953
    %8955 = vdwg.mxu0
    %8956 = vmatpush.bf16.msra.mxu0 %v6382
    %8957 = vmatpush.bf16.msra.mxu0 %v6366
    %8958 = vmatpush.bf16.msra.mxu0 %v6350
    %8959 = vmatpush.bf16.msra.mxu0 %v6334
    %8960 = vmatpush.bf16.msra.mxu0 %v6318
    %8961 = vmatpush.bf16.msra.mxu0 %v6302
    %8962 = vmatpush.bf16.msra.mxu0 %v6286
    %8963 = vmatpush.bf16.msra.mxu0 %v6270
    %8964 = vmatmul.bf16.gmra.mxu0 %v2536
    %v8965 = vpop.f32.mrf.mxu0
    %v8966 = vadd.f32 %v8947, %v8965
    %v8967 = vpop.f32.mrf.mxu0
    %v8968 = vadd.f32 %v8949, %v8967
    %8969 = vmatmul.bf16.gmra.mxu0 %v2542
    %v8970 = vpop.f32.mrf.mxu0
    %v8971 = vadd.f32 %v8952, %v8970
    %v8972 = vpop.f32.mrf.mxu0
    %v8973 = vadd.f32 %v8954, %v8972
    %8974 = vdwg.mxu0
    %8975 = vst [vmem:[#allocation7] sm:$0xff] %v7256
    %8976 = vst [vmem:[#allocation7 + $0x8] sm:$0xff] %v7370
    %8977 = vst [vmem:[#allocation7 + $0x10] sm:$0xff] %v7484
    %8978 = vst [vmem:[#allocation7 + $0x18] sm:$0xff] %v7598
    %8979 = vst [vmem:[#allocation7 + $0x20] sm:$0xff] %v7258
    %8980 = vst [vmem:[#allocation7 + $0x28] sm:$0xff] %v7372
    %8981 = vst [vmem:[#allocation7 + $0x30] sm:$0xff] %v7486
    %8982 = vst [vmem:[#allocation7 + $0x38] sm:$0xff] %v7600
    %8983 = vst [vmem:[#allocation7 + $0x40] sm:$0xff] %v7261
    %8984 = vst [vmem:[#allocation7 + $0x48] sm:$0xff] %v7375
    %8985 = vst [vmem:[#allocation7 + $0x50] sm:$0xff] %v7489
    %8986 = vst [vmem:[#allocation7 + $0x58] sm:$0xff] %v7603
    %8987 = vst [vmem:[#allocation7 + $0x60] sm:$0xff] %v7263
    %8988 = vst [vmem:[#allocation7 + $0x68] sm:$0xff] %v7377
    %8989 = vst [vmem:[#allocation7 + $0x70] sm:$0xff] %v7491
    %8990 = vst [vmem:[#allocation7 + $0x78] sm:$0xff] %v7605
    %8991 = vst [vmem:[#allocation7 + $0x80] sm:$0xff] %v7712
    %8992 = vst [vmem:[#allocation7 + $0x88] sm:$0xff] %v7826
    %8993 = vst [vmem:[#allocation7 + $0x90] sm:$0xff] %v7940
    %8994 = vst [vmem:[#allocation7 + $0x98] sm:$0xff] %v8054
    %8995 = vst [vmem:[#allocation7 + $0xa0] sm:$0xff] %v7714
    %8996 = vst [vmem:[#allocation7 + $0xa8] sm:$0xff] %v7828
    %8997 = vst [vmem:[#allocation7 + $0xb0] sm:$0xff] %v7942
    %8998 = vst [vmem:[#allocation7 + $0xb8] sm:$0xff] %v8056
    %8999 = vst [vmem:[#allocation7 + $0xc0] sm:$0xff] %v7717
    %9000 = vst [vmem:[#allocation7 + $0xc8] sm:$0xff] %v7831
    %9001 = vst [vmem:[#allocation7 + $0xd0] sm:$0xff] %v7945
    %9002 = vst [vmem:[#allocation7 + $0xd8] sm:$0xff] %v8059
    %9003 = vst [vmem:[#allocation7 + $0xe0] sm:$0xff] %v7719
    %9004 = vst [vmem:[#allocation7 + $0xe8] sm:$0xff] %v7833
    %9005 = vst [vmem:[#allocation7 + $0xf0] sm:$0xff] %v7947
    %9006 = vst [vmem:[#allocation7 + $0xf8] sm:$0xff] %v8061
    %9007 = vst [vmem:[#allocation7 + $0x100] sm:$0xff] %v8168
    %9008 = vst [vmem:[#allocation7 + $0x108] sm:$0xff] %v8282
    %9009 = vst [vmem:[#allocation7 + $0x110] sm:$0xff] %v8396
    %9010 = vst [vmem:[#allocation7 + $0x118] sm:$0xff] %v8510
    %9011 = vst [vmem:[#allocation7 + $0x120] sm:$0xff] %v8170
    %9012 = vst [vmem:[#allocation7 + $0x128] sm:$0xff] %v8284
    %9013 = vst [vmem:[#allocation7 + $0x130] sm:$0xff] %v8398
    %9014 = vst [vmem:[#allocation7 + $0x138] sm:$0xff] %v8512
    %9015 = vst [vmem:[#allocation7 + $0x140] sm:$0xff] %v8173
    %9016 = vst [vmem:[#allocation7 + $0x148] sm:$0xff] %v8287
    %9017 = vst [vmem:[#allocation7 + $0x150] sm:$0xff] %v8401
    %9018 = vst [vmem:[#allocation7 + $0x158] sm:$0xff] %v8515
    %9019 = vst [vmem:[#allocation7 + $0x160] sm:$0xff] %v8175
    %9020 = vst [vmem:[#allocation7 + $0x168] sm:$0xff] %v8289
    %9021 = vst [vmem:[#allocation7 + $0x170] sm:$0xff] %v8403
    %9022 = vst [vmem:[#allocation7 + $0x178] sm:$0xff] %v8517
    %9023 = vst [vmem:[#allocation7 + $0x180] sm:$0xff] %v8624
    %9024 = vst [vmem:[#allocation7 + $0x188] sm:$0xff] %v8738
    %9025 = vst [vmem:[#allocation7 + $0x190] sm:$0xff] %v8852
    %9026 = vst [vmem:[#allocation7 + $0x198] sm:$0xff] %v8966
    %9027 = vst [vmem:[#allocation7 + $0x1a0] sm:$0xff] %v8626
    %9028 = vst [vmem:[#allocation7 + $0x1a8] sm:$0xff] %v8740
    %9029 = vst [vmem:[#allocation7 + $0x1b0] sm:$0xff] %v8854
    %9030 = vst [vmem:[#allocation7 + $0x1b8] sm:$0xff] %v8968
    %9031 = vst [vmem:[#allocation7 + $0x1c0] sm:$0xff] %v8629
    %9032 = vst [vmem:[#allocation7 + $0x1c8] sm:$0xff] %v8743
    %9033 = vst [vmem:[#allocation7 + $0x1d0] sm:$0xff] %v8857
    %9034 = vst [vmem:[#allocation7 + $0x1d8] sm:$0xff] %v8971
    %9035 = vst [vmem:[#allocation7 + $0x1e0] sm:$0xff] %v8631
    %9036 = vst [vmem:[#allocation7 + $0x1e8] sm:$0xff] %v8745
    %9037 = vst [vmem:[#allocation7 + $0x1f0] sm:$0xff] %v8859
    %9038 = vst [vmem:[#allocation7 + $0x1f8] sm:$0xff] %v8973
    %v9039 = vld [vmem:[#allocation7] sm:$0xff]
    %v9040 = vld [vmem:[#allocation7 + $0x8] sm:$0xff]
    %v9041 = vld [vmem:[#allocation7 + $0x10] sm:$0xff]
    %v9042 = vld [vmem:[#allocation7 + $0x18] sm:$0xff]
    %v9043 = vld [vmem:[#allocation7 + $0x20] sm:$0xff]
    %v9044 = vld [vmem:[#allocation7 + $0x28] sm:$0xff]
    %v9045 = vld [vmem:[#allocation7 + $0x30] sm:$0xff]
    %v9046 = vld [vmem:[#allocation7 + $0x38] sm:$0xff]
    %v9047 = vld [vmem:[#allocation7 + $0x40] sm:$0xff]
    %v9048 = vld [vmem:[#allocation7 + $0x48] sm:$0xff]
    %v9049 = vld [vmem:[#allocation7 + $0x50] sm:$0xff]
    %v9050 = vld [vmem:[#allocation7 + $0x58] sm:$0xff]
    %v9051 = vld [vmem:[#allocation7 + $0x60] sm:$0xff]
    %v9052 = vld [vmem:[#allocation7 + $0x68] sm:$0xff]
    %v9053 = vld [vmem:[#allocation7 + $0x70] sm:$0xff]
    %v9054 = vld [vmem:[#allocation7 + $0x78] sm:$0xff]
    %v9055 = vld [vmem:[#allocation7 + $0x80] sm:$0xff]
    %v9056 = vld [vmem:[#allocation7 + $0x88] sm:$0xff]
    %v9057 = vld [vmem:[#allocation7 + $0x90] sm:$0xff]
    %v9058 = vld [vmem:[#allocation7 + $0x98] sm:$0xff]
    %v9059 = vld [vmem:[#allocation7 + $0xa0] sm:$0xff]
    %v9060 = vld [vmem:[#allocation7 + $0xa8] sm:$0xff]
    %v9061 = vld [vmem:[#allocation7 + $0xb0] sm:$0xff]
    %v9062 = vld [vmem:[#allocation7 + $0xb8] sm:$0xff]
    %v9063 = vld [vmem:[#allocation7 + $0xc0] sm:$0xff]
    %v9064 = vld [vmem:[#allocation7 + $0xc8] sm:$0xff]
    %v9065 = vld [vmem:[#allocation7 + $0xd0] sm:$0xff]
    %v9066 = vld [vmem:[#allocation7 + $0xd8] sm:$0xff]
    %v9067 = vld [vmem:[#allocation7 + $0xe0] sm:$0xff]
    %v9068 = vld [vmem:[#allocation7 + $0xe8] sm:$0xff]
    %v9069 = vld [vmem:[#allocation7 + $0xf0] sm:$0xff]
    %v9070 = vld [vmem:[#allocation7 + $0xf8] sm:$0xff]
    %v9071 = vld [vmem:[#allocation7 + $0x100] sm:$0xff]
    %v9072 = vld [vmem:[#allocation7 + $0x108] sm:$0xff]
    %v9073 = vld [vmem:[#allocation7 + $0x110] sm:$0xff]
    %v9074 = vld [vmem:[#allocation7 + $0x118] sm:$0xff]
    %v9075 = vld [vmem:[#allocation7 + $0x120] sm:$0xff]
    %v9076 = vld [vmem:[#allocation7 + $0x128] sm:$0xff]
    %v9077 = vld [vmem:[#allocation7 + $0x130] sm:$0xff]
    %v9078 = vld [vmem:[#allocation7 + $0x138] sm:$0xff]
    %v9079 = vld [vmem:[#allocation7 + $0x140] sm:$0xff]
    %v9080 = vld [vmem:[#allocation7 + $0x148] sm:$0xff]
    %v9081 = vld [vmem:[#allocation7 + $0x150] sm:$0xff]
    %v9082 = vld [vmem:[#allocation7 + $0x158] sm:$0xff]
    %v9083 = vld [vmem:[#allocation7 + $0x160] sm:$0xff]
    %v9084 = vld [vmem:[#allocation7 + $0x168] sm:$0xff]
    %v9085 = vld [vmem:[#allocation7 + $0x170] sm:$0xff]
    %v9086 = vld [vmem:[#allocation7 + $0x178] sm:$0xff]
    %v9087 = vld [vmem:[#allocation7 + $0x180] sm:$0xff]
    %v9088 = vld [vmem:[#allocation7 + $0x188] sm:$0xff]
    %v9089 = vld [vmem:[#allocation7 + $0x190] sm:$0xff]
    %v9090 = vld [vmem:[#allocation7 + $0x198] sm:$0xff]
    %v9091 = vld [vmem:[#allocation7 + $0x1a0] sm:$0xff]
    %v9092 = vld [vmem:[#allocation7 + $0x1a8] sm:$0xff]
    %v9093 = vld [vmem:[#allocation7 + $0x1b0] sm:$0xff]
    %v9094 = vld [vmem:[#allocation7 + $0x1b8] sm:$0xff]
    %v9095 = vld [vmem:[#allocation7 + $0x1c0] sm:$0xff]
    %v9096 = vld [vmem:[#allocation7 + $0x1c8] sm:$0xff]
    %v9097 = vld [vmem:[#allocation7 + $0x1d0] sm:$0xff]
    %v9098 = vld [vmem:[#allocation7 + $0x1d8] sm:$0xff]
    %v9099 = vld [vmem:[#allocation7 + $0x1e0] sm:$0xff]
    %v9100 = vld [vmem:[#allocation7 + $0x1e8] sm:$0xff]
    %v9101 = vld [vmem:[#allocation7 + $0x1f0] sm:$0xff]
    %v9102 = vld [vmem:[#allocation7 + $0x1f8] sm:$0xff]
    %s9103 = scalar_lea.vmem [#allocation21], 10
    %v9104 = vld [vmem:[%s9103] ss:$2 sm:$0xf]
    %s9105 = scalar_lea.vmem [#allocation21], 11
    %v9106 = vld [vmem:[%s9105] ss:$2 sm:$0xf]
    %v9107 = vadd.f32 %v9039, %v9043
    %v9108 = vadd.f32 %v9107, %v9047
    %v9109 = vadd.f32 %v9108, %v9051
    %v9110 = vadd.f32 %v9109, %v9055
    %v9111 = vadd.f32 %v9110, %v9059
    %v9112 = vadd.f32 %v9111, %v9063
    %v9113 = vadd.f32 %v9112, %v9067
    %v9114 = vadd.f32 %v9113, %v9071
    %v9115 = vadd.f32 %v9114, %v9075
    %v9116 = vadd.f32 %v9115, %v9079
    %v9117 = vadd.f32 %v9116, %v9083
    %v9118 = vadd.f32 %v9117, %v9087
    %v9119 = vadd.f32 %v9118, %v9091
    %v9120 = vadd.f32 %v9119, %v9095
    %v9121 = vadd.f32 %v9120, %v9099
    %v9122 = vrot.slane %v9121, 4
    %v9123 = vadd.f32 %v9121, %v9122
    %v9124 = vrot.slane %v9123, 2
    %v9125 = vadd.f32 %v9123, %v9124
    %v9126 = vrot.slane %v9125, 1
    %v9127 = vadd.f32 %v9125, %v9126
    %v9128 = vadd.f32 %v9040, %v9044
    %v9129 = vadd.f32 %v9128, %v9048
    %v9130 = vadd.f32 %v9129, %v9052
    %v9131 = vadd.f32 %v9130, %v9056
    %v9132 = vadd.f32 %v9131, %v9060
    %v9133 = vadd.f32 %v9132, %v9064
    %v9134 = vadd.f32 %v9133, %v9068
    %v9135 = vadd.f32 %v9134, %v9072
    %v9136 = vadd.f32 %v9135, %v9076
    %v9137 = vadd.f32 %v9136, %v9080
    %v9138 = vadd.f32 %v9137, %v9084
    %v9139 = vadd.f32 %v9138, %v9088
    %v9140 = vadd.f32 %v9139, %v9092
    %v9141 = vadd.f32 %v9140, %v9096
    %v9142 = vadd.f32 %v9141, %v9100
    %v9143 = vrot.slane %v9142, 4
    %v9144 = vadd.f32 %v9142, %v9143
    %v9145 = vrot.slane %v9144, 2
    %v9146 = vadd.f32 %v9144, %v9145
    %v9147 = vrot.slane %v9146, 1
    %v9148 = vadd.f32 %v9146, %v9147
    %v9149 = vadd.f32 %v9041, %v9045
    %v9150 = vadd.f32 %v9149, %v9049
    %v9151 = vadd.f32 %v9150, %v9053
    %v9152 = vadd.f32 %v9151, %v9057
    %v9153 = vadd.f32 %v9152, %v9061
    %v9154 = vadd.f32 %v9153, %v9065
    %v9155 = vadd.f32 %v9154, %v9069
    %v9156 = vadd.f32 %v9155, %v9073
    %v9157 = vadd.f32 %v9156, %v9077
    %v9158 = vadd.f32 %v9157, %v9081
    %v9159 = vadd.f32 %v9158, %v9085
    %v9160 = vadd.f32 %v9159, %v9089
    %v9161 = vadd.f32 %v9160, %v9093
    %v9162 = vadd.f32 %v9161, %v9097
    %v9163 = vadd.f32 %v9162, %v9101
    %v9164 = vrot.slane %v9163, 4
    %v9165 = vadd.f32 %v9163, %v9164
    %v9166 = vrot.slane %v9165, 2
    %v9167 = vadd.f32 %v9165, %v9166
    %v9168 = vrot.slane %v9167, 1
    %v9169 = vadd.f32 %v9167, %v9168
    %v9170 = vadd.f32 %v9042, %v9046
    %v9171 = vadd.f32 %v9170, %v9050
    %v9172 = vadd.f32 %v9171, %v9054
    %v9173 = vadd.f32 %v9172, %v9058
    %v9174 = vadd.f32 %v9173, %v9062
    %v9175 = vadd.f32 %v9174, %v9066
    %v9176 = vadd.f32 %v9175, %v9070
    %v9177 = vadd.f32 %v9176, %v9074
    %v9178 = vadd.f32 %v9177, %v9078
    %v9179 = vadd.f32 %v9178, %v9082
    %v9180 = vadd.f32 %v9179, %v9086
    %v9181 = vadd.f32 %v9180, %v9090
    %v9182 = vadd.f32 %v9181, %v9094
    %v9183 = vadd.f32 %v9182, %v9098
    %v9184 = vadd.f32 %v9183, %v9102
    %v9185 = vrot.slane %v9184, 4
    %v9186 = vadd.f32 %v9184, %v9185
    %v9187 = vrot.slane %v9186, 2
    %v9188 = vadd.f32 %v9186, %v9187
    %v9189 = vrot.slane %v9188, 1
    %v9190 = vadd.f32 %v9188, %v9189
    %9193 = vrot.lane.b32.xlu0 %v9127, 48
    %v9194 = vpop.permute.xlu0 %9193
    %9195 = vrot.lane.b32.xlu0 %v9148, 48
    %v9196 = vpop.permute.xlu0 %9195
    %vm9197 = vcmask 392192
    %v9198 = vsel %vm9197, %v9194, %v9196
    %v9200 = vadd.f32 %v9127, %v9198
    %9201 = vrot.lane.b32.xlu0 %v9148, 96
    %v9202 = vpop.permute.xlu0 %9201
    %v9204 = vadd.f32 %v9200, %v9202
    %9206 = vrot.lane.b32.xlu0 %v9148, 16
    %v9207 = vpop.permute.xlu0 %9206
    %9208 = vrot.lane.b32.xlu0 %v9169, 16
    %v9209 = vpop.permute.xlu0 %9208
    %vm9210 = vcmask 130048
    %v9211 = vsel %vm9210, %v9207, %v9209
    %v9213 = vadd.f32 %v9204, %v9211
    %9215 = vrot.lane.b32.xlu0 %v9169, 64
    %v9216 = vpop.permute.xlu0 %9215
    %9217 = vrot.lane.b32.xlu0 %v9190, 64
    %v9218 = vpop.permute.xlu0 %9217
    %vm9219 = vcmask 523264
    %v9220 = vsel %vm9219, %v9216, %v9218
    %v9222 = vadd.f32 %v9213, %v9220
    %9223 = vrot.lane.b32.xlu0 %v9190, 112
    %v9224 = vpop.permute.xlu0 %9223
    %v9226 = vadd.f32 %v9222, %v9224
    %v9227 = vmul.f32 %v9226, 0.0013020834
    %vm9228 = vcmask 647168
    %9229 = vst.msk [vmem:[#allocation8] sm:$0x1] %vm9228, %v9227
    %9231 = vrot.lane.b32.xlu0 %v9227, 80
    %v9232 = vpop.permute.xlu0 %9231
    %v9233 = vrot.slane %v9232, 6
    %vm9234 = vcmask 654336
    %v9235 = vsel %vm9234, %v9233, %v9232
    %vm9237 = vcmask 1041024
    %vm9238 = vcmask 256002
    %vm9239 = vmor %vm9238, %vm9237
    %9240 = vst.msk [vmem:[#allocation8] sm:$0x5] %vm9239, %v9235
    %9241 = vrot.lane.b32.xlu0 %v9227, 32
    %v9242 = vpop.permute.xlu0 %9241
    %vm9244 = vcmask 909568
    %9245 = vst.msk [vmem:[#allocation8 + $0x2] sm:$0x1] %vm9244, %v9242
    %9246 = vrot.lane.b32.xlu0 %v9227, 112
    %v9247 = vpop.permute.xlu0 %9246
    %v9248 = vrot.slane %v9247, 6
    %vm9249 = vcmask 916480
    %v9250 = vsel %vm9249, %v9248, %v9247
    %vm9252 = vcmask 1041280
    %vm9253 = vcmask 518146
    %vm9254 = vmor %vm9253, %vm9252
    %9255 = vst.msk [vmem:[#allocation8 + $0x2] sm:$0x5] %vm9254, %v9250
    %9256 = vrot.lane.b32.xlu0 %v9227, 64
    %v9257 = vpop.permute.xlu0 %9256
    %v9258 = vrot.slane %v9257, 6
    %v9259 = vsel %vm9219, %v9258, %v9257
    %vm9261 = vcmask 1040896
    %vm9262 = vcmask 124930
    %vm9263 = vmor %vm9262, %vm9261
    %9264 = vst.msk [vmem:[#allocation8 + $0x4] sm:$0x5] %vm9263, %v9259
    %9265 = vrot.lane.b32.xlu0 %v9227, 16
    %v9266 = vpop.permute.xlu0 %9265
    %vm9268 = vcmask 778368
    %9269 = vst.msk [vmem:[#allocation8 + $0x6] sm:$0x1] %vm9268, %v9266
    %vm9270 = vcmask 1041152
    %9271 = vst.msk [vmem:[#allocation8 + $0x6] sm:$0x1] %vm9270, 0.0
    %v9272 = vld [vmem:[#allocation8] ss:$2 sm:$0xf]
    %v9274 = vperm.slane %v9272, 0
    %v9275 = vperm.slane %v9272, 1
    %v9276 = vperm.slane %v9272, 2
    %v9277 = vperm.slane %v9272, 3
    %v9282 = vsub.f32 %v9039, %v9274
    %v9283 = vsub.f32 %v9040, %v9275
    %v9284 = vsub.f32 %v9041, %v9276
    %v9285 = vsub.f32 %v9042, %v9277
    %v9286 = vsub.f32 %v9043, %v9274
    %v9287 = vsub.f32 %v9044, %v9275
    %v9288 = vsub.f32 %v9045, %v9276
    %v9289 = vsub.f32 %v9046, %v9277
    %v9290 = vsub.f32 %v9047, %v9274
    %v9291 = vsub.f32 %v9048, %v9275
    %v9292 = vsub.f32 %v9049, %v9276
    %v9293 = vsub.f32 %v9050, %v9277
    %v9294 = vsub.f32 %v9051, %v9274
    %v9295 = vsub.f32 %v9052, %v9275
    %v9296 = vsub.f32 %v9053, %v9276
    %v9297 = vsub.f32 %v9054, %v9277
    %v9298 = vsub.f32 %v9055, %v9274
    %v9299 = vsub.f32 %v9056, %v9275
    %v9300 = vsub.f32 %v9057, %v9276
    %v9301 = vsub.f32 %v9058, %v9277
    %v9302 = vsub.f32 %v9059, %v9274
    %v9303 = vsub.f32 %v9060, %v9275
    %v9304 = vsub.f32 %v9061, %v9276
    %v9305 = vsub.f32 %v9062, %v9277
    %v9306 = vsub.f32 %v9063, %v9274
    %v9307 = vsub.f32 %v9064, %v9275
    %v9308 = vsub.f32 %v9065, %v9276
    %v9309 = vsub.f32 %v9066, %v9277
    %v9310 = vsub.f32 %v9067, %v9274
    %v9311 = vsub.f32 %v9068, %v9275
    %v9312 = vsub.f32 %v9069, %v9276
    %v9313 = vsub.f32 %v9070, %v9277
    %v9314 = vsub.f32 %v9071, %v9274
    %v9315 = vsub.f32 %v9072, %v9275
    %v9316 = vsub.f32 %v9073, %v9276
    %v9317 = vsub.f32 %v9074, %v9277
    %v9318 = vsub.f32 %v9075, %v9274
    %v9319 = vsub.f32 %v9076, %v9275
    %v9320 = vsub.f32 %v9077, %v9276
    %v9321 = vsub.f32 %v9078, %v9277
    %v9322 = vsub.f32 %v9079, %v9274
    %v9323 = vsub.f32 %v9080, %v9275
    %v9324 = vsub.f32 %v9081, %v9276
    %v9325 = vsub.f32 %v9082, %v9277
    %v9326 = vsub.f32 %v9083, %v9274
    %v9327 = vsub.f32 %v9084, %v9275
    %v9328 = vsub.f32 %v9085, %v9276
    %v9329 = vsub.f32 %v9086, %v9277
    %v9330 = vsub.f32 %v9087, %v9274
    %v9331 = vsub.f32 %v9088, %v9275
    %v9332 = vsub.f32 %v9089, %v9276
    %v9333 = vsub.f32 %v9090, %v9277
    %v9334 = vsub.f32 %v9091, %v9274
    %v9335 = vsub.f32 %v9092, %v9275
    %v9336 = vsub.f32 %v9093, %v9276
    %v9337 = vsub.f32 %v9094, %v9277
    %v9338 = vsub.f32 %v9095, %v9274
    %v9339 = vsub.f32 %v9096, %v9275
    %v9340 = vsub.f32 %v9097, %v9276
    %v9341 = vsub.f32 %v9098, %v9277
    %v9342 = vsub.f32 %v9099, %v9274
    %v9343 = vsub.f32 %v9100, %v9275
    %v9344 = vsub.f32 %v9101, %v9276
    %v9345 = vsub.f32 %v9102, %v9277
    %v9346 = vmul.f32 %v9282, %v9282
    %v9347 = vmul.f32 %v9283, %v9283
    %v9348 = vmul.f32 %v9284, %v9284
    %v9349 = vmul.f32 %v9285, %v9285
    %v9350 = vmul.f32 %v9286, %v9286
    %v9351 = vmul.f32 %v9287, %v9287
    %v9352 = vmul.f32 %v9288, %v9288
    %v9353 = vmul.f32 %v9289, %v9289
    %v9354 = vmul.f32 %v9290, %v9290
    %v9355 = vmul.f32 %v9291, %v9291
    %v9356 = vmul.f32 %v9292, %v9292
    %v9357 = vmul.f32 %v9293, %v9293
    %v9358 = vmul.f32 %v9294, %v9294
    %v9359 = vmul.f32 %v9295, %v9295
    %v9360 = vmul.f32 %v9296, %v9296
    %v9361 = vmul.f32 %v9297, %v9297
    %v9362 = vmul.f32 %v9298, %v9298
    %v9363 = vmul.f32 %v9299, %v9299
    %v9364 = vmul.f32 %v9300, %v9300
    %v9365 = vmul.f32 %v9301, %v9301
    %v9366 = vmul.f32 %v9302, %v9302
    %v9367 = vmul.f32 %v9303, %v9303
    %v9368 = vmul.f32 %v9304, %v9304
    %v9369 = vmul.f32 %v9305, %v9305
    %v9370 = vmul.f32 %v9306, %v9306
    %v9371 = vmul.f32 %v9307, %v9307
    %v9372 = vmul.f32 %v9308, %v9308
    %v9373 = vmul.f32 %v9309, %v9309
    %v9374 = vmul.f32 %v9310, %v9310
    %v9375 = vmul.f32 %v9311, %v9311
    %v9376 = vmul.f32 %v9312, %v9312
    %v9377 = vmul.f32 %v9313, %v9313
    %v9378 = vmul.f32 %v9314, %v9314
    %v9379 = vmul.f32 %v9315, %v9315
    %v9380 = vmul.f32 %v9316, %v9316
    %v9381 = vmul.f32 %v9317, %v9317
    %v9382 = vmul.f32 %v9318, %v9318
    %v9383 = vmul.f32 %v9319, %v9319
    %v9384 = vmul.f32 %v9320, %v9320
    %v9385 = vmul.f32 %v9321, %v9321
    %v9386 = vmul.f32 %v9322, %v9322
    %v9387 = vmul.f32 %v9323, %v9323
    %v9388 = vmul.f32 %v9324, %v9324
    %v9389 = vmul.f32 %v9325, %v9325
    %v9390 = vmul.f32 %v9326, %v9326
    %v9391 = vmul.f32 %v9327, %v9327
    %v9392 = vmul.f32 %v9328, %v9328
    %v9393 = vmul.f32 %v9329, %v9329
    %v9394 = vmul.f32 %v9330, %v9330
    %v9395 = vmul.f32 %v9331, %v9331
    %v9396 = vmul.f32 %v9332, %v9332
    %v9397 = vmul.f32 %v9333, %v9333
    %v9398 = vmul.f32 %v9334, %v9334
    %v9399 = vmul.f32 %v9335, %v9335
    %v9400 = vmul.f32 %v9336, %v9336
    %v9401 = vmul.f32 %v9337, %v9337
    %v9402 = vmul.f32 %v9338, %v9338
    %v9403 = vmul.f32 %v9339, %v9339
    %v9404 = vmul.f32 %v9340, %v9340
    %v9405 = vmul.f32 %v9341, %v9341
    %v9406 = vmul.f32 %v9342, %v9342
    %v9407 = vmul.f32 %v9343, %v9343
    %v9408 = vmul.f32 %v9344, %v9344
    %v9409 = vmul.f32 %v9345, %v9345
    %v9410 = vadd.f32 %v9346, %v9350
    %v9411 = vadd.f32 %v9410, %v9354
    %v9412 = vadd.f32 %v9411, %v9358
    %v9413 = vadd.f32 %v9412, %v9362
    %v9414 = vadd.f32 %v9413, %v9366
    %v9415 = vadd.f32 %v9414, %v9370
    %v9416 = vadd.f32 %v9415, %v9374
    %v9417 = vadd.f32 %v9416, %v9378
    %v9418 = vadd.f32 %v9417, %v9382
    %v9419 = vadd.f32 %v9418, %v9386
    %v9420 = vadd.f32 %v9419, %v9390
    %v9421 = vadd.f32 %v9420, %v9394
    %v9422 = vadd.f32 %v9421, %v9398
    %v9423 = vadd.f32 %v9422, %v9402
    %v9424 = vadd.f32 %v9423, %v9406
    %v9425 = vrot.slane %v9424, 4
    %v9426 = vadd.f32 %v9424, %v9425
    %v9427 = vrot.slane %v9426, 2
    %v9428 = vadd.f32 %v9426, %v9427
    %v9429 = vrot.slane %v9428, 1
    %v9430 = vadd.f32 %v9428, %v9429
    %v9431 = vadd.f32 %v9347, %v9351
    %v9432 = vadd.f32 %v9431, %v9355
    %v9433 = vadd.f32 %v9432, %v9359
    %v9434 = vadd.f32 %v9433, %v9363
    %v9435 = vadd.f32 %v9434, %v9367
    %v9436 = vadd.f32 %v9435, %v9371
    %v9437 = vadd.f32 %v9436, %v9375
    %v9438 = vadd.f32 %v9437, %v9379
    %v9439 = vadd.f32 %v9438, %v9383
    %v9440 = vadd.f32 %v9439, %v9387
    %v9441 = vadd.f32 %v9440, %v9391
    %v9442 = vadd.f32 %v9441, %v9395
    %v9443 = vadd.f32 %v9442, %v9399
    %v9444 = vadd.f32 %v9443, %v9403
    %v9445 = vadd.f32 %v9444, %v9407
    %v9446 = vrot.slane %v9445, 4
    %v9447 = vadd.f32 %v9445, %v9446
    %v9448 = vrot.slane %v9447, 2
    %v9449 = vadd.f32 %v9447, %v9448
    %v9450 = vrot.slane %v9449, 1
    %v9451 = vadd.f32 %v9449, %v9450
    %v9452 = vadd.f32 %v9348, %v9352
    %v9453 = vadd.f32 %v9452, %v9356
    %v9454 = vadd.f32 %v9453, %v9360
    %v9455 = vadd.f32 %v9454, %v9364
    %v9456 = vadd.f32 %v9455, %v9368
    %v9457 = vadd.f32 %v9456, %v9372
    %v9458 = vadd.f32 %v9457, %v9376
    %v9459 = vadd.f32 %v9458, %v9380
    %v9460 = vadd.f32 %v9459, %v9384
    %v9461 = vadd.f32 %v9460, %v9388
    %v9462 = vadd.f32 %v9461, %v9392
    %v9463 = vadd.f32 %v9462, %v9396
    %v9464 = vadd.f32 %v9463, %v9400
    %v9465 = vadd.f32 %v9464, %v9404
    %v9466 = vadd.f32 %v9465, %v9408
    %v9467 = vrot.slane %v9466, 4
    %v9468 = vadd.f32 %v9466, %v9467
    %v9469 = vrot.slane %v9468, 2
    %v9470 = vadd.f32 %v9468, %v9469
    %v9471 = vrot.slane %v9470, 1
    %v9472 = vadd.f32 %v9470, %v9471
    %v9473 = vadd.f32 %v9349, %v9353
    %v9474 = vadd.f32 %v9473, %v9357
    %v9475 = vadd.f32 %v9474, %v9361
    %v9476 = vadd.f32 %v9475, %v9365
    %v9477 = vadd.f32 %v9476, %v9369
    %v9478 = vadd.f32 %v9477, %v9373
    %v9479 = vadd.f32 %v9478, %v9377
    %v9480 = vadd.f32 %v9479, %v9381
    %v9481 = vadd.f32 %v9480, %v9385
    %v9482 = vadd.f32 %v9481, %v9389
    %v9483 = vadd.f32 %v9482, %v9393
    %v9484 = vadd.f32 %v9483, %v9397
    %v9485 = vadd.f32 %v9484, %v9401
    %v9486 = vadd.f32 %v9485, %v9405
    %v9487 = vadd.f32 %v9486, %v9409
    %v9488 = vrot.slane %v9487, 4
    %v9489 = vadd.f32 %v9487, %v9488
    %v9490 = vrot.slane %v9489, 2
    %v9491 = vadd.f32 %v9489, %v9490
    %v9492 = vrot.slane %v9491, 1
    %v9493 = vadd.f32 %v9491, %v9492
    %9496 = vrot.lane.b32.xlu0 %v9430, 48
    %v9497 = vpop.permute.xlu0 %9496
    %9498 = vrot.lane.b32.xlu0 %v9451, 48
    %v9499 = vpop.permute.xlu0 %9498
    %v9500 = vsel %vm9197, %v9497, %v9499
    %v9502 = vadd.f32 %v9430, %v9500
    %9503 = vrot.lane.b32.xlu0 %v9451, 96
    %v9504 = vpop.permute.xlu0 %9503
    %v9506 = vadd.f32 %v9502, %v9504
    %9508 = vrot.lane.b32.xlu0 %v9451, 16
    %v9509 = vpop.permute.xlu0 %9508
    %9510 = vrot.lane.b32.xlu0 %v9472, 16
    %v9511 = vpop.permute.xlu0 %9510
    %v9512 = vsel %vm9210, %v9509, %v9511
    %v9514 = vadd.f32 %v9506, %v9512
    %9516 = vrot.lane.b32.xlu0 %v9472, 64
    %v9517 = vpop.permute.xlu0 %9516
    %9518 = vrot.lane.b32.xlu0 %v9493, 64
    %v9519 = vpop.permute.xlu0 %9518
    %v9520 = vsel %vm9219, %v9517, %v9519
    %v9522 = vadd.f32 %v9514, %v9520
    %9523 = vrot.lane.b32.xlu0 %v9493, 112
    %v9524 = vpop.permute.xlu0 %9523
    %v9526 = vadd.f32 %v9522, %v9524
    %v9527 = vmul.f32 %v9526, 0.0013020834
    %9528 = vst.msk [vmem:[#allocation8 + $0x1] sm:$0x1] %vm9228, %v9527
    %9530 = vrot.lane.b32.xlu0 %v9527, 80
    %v9531 = vpop.permute.xlu0 %9530
    %v9532 = vrot.slane %v9531, 6
    %v9533 = vsel %vm9234, %v9532, %v9531
    %9535 = vst.msk [vmem:[#allocation8 + $0x1] sm:$0x5] %vm9239, %v9533
    %9536 = vrot.lane.b32.xlu0 %v9527, 32
    %v9537 = vpop.permute.xlu0 %9536
    %9539 = vst.msk [vmem:[#allocation8 + $0x3] sm:$0x1] %vm9244, %v9537
    %9540 = vrot.lane.b32.xlu0 %v9527, 112
    %v9541 = vpop.permute.xlu0 %9540
    %v9542 = vrot.slane %v9541, 6
    %v9543 = vsel %vm9249, %v9542, %v9541
    %9545 = vst.msk [vmem:[#allocation8 + $0x3] sm:$0x5] %vm9254, %v9543
    %9546 = vrot.lane.b32.xlu0 %v9527, 64
    %v9547 = vpop.permute.xlu0 %9546
    %v9548 = vrot.slane %v9547, 6
    %v9549 = vsel %vm9219, %v9548, %v9547
    %9551 = vst.msk [vmem:[#allocation8 + $0x5] sm:$0x5] %vm9263, %v9549
    %9552 = vrot.lane.b32.xlu0 %v9527, 16
    %v9553 = vpop.permute.xlu0 %9552
    %9555 = vst.msk [vmem:[#allocation8 + $0x7] sm:$0x1] %vm9268, %v9553
    %9556 = vst.msk [vmem:[#allocation8 + $0x7] sm:$0x1] %vm9270, 0.0
    %s9557 = scalar_lea.vmem [#allocation8], 1
    %v9558 = vld [vmem:[%s9557] ss:$2 sm:$0xf]
    %v9559 = vadd.f32 %v9558, 1e-05
    %v9560 = vrsqrt.pop %v9559
    %v9561 = vmul.f32 %v9560, %v9559
    %v9562 = vmul.f32 %v9561, %v9560
    %v9563 = vmul.f32 0.5, %v9562
    %v9564 = vsub.f32 1.5, %v9563
    %v9565 = vmul.f32 %v9560, %v9564
    %vm9566 = vweird.f32 %v9559
    %vm9567 = vweird.f32 %v9560
    %vm9568 = vmor %vm9566, %vm9567
    %v9569 = vsel %vm9568, %v9560, %v9565
    %v9571 = vperm.slane %v9569, 0
    %v9572 = vperm.slane %v9569, 1
    %v9573 = vperm.slane %v9569, 2
    %v9574 = vperm.slane %v9569, 3
    %v9579 = vmul.f32 %v9282, %v9571
    %v9580 = vmul.f32 %v9283, %v9572
    %v9581 = vmul.f32 %v9284, %v9573
    %v9582 = vmul.f32 %v9285, %v9574
    %v9583 = vmul.f32 %v9286, %v9571
    %v9584 = vmul.f32 %v9287, %v9572
    %v9585 = vmul.f32 %v9288, %v9573
    %v9586 = vmul.f32 %v9289, %v9574
    %v9587 = vmul.f32 %v9290, %v9571
    %v9588 = vmul.f32 %v9291, %v9572
    %v9589 = vmul.f32 %v9292, %v9573
    %v9590 = vmul.f32 %v9293, %v9574
    %v9591 = vmul.f32 %v9294, %v9571
    %v9592 = vmul.f32 %v9295, %v9572
    %v9593 = vmul.f32 %v9296, %v9573
    %v9594 = vmul.f32 %v9297, %v9574
    %v9595 = vmul.f32 %v9298, %v9571
    %v9596 = vmul.f32 %v9299, %v9572
    %v9597 = vmul.f32 %v9300, %v9573
    %v9598 = vmul.f32 %v9301, %v9574
    %v9599 = vmul.f32 %v9302, %v9571
    %v9600 = vmul.f32 %v9303, %v9572
    %v9601 = vmul.f32 %v9304, %v9573
    %v9602 = vmul.f32 %v9305, %v9574
    %v9603 = vmul.f32 %v9306, %v9571
    %v9604 = vmul.f32 %v9307, %v9572
    %v9605 = vmul.f32 %v9308, %v9573
    %v9606 = vmul.f32 %v9309, %v9574
    %v9607 = vmul.f32 %v9310, %v9571
    %v9608 = vmul.f32 %v9311, %v9572
    %v9609 = vmul.f32 %v9312, %v9573
    %v9610 = vmul.f32 %v9313, %v9574
    %v9611 = vmul.f32 %v9314, %v9571
    %v9612 = vmul.f32 %v9315, %v9572
    %v9613 = vmul.f32 %v9316, %v9573
    %v9614 = vmul.f32 %v9317, %v9574
    %v9615 = vmul.f32 %v9318, %v9571
    %v9616 = vmul.f32 %v9319, %v9572
    %v9617 = vmul.f32 %v9320, %v9573
    %v9618 = vmul.f32 %v9321, %v9574
    %v9619 = vmul.f32 %v9322, %v9571
    %v9620 = vmul.f32 %v9323, %v9572
    %v9621 = vmul.f32 %v9324, %v9573
    %v9622 = vmul.f32 %v9325, %v9574
    %v9623 = vmul.f32 %v9326, %v9571
    %v9624 = vmul.f32 %v9327, %v9572
    %v9625 = vmul.f32 %v9328, %v9573
    %v9626 = vmul.f32 %v9329, %v9574
    %v9627 = vmul.f32 %v9330, %v9571
    %v9628 = vmul.f32 %v9331, %v9572
    %v9629 = vmul.f32 %v9332, %v9573
    %v9630 = vmul.f32 %v9333, %v9574
    %v9631 = vmul.f32 %v9334, %v9571
    %v9632 = vmul.f32 %v9335, %v9572
    %v9633 = vmul.f32 %v9336, %v9573
    %v9634 = vmul.f32 %v9337, %v9574
    %v9635 = vmul.f32 %v9338, %v9571
    %v9636 = vmul.f32 %v9339, %v9572
    %v9637 = vmul.f32 %v9340, %v9573
    %v9638 = vmul.f32 %v9341, %v9574
    %v9639 = vmul.f32 %v9342, %v9571
    %v9640 = vmul.f32 %v9343, %v9572
    %v9641 = vmul.f32 %v9344, %v9573
    %v9642 = vmul.f32 %v9345, %v9574
    %v9644 = vperm.slane %v9104, 0
    %v9645 = vperm.slane %v9104, 1
    %v9646 = vperm.slane %v9104, 2
    %v9647 = vperm.slane %v9104, 3
    %v9652 = vmul.f32 %v9579, %v9644
    %v9653 = vmul.f32 %v9580, %v9645
    %v9654 = vmul.f32 %v9581, %v9646
    %v9655 = vmul.f32 %v9582, %v9647
    %v9656 = vmul.f32 %v9583, %v9644
    %v9657 = vmul.f32 %v9584, %v9645
    %v9658 = vmul.f32 %v9585, %v9646
    %v9659 = vmul.f32 %v9586, %v9647
    %v9660 = vmul.f32 %v9587, %v9644
    %v9661 = vmul.f32 %v9588, %v9645
    %v9662 = vmul.f32 %v9589, %v9646
    %v9663 = vmul.f32 %v9590, %v9647
    %v9664 = vmul.f32 %v9591, %v9644
    %v9665 = vmul.f32 %v9592, %v9645
    %v9666 = vmul.f32 %v9593, %v9646
    %v9667 = vmul.f32 %v9594, %v9647
    %v9668 = vmul.f32 %v9595, %v9644
    %v9669 = vmul.f32 %v9596, %v9645
    %v9670 = vmul.f32 %v9597, %v9646
    %v9671 = vmul.f32 %v9598, %v9647
    %v9672 = vmul.f32 %v9599, %v9644
    %v9673 = vmul.f32 %v9600, %v9645
    %v9674 = vmul.f32 %v9601, %v9646
    %v9675 = vmul.f32 %v9602, %v9647
    %v9676 = vmul.f32 %v9603, %v9644
    %v9677 = vmul.f32 %v9604, %v9645
    %v9678 = vmul.f32 %v9605, %v9646
    %v9679 = vmul.f32 %v9606, %v9647
    %v9680 = vmul.f32 %v9607, %v9644
    %v9681 = vmul.f32 %v9608, %v9645
    %v9682 = vmul.f32 %v9609, %v9646
    %v9683 = vmul.f32 %v9610, %v9647
    %v9684 = vmul.f32 %v9611, %v9644
    %v9685 = vmul.f32 %v9612, %v9645
    %v9686 = vmul.f32 %v9613, %v9646
    %v9687 = vmul.f32 %v9614, %v9647
    %v9688 = vmul.f32 %v9615, %v9644
    %v9689 = vmul.f32 %v9616, %v9645
    %v9690 = vmul.f32 %v9617, %v9646
    %v9691 = vmul.f32 %v9618, %v9647
    %v9692 = vmul.f32 %v9619, %v9644
    %v9693 = vmul.f32 %v9620, %v9645
    %v9694 = vmul.f32 %v9621, %v9646
    %v9695 = vmul.f32 %v9622, %v9647
    %v9696 = vmul.f32 %v9623, %v9644
    %v9697 = vmul.f32 %v9624, %v9645
    %v9698 = vmul.f32 %v9625, %v9646
    %v9699 = vmul.f32 %v9626, %v9647
    %v9700 = vmul.f32 %v9627, %v9644
    %v9701 = vmul.f32 %v9628, %v9645
    %v9702 = vmul.f32 %v9629, %v9646
    %v9703 = vmul.f32 %v9630, %v9647
    %v9704 = vmul.f32 %v9631, %v9644
    %v9705 = vmul.f32 %v9632, %v9645
    %v9706 = vmul.f32 %v9633, %v9646
    %v9707 = vmul.f32 %v9634, %v9647
    %v9708 = vmul.f32 %v9635, %v9644
    %v9709 = vmul.f32 %v9636, %v9645
    %v9710 = vmul.f32 %v9637, %v9646
    %v9711 = vmul.f32 %v9638, %v9647
    %v9712 = vmul.f32 %v9639, %v9644
    %v9713 = vmul.f32 %v9640, %v9645
    %v9714 = vmul.f32 %v9641, %v9646
    %v9715 = vmul.f32 %v9642, %v9647
    %v9717 = vperm.slane %v9106, 0
    %v9718 = vperm.slane %v9106, 1
    %v9719 = vperm.slane %v9106, 2
    %v9720 = vperm.slane %v9106, 3
    %v9725 = vadd.f32 %v9652, %v9717
    %v9726 = vadd.f32 %v9653, %v9718
    %v9727 = vadd.f32 %v9654, %v9719
    %v9728 = vadd.f32 %v9655, %v9720
    %v9729 = vadd.f32 %v9656, %v9717
    %v9730 = vadd.f32 %v9657, %v9718
    %v9731 = vadd.f32 %v9658, %v9719
    %v9732 = vadd.f32 %v9659, %v9720
    %v9733 = vadd.f32 %v9660, %v9717
    %v9734 = vadd.f32 %v9661, %v9718
    %v9735 = vadd.f32 %v9662, %v9719
    %v9736 = vadd.f32 %v9663, %v9720
    %v9737 = vadd.f32 %v9664, %v9717
    %v9738 = vadd.f32 %v9665, %v9718
    %v9739 = vadd.f32 %v9666, %v9719
    %v9740 = vadd.f32 %v9667, %v9720
    %v9741 = vadd.f32 %v9668, %v9717
    %v9742 = vadd.f32 %v9669, %v9718
    %v9743 = vadd.f32 %v9670, %v9719
    %v9744 = vadd.f32 %v9671, %v9720
    %v9745 = vadd.f32 %v9672, %v9717
    %v9746 = vadd.f32 %v9673, %v9718
    %v9747 = vadd.f32 %v9674, %v9719
    %v9748 = vadd.f32 %v9675, %v9720
    %v9749 = vadd.f32 %v9676, %v9717
    %v9750 = vadd.f32 %v9677, %v9718
    %v9751 = vadd.f32 %v9678, %v9719
    %v9752 = vadd.f32 %v9679, %v9720
    %v9753 = vadd.f32 %v9680, %v9717
    %v9754 = vadd.f32 %v9681, %v9718
    %v9755 = vadd.f32 %v9682, %v9719
    %v9756 = vadd.f32 %v9683, %v9720
    %v9757 = vadd.f32 %v9684, %v9717
    %v9758 = vadd.f32 %v9685, %v9718
    %v9759 = vadd.f32 %v9686, %v9719
    %v9760 = vadd.f32 %v9687, %v9720
    %v9761 = vadd.f32 %v9688, %v9717
    %v9762 = vadd.f32 %v9689, %v9718
    %v9763 = vadd.f32 %v9690, %v9719
    %v9764 = vadd.f32 %v9691, %v9720
    %v9765 = vadd.f32 %v9692, %v9717
    %v9766 = vadd.f32 %v9693, %v9718
    %v9767 = vadd.f32 %v9694, %v9719
    %v9768 = vadd.f32 %v9695, %v9720
    %v9769 = vadd.f32 %v9696, %v9717
    %v9770 = vadd.f32 %v9697, %v9718
    %v9771 = vadd.f32 %v9698, %v9719
    %v9772 = vadd.f32 %v9699, %v9720
    %v9773 = vadd.f32 %v9700, %v9717
    %v9774 = vadd.f32 %v9701, %v9718
    %v9775 = vadd.f32 %v9702, %v9719
    %v9776 = vadd.f32 %v9703, %v9720
    %v9777 = vadd.f32 %v9704, %v9717
    %v9778 = vadd.f32 %v9705, %v9718
    %v9779 = vadd.f32 %v9706, %v9719
    %v9780 = vadd.f32 %v9707, %v9720
    %v9781 = vadd.f32 %v9708, %v9717
    %v9782 = vadd.f32 %v9709, %v9718
    %v9783 = vadd.f32 %v9710, %v9719
    %v9784 = vadd.f32 %v9711, %v9720
    %v9785 = vadd.f32 %v9712, %v9717
    %v9786 = vadd.f32 %v9713, %v9718
    %v9787 = vadd.f32 %v9714, %v9719
    %v9788 = vadd.f32 %v9715, %v9720
    %v9789 = vmax.f32 %v9725, 0.0
    %v9790 = vmax.f32 %v9726, 0.0
    %v9791 = vmax.f32 %v9727, 0.0
    %v9792 = vmax.f32 %v9728, 0.0
    %v9793 = vmax.f32 %v9729, 0.0
    %v9794 = vmax.f32 %v9730, 0.0
    %v9795 = vmax.f32 %v9731, 0.0
    %v9796 = vmax.f32 %v9732, 0.0
    %v9797 = vmax.f32 %v9733, 0.0
    %v9798 = vmax.f32 %v9734, 0.0
    %v9799 = vmax.f32 %v9735, 0.0
    %v9800 = vmax.f32 %v9736, 0.0
    %v9801 = vmax.f32 %v9737, 0.0
    %v9802 = vmax.f32 %v9738, 0.0
    %v9803 = vmax.f32 %v9739, 0.0
    %v9804 = vmax.f32 %v9740, 0.0
    %v9805 = vmax.f32 %v9741, 0.0
    %v9806 = vmax.f32 %v9742, 0.0
    %v9807 = vmax.f32 %v9743, 0.0
    %v9808 = vmax.f32 %v9744, 0.0
    %v9809 = vmax.f32 %v9745, 0.0
    %v9810 = vmax.f32 %v9746, 0.0
    %v9811 = vmax.f32 %v9747, 0.0
    %v9812 = vmax.f32 %v9748, 0.0
    %v9813 = vmax.f32 %v9749, 0.0
    %v9814 = vmax.f32 %v9750, 0.0
    %v9815 = vmax.f32 %v9751, 0.0
    %v9816 = vmax.f32 %v9752, 0.0
    %v9817 = vmax.f32 %v9753, 0.0
    %v9818 = vmax.f32 %v9754, 0.0
    %v9819 = vmax.f32 %v9755, 0.0
    %v9820 = vmax.f32 %v9756, 0.0
    %v9821 = vmax.f32 %v9757, 0.0
    %v9822 = vmax.f32 %v9758, 0.0
    %v9823 = vmax.f32 %v9759, 0.0
    %v9824 = vmax.f32 %v9760, 0.0
    %v9825 = vmax.f32 %v9761, 0.0
    %v9826 = vmax.f32 %v9762, 0.0
    %v9827 = vmax.f32 %v9763, 0.0
    %v9828 = vmax.f32 %v9764, 0.0
    %v9829 = vmax.f32 %v9765, 0.0
    %v9830 = vmax.f32 %v9766, 0.0
    %v9831 = vmax.f32 %v9767, 0.0
    %v9832 = vmax.f32 %v9768, 0.0
    %v9833 = vmax.f32 %v9769, 0.0
    %v9834 = vmax.f32 %v9770, 0.0
    %v9835 = vmax.f32 %v9771, 0.0
    %v9836 = vmax.f32 %v9772, 0.0
    %v9837 = vmax.f32 %v9773, 0.0
    %v9838 = vmax.f32 %v9774, 0.0
    %v9839 = vmax.f32 %v9775, 0.0
    %v9840 = vmax.f32 %v9776, 0.0
    %v9841 = vmax.f32 %v9777, 0.0
    %v9842 = vmax.f32 %v9778, 0.0
    %v9843 = vmax.f32 %v9779, 0.0
    %v9844 = vmax.f32 %v9780, 0.0
    %v9845 = vmax.f32 %v9781, 0.0
    %v9846 = vmax.f32 %v9782, 0.0
    %v9847 = vmax.f32 %v9783, 0.0
    %v9848 = vmax.f32 %v9784, 0.0
    %v9849 = vmax.f32 %v9785, 0.0
    %v9850 = vmax.f32 %v9786, 0.0
    %v9851 = vmax.f32 %v9787, 0.0
    %v9852 = vmax.f32 %v9788, 0.0
    %v9853 = vpack.c.bf16 %v9793, %v9789
    %v9854 = vpack.c.bf16 %v9794, %v9790
    %v9855 = vpack.c.bf16 %v9795, %v9791
    %v9856 = vpack.c.bf16 %v9796, %v9792
    %v9857 = vpack.c.bf16 %v9801, %v9797
    %v9858 = vpack.c.bf16 %v9802, %v9798
    %v9859 = vpack.c.bf16 %v9803, %v9799
    %v9860 = vpack.c.bf16 %v9804, %v9800
    %v9861 = vpack.c.bf16 %v9809, %v9805
    %v9862 = vpack.c.bf16 %v9810, %v9806
    %v9863 = vpack.c.bf16 %v9811, %v9807
    %v9864 = vpack.c.bf16 %v9812, %v9808
    %v9865 = vpack.c.bf16 %v9817, %v9813
    %v9866 = vpack.c.bf16 %v9818, %v9814
    %v9867 = vpack.c.bf16 %v9819, %v9815
    %v9868 = vpack.c.bf16 %v9820, %v9816
    %v9869 = vpack.c.bf16 %v9825, %v9821
    %v9870 = vpack.c.bf16 %v9826, %v9822
    %v9871 = vpack.c.bf16 %v9827, %v9823
    %v9872 = vpack.c.bf16 %v9828, %v9824
    %v9873 = vpack.c.bf16 %v9833, %v9829
    %v9874 = vpack.c.bf16 %v9834, %v9830
    %v9875 = vpack.c.bf16 %v9835, %v9831
    %v9876 = vpack.c.bf16 %v9836, %v9832
    %v9877 = vpack.c.bf16 %v9841, %v9837
    %v9878 = vpack.c.bf16 %v9842, %v9838
    %v9879 = vpack.c.bf16 %v9843, %v9839
    %v9880 = vpack.c.bf16 %v9844, %v9840
    %v9881 = vpack.c.bf16 %v9849, %v9845
    %v9882 = vpack.c.bf16 %v9850, %v9846
    %v9883 = vpack.c.bf16 %v9851, %v9847
    %v9884 = vpack.c.bf16 %v9852, %v9848
    %v9885 = vld [vmem:[#allocation20] sm:$0xff]
    %v9886 = vld [vmem:[#allocation20 + $0x8] sm:$0xf]
    %v9887 = vld [vmem:[#allocation20 + $0xc] sm:$0xff]
    %v9888 = vld [vmem:[#allocation20 + $0x14] sm:$0xf]
    %v9889 = vld [vmem:[#allocation20 + $0x18] sm:$0xff]
    %v9890 = vld [vmem:[#allocation20 + $0x20] sm:$0xf]
    %v9891 = vld [vmem:[#allocation20 + $0x24] sm:$0xff]
    %v9892 = vld [vmem:[#allocation20 + $0x2c] sm:$0xf]
    %v9893 = vld [vmem:[#allocation20 + $0x30] sm:$0xff]
    %v9894 = vld [vmem:[#allocation20 + $0x38] sm:$0xf]
    %v9895 = vld [vmem:[#allocation20 + $0x3c] sm:$0xff]
    %v9896 = vld [vmem:[#allocation20 + $0x44] sm:$0xf]
    %v9897 = vld [vmem:[#allocation20 + $0x48] sm:$0xff]
    %v9898 = vld [vmem:[#allocation20 + $0x50] sm:$0xf]
    %v9899 = vld [vmem:[#allocation20 + $0x54] sm:$0xff]
    %v9900 = vld [vmem:[#allocation20 + $0x5c] sm:$0xf]
    %v9901 = vld [vmem:[#allocation20 + $0x60] sm:$0xff]
    %v9902 = vld [vmem:[#allocation20 + $0x68] sm:$0xf]
    %v9903 = vld [vmem:[#allocation20 + $0x6c] sm:$0xff]
    %v9904 = vld [vmem:[#allocation20 + $0x74] sm:$0xf]
    %v9905 = vld [vmem:[#allocation20 + $0x78] sm:$0xff]
    %v9906 = vld [vmem:[#allocation20 + $0x80] sm:$0xf]
    %v9907 = vld [vmem:[#allocation20 + $0x84] sm:$0xff]
    %v9908 = vld [vmem:[#allocation20 + $0x8c] sm:$0xf]
    %v9909 = vld [vmem:[#allocation20 + $0x90] sm:$0xff]
    %v9910 = vld [vmem:[#allocation20 + $0x98] sm:$0xf]
    %v9911 = vld [vmem:[#allocation20 + $0x9c] sm:$0xff]
    %v9912 = vld [vmem:[#allocation20 + $0xa4] sm:$0xf]
    %v9913 = vld [vmem:[#allocation20 + $0xa8] sm:$0xff]
    %v9914 = vld [vmem:[#allocation20 + $0xb0] sm:$0xf]
    %v9915 = vld [vmem:[#allocation20 + $0xb4] sm:$0xff]
    %v9916 = vld [vmem:[#allocation20 + $0xbc] sm:$0xf]
    %v9917 = vld [vmem:[#allocation20 + $0xc0] sm:$0xff]
    %v9918 = vld [vmem:[#allocation20 + $0xc8] sm:$0xf]
    %v9919 = vld [vmem:[#allocation20 + $0xcc] sm:$0xff]
    %v9920 = vld [vmem:[#allocation20 + $0xd4] sm:$0xf]
    %v9921 = vld [vmem:[#allocation20 + $0xd8] sm:$0xff]
    %v9922 = vld [vmem:[#allocation20 + $0xe0] sm:$0xf]
    %v9923 = vld [vmem:[#allocation20 + $0xe4] sm:$0xff]
    %v9924 = vld [vmem:[#allocation20 + $0xec] sm:$0xf]
    %v9925 = vld [vmem:[#allocation20 + $0xf0] sm:$0xff]
    %v9926 = vld [vmem:[#allocation20 + $0xf8] sm:$0xf]
    %v9927 = vld [vmem:[#allocation20 + $0xfc] sm:$0xff]
    %v9928 = vld [vmem:[#allocation20 + $0x104] sm:$0xf]
    %v9929 = vld [vmem:[#allocation20 + $0x108] sm:$0xff]
    %v9930 = vld [vmem:[#allocation20 + $0x110] sm:$0xf]
    %v9931 = vld [vmem:[#allocation20 + $0x114] sm:$0xff]
    %v9932 = vld [vmem:[#allocation20 + $0x11c] sm:$0xf]
    %v9933 = vld [vmem:[#allocation20 + $0x120] sm:$0xff]
    %v9934 = vld [vmem:[#allocation20 + $0x128] sm:$0xf]
    %v9935 = vld [vmem:[#allocation20 + $0x12c] sm:$0xff]
    %v9936 = vld [vmem:[#allocation20 + $0x134] sm:$0xf]
    %v9937 = vld [vmem:[#allocation20 + $0x138] sm:$0xff]
    %v9938 = vld [vmem:[#allocation20 + $0x140] sm:$0xf]
    %v9939 = vld [vmem:[#allocation20 + $0x144] sm:$0xff]
    %v9940 = vld [vmem:[#allocation20 + $0x14c] sm:$0xf]
    %v9941 = vld [vmem:[#allocation20 + $0x150] sm:$0xff]
    %v9942 = vld [vmem:[#allocation20 + $0x158] sm:$0xf]
    %v9943 = vld [vmem:[#allocation20 + $0x15c] sm:$0xff]
    %v9944 = vld [vmem:[#allocation20 + $0x164] sm:$0xf]
    %v9945 = vld [vmem:[#allocation20 + $0x168] sm:$0xff]
    %v9946 = vld [vmem:[#allocation20 + $0x170] sm:$0xf]
    %v9947 = vld [vmem:[#allocation20 + $0x174] sm:$0xff]
    %v9948 = vld [vmem:[#allocation20 + $0x17c] sm:$0xf]
    %v9949 = vld [vmem:[#allocation20 + $0x180] sm:$0xff]
    %v9950 = vld [vmem:[#allocation20 + $0x188] sm:$0xf]
    %v9951 = vld [vmem:[#allocation20 + $0x18c] sm:$0xff]
    %v9952 = vld [vmem:[#allocation20 + $0x194] sm:$0xf]
    %v9953 = vld [vmem:[#allocation20 + $0x198] sm:$0xff]
    %v9954 = vld [vmem:[#allocation20 + $0x1a0] sm:$0xf]
    %v9955 = vld [vmem:[#allocation20 + $0x1a4] sm:$0xff]
    %v9956 = vld [vmem:[#allocation20 + $0x1ac] sm:$0xf]
    %v9957 = vld [vmem:[#allocation20 + $0x1b0] sm:$0xff]
    %v9958 = vld [vmem:[#allocation20 + $0x1b8] sm:$0xf]
    %v9959 = vld [vmem:[#allocation20 + $0x1bc] sm:$0xff]
    %v9960 = vld [vmem:[#allocation20 + $0x1c4] sm:$0xf]
    %v9961 = vld [vmem:[#allocation20 + $0x1c8] sm:$0xff]
    %v9962 = vld [vmem:[#allocation20 + $0x1d0] sm:$0xf]
    %v9963 = vld [vmem:[#allocation20 + $0x1d4] sm:$0xff]
    %v9964 = vld [vmem:[#allocation20 + $0x1dc] sm:$0xf]
    %v9965 = vld [vmem:[#allocation20 + $0x1e0] sm:$0xff]
    %v9966 = vld [vmem:[#allocation20 + $0x1e8] sm:$0xf]
    %v9967 = vld [vmem:[#allocation20 + $0x1ec] sm:$0xff]
    %v9968 = vld [vmem:[#allocation20 + $0x1f4] sm:$0xf]
    %v9969 = vld [vmem:[#allocation20 + $0x1f8] sm:$0xff]
    %v9970 = vld [vmem:[#allocation20 + $0x200] sm:$0xf]
    %v9971 = vld [vmem:[#allocation20 + $0x204] sm:$0xff]
    %v9972 = vld [vmem:[#allocation20 + $0x20c] sm:$0xf]
    %v9973 = vld [vmem:[#allocation20 + $0x210] sm:$0xff]
    %v9974 = vld [vmem:[#allocation20 + $0x218] sm:$0xf]
    %v9975 = vld [vmem:[#allocation20 + $0x21c] sm:$0xff]
    %v9976 = vld [vmem:[#allocation20 + $0x224] sm:$0xf]
    %v9977 = vld [vmem:[#allocation20 + $0x228] sm:$0xff]
    %v9978 = vld [vmem:[#allocation20 + $0x230] sm:$0xf]
    %v9979 = vld [vmem:[#allocation20 + $0x234] sm:$0xff]
    %v9980 = vld [vmem:[#allocation20 + $0x23c] sm:$0xf]
    %v9981 = vld [vmem:[#allocation20 + $0x240] sm:$0xff]
    %v9982 = vld [vmem:[#allocation20 + $0x248] sm:$0xf]
    %v9983 = vld [vmem:[#allocation20 + $0x24c] sm:$0xff]
    %v9984 = vld [vmem:[#allocation20 + $0x254] sm:$0xf]
    %v9985 = vld [vmem:[#allocation20 + $0x258] sm:$0xff]
    %v9986 = vld [vmem:[#allocation20 + $0x260] sm:$0xf]
    %v9987 = vld [vmem:[#allocation20 + $0x264] sm:$0xff]
    %v9988 = vld [vmem:[#allocation20 + $0x26c] sm:$0xf]
    %v9989 = vld [vmem:[#allocation20 + $0x270] sm:$0xff]
    %v9990 = vld [vmem:[#allocation20 + $0x278] sm:$0xf]
    %v9991 = vld [vmem:[#allocation20 + $0x27c] sm:$0xff]
    %v9992 = vld [vmem:[#allocation20 + $0x284] sm:$0xf]
    %v9993 = vld [vmem:[#allocation20 + $0x288] sm:$0xff]
    %v9994 = vld [vmem:[#allocation20 + $0x290] sm:$0xf]
    %v9995 = vld [vmem:[#allocation20 + $0x294] sm:$0xff]
    %v9996 = vld [vmem:[#allocation20 + $0x29c] sm:$0xf]
    %v9997 = vld [vmem:[#allocation20 + $0x2a0] sm:$0xff]
    %v9998 = vld [vmem:[#allocation20 + $0x2a8] sm:$0xf]
    %v9999 = vld [vmem:[#allocation20 + $0x2ac] sm:$0xff]
    %v10000 = vld [vmem:[#allocation20 + $0x2b4] sm:$0xf]
    %v10001 = vld [vmem:[#allocation20 + $0x2b8] sm:$0xff]
    %v10002 = vld [vmem:[#allocation20 + $0x2c0] sm:$0xf]
    %v10003 = vld [vmem:[#allocation20 + $0x2c4] sm:$0xff]
    %v10004 = vld [vmem:[#allocation20 + $0x2cc] sm:$0xf]
    %v10005 = vld [vmem:[#allocation20 + $0x2d0] sm:$0xff]
    %v10006 = vld [vmem:[#allocation20 + $0x2d8] sm:$0xf]
    %v10007 = vld [vmem:[#allocation20 + $0x2dc] sm:$0xff]
    %v10008 = vld [vmem:[#allocation20 + $0x2e4] sm:$0xf]
    %v10009 = vld [vmem:[#allocation20 + $0x2e8] sm:$0xff]
    %v10010 = vld [vmem:[#allocation20 + $0x2f0] sm:$0xf]
    %v10011 = vld [vmem:[#allocation20 + $0x2f4] sm:$0xff]
    %v10012 = vld [vmem:[#allocation20 + $0x2fc] sm:$0xf]
    %v10141 = vunpack.c.l.b16 %v9885
    %v10142 = vunpack.c.h.b16 %v9885
    %v10143 = vunpack.c.l.b16 %v9886
    %v10144 = vunpack.c.l.b16 %v9887
    %v10145 = vunpack.c.h.b16 %v9887
    %v10146 = vunpack.c.l.b16 %v9888
    %v10147 = vunpack.c.l.b16 %v9889
    %v10148 = vunpack.c.h.b16 %v9889
    %v10149 = vunpack.c.l.b16 %v9890
    %v10150 = vunpack.c.l.b16 %v9891
    %v10151 = vunpack.c.h.b16 %v9891
    %v10152 = vunpack.c.l.b16 %v9892
    %v10153 = vunpack.c.l.b16 %v9893
    %v10154 = vunpack.c.h.b16 %v9893
    %v10155 = vunpack.c.l.b16 %v9894
    %v10156 = vunpack.c.l.b16 %v9895
    %v10157 = vunpack.c.h.b16 %v9895
    %v10158 = vunpack.c.l.b16 %v9896
    %v10159 = vunpack.c.l.b16 %v9897
    %v10160 = vunpack.c.h.b16 %v9897
    %v10161 = vunpack.c.l.b16 %v9898
    %v10162 = vunpack.c.l.b16 %v9899
    %v10163 = vunpack.c.h.b16 %v9899
    %v10164 = vunpack.c.l.b16 %v9900
    %v10165 = vunpack.c.l.b16 %v9901
    %v10166 = vunpack.c.h.b16 %v9901
    %v10167 = vunpack.c.l.b16 %v9902
    %v10168 = vunpack.c.l.b16 %v9903
    %v10169 = vunpack.c.h.b16 %v9903
    %v10170 = vunpack.c.l.b16 %v9904
    %v10171 = vunpack.c.l.b16 %v9905
    %v10172 = vunpack.c.h.b16 %v9905
    %v10173 = vunpack.c.l.b16 %v9906
    %v10174 = vunpack.c.l.b16 %v9907
    %v10175 = vunpack.c.h.b16 %v9907
    %v10176 = vunpack.c.l.b16 %v9908
    %v10177 = vunpack.c.l.b16 %v9909
    %v10178 = vunpack.c.h.b16 %v9909
    %v10179 = vunpack.c.l.b16 %v9910
    %v10180 = vunpack.c.l.b16 %v9911
    %v10181 = vunpack.c.h.b16 %v9911
    %v10182 = vunpack.c.l.b16 %v9912
    %v10183 = vunpack.c.l.b16 %v9913
    %v10184 = vunpack.c.h.b16 %v9913
    %v10185 = vunpack.c.l.b16 %v9914
    %v10186 = vunpack.c.l.b16 %v9915
    %v10187 = vunpack.c.h.b16 %v9915
    %v10188 = vunpack.c.l.b16 %v9916
    %v10189 = vunpack.c.l.b16 %v9917
    %v10190 = vunpack.c.h.b16 %v9917
    %v10191 = vunpack.c.l.b16 %v9918
    %v10192 = vunpack.c.l.b16 %v9919
    %v10193 = vunpack.c.h.b16 %v9919
    %v10194 = vunpack.c.l.b16 %v9920
    %v10195 = vunpack.c.l.b16 %v9921
    %v10196 = vunpack.c.h.b16 %v9921
    %v10197 = vunpack.c.l.b16 %v9922
    %v10198 = vunpack.c.l.b16 %v9923
    %v10199 = vunpack.c.h.b16 %v9923
    %v10200 = vunpack.c.l.b16 %v9924
    %v10201 = vunpack.c.l.b16 %v9925
    %v10202 = vunpack.c.h.b16 %v9925
    %v10203 = vunpack.c.l.b16 %v9926
    %v10204 = vunpack.c.l.b16 %v9927
    %v10205 = vunpack.c.h.b16 %v9927
    %v10206 = vunpack.c.l.b16 %v9928
    %v10207 = vunpack.c.l.b16 %v9929
    %v10208 = vunpack.c.h.b16 %v9929
    %v10209 = vunpack.c.l.b16 %v9930
    %v10210 = vunpack.c.l.b16 %v9931
    %v10211 = vunpack.c.h.b16 %v9931
    %v10212 = vunpack.c.l.b16 %v9932
    %v10213 = vunpack.c.l.b16 %v9933
    %v10214 = vunpack.c.h.b16 %v9933
    %v10215 = vunpack.c.l.b16 %v9934
    %v10216 = vunpack.c.l.b16 %v9935
    %v10217 = vunpack.c.h.b16 %v9935
    %v10218 = vunpack.c.l.b16 %v9936
    %v10219 = vunpack.c.l.b16 %v9937
    %v10220 = vunpack.c.h.b16 %v9937
    %v10221 = vunpack.c.l.b16 %v9938
    %v10222 = vunpack.c.l.b16 %v9939
    %v10223 = vunpack.c.h.b16 %v9939
    %v10224 = vunpack.c.l.b16 %v9940
    %v10225 = vunpack.c.l.b16 %v9941
    %v10226 = vunpack.c.h.b16 %v9941
    %v10227 = vunpack.c.l.b16 %v9942
    %v10228 = vunpack.c.l.b16 %v9943
    %v10229 = vunpack.c.h.b16 %v9943
    %v10230 = vunpack.c.l.b16 %v9944
    %v10231 = vunpack.c.l.b16 %v9945
    %v10232 = vunpack.c.h.b16 %v9945
    %v10233 = vunpack.c.l.b16 %v9946
    %v10234 = vunpack.c.l.b16 %v9947
    %v10235 = vunpack.c.h.b16 %v9947
    %v10236 = vunpack.c.l.b16 %v9948
    %v10237 = vunpack.c.l.b16 %v9949
    %v10238 = vunpack.c.h.b16 %v9949
    %v10239 = vunpack.c.l.b16 %v9950
    %v10240 = vunpack.c.l.b16 %v9951
    %v10241 = vunpack.c.h.b16 %v9951
    %v10242 = vunpack.c.l.b16 %v9952
    %v10243 = vunpack.c.l.b16 %v9953
    %v10244 = vunpack.c.h.b16 %v9953
    %v10245 = vunpack.c.l.b16 %v9954
    %v10246 = vunpack.c.l.b16 %v9955
    %v10247 = vunpack.c.h.b16 %v9955
    %v10248 = vunpack.c.l.b16 %v9956
    %v10249 = vunpack.c.l.b16 %v9957
    %v10250 = vunpack.c.h.b16 %v9957
    %v10251 = vunpack.c.l.b16 %v9958
    %v10252 = vunpack.c.l.b16 %v9959
    %v10253 = vunpack.c.h.b16 %v9959
    %v10254 = vunpack.c.l.b16 %v9960
    %v10255 = vunpack.c.l.b16 %v9961
    %v10256 = vunpack.c.h.b16 %v9961
    %v10257 = vunpack.c.l.b16 %v9962
    %v10258 = vunpack.c.l.b16 %v9963
    %v10259 = vunpack.c.h.b16 %v9963
    %v10260 = vunpack.c.l.b16 %v9964
    %v10261 = vunpack.c.l.b16 %v9965
    %v10262 = vunpack.c.h.b16 %v9965
    %v10263 = vunpack.c.l.b16 %v9966
    %v10264 = vunpack.c.l.b16 %v9967
    %v10265 = vunpack.c.h.b16 %v9967
    %v10266 = vunpack.c.l.b16 %v9968
    %v10267 = vunpack.c.l.b16 %v9969
    %v10268 = vunpack.c.h.b16 %v9969
    %v10269 = vunpack.c.l.b16 %v9970
    %v10270 = vunpack.c.l.b16 %v9971
    %v10271 = vunpack.c.h.b16 %v9971
    %v10272 = vunpack.c.l.b16 %v9972
    %v10273 = vunpack.c.l.b16 %v9973
    %v10274 = vunpack.c.h.b16 %v9973
    %v10275 = vunpack.c.l.b16 %v9974
    %v10276 = vunpack.c.l.b16 %v9975
    %v10277 = vunpack.c.h.b16 %v9975
    %v10278 = vunpack.c.l.b16 %v9976
    %v10279 = vunpack.c.l.b16 %v9977
    %v10280 = vunpack.c.h.b16 %v9977
    %v10281 = vunpack.c.l.b16 %v9978
    %v10282 = vunpack.c.l.b16 %v9979
    %v10283 = vunpack.c.h.b16 %v9979
    %v10284 = vunpack.c.l.b16 %v9980
    %v10285 = vunpack.c.l.b16 %v9981
    %v10286 = vunpack.c.h.b16 %v9981
    %v10287 = vunpack.c.l.b16 %v9982
    %v10288 = vunpack.c.l.b16 %v9983
    %v10289 = vunpack.c.h.b16 %v9983
    %v10290 = vunpack.c.l.b16 %v9984
    %v10291 = vunpack.c.l.b16 %v9985
    %v10292 = vunpack.c.h.b16 %v9985
    %v10293 = vunpack.c.l.b16 %v9986
    %v10294 = vunpack.c.l.b16 %v9987
    %v10295 = vunpack.c.h.b16 %v9987
    %v10296 = vunpack.c.l.b16 %v9988
    %v10297 = vunpack.c.l.b16 %v9989
    %v10298 = vunpack.c.h.b16 %v9989
    %v10299 = vunpack.c.l.b16 %v9990
    %v10300 = vunpack.c.l.b16 %v9991
    %v10301 = vunpack.c.h.b16 %v9991
    %v10302 = vunpack.c.l.b16 %v9992
    %v10303 = vunpack.c.l.b16 %v9993
    %v10304 = vunpack.c.h.b16 %v9993
    %v10305 = vunpack.c.l.b16 %v9994
    %v10306 = vunpack.c.l.b16 %v9995
    %v10307 = vunpack.c.h.b16 %v9995
    %v10308 = vunpack.c.l.b16 %v9996
    %v10309 = vunpack.c.l.b16 %v9997
    %v10310 = vunpack.c.h.b16 %v9997
    %v10311 = vunpack.c.l.b16 %v9998
    %v10312 = vunpack.c.l.b16 %v9999
    %v10313 = vunpack.c.h.b16 %v9999
    %v10314 = vunpack.c.l.b16 %v10000
    %v10315 = vunpack.c.l.b16 %v10001
    %v10316 = vunpack.c.h.b16 %v10001
    %v10317 = vunpack.c.l.b16 %v10002
    %v10318 = vunpack.c.l.b16 %v10003
    %v10319 = vunpack.c.h.b16 %v10003
    %v10320 = vunpack.c.l.b16 %v10004
    %v10321 = vunpack.c.l.b16 %v10005
    %v10322 = vunpack.c.h.b16 %v10005
    %v10323 = vunpack.c.l.b16 %v10006
    %v10324 = vunpack.c.l.b16 %v10007
    %v10325 = vunpack.c.h.b16 %v10007
    %v10326 = vunpack.c.l.b16 %v10008
    %v10327 = vunpack.c.l.b16 %v10009
    %v10328 = vunpack.c.h.b16 %v10009
    %v10329 = vunpack.c.l.b16 %v10010
    %v10330 = vunpack.c.l.b16 %v10011
    %v10331 = vunpack.c.h.b16 %v10011
    %v10332 = vunpack.c.l.b16 %v10012
    %v10333 = vpack.c.b16 %v10144, %v10141
    %v10334 = vpack.c.b16 %v10145, %v10142
    %v10335 = vpack.c.b16 %v10146, %v10143
    %v10336 = vpack.c.b16 %v10150, %v10147
    %v10337 = vpack.c.b16 %v10151, %v10148
    %v10338 = vpack.c.b16 %v10152, %v10149
    %v10339 = vpack.c.b16 %v10156, %v10153
    %v10340 = vpack.c.b16 %v10157, %v10154
    %v10341 = vpack.c.b16 %v10158, %v10155
    %v10342 = vpack.c.b16 %v10162, %v10159
    %v10343 = vpack.c.b16 %v10163, %v10160
    %v10344 = vpack.c.b16 %v10164, %v10161
    %v10345 = vpack.c.b16 %v10168, %v10165
    %v10346 = vpack.c.b16 %v10169, %v10166
    %v10347 = vpack.c.b16 %v10170, %v10167
    %v10348 = vpack.c.b16 %v10174, %v10171
    %v10349 = vpack.c.b16 %v10175, %v10172
    %v10350 = vpack.c.b16 %v10176, %v10173
    %v10351 = vpack.c.b16 %v10180, %v10177
    %v10352 = vpack.c.b16 %v10181, %v10178
    %v10353 = vpack.c.b16 %v10182, %v10179
    %v10354 = vpack.c.b16 %v10186, %v10183
    %v10355 = vpack.c.b16 %v10187, %v10184
    %v10356 = vpack.c.b16 %v10188, %v10185
    %v10357 = vpack.c.b16 %v10192, %v10189
    %v10358 = vpack.c.b16 %v10193, %v10190
    %v10359 = vpack.c.b16 %v10194, %v10191
    %v10360 = vpack.c.b16 %v10198, %v10195
    %v10361 = vpack.c.b16 %v10199, %v10196
    %v10362 = vpack.c.b16 %v10200, %v10197
    %v10363 = vpack.c.b16 %v10204, %v10201
    %v10364 = vpack.c.b16 %v10205, %v10202
    %v10365 = vpack.c.b16 %v10206, %v10203
    %v10366 = vpack.c.b16 %v10210, %v10207
    %v10367 = vpack.c.b16 %v10211, %v10208
    %v10368 = vpack.c.b16 %v10212, %v10209
    %v10369 = vpack.c.b16 %v10216, %v10213
    %v10370 = vpack.c.b16 %v10217, %v10214
    %v10371 = vpack.c.b16 %v10218, %v10215
    %v10372 = vpack.c.b16 %v10222, %v10219
    %v10373 = vpack.c.b16 %v10223, %v10220
    %v10374 = vpack.c.b16 %v10224, %v10221
    %v10375 = vpack.c.b16 %v10228, %v10225
    %v10376 = vpack.c.b16 %v10229, %v10226
    %v10377 = vpack.c.b16 %v10230, %v10227
    %v10378 = vpack.c.b16 %v10234, %v10231
    %v10379 = vpack.c.b16 %v10235, %v10232
    %v10380 = vpack.c.b16 %v10236, %v10233
    %v10381 = vpack.c.b16 %v10240, %v10237
    %v10382 = vpack.c.b16 %v10241, %v10238
    %v10383 = vpack.c.b16 %v10242, %v10239
    %v10384 = vpack.c.b16 %v10246, %v10243
    %v10385 = vpack.c.b16 %v10247, %v10244
    %v10386 = vpack.c.b16 %v10248, %v10245
    %v10387 = vpack.c.b16 %v10252, %v10249
    %v10388 = vpack.c.b16 %v10253, %v10250
    %v10389 = vpack.c.b16 %v10254, %v10251
    %v10390 = vpack.c.b16 %v10258, %v10255
    %v10391 = vpack.c.b16 %v10259, %v10256
    %v10392 = vpack.c.b16 %v10260, %v10257
    %v10393 = vpack.c.b16 %v10264, %v10261
    %v10394 = vpack.c.b16 %v10265, %v10262
    %v10395 = vpack.c.b16 %v10266, %v10263
    %v10396 = vpack.c.b16 %v10270, %v10267
    %v10397 = vpack.c.b16 %v10271, %v10268
    %v10398 = vpack.c.b16 %v10272, %v10269
    %v10399 = vpack.c.b16 %v10276, %v10273
    %v10400 = vpack.c.b16 %v10277, %v10274
    %v10401 = vpack.c.b16 %v10278, %v10275
    %v10402 = vpack.c.b16 %v10282, %v10279
    %v10403 = vpack.c.b16 %v10283, %v10280
    %v10404 = vpack.c.b16 %v10284, %v10281
    %v10405 = vpack.c.b16 %v10288, %v10285
    %v10406 = vpack.c.b16 %v10289, %v10286
    %v10407 = vpack.c.b16 %v10290, %v10287
    %v10408 = vpack.c.b16 %v10294, %v10291
    %v10409 = vpack.c.b16 %v10295, %v10292
    %v10410 = vpack.c.b16 %v10296, %v10293
    %v10411 = vpack.c.b16 %v10300, %v10297
    %v10412 = vpack.c.b16 %v10301, %v10298
    %v10413 = vpack.c.b16 %v10302, %v10299
    %v10414 = vpack.c.b16 %v10306, %v10303
    %v10415 = vpack.c.b16 %v10307, %v10304
    %v10416 = vpack.c.b16 %v10308, %v10305
    %v10417 = vpack.c.b16 %v10312, %v10309
    %v10418 = vpack.c.b16 %v10313, %v10310
    %v10419 = vpack.c.b16 %v10314, %v10311
    %v10420 = vpack.c.b16 %v10318, %v10315
    %v10421 = vpack.c.b16 %v10319, %v10316
    %v10422 = vpack.c.b16 %v10320, %v10317
    %v10423 = vpack.c.b16 %v10324, %v10321
    %v10424 = vpack.c.b16 %v10325, %v10322
    %v10425 = vpack.c.b16 %v10326, %v10323
    %v10426 = vpack.c.b16 %v10330, %v10327
    %v10427 = vpack.c.b16 %v10331, %v10328
    %v10428 = vpack.c.b16 %v10332, %v10329
    %10525 = vmatpush.bf16.msra.mxu0 %v10354
    %10526 = vmatpush.bf16.msra.mxu0 %v10351
    %10527 = vmatpush.bf16.msra.mxu0 %v10348
    %10528 = vmatpush.bf16.msra.mxu0 %v10345
    %10529 = vmatpush.bf16.msra.mxu0 %v10342
    %10530 = vmatpush.bf16.msra.mxu0 %v10339
    %10531 = vmatpush.bf16.msra.mxu0 %v10336
    %10532 = vmatpush.bf16.msra.mxu0 %v10333
    %10533 = vmatmul.bf16.gmra.mxu0 %v9853
    %v10534 = vpop.f32.mrf.mxu0
    %v10535 = vadd.f32 0.0, %v10534
    %v10536 = vpop.f32.mrf.mxu0
    %v10537 = vadd.f32 0.0, %v10536
    %10538 = vmatmul.bf16.gmra.mxu0 %v9857
    %v10539 = vpop.f32.mrf.mxu0
    %v10540 = vadd.f32 0.0, %v10539
    %v10541 = vpop.f32.mrf.mxu0
    %v10542 = vadd.f32 0.0, %v10541
    %10543 = vmatmul.bf16.gmra.mxu0 %v9861
    %v10544 = vpop.f32.mrf.mxu0
    %v10545 = vadd.f32 0.0, %v10544
    %v10546 = vpop.f32.mrf.mxu0
    %v10547 = vadd.f32 0.0, %v10546
    %10548 = vmatmul.bf16.gmra.mxu0 %v9865
    %v10549 = vpop.f32.mrf.mxu0
    %v10550 = vadd.f32 0.0, %v10549
    %v10551 = vpop.f32.mrf.mxu0
    %v10552 = vadd.f32 0.0, %v10551
    %10553 = vmatmul.bf16.gmra.mxu0 %v9869
    %v10554 = vpop.f32.mrf.mxu0
    %v10555 = vadd.f32 0.0, %v10554
    %v10556 = vpop.f32.mrf.mxu0
    %v10557 = vadd.f32 0.0, %v10556
    %10558 = vmatmul.bf16.gmra.mxu0 %v9873
    %v10559 = vpop.f32.mrf.mxu0
    %v10560 = vadd.f32 0.0, %v10559
    %v10561 = vpop.f32.mrf.mxu0
    %v10562 = vadd.f32 0.0, %v10561
    %10563 = vmatmul.bf16.gmra.mxu0 %v9877
    %v10564 = vpop.f32.mrf.mxu0
    %v10565 = vadd.f32 0.0, %v10564
    %v10566 = vpop.f32.mrf.mxu0
    %v10567 = vadd.f32 0.0, %v10566
    %10568 = vmatmul.bf16.gmra.mxu0 %v9881
    %v10569 = vpop.f32.mrf.mxu0
    %v10570 = vadd.f32 0.0, %v10569
    %v10571 = vpop.f32.mrf.mxu0
    %v10572 = vadd.f32 0.0, %v10571
    %10573 = vdwg.mxu0
    %10574 = vmatpush.bf16.msra.mxu0 %v10378
    %10575 = vmatpush.bf16.msra.mxu0 %v10375
    %10576 = vmatpush.bf16.msra.mxu0 %v10372
    %10577 = vmatpush.bf16.msra.mxu0 %v10369
    %10578 = vmatpush.bf16.msra.mxu0 %v10366
    %10579 = vmatpush.bf16.msra.mxu0 %v10363
    %10580 = vmatpush.bf16.msra.mxu0 %v10360
    %10581 = vmatpush.bf16.msra.mxu0 %v10357
    %10582 = vmatmul.bf16.gmra.mxu0 %v9854
    %v10583 = vpop.f32.mrf.mxu0
    %v10584 = vadd.f32 %v10535, %v10583
    %v10585 = vpop.f32.mrf.mxu0
    %v10586 = vadd.f32 %v10537, %v10585
    %10587 = vmatmul.bf16.gmra.mxu0 %v9858
    %v10588 = vpop.f32.mrf.mxu0
    %v10589 = vadd.f32 %v10540, %v10588
    %v10590 = vpop.f32.mrf.mxu0
    %v10591 = vadd.f32 %v10542, %v10590
    %10592 = vmatmul.bf16.gmra.mxu0 %v9862
    %v10593 = vpop.f32.mrf.mxu0
    %v10594 = vadd.f32 %v10545, %v10593
    %v10595 = vpop.f32.mrf.mxu0
    %v10596 = vadd.f32 %v10547, %v10595
    %10597 = vmatmul.bf16.gmra.mxu0 %v9866
    %v10598 = vpop.f32.mrf.mxu0
    %v10599 = vadd.f32 %v10550, %v10598
    %v10600 = vpop.f32.mrf.mxu0
    %v10601 = vadd.f32 %v10552, %v10600
    %10602 = vmatmul.bf16.gmra.mxu0 %v9870
    %v10603 = vpop.f32.mrf.mxu0
    %v10604 = vadd.f32 %v10555, %v10603
    %v10605 = vpop.f32.mrf.mxu0
    %v10606 = vadd.f32 %v10557, %v10605
    %10607 = vmatmul.bf16.gmra.mxu0 %v9874
    %v10608 = vpop.f32.mrf.mxu0
    %v10609 = vadd.f32 %v10560, %v10608
    %v10610 = vpop.f32.mrf.mxu0
    %v10611 = vadd.f32 %v10562, %v10610
    %10612 = vmatmul.bf16.gmra.mxu0 %v9878
    %v10613 = vpop.f32.mrf.mxu0
    %v10614 = vadd.f32 %v10565, %v10613
    %v10615 = vpop.f32.mrf.mxu0
    %v10616 = vadd.f32 %v10567, %v10615
    %10617 = vmatmul.bf16.gmra.mxu0 %v9882
    %v10618 = vpop.f32.mrf.mxu0
    %v10619 = vadd.f32 %v10570, %v10618
    %v10620 = vpop.f32.mrf.mxu0
    %v10621 = vadd.f32 %v10572, %v10620
    %10622 = vdwg.mxu0
    %10623 = vmatpush.bf16.msra.mxu0 %v10402
    %10624 = vmatpush.bf16.msra.mxu0 %v10399
    %10625 = vmatpush.bf16.msra.mxu0 %v10396
    %10626 = vmatpush.bf16.msra.mxu0 %v10393
    %10627 = vmatpush.bf16.msra.mxu0 %v10390
    %10628 = vmatpush.bf16.msra.mxu0 %v10387
    %10629 = vmatpush.bf16.msra.mxu0 %v10384
    %10630 = vmatpush.bf16.msra.mxu0 %v10381
    %10631 = vmatmul.bf16.gmra.mxu0 %v9855
    %v10632 = vpop.f32.mrf.mxu0
    %v10633 = vadd.f32 %v10584, %v10632
    %v10634 = vpop.f32.mrf.mxu0
    %v10635 = vadd.f32 %v10586, %v10634
    %10636 = vmatmul.bf16.gmra.mxu0 %v9859
    %v10637 = vpop.f32.mrf.mxu0
    %v10638 = vadd.f32 %v10589, %v10637
    %v10639 = vpop.f32.mrf.mxu0
    %v10640 = vadd.f32 %v10591, %v10639
    %10641 = vmatmul.bf16.gmra.mxu0 %v9863
    %v10642 = vpop.f32.mrf.mxu0
    %v10643 = vadd.f32 %v10594, %v10642
    %v10644 = vpop.f32.mrf.mxu0
    %v10645 = vadd.f32 %v10596, %v10644
    %10646 = vmatmul.bf16.gmra.mxu0 %v9867
    %v10647 = vpop.f32.mrf.mxu0
    %v10648 = vadd.f32 %v10599, %v10647
    %v10649 = vpop.f32.mrf.mxu0
    %v10650 = vadd.f32 %v10601, %v10649
    %10651 = vmatmul.bf16.gmra.mxu0 %v9871
    %v10652 = vpop.f32.mrf.mxu0
    %v10653 = vadd.f32 %v10604, %v10652
    %v10654 = vpop.f32.mrf.mxu0
    %v10655 = vadd.f32 %v10606, %v10654
    %10656 = vmatmul.bf16.gmra.mxu0 %v9875
    %v10657 = vpop.f32.mrf.mxu0
    %v10658 = vadd.f32 %v10609, %v10657
    %v10659 = vpop.f32.mrf.mxu0
    %v10660 = vadd.f32 %v10611, %v10659
    %10661 = vmatmul.bf16.gmra.mxu0 %v9879
    %v10662 = vpop.f32.mrf.mxu0
    %v10663 = vadd.f32 %v10614, %v10662
    %v10664 = vpop.f32.mrf.mxu0
    %v10665 = vadd.f32 %v10616, %v10664
    %10666 = vmatmul.bf16.gmra.mxu0 %v9883
    %v10667 = vpop.f32.mrf.mxu0
    %v10668 = vadd.f32 %v10619, %v10667
    %v10669 = vpop.f32.mrf.mxu0
    %v10670 = vadd.f32 %v10621, %v10669
    %10671 = vdwg.mxu0
    %10672 = vmatpush.bf16.msra.mxu0 %v10426
    %10673 = vmatpush.bf16.msra.mxu0 %v10423
    %10674 = vmatpush.bf16.msra.mxu0 %v10420
    %10675 = vmatpush.bf16.msra.mxu0 %v10417
    %10676 = vmatpush.bf16.msra.mxu0 %v10414
    %10677 = vmatpush.bf16.msra.mxu0 %v10411
    %10678 = vmatpush.bf16.msra.mxu0 %v10408
    %10679 = vmatpush.bf16.msra.mxu0 %v10405
    %10680 = vmatmul.bf16.gmra.mxu0 %v9856
    %v10681 = vpop.f32.mrf.mxu0
    %v10682 = vadd.f32 %v10633, %v10681
    %v10683 = vpop.f32.mrf.mxu0
    %v10684 = vadd.f32 %v10635, %v10683
    %10685 = vmatmul.bf16.gmra.mxu0 %v9860
    %v10686 = vpop.f32.mrf.mxu0
    %v10687 = vadd.f32 %v10638, %v10686
    %v10688 = vpop.f32.mrf.mxu0
    %v10689 = vadd.f32 %v10640, %v10688
    %10690 = vmatmul.bf16.gmra.mxu0 %v9864
    %v10691 = vpop.f32.mrf.mxu0
    %v10692 = vadd.f32 %v10643, %v10691
    %v10693 = vpop.f32.mrf.mxu0
    %v10694 = vadd.f32 %v10645, %v10693
    %10695 = vmatmul.bf16.gmra.mxu0 %v9868
    %v10696 = vpop.f32.mrf.mxu0
    %v10697 = vadd.f32 %v10648, %v10696
    %v10698 = vpop.f32.mrf.mxu0
    %v10699 = vadd.f32 %v10650, %v10698
    %10700 = vmatmul.bf16.gmra.mxu0 %v9872
    %v10701 = vpop.f32.mrf.mxu0
    %v10702 = vadd.f32 %v10653, %v10701
    %v10703 = vpop.f32.mrf.mxu0
    %v10704 = vadd.f32 %v10655, %v10703
    %10705 = vmatmul.bf16.gmra.mxu0 %v9876
    %v10706 = vpop.f32.mrf.mxu0
    %v10707 = vadd.f32 %v10658, %v10706
    %v10708 = vpop.f32.mrf.mxu0
    %v10709 = vadd.f32 %v10660, %v10708
    %10710 = vmatmul.bf16.gmra.mxu0 %v9880
    %v10711 = vpop.f32.mrf.mxu0
    %v10712 = vadd.f32 %v10663, %v10711
    %v10713 = vpop.f32.mrf.mxu0
    %v10714 = vadd.f32 %v10665, %v10713
    %10715 = vmatmul.bf16.gmra.mxu0 %v9884
    %v10716 = vpop.f32.mrf.mxu0
    %v10717 = vadd.f32 %v10668, %v10716
    %v10718 = vpop.f32.mrf.mxu0
    %v10719 = vadd.f32 %v10670, %v10718
    %10720 = vdwg.mxu0
    %10721 = vmatpush.bf16.msra.mxu0 %v10355
    %10722 = vmatpush.bf16.msra.mxu0 %v10352
    %10723 = vmatpush.bf16.msra.mxu0 %v10349
    %10724 = vmatpush.bf16.msra.mxu0 %v10346
    %10725 = vmatpush.bf16.msra.mxu0 %v10343
    %10726 = vmatpush.bf16.msra.mxu0 %v10340
    %10727 = vmatpush.bf16.msra.mxu0 %v10337
    %10728 = vmatpush.bf16.msra.mxu0 %v10334
    %10729 = vmatmul.bf16.gmra.mxu0 %v9853
    %v10730 = vpop.f32.mrf.mxu0
    %v10731 = vadd.f32 0.0, %v10730
    %v10732 = vpop.f32.mrf.mxu0
    %v10733 = vadd.f32 0.0, %v10732
    %10734 = vmatmul.bf16.gmra.mxu0 %v9857
    %v10735 = vpop.f32.mrf.mxu0
    %v10736 = vadd.f32 0.0, %v10735
    %v10737 = vpop.f32.mrf.mxu0
    %v10738 = vadd.f32 0.0, %v10737
    %10739 = vmatmul.bf16.gmra.mxu0 %v9861
    %v10740 = vpop.f32.mrf.mxu0
    %v10741 = vadd.f32 0.0, %v10740
    %v10742 = vpop.f32.mrf.mxu0
    %v10743 = vadd.f32 0.0, %v10742
    %10744 = vmatmul.bf16.gmra.mxu0 %v9865
    %v10745 = vpop.f32.mrf.mxu0
    %v10746 = vadd.f32 0.0, %v10745
    %v10747 = vpop.f32.mrf.mxu0
    %v10748 = vadd.f32 0.0, %v10747
    %10749 = vmatmul.bf16.gmra.mxu0 %v9869
    %v10750 = vpop.f32.mrf.mxu0
    %v10751 = vadd.f32 0.0, %v10750
    %v10752 = vpop.f32.mrf.mxu0
    %v10753 = vadd.f32 0.0, %v10752
    %10754 = vmatmul.bf16.gmra.mxu0 %v9873
    %v10755 = vpop.f32.mrf.mxu0
    %v10756 = vadd.f32 0.0, %v10755
    %v10757 = vpop.f32.mrf.mxu0
    %v10758 = vadd.f32 0.0, %v10757
    %10759 = vmatmul.bf16.gmra.mxu0 %v9877
    %v10760 = vpop.f32.mrf.mxu0
    %v10761 = vadd.f32 0.0, %v10760
    %v10762 = vpop.f32.mrf.mxu0
    %v10763 = vadd.f32 0.0, %v10762
    %10764 = vmatmul.bf16.gmra.mxu0 %v9881
    %v10765 = vpop.f32.mrf.mxu0
    %v10766 = vadd.f32 0.0, %v10765
    %v10767 = vpop.f32.mrf.mxu0
    %v10768 = vadd.f32 0.0, %v10767
    %10769 = vdwg.mxu0
    %10770 = vmatpush.bf16.msra.mxu0 %v10379
    %10771 = vmatpush.bf16.msra.mxu0 %v10376
    %10772 = vmatpush.bf16.msra.mxu0 %v10373
    %10773 = vmatpush.bf16.msra.mxu0 %v10370
    %10774 = vmatpush.bf16.msra.mxu0 %v10367
    %10775 = vmatpush.bf16.msra.mxu0 %v10364
    %10776 = vmatpush.bf16.msra.mxu0 %v10361
    %10777 = vmatpush.bf16.msra.mxu0 %v10358
    %10778 = vmatmul.bf16.gmra.mxu0 %v9854
    %v10779 = vpop.f32.mrf.mxu0
    %v10780 = vadd.f32 %v10731, %v10779
    %v10781 = vpop.f32.mrf.mxu0
    %v10782 = vadd.f32 %v10733, %v10781
    %10783 = vmatmul.bf16.gmra.mxu0 %v9858
    %v10784 = vpop.f32.mrf.mxu0
    %v10785 = vadd.f32 %v10736, %v10784
    %v10786 = vpop.f32.mrf.mxu0
    %v10787 = vadd.f32 %v10738, %v10786
    %10788 = vmatmul.bf16.gmra.mxu0 %v9862
    %v10789 = vpop.f32.mrf.mxu0
    %v10790 = vadd.f32 %v10741, %v10789
    %v10791 = vpop.f32.mrf.mxu0
    %v10792 = vadd.f32 %v10743, %v10791
    %10793 = vmatmul.bf16.gmra.mxu0 %v9866
    %v10794 = vpop.f32.mrf.mxu0
    %v10795 = vadd.f32 %v10746, %v10794
    %v10796 = vpop.f32.mrf.mxu0
    %v10797 = vadd.f32 %v10748, %v10796
    %10798 = vmatmul.bf16.gmra.mxu0 %v9870
    %v10799 = vpop.f32.mrf.mxu0
    %v10800 = vadd.f32 %v10751, %v10799
    %v10801 = vpop.f32.mrf.mxu0
    %v10802 = vadd.f32 %v10753, %v10801
    %10803 = vmatmul.bf16.gmra.mxu0 %v9874
    %v10804 = vpop.f32.mrf.mxu0
    %v10805 = vadd.f32 %v10756, %v10804
    %v10806 = vpop.f32.mrf.mxu0
    %v10807 = vadd.f32 %v10758, %v10806
    %10808 = vmatmul.bf16.gmra.mxu0 %v9878
    %v10809 = vpop.f32.mrf.mxu0
    %v10810 = vadd.f32 %v10761, %v10809
    %v10811 = vpop.f32.mrf.mxu0
    %v10812 = vadd.f32 %v10763, %v10811
    %10813 = vmatmul.bf16.gmra.mxu0 %v9882
    %v10814 = vpop.f32.mrf.mxu0
    %v10815 = vadd.f32 %v10766, %v10814
    %v10816 = vpop.f32.mrf.mxu0
    %v10817 = vadd.f32 %v10768, %v10816
    %10818 = vdwg.mxu0
    %10819 = vmatpush.bf16.msra.mxu0 %v10403
    %10820 = vmatpush.bf16.msra.mxu0 %v10400
    %10821 = vmatpush.bf16.msra.mxu0 %v10397
    %10822 = vmatpush.bf16.msra.mxu0 %v10394
    %10823 = vmatpush.bf16.msra.mxu0 %v10391
    %10824 = vmatpush.bf16.msra.mxu0 %v10388
    %10825 = vmatpush.bf16.msra.mxu0 %v10385
    %10826 = vmatpush.bf16.msra.mxu0 %v10382
    %10827 = vmatmul.bf16.gmra.mxu0 %v9855
    %v10828 = vpop.f32.mrf.mxu0
    %v10829 = vadd.f32 %v10780, %v10828
    %v10830 = vpop.f32.mrf.mxu0
    %v10831 = vadd.f32 %v10782, %v10830
    %10832 = vmatmul.bf16.gmra.mxu0 %v9859
    %v10833 = vpop.f32.mrf.mxu0
    %v10834 = vadd.f32 %v10785, %v10833
    %v10835 = vpop.f32.mrf.mxu0
    %v10836 = vadd.f32 %v10787, %v10835
    %10837 = vmatmul.bf16.gmra.mxu0 %v9863
    %v10838 = vpop.f32.mrf.mxu0
    %v10839 = vadd.f32 %v10790, %v10838
    %v10840 = vpop.f32.mrf.mxu0
    %v10841 = vadd.f32 %v10792, %v10840
    %10842 = vmatmul.bf16.gmra.mxu0 %v9867
    %v10843 = vpop.f32.mrf.mxu0
    %v10844 = vadd.f32 %v10795, %v10843
    %v10845 = vpop.f32.mrf.mxu0
    %v10846 = vadd.f32 %v10797, %v10845
    %10847 = vmatmul.bf16.gmra.mxu0 %v9871
    %v10848 = vpop.f32.mrf.mxu0
    %v10849 = vadd.f32 %v10800, %v10848
    %v10850 = vpop.f32.mrf.mxu0
    %v10851 = vadd.f32 %v10802, %v10850
    %10852 = vmatmul.bf16.gmra.mxu0 %v9875
    %v10853 = vpop.f32.mrf.mxu0
    %v10854 = vadd.f32 %v10805, %v10853
    %v10855 = vpop.f32.mrf.mxu0
    %v10856 = vadd.f32 %v10807, %v10855
    %10857 = vmatmul.bf16.gmra.mxu0 %v9879
    %v10858 = vpop.f32.mrf.mxu0
    %v10859 = vadd.f32 %v10810, %v10858
    %v10860 = vpop.f32.mrf.mxu0
    %v10861 = vadd.f32 %v10812, %v10860
    %10862 = vmatmul.bf16.gmra.mxu0 %v9883
    %v10863 = vpop.f32.mrf.mxu0
    %v10864 = vadd.f32 %v10815, %v10863
    %v10865 = vpop.f32.mrf.mxu0
    %v10866 = vadd.f32 %v10817, %v10865
    %10867 = vdwg.mxu0
    %10868 = vmatpush.bf16.msra.mxu0 %v10427
    %10869 = vmatpush.bf16.msra.mxu0 %v10424
    %10870 = vmatpush.bf16.msra.mxu0 %v10421
    %10871 = vmatpush.bf16.msra.mxu0 %v10418
    %10872 = vmatpush.bf16.msra.mxu0 %v10415
    %10873 = vmatpush.bf16.msra.mxu0 %v10412
    %10874 = vmatpush.bf16.msra.mxu0 %v10409
    %10875 = vmatpush.bf16.msra.mxu0 %v10406
    %10876 = vmatmul.bf16.gmra.mxu0 %v9856
    %v10877 = vpop.f32.mrf.mxu0
    %v10878 = vadd.f32 %v10829, %v10877
    %v10879 = vpop.f32.mrf.mxu0
    %v10880 = vadd.f32 %v10831, %v10879
    %10881 = vmatmul.bf16.gmra.mxu0 %v9860
    %v10882 = vpop.f32.mrf.mxu0
    %v10883 = vadd.f32 %v10834, %v10882
    %v10884 = vpop.f32.mrf.mxu0
    %v10885 = vadd.f32 %v10836, %v10884
    %10886 = vmatmul.bf16.gmra.mxu0 %v9864
    %v10887 = vpop.f32.mrf.mxu0
    %v10888 = vadd.f32 %v10839, %v10887
    %v10889 = vpop.f32.mrf.mxu0
    %v10890 = vadd.f32 %v10841, %v10889
    %10891 = vmatmul.bf16.gmra.mxu0 %v9868
    %v10892 = vpop.f32.mrf.mxu0
    %v10893 = vadd.f32 %v10844, %v10892
    %v10894 = vpop.f32.mrf.mxu0
    %v10895 = vadd.f32 %v10846, %v10894
    %10896 = vmatmul.bf16.gmra.mxu0 %v9872
    %v10897 = vpop.f32.mrf.mxu0
    %v10898 = vadd.f32 %v10849, %v10897
    %v10899 = vpop.f32.mrf.mxu0
    %v10900 = vadd.f32 %v10851, %v10899
    %10901 = vmatmul.bf16.gmra.mxu0 %v9876
    %v10902 = vpop.f32.mrf.mxu0
    %v10903 = vadd.f32 %v10854, %v10902
    %v10904 = vpop.f32.mrf.mxu0
    %v10905 = vadd.f32 %v10856, %v10904
    %10906 = vmatmul.bf16.gmra.mxu0 %v9880
    %v10907 = vpop.f32.mrf.mxu0
    %v10908 = vadd.f32 %v10859, %v10907
    %v10909 = vpop.f32.mrf.mxu0
    %v10910 = vadd.f32 %v10861, %v10909
    %10911 = vmatmul.bf16.gmra.mxu0 %v9884
    %v10912 = vpop.f32.mrf.mxu0
    %v10913 = vadd.f32 %v10864, %v10912
    %v10914 = vpop.f32.mrf.mxu0
    %v10915 = vadd.f32 %v10866, %v10914
    %10916 = vdwg.mxu0
    %10917 = vmatpush.bf16.msra.mxu0 %v10356
    %10918 = vmatpush.bf16.msra.mxu0 %v10353
    %10919 = vmatpush.bf16.msra.mxu0 %v10350
    %10920 = vmatpush.bf16.msra.mxu0 %v10347
    %10921 = vmatpush.bf16.msra.mxu0 %v10344
    %10922 = vmatpush.bf16.msra.mxu0 %v10341
    %10923 = vmatpush.bf16.msra.mxu0 %v10338
    %10924 = vmatpush.bf16.msra.mxu0 %v10335
    %10925 = vmatmul.bf16.gmra.mxu0 %v9853
    %v10926 = vpop.f32.mrf.mxu0
    %v10927 = vadd.f32 0.0, %v10926
    %v10928 = vpop.f32.mrf.mxu0
    %v10929 = vadd.f32 0.0, %v10928
    %10930 = vmatmul.bf16.gmra.mxu0 %v9857
    %v10931 = vpop.f32.mrf.mxu0
    %v10932 = vadd.f32 0.0, %v10931
    %v10933 = vpop.f32.mrf.mxu0
    %v10934 = vadd.f32 0.0, %v10933
    %10935 = vmatmul.bf16.gmra.mxu0 %v9861
    %v10936 = vpop.f32.mrf.mxu0
    %v10937 = vadd.f32 0.0, %v10936
    %v10938 = vpop.f32.mrf.mxu0
    %v10939 = vadd.f32 0.0, %v10938
    %10940 = vmatmul.bf16.gmra.mxu0 %v9865
    %v10941 = vpop.f32.mrf.mxu0
    %v10942 = vadd.f32 0.0, %v10941
    %v10943 = vpop.f32.mrf.mxu0
    %v10944 = vadd.f32 0.0, %v10943
    %10945 = vmatmul.bf16.gmra.mxu0 %v9869
    %v10946 = vpop.f32.mrf.mxu0
    %v10947 = vadd.f32 0.0, %v10946
    %v10948 = vpop.f32.mrf.mxu0
    %v10949 = vadd.f32 0.0, %v10948
    %10950 = vmatmul.bf16.gmra.mxu0 %v9873
    %v10951 = vpop.f32.mrf.mxu0
    %v10952 = vadd.f32 0.0, %v10951
    %v10953 = vpop.f32.mrf.mxu0
    %v10954 = vadd.f32 0.0, %v10953
    %10955 = vmatmul.bf16.gmra.mxu0 %v9877
    %v10956 = vpop.f32.mrf.mxu0
    %v10957 = vadd.f32 0.0, %v10956
    %v10958 = vpop.f32.mrf.mxu0
    %v10959 = vadd.f32 0.0, %v10958
    %10960 = vmatmul.bf16.gmra.mxu0 %v9881
    %v10961 = vpop.f32.mrf.mxu0
    %v10962 = vadd.f32 0.0, %v10961
    %v10963 = vpop.f32.mrf.mxu0
    %v10964 = vadd.f32 0.0, %v10963
    %10965 = vdwg.mxu0
    %10966 = vmatpush.bf16.msra.mxu0 %v10380
    %10967 = vmatpush.bf16.msra.mxu0 %v10377
    %10968 = vmatpush.bf16.msra.mxu0 %v10374
    %10969 = vmatpush.bf16.msra.mxu0 %v10371
    %10970 = vmatpush.bf16.msra.mxu0 %v10368
    %10971 = vmatpush.bf16.msra.mxu0 %v10365
    %10972 = vmatpush.bf16.msra.mxu0 %v10362
    %10973 = vmatpush.bf16.msra.mxu0 %v10359
    %10974 = vmatmul.bf16.gmra.mxu0 %v9854
    %v10975 = vpop.f32.mrf.mxu0
    %v10976 = vadd.f32 %v10927, %v10975
    %v10977 = vpop.f32.mrf.mxu0
    %v10978 = vadd.f32 %v10929, %v10977
    %10979 = vmatmul.bf16.gmra.mxu0 %v9858
    %v10980 = vpop.f32.mrf.mxu0
    %v10981 = vadd.f32 %v10932, %v10980
    %v10982 = vpop.f32.mrf.mxu0
    %v10983 = vadd.f32 %v10934, %v10982
    %10984 = vmatmul.bf16.gmra.mxu0 %v9862
    %v10985 = vpop.f32.mrf.mxu0
    %v10986 = vadd.f32 %v10937, %v10985
    %v10987 = vpop.f32.mrf.mxu0
    %v10988 = vadd.f32 %v10939, %v10987
    %10989 = vmatmul.bf16.gmra.mxu0 %v9866
    %v10990 = vpop.f32.mrf.mxu0
    %v10991 = vadd.f32 %v10942, %v10990
    %v10992 = vpop.f32.mrf.mxu0
    %v10993 = vadd.f32 %v10944, %v10992
    %10994 = vmatmul.bf16.gmra.mxu0 %v9870
    %v10995 = vpop.f32.mrf.mxu0
    %v10996 = vadd.f32 %v10947, %v10995
    %v10997 = vpop.f32.mrf.mxu0
    %v10998 = vadd.f32 %v10949, %v10997
    %10999 = vmatmul.bf16.gmra.mxu0 %v9874
    %v11000 = vpop.f32.mrf.mxu0
    %v11001 = vadd.f32 %v10952, %v11000
    %v11002 = vpop.f32.mrf.mxu0
    %v11003 = vadd.f32 %v10954, %v11002
    %11004 = vmatmul.bf16.gmra.mxu0 %v9878
    %v11005 = vpop.f32.mrf.mxu0
    %v11006 = vadd.f32 %v10957, %v11005
    %v11007 = vpop.f32.mrf.mxu0
    %v11008 = vadd.f32 %v10959, %v11007
    %11009 = vmatmul.bf16.gmra.mxu0 %v9882
    %v11010 = vpop.f32.mrf.mxu0
    %v11011 = vadd.f32 %v10962, %v11010
    %v11012 = vpop.f32.mrf.mxu0
    %v11013 = vadd.f32 %v10964, %v11012
    %11014 = vdwg.mxu0
    %11015 = vmatpush.bf16.msra.mxu0 %v10404
    %11016 = vmatpush.bf16.msra.mxu0 %v10401
    %11017 = vmatpush.bf16.msra.mxu0 %v10398
    %11018 = vmatpush.bf16.msra.mxu0 %v10395
    %11019 = vmatpush.bf16.msra.mxu0 %v10392
    %11020 = vmatpush.bf16.msra.mxu0 %v10389
    %11021 = vmatpush.bf16.msra.mxu0 %v10386
    %11022 = vmatpush.bf16.msra.mxu0 %v10383
    %11023 = vmatmul.bf16.gmra.mxu0 %v9855
    %v11024 = vpop.f32.mrf.mxu0
    %v11025 = vadd.f32 %v10976, %v11024
    %v11026 = vpop.f32.mrf.mxu0
    %v11027 = vadd.f32 %v10978, %v11026
    %11028 = vmatmul.bf16.gmra.mxu0 %v9859
    %v11029 = vpop.f32.mrf.mxu0
    %v11030 = vadd.f32 %v10981, %v11029
    %v11031 = vpop.f32.mrf.mxu0
    %v11032 = vadd.f32 %v10983, %v11031
    %11033 = vmatmul.bf16.gmra.mxu0 %v9863
    %v11034 = vpop.f32.mrf.mxu0
    %v11035 = vadd.f32 %v10986, %v11034
    %v11036 = vpop.f32.mrf.mxu0
    %v11037 = vadd.f32 %v10988, %v11036
    %11038 = vmatmul.bf16.gmra.mxu0 %v9867
    %v11039 = vpop.f32.mrf.mxu0
    %v11040 = vadd.f32 %v10991, %v11039
    %v11041 = vpop.f32.mrf.mxu0
    %v11042 = vadd.f32 %v10993, %v11041
    %11043 = vmatmul.bf16.gmra.mxu0 %v9871
    %v11044 = vpop.f32.mrf.mxu0
    %v11045 = vadd.f32 %v10996, %v11044
    %v11046 = vpop.f32.mrf.mxu0
    %v11047 = vadd.f32 %v10998, %v11046
    %11048 = vmatmul.bf16.gmra.mxu0 %v9875
    %v11049 = vpop.f32.mrf.mxu0
    %v11050 = vadd.f32 %v11001, %v11049
    %v11051 = vpop.f32.mrf.mxu0
    %v11052 = vadd.f32 %v11003, %v11051
    %11053 = vmatmul.bf16.gmra.mxu0 %v9879
    %v11054 = vpop.f32.mrf.mxu0
    %v11055 = vadd.f32 %v11006, %v11054
    %v11056 = vpop.f32.mrf.mxu0
    %v11057 = vadd.f32 %v11008, %v11056
    %11058 = vmatmul.bf16.gmra.mxu0 %v9883
    %v11059 = vpop.f32.mrf.mxu0
    %v11060 = vadd.f32 %v11011, %v11059
    %v11061 = vpop.f32.mrf.mxu0
    %v11062 = vadd.f32 %v11013, %v11061
    %11063 = vdwg.mxu0
    %11064 = vmatpush.bf16.msra.mxu0 %v10428
    %11065 = vmatpush.bf16.msra.mxu0 %v10425
    %11066 = vmatpush.bf16.msra.mxu0 %v10422
    %11067 = vmatpush.bf16.msra.mxu0 %v10419
    %11068 = vmatpush.bf16.msra.mxu0 %v10416
    %11069 = vmatpush.bf16.msra.mxu0 %v10413
    %11070 = vmatpush.bf16.msra.mxu0 %v10410
    %11071 = vmatpush.bf16.msra.mxu0 %v10407
    %11072 = vmatmul.bf16.gmra.mxu0 %v9856
    %v11073 = vpop.f32.mrf.mxu0
    %v11074 = vadd.f32 %v11025, %v11073
    %v11075 = vpop.f32.mrf.mxu0
    %v11076 = vadd.f32 %v11027, %v11075
    %11077 = vmatmul.bf16.gmra.mxu0 %v9860
    %v11078 = vpop.f32.mrf.mxu0
    %v11079 = vadd.f32 %v11030, %v11078
    %v11080 = vpop.f32.mrf.mxu0
    %v11081 = vadd.f32 %v11032, %v11080
    %11082 = vmatmul.bf16.gmra.mxu0 %v9864
    %v11083 = vpop.f32.mrf.mxu0
    %v11084 = vadd.f32 %v11035, %v11083
    %v11085 = vpop.f32.mrf.mxu0
    %v11086 = vadd.f32 %v11037, %v11085
    %11087 = vmatmul.bf16.gmra.mxu0 %v9868
    %v11088 = vpop.f32.mrf.mxu0
    %v11089 = vadd.f32 %v11040, %v11088
    %v11090 = vpop.f32.mrf.mxu0
    %v11091 = vadd.f32 %v11042, %v11090
    %11092 = vmatmul.bf16.gmra.mxu0 %v9872
    %v11093 = vpop.f32.mrf.mxu0
    %v11094 = vadd.f32 %v11045, %v11093
    %v11095 = vpop.f32.mrf.mxu0
    %v11096 = vadd.f32 %v11047, %v11095
    %11097 = vmatmul.bf16.gmra.mxu0 %v9876
    %v11098 = vpop.f32.mrf.mxu0
    %v11099 = vadd.f32 %v11050, %v11098
    %v11100 = vpop.f32.mrf.mxu0
    %v11101 = vadd.f32 %v11052, %v11100
    %11102 = vmatmul.bf16.gmra.mxu0 %v9880
    %v11103 = vpop.f32.mrf.mxu0
    %v11104 = vadd.f32 %v11055, %v11103
    %v11105 = vpop.f32.mrf.mxu0
    %v11106 = vadd.f32 %v11057, %v11105
    %11107 = vmatmul.bf16.gmra.mxu0 %v9884
    %v11108 = vpop.f32.mrf.mxu0
    %v11109 = vadd.f32 %v11060, %v11108
    %v11110 = vpop.f32.mrf.mxu0
    %v11111 = vadd.f32 %v11062, %v11110
    %11112 = vdwg.mxu0
    %s11113 = scalar_lea.vmem [#allocation21], 18
    %v11114 = vld [vmem:[%s11113] ss:$2 sm:$0x7]
    %s11115 = scalar_lea.vmem [#allocation21], 19
    %v11116 = vld [vmem:[%s11115] ss:$2 sm:$0x7]
    %v11117 = vadd.f32 %v10682, %v10684
    %v11118 = vadd.f32 %v11117, %v10687
    %v11119 = vadd.f32 %v11118, %v10689
    %v11120 = vadd.f32 %v11119, %v10692
    %v11121 = vadd.f32 %v11120, %v10694
    %v11122 = vadd.f32 %v11121, %v10697
    %v11123 = vadd.f32 %v11122, %v10699
    %v11124 = vadd.f32 %v11123, %v10702
    %v11125 = vadd.f32 %v11124, %v10704
    %v11126 = vadd.f32 %v11125, %v10707
    %v11127 = vadd.f32 %v11126, %v10709
    %v11128 = vadd.f32 %v11127, %v10712
    %v11129 = vadd.f32 %v11128, %v10714
    %v11130 = vadd.f32 %v11129, %v10717
    %v11131 = vadd.f32 %v11130, %v10719
    %v11132 = vrot.slane %v11131, 4
    %v11133 = vadd.f32 %v11131, %v11132
    %v11134 = vrot.slane %v11133, 2
    %v11135 = vadd.f32 %v11133, %v11134
    %v11136 = vrot.slane %v11135, 1
    %v11137 = vadd.f32 %v11135, %v11136
    %v11138 = vadd.f32 %v10878, %v10880
    %v11139 = vadd.f32 %v11138, %v10883
    %v11140 = vadd.f32 %v11139, %v10885
    %v11141 = vadd.f32 %v11140, %v10888
    %v11142 = vadd.f32 %v11141, %v10890
    %v11143 = vadd.f32 %v11142, %v10893
    %v11144 = vadd.f32 %v11143, %v10895
    %v11145 = vadd.f32 %v11144, %v10898
    %v11146 = vadd.f32 %v11145, %v10900
    %v11147 = vadd.f32 %v11146, %v10903
    %v11148 = vadd.f32 %v11147, %v10905
    %v11149 = vadd.f32 %v11148, %v10908
    %v11150 = vadd.f32 %v11149, %v10910
    %v11151 = vadd.f32 %v11150, %v10913
    %v11152 = vadd.f32 %v11151, %v10915
    %v11153 = vrot.slane %v11152, 4
    %v11154 = vadd.f32 %v11152, %v11153
    %v11155 = vrot.slane %v11154, 2
    %v11156 = vadd.f32 %v11154, %v11155
    %v11157 = vrot.slane %v11156, 1
    %v11158 = vadd.f32 %v11156, %v11157
    %v11159 = vadd.f32 %v11074, %v11076
    %v11160 = vadd.f32 %v11159, %v11079
    %v11161 = vadd.f32 %v11160, %v11081
    %v11162 = vadd.f32 %v11161, %v11084
    %v11163 = vadd.f32 %v11162, %v11086
    %v11164 = vadd.f32 %v11163, %v11089
    %v11165 = vadd.f32 %v11164, %v11091
    %v11166 = vadd.f32 %v11165, %v11094
    %v11167 = vadd.f32 %v11166, %v11096
    %v11168 = vadd.f32 %v11167, %v11099
    %v11169 = vadd.f32 %v11168, %v11101
    %v11170 = vadd.f32 %v11169, %v11104
    %v11171 = vadd.f32 %v11170, %v11106
    %v11172 = vadd.f32 %v11171, %v11109
    %v11173 = vadd.f32 %v11172, %v11111
    %v11174 = vrot.slane %v11173, 4
    %v11175 = vadd.f32 %v11173, %v11174
    %v11176 = vrot.slane %v11175, 2
    %v11177 = vadd.f32 %v11175, %v11176
    %v11178 = vrot.slane %v11177, 1
    %v11179 = vadd.f32 %v11177, %v11178
    %vm11180 = vcmask 581632
    %v11181 = vsel %vm11180, %v11137, 0.0
    %11182 = vadd.xlane.f32.xlu0 %v11181
    %v11183 = vpop.xlane.xlu0 %11182
    %v11184 = vrot.slane %v11183, 4
    %v11185 = vadd.f32 %v11183, %v11184
    %v11186 = vrot.slane %v11185, 2
    %v11187 = vadd.f32 %v11185, %v11186
    %v11188 = vrot.slane %v11187, 1
    %v11189 = vadd.f32 %v11187, %v11188
    %s11190 = vtos %v11189
    %v11191 = vstv %s11190
    %v11192 = vmul.f32 %v11191, 0.000108506945
    %11193 = vst.msk [vmem:[#allocation9] sm:$0x1] %vm11180, %v11192
    %11196 = vrot.lane.b32.xlu0 %v11137, 56
    %v11197 = vpop.permute.xlu0 %11196
    %11198 = vrot.lane.b32.xlu0 %v11158, 56
    %v11199 = vpop.permute.xlu0 %11198
    %vm11200 = vcmask 457728
    %v11201 = vsel %vm11200, %v11197, %v11199
    %v11203 = vsel %vm11180, %v11201, 0.0
    %11204 = vadd.xlane.f32.xlu0 %v11203
    %v11205 = vpop.xlane.xlu0 %11204
    %v11206 = vrot.slane %v11205, 4
    %v11207 = vadd.f32 %v11205, %v11206
    %v11208 = vrot.slane %v11207, 2
    %v11209 = vadd.f32 %v11207, %v11208
    %v11210 = vrot.slane %v11209, 1
    %v11211 = vadd.f32 %v11209, %v11210
    %s11212 = vtos %v11211
    %v11213 = vstv %s11212
    %v11214 = vmul.f32 %v11213, 0.000108506945
    %vm11215 = vcmask 1040960
    %vm11216 = vmor %vm9262, %vm11215
    %11217 = vst.msk [vmem:[#allocation9] sm:$0x5] %vm11216, %v11214
    %11218 = vrot.lane.b32.xlu0 %v11158, 112
    %v11219 = vpop.permute.xlu0 %11218
    %v11221 = vsel %vm11180, %v11219, 0.0
    %11222 = vadd.xlane.f32.xlu0 %v11221
    %v11223 = vpop.xlane.xlu0 %11222
    %v11224 = vrot.slane %v11223, 4
    %v11225 = vadd.f32 %v11223, %v11224
    %v11226 = vrot.slane %v11225, 2
    %v11227 = vadd.f32 %v11225, %v11226
    %v11228 = vrot.slane %v11227, 1
    %v11229 = vadd.f32 %v11227, %v11228
    %s11230 = vtos %v11229
    %v11231 = vstv %s11230
    %v11232 = vmul.f32 %v11231, 0.000108506945
    %vm11233 = vcmask 712832
    %11234 = vst.msk [vmem:[#allocation9 + $0x2] sm:$0x1] %vm11233, %v11232
    %11236 = vrot.lane.b32.xlu0 %v11158, 40
    %v11237 = vpop.permute.xlu0 %11236
    %11238 = vrot.lane.b32.xlu0 %v11179, 40
    %v11239 = vpop.permute.xlu0 %11238
    %vm11240 = vcmask 326656
    %v11241 = vsel %vm11240, %v11237, %v11239
    %v11243 = vsel %vm11180, %v11241, 0.0
    %11244 = vadd.xlane.f32.xlu0 %v11243
    %v11245 = vpop.xlane.xlu0 %11244
    %v11246 = vrot.slane %v11245, 4
    %v11247 = vadd.f32 %v11245, %v11246
    %v11248 = vrot.slane %v11247, 2
    %v11249 = vadd.f32 %v11247, %v11248
    %v11250 = vrot.slane %v11249, 1
    %v11251 = vadd.f32 %v11249, %v11250
    %s11252 = vtos %v11251
    %v11253 = vstv %s11252
    %v11254 = vmul.f32 %v11253, 0.000108506945
    %vm11255 = vcmask 1041088
    %vm11256 = vmor %vm9238, %vm11255
    %11257 = vst.msk [vmem:[#allocation9 + $0x2] sm:$0x5] %vm11256, %v11254
    %11258 = vrot.lane.b32.xlu0 %v11179, 96
    %v11259 = vpop.permute.xlu0 %11258
    %v11261 = vsel %vm11180, %v11259, 0.0
    %11262 = vadd.xlane.f32.xlu0 %v11261
    %v11263 = vpop.xlane.xlu0 %11262
    %v11264 = vrot.slane %v11263, 4
    %v11265 = vadd.f32 %v11263, %v11264
    %v11266 = vrot.slane %v11265, 2
    %v11267 = vadd.f32 %v11265, %v11266
    %v11268 = vrot.slane %v11267, 1
    %v11269 = vadd.f32 %v11267, %v11268
    %s11270 = vtos %v11269
    %v11271 = vstv %s11270
    %v11272 = vmul.f32 %v11271, 0.000108506945
    %vm11273 = vcmask 844032
    %11274 = vst.msk [vmem:[#allocation9 + $0x4] sm:$0x1] %vm11273, %v11272
    %vm11275 = vcmask 1041216
    %11276 = vst.msk [vmem:[#allocation9 + $0x4] sm:$0x1] %vm11275, 0.0
    %v11277 = vld [vmem:[#allocation9] ss:$2 sm:$0x7]
    %v11279 = vperm.slane %v11277, 0
    %v11280 = vperm.slane %v11277, 1
    %v11281 = vperm.slane %v11277, 2
    %v11285 = vsub.f32 %v10682, %v11279
    %v11286 = vsub.f32 %v10878, %v11280
    %v11287 = vsub.f32 %v11074, %v11281
    %v11288 = vsub.f32 %v10684, %v11279
    %v11289 = vsub.f32 %v10880, %v11280
    %v11290 = vsub.f32 %v11076, %v11281
    %v11291 = vsub.f32 %v10687, %v11279
    %v11292 = vsub.f32 %v10883, %v11280
    %v11293 = vsub.f32 %v11079, %v11281
    %v11294 = vsub.f32 %v10689, %v11279
    %v11295 = vsub.f32 %v10885, %v11280
    %v11296 = vsub.f32 %v11081, %v11281
    %v11297 = vsub.f32 %v10692, %v11279
    %v11298 = vsub.f32 %v10888, %v11280
    %v11299 = vsub.f32 %v11084, %v11281
    %v11300 = vsub.f32 %v10694, %v11279
    %v11301 = vsub.f32 %v10890, %v11280
    %v11302 = vsub.f32 %v11086, %v11281
    %v11303 = vsub.f32 %v10697, %v11279
    %v11304 = vsub.f32 %v10893, %v11280
    %v11305 = vsub.f32 %v11089, %v11281
    %v11306 = vsub.f32 %v10699, %v11279
    %v11307 = vsub.f32 %v10895, %v11280
    %v11308 = vsub.f32 %v11091, %v11281
    %v11309 = vsub.f32 %v10702, %v11279
    %v11310 = vsub.f32 %v10898, %v11280
    %v11311 = vsub.f32 %v11094, %v11281
    %v11312 = vsub.f32 %v10704, %v11279
    %v11313 = vsub.f32 %v10900, %v11280
    %v11314 = vsub.f32 %v11096, %v11281
    %v11315 = vsub.f32 %v10707, %v11279
    %v11316 = vsub.f32 %v10903, %v11280
    %v11317 = vsub.f32 %v11099, %v11281
    %v11318 = vsub.f32 %v10709, %v11279
    %v11319 = vsub.f32 %v10905, %v11280
    %v11320 = vsub.f32 %v11101, %v11281
    %v11321 = vsub.f32 %v10712, %v11279
    %v11322 = vsub.f32 %v10908, %v11280
    %v11323 = vsub.f32 %v11104, %v11281
    %v11324 = vsub.f32 %v10714, %v11279
    %v11325 = vsub.f32 %v10910, %v11280
    %v11326 = vsub.f32 %v11106, %v11281
    %v11327 = vsub.f32 %v10717, %v11279
    %v11328 = vsub.f32 %v10913, %v11280
    %v11329 = vsub.f32 %v11109, %v11281
    %v11330 = vsub.f32 %v10719, %v11279
    %v11331 = vsub.f32 %v10915, %v11280
    %v11332 = vsub.f32 %v11111, %v11281
    %v11333 = vmul.f32 %v11285, %v11285
    %v11334 = vmul.f32 %v11286, %v11286
    %v11335 = vmul.f32 %v11287, %v11287
    %v11336 = vmul.f32 %v11288, %v11288
    %v11337 = vmul.f32 %v11289, %v11289
    %v11338 = vmul.f32 %v11290, %v11290
    %v11339 = vmul.f32 %v11291, %v11291
    %v11340 = vmul.f32 %v11292, %v11292
    %v11341 = vmul.f32 %v11293, %v11293
    %v11342 = vmul.f32 %v11294, %v11294
    %v11343 = vmul.f32 %v11295, %v11295
    %v11344 = vmul.f32 %v11296, %v11296
    %v11345 = vmul.f32 %v11297, %v11297
    %v11346 = vmul.f32 %v11298, %v11298
    %v11347 = vmul.f32 %v11299, %v11299
    %v11348 = vmul.f32 %v11300, %v11300
    %v11349 = vmul.f32 %v11301, %v11301
    %v11350 = vmul.f32 %v11302, %v11302
    %v11351 = vmul.f32 %v11303, %v11303
    %v11352 = vmul.f32 %v11304, %v11304
    %v11353 = vmul.f32 %v11305, %v11305
    %v11354 = vmul.f32 %v11306, %v11306
    %v11355 = vmul.f32 %v11307, %v11307
    %v11356 = vmul.f32 %v11308, %v11308
    %v11357 = vmul.f32 %v11309, %v11309
    %v11358 = vmul.f32 %v11310, %v11310
    %v11359 = vmul.f32 %v11311, %v11311
    %v11360 = vmul.f32 %v11312, %v11312
    %v11361 = vmul.f32 %v11313, %v11313
    %v11362 = vmul.f32 %v11314, %v11314
    %v11363 = vmul.f32 %v11315, %v11315
    %v11364 = vmul.f32 %v11316, %v11316
    %v11365 = vmul.f32 %v11317, %v11317
    %v11366 = vmul.f32 %v11318, %v11318
    %v11367 = vmul.f32 %v11319, %v11319
    %v11368 = vmul.f32 %v11320, %v11320
    %v11369 = vmul.f32 %v11321, %v11321
    %v11370 = vmul.f32 %v11322, %v11322
    %v11371 = vmul.f32 %v11323, %v11323
    %v11372 = vmul.f32 %v11324, %v11324
    %v11373 = vmul.f32 %v11325, %v11325
    %v11374 = vmul.f32 %v11326, %v11326
    %v11375 = vmul.f32 %v11327, %v11327
    %v11376 = vmul.f32 %v11328, %v11328
    %v11377 = vmul.f32 %v11329, %v11329
    %v11378 = vmul.f32 %v11330, %v11330
    %v11379 = vmul.f32 %v11331, %v11331
    %v11380 = vmul.f32 %v11332, %v11332
    %v11381 = vadd.f32 %v11333, %v11336
    %v11382 = vadd.f32 %v11381, %v11339
    %v11383 = vadd.f32 %v11382, %v11342
    %v11384 = vadd.f32 %v11383, %v11345
    %v11385 = vadd.f32 %v11384, %v11348
    %v11386 = vadd.f32 %v11385, %v11351
    %v11387 = vadd.f32 %v11386, %v11354
    %v11388 = vadd.f32 %v11387, %v11357
    %v11389 = vadd.f32 %v11388, %v11360
    %v11390 = vadd.f32 %v11389, %v11363
    %v11391 = vadd.f32 %v11390, %v11366
    %v11392 = vadd.f32 %v11391, %v11369
    %v11393 = vadd.f32 %v11392, %v11372
    %v11394 = vadd.f32 %v11393, %v11375
    %v11395 = vadd.f32 %v11394, %v11378
    %v11396 = vrot.slane %v11395, 4
    %v11397 = vadd.f32 %v11395, %v11396
    %v11398 = vrot.slane %v11397, 2
    %v11399 = vadd.f32 %v11397, %v11398
    %v11400 = vrot.slane %v11399, 1
    %v11401 = vadd.f32 %v11399, %v11400
    %v11402 = vadd.f32 %v11334, %v11337
    %v11403 = vadd.f32 %v11402, %v11340
    %v11404 = vadd.f32 %v11403, %v11343
    %v11405 = vadd.f32 %v11404, %v11346
    %v11406 = vadd.f32 %v11405, %v11349
    %v11407 = vadd.f32 %v11406, %v11352
    %v11408 = vadd.f32 %v11407, %v11355
    %v11409 = vadd.f32 %v11408, %v11358
    %v11410 = vadd.f32 %v11409, %v11361
    %v11411 = vadd.f32 %v11410, %v11364
    %v11412 = vadd.f32 %v11411, %v11367
    %v11413 = vadd.f32 %v11412, %v11370
    %v11414 = vadd.f32 %v11413, %v11373
    %v11415 = vadd.f32 %v11414, %v11376
    %v11416 = vadd.f32 %v11415, %v11379
    %v11417 = vrot.slane %v11416, 4
    %v11418 = vadd.f32 %v11416, %v11417
    %v11419 = vrot.slane %v11418, 2
    %v11420 = vadd.f32 %v11418, %v11419
    %v11421 = vrot.slane %v11420, 1
    %v11422 = vadd.f32 %v11420, %v11421
    %v11423 = vadd.f32 %v11335, %v11338
    %v11424 = vadd.f32 %v11423, %v11341
    %v11425 = vadd.f32 %v11424, %v11344
    %v11426 = vadd.f32 %v11425, %v11347
    %v11427 = vadd.f32 %v11426, %v11350
    %v11428 = vadd.f32 %v11427, %v11353
    %v11429 = vadd.f32 %v11428, %v11356
    %v11430 = vadd.f32 %v11429, %v11359
    %v11431 = vadd.f32 %v11430, %v11362
    %v11432 = vadd.f32 %v11431, %v11365
    %v11433 = vadd.f32 %v11432, %v11368
    %v11434 = vadd.f32 %v11433, %v11371
    %v11435 = vadd.f32 %v11434, %v11374
    %v11436 = vadd.f32 %v11435, %v11377
    %v11437 = vadd.f32 %v11436, %v11380
    %v11438 = vrot.slane %v11437, 4
    %v11439 = vadd.f32 %v11437, %v11438
    %v11440 = vrot.slane %v11439, 2
    %v11441 = vadd.f32 %v11439, %v11440
    %v11442 = vrot.slane %v11441, 1
    %v11443 = vadd.f32 %v11441, %v11442
    %v11444 = vsel %vm11180, %v11401, 0.0
    %11445 = vadd.xlane.f32.xlu0 %v11444
    %v11446 = vpop.xlane.xlu0 %11445
    %v11447 = vrot.slane %v11446, 4
    %v11448 = vadd.f32 %v11446, %v11447
    %v11449 = vrot.slane %v11448, 2
    %v11450 = vadd.f32 %v11448, %v11449
    %v11451 = vrot.slane %v11450, 1
    %v11452 = vadd.f32 %v11450, %v11451
    %s11453 = vtos %v11452
    %v11454 = vstv %s11453
    %v11455 = vmul.f32 %v11454, 0.000108506945
    %11456 = vst.msk [vmem:[#allocation9 + $0x1] sm:$0x1] %vm11180, %v11455
    %11459 = vrot.lane.b32.xlu0 %v11401, 56
    %v11460 = vpop.permute.xlu0 %11459
    %11461 = vrot.lane.b32.xlu0 %v11422, 56
    %v11462 = vpop.permute.xlu0 %11461
    %v11463 = vsel %vm11200, %v11460, %v11462
    %v11465 = vsel %vm11180, %v11463, 0.0
    %11466 = vadd.xlane.f32.xlu0 %v11465
    %v11467 = vpop.xlane.xlu0 %11466
    %v11468 = vrot.slane %v11467, 4
    %v11469 = vadd.f32 %v11467, %v11468
    %v11470 = vrot.slane %v11469, 2
    %v11471 = vadd.f32 %v11469, %v11470
    %v11472 = vrot.slane %v11471, 1
    %v11473 = vadd.f32 %v11471, %v11472
    %s11474 = vtos %v11473
    %v11475 = vstv %s11474
    %v11476 = vmul.f32 %v11475, 0.000108506945
    %11477 = vst.msk [vmem:[#allocation9 + $0x1] sm:$0x5] %vm11216, %v11476
    %11478 = vrot.lane.b32.xlu0 %v11422, 112
    %v11479 = vpop.permute.xlu0 %11478
    %v11481 = vsel %vm11180, %v11479, 0.0
    %11482 = vadd.xlane.f32.xlu0 %v11481
    %v11483 = vpop.xlane.xlu0 %11482
    %v11484 = vrot.slane %v11483, 4
    %v11485 = vadd.f32 %v11483, %v11484
    %v11486 = vrot.slane %v11485, 2
    %v11487 = vadd.f32 %v11485, %v11486
    %v11488 = vrot.slane %v11487, 1
    %v11489 = vadd.f32 %v11487, %v11488
    %s11490 = vtos %v11489
    %v11491 = vstv %s11490
    %v11492 = vmul.f32 %v11491, 0.000108506945
    %11493 = vst.msk [vmem:[#allocation9 + $0x3] sm:$0x1] %vm11233, %v11492
    %11495 = vrot.lane.b32.xlu0 %v11422, 40
    %v11496 = vpop.permute.xlu0 %11495
    %11497 = vrot.lane.b32.xlu0 %v11443, 40
    %v11498 = vpop.permute.xlu0 %11497
    %v11499 = vsel %vm11240, %v11496, %v11498
    %v11501 = vsel %vm11180, %v11499, 0.0
    %11502 = vadd.xlane.f32.xlu0 %v11501
    %v11503 = vpop.xlane.xlu0 %11502
    %v11504 = vrot.slane %v11503, 4
    %v11505 = vadd.f32 %v11503, %v11504
    %v11506 = vrot.slane %v11505, 2
    %v11507 = vadd.f32 %v11505, %v11506
    %v11508 = vrot.slane %v11507, 1
    %v11509 = vadd.f32 %v11507, %v11508
    %s11510 = vtos %v11509
    %v11511 = vstv %s11510
    %v11512 = vmul.f32 %v11511, 0.000108506945
    %11513 = vst.msk [vmem:[#allocation9 + $0x3] sm:$0x5] %vm11256, %v11512
    %11514 = vrot.lane.b32.xlu0 %v11443, 96
    %v11515 = vpop.permute.xlu0 %11514
    %v11517 = vsel %vm11180, %v11515, 0.0
    %11518 = vadd.xlane.f32.xlu0 %v11517
    %v11519 = vpop.xlane.xlu0 %11518
    %v11520 = vrot.slane %v11519, 4
    %v11521 = vadd.f32 %v11519, %v11520
    %v11522 = vrot.slane %v11521, 2
    %v11523 = vadd.f32 %v11521, %v11522
    %v11524 = vrot.slane %v11523, 1
    %v11525 = vadd.f32 %v11523, %v11524
    %s11526 = vtos %v11525
    %v11527 = vstv %s11526
    %v11528 = vmul.f32 %v11527, 0.000108506945
    %11529 = vst.msk [vmem:[#allocation9 + $0x5] sm:$0x1] %vm11273, %v11528
    %11530 = vst.msk [vmem:[#allocation9 + $0x5] sm:$0x1] %vm11275, 0.0
    %s11531 = scalar_lea.vmem [#allocation9], 1
    %v11532 = vld [vmem:[%s11531] ss:$2 sm:$0x7]
    %v11533 = vadd.f32 %v11532, 1e-05
    %v11534 = vrsqrt.pop %v11533
    %v11535 = vmul.f32 %v11534, %v11533
    %v11536 = vmul.f32 %v11535, %v11534
    %v11537 = vmul.f32 0.5, %v11536
    %v11538 = vsub.f32 1.5, %v11537
    %v11539 = vmul.f32 %v11534, %v11538
    %vm11540 = vweird.f32 %v11533
    %vm11541 = vweird.f32 %v11534
    %vm11542 = vmor %vm11540, %vm11541
    %v11543 = vsel %vm11542, %v11534, %v11539
    %v11545 = vperm.slane %v11543, 0
    %v11546 = vperm.slane %v11543, 1
    %v11547 = vperm.slane %v11543, 2
    %v11551 = vmul.f32 %v11285, %v11545
    %v11552 = vmul.f32 %v11286, %v11546
    %v11553 = vmul.f32 %v11287, %v11547
    %v11554 = vmul.f32 %v11288, %v11545
    %v11555 = vmul.f32 %v11289, %v11546
    %v11556 = vmul.f32 %v11290, %v11547
    %v11557 = vmul.f32 %v11291, %v11545
    %v11558 = vmul.f32 %v11292, %v11546
    %v11559 = vmul.f32 %v11293, %v11547
    %v11560 = vmul.f32 %v11294, %v11545
    %v11561 = vmul.f32 %v11295, %v11546
    %v11562 = vmul.f32 %v11296, %v11547
    %v11563 = vmul.f32 %v11297, %v11545
    %v11564 = vmul.f32 %v11298, %v11546
    %v11565 = vmul.f32 %v11299, %v11547
    %v11566 = vmul.f32 %v11300, %v11545
    %v11567 = vmul.f32 %v11301, %v11546
    %v11568 = vmul.f32 %v11302, %v11547
    %v11569 = vmul.f32 %v11303, %v11545
    %v11570 = vmul.f32 %v11304, %v11546
    %v11571 = vmul.f32 %v11305, %v11547
    %v11572 = vmul.f32 %v11306, %v11545
    %v11573 = vmul.f32 %v11307, %v11546
    %v11574 = vmul.f32 %v11308, %v11547
    %v11575 = vmul.f32 %v11309, %v11545
    %v11576 = vmul.f32 %v11310, %v11546
    %v11577 = vmul.f32 %v11311, %v11547
    %v11578 = vmul.f32 %v11312, %v11545
    %v11579 = vmul.f32 %v11313, %v11546
    %v11580 = vmul.f32 %v11314, %v11547
    %v11581 = vmul.f32 %v11315, %v11545
    %v11582 = vmul.f32 %v11316, %v11546
    %v11583 = vmul.f32 %v11317, %v11547
    %v11584 = vmul.f32 %v11318, %v11545
    %v11585 = vmul.f32 %v11319, %v11546
    %v11586 = vmul.f32 %v11320, %v11547
    %v11587 = vmul.f32 %v11321, %v11545
    %v11588 = vmul.f32 %v11322, %v11546
    %v11589 = vmul.f32 %v11323, %v11547
    %v11590 = vmul.f32 %v11324, %v11545
    %v11591 = vmul.f32 %v11325, %v11546
    %v11592 = vmul.f32 %v11326, %v11547
    %v11593 = vmul.f32 %v11327, %v11545
    %v11594 = vmul.f32 %v11328, %v11546
    %v11595 = vmul.f32 %v11329, %v11547
    %v11596 = vmul.f32 %v11330, %v11545
    %v11597 = vmul.f32 %v11331, %v11546
    %v11598 = vmul.f32 %v11332, %v11547
    %v11600 = vperm.slane %v11114, 0
    %v11601 = vperm.slane %v11114, 1
    %v11602 = vperm.slane %v11114, 2
    %v11606 = vmul.f32 %v11551, %v11600
    %v11607 = vmul.f32 %v11552, %v11601
    %v11608 = vmul.f32 %v11553, %v11602
    %v11609 = vmul.f32 %v11554, %v11600
    %v11610 = vmul.f32 %v11555, %v11601
    %v11611 = vmul.f32 %v11556, %v11602
    %v11612 = vmul.f32 %v11557, %v11600
    %v11613 = vmul.f32 %v11558, %v11601
    %v11614 = vmul.f32 %v11559, %v11602
    %v11615 = vmul.f32 %v11560, %v11600
    %v11616 = vmul.f32 %v11561, %v11601
    %v11617 = vmul.f32 %v11562, %v11602
    %v11618 = vmul.f32 %v11563, %v11600
    %v11619 = vmul.f32 %v11564, %v11601
    %v11620 = vmul.f32 %v11565, %v11602
    %v11621 = vmul.f32 %v11566, %v11600
    %v11622 = vmul.f32 %v11567, %v11601
    %v11623 = vmul.f32 %v11568, %v11602
    %v11624 = vmul.f32 %v11569, %v11600
    %v11625 = vmul.f32 %v11570, %v11601
    %v11626 = vmul.f32 %v11571, %v11602
    %v11627 = vmul.f32 %v11572, %v11600
    %v11628 = vmul.f32 %v11573, %v11601
    %v11629 = vmul.f32 %v11574, %v11602
    %v11630 = vmul.f32 %v11575, %v11600
    %v11631 = vmul.f32 %v11576, %v11601
    %v11632 = vmul.f32 %v11577, %v11602
    %v11633 = vmul.f32 %v11578, %v11600
    %v11634 = vmul.f32 %v11579, %v11601
    %v11635 = vmul.f32 %v11580, %v11602
    %v11636 = vmul.f32 %v11581, %v11600
    %v11637 = vmul.f32 %v11582, %v11601
    %v11638 = vmul.f32 %v11583, %v11602
    %v11639 = vmul.f32 %v11584, %v11600
    %v11640 = vmul.f32 %v11585, %v11601
    %v11641 = vmul.f32 %v11586, %v11602
    %v11642 = vmul.f32 %v11587, %v11600
    %v11643 = vmul.f32 %v11588, %v11601
    %v11644 = vmul.f32 %v11589, %v11602
    %v11645 = vmul.f32 %v11590, %v11600
    %v11646 = vmul.f32 %v11591, %v11601
    %v11647 = vmul.f32 %v11592, %v11602
    %v11648 = vmul.f32 %v11593, %v11600
    %v11649 = vmul.f32 %v11594, %v11601
    %v11650 = vmul.f32 %v11595, %v11602
    %v11651 = vmul.f32 %v11596, %v11600
    %v11652 = vmul.f32 %v11597, %v11601
    %v11653 = vmul.f32 %v11598, %v11602
    %v11655 = vperm.slane %v11116, 0
    %v11656 = vperm.slane %v11116, 1
    %v11657 = vperm.slane %v11116, 2
    %v11661 = vadd.f32 %v11606, %v11655
    %v11662 = vadd.f32 %v11607, %v11656
    %v11663 = vadd.f32 %v11608, %v11657
    %v11664 = vadd.f32 %v11609, %v11655
    %v11665 = vadd.f32 %v11610, %v11656
    %v11666 = vadd.f32 %v11611, %v11657
    %v11667 = vadd.f32 %v11612, %v11655
    %v11668 = vadd.f32 %v11613, %v11656
    %v11669 = vadd.f32 %v11614, %v11657
    %v11670 = vadd.f32 %v11615, %v11655
    %v11671 = vadd.f32 %v11616, %v11656
    %v11672 = vadd.f32 %v11617, %v11657
    %v11673 = vadd.f32 %v11618, %v11655
    %v11674 = vadd.f32 %v11619, %v11656
    %v11675 = vadd.f32 %v11620, %v11657
    %v11676 = vadd.f32 %v11621, %v11655
    %v11677 = vadd.f32 %v11622, %v11656
    %v11678 = vadd.f32 %v11623, %v11657
    %v11679 = vadd.f32 %v11624, %v11655
    %v11680 = vadd.f32 %v11625, %v11656
    %v11681 = vadd.f32 %v11626, %v11657
    %v11682 = vadd.f32 %v11627, %v11655
    %v11683 = vadd.f32 %v11628, %v11656
    %v11684 = vadd.f32 %v11629, %v11657
    %v11685 = vadd.f32 %v11630, %v11655
    %v11686 = vadd.f32 %v11631, %v11656
    %v11687 = vadd.f32 %v11632, %v11657
    %v11688 = vadd.f32 %v11633, %v11655
    %v11689 = vadd.f32 %v11634, %v11656
    %v11690 = vadd.f32 %v11635, %v11657
    %v11691 = vadd.f32 %v11636, %v11655
    %v11692 = vadd.f32 %v11637, %v11656
    %v11693 = vadd.f32 %v11638, %v11657
    %v11694 = vadd.f32 %v11639, %v11655
    %v11695 = vadd.f32 %v11640, %v11656
    %v11696 = vadd.f32 %v11641, %v11657
    %v11697 = vadd.f32 %v11642, %v11655
    %v11698 = vadd.f32 %v11643, %v11656
    %v11699 = vadd.f32 %v11644, %v11657
    %v11700 = vadd.f32 %v11645, %v11655
    %v11701 = vadd.f32 %v11646, %v11656
    %v11702 = vadd.f32 %v11647, %v11657
    %v11703 = vadd.f32 %v11648, %v11655
    %v11704 = vadd.f32 %v11649, %v11656
    %v11705 = vadd.f32 %v11650, %v11657
    %v11706 = vadd.f32 %v11651, %v11655
    %v11707 = vadd.f32 %v11652, %v11656
    %v11708 = vadd.f32 %v11653, %v11657
    %v11709 = vmax.f32 %v11661, 0.0
    %v11710 = vmax.f32 %v11662, 0.0
    %v11711 = vmax.f32 %v11663, 0.0
    %v11712 = vmax.f32 %v11664, 0.0
    %v11713 = vmax.f32 %v11665, 0.0
    %v11714 = vmax.f32 %v11666, 0.0
    %v11715 = vmax.f32 %v11667, 0.0
    %v11716 = vmax.f32 %v11668, 0.0
    %v11717 = vmax.f32 %v11669, 0.0
    %v11718 = vmax.f32 %v11670, 0.0
    %v11719 = vmax.f32 %v11671, 0.0
    %v11720 = vmax.f32 %v11672, 0.0
    %v11721 = vmax.f32 %v11673, 0.0
    %v11722 = vmax.f32 %v11674, 0.0
    %v11723 = vmax.f32 %v11675, 0.0
    %v11724 = vmax.f32 %v11676, 0.0
    %v11725 = vmax.f32 %v11677, 0.0
    %v11726 = vmax.f32 %v11678, 0.0
    %v11727 = vmax.f32 %v11679, 0.0
    %v11728 = vmax.f32 %v11680, 0.0
    %v11729 = vmax.f32 %v11681, 0.0
    %v11730 = vmax.f32 %v11682, 0.0
    %v11731 = vmax.f32 %v11683, 0.0
    %v11732 = vmax.f32 %v11684, 0.0
    %v11733 = vmax.f32 %v11685, 0.0
    %v11734 = vmax.f32 %v11686, 0.0
    %v11735 = vmax.f32 %v11687, 0.0
    %v11736 = vmax.f32 %v11688, 0.0
    %v11737 = vmax.f32 %v11689, 0.0
    %v11738 = vmax.f32 %v11690, 0.0
    %v11739 = vmax.f32 %v11691, 0.0
    %v11740 = vmax.f32 %v11692, 0.0
    %v11741 = vmax.f32 %v11693, 0.0
    %v11742 = vmax.f32 %v11694, 0.0
    %v11743 = vmax.f32 %v11695, 0.0
    %v11744 = vmax.f32 %v11696, 0.0
    %v11745 = vmax.f32 %v11697, 0.0
    %v11746 = vmax.f32 %v11698, 0.0
    %v11747 = vmax.f32 %v11699, 0.0
    %v11748 = vmax.f32 %v11700, 0.0
    %v11749 = vmax.f32 %v11701, 0.0
    %v11750 = vmax.f32 %v11702, 0.0
    %v11751 = vmax.f32 %v11703, 0.0
    %v11752 = vmax.f32 %v11704, 0.0
    %v11753 = vmax.f32 %v11705, 0.0
    %v11754 = vmax.f32 %v11706, 0.0
    %v11755 = vmax.f32 %v11707, 0.0
    %v11756 = vmax.f32 %v11708, 0.0
    %11757 = vst [vmem:[%s8] sm:$0xff] %v11709
    %11758 = vst [vmem:[%s8 + $0x8] sm:$0xff] %v11710
    %11759 = vst [vmem:[%s8 + $0x10] sm:$0xff] %v11711
    %11760 = vst [vmem:[%s8 + $0x18] sm:$0xff] %v11712
    %11761 = vst [vmem:[%s8 + $0x20] sm:$0xff] %v11713
    %11762 = vst [vmem:[%s8 + $0x28] sm:$0xff] %v11714
    %11763 = vst [vmem:[%s8 + $0x30] sm:$0xff] %v11715
    %11764 = vst [vmem:[%s8 + $0x38] sm:$0xff] %v11716
    %11765 = vst [vmem:[%s8 + $0x40] sm:$0xff] %v11717
    %11766 = vst [vmem:[%s8 + $0x48] sm:$0xff] %v11718
    %11767 = vst [vmem:[%s8 + $0x50] sm:$0xff] %v11719
    %11768 = vst [vmem:[%s8 + $0x58] sm:$0xff] %v11720
    %11769 = vst [vmem:[%s8 + $0x60] sm:$0xff] %v11721
    %11770 = vst [vmem:[%s8 + $0x68] sm:$0xff] %v11722
    %11771 = vst [vmem:[%s8 + $0x70] sm:$0xff] %v11723
    %11772 = vst [vmem:[%s8 + $0x78] sm:$0xff] %v11724
    %11773 = vst [vmem:[%s8 + $0x80] sm:$0xff] %v11725
    %11774 = vst [vmem:[%s8 + $0x88] sm:$0xff] %v11726
    %11775 = vst [vmem:[%s8 + $0x90] sm:$0xff] %v11727
    %11776 = vst [vmem:[%s8 + $0x98] sm:$0xff] %v11728
    %11777 = vst [vmem:[%s8 + $0xa0] sm:$0xff] %v11729
    %11778 = vst [vmem:[%s8 + $0xa8] sm:$0xff] %v11730
    %11779 = vst [vmem:[%s8 + $0xb0] sm:$0xff] %v11731
    %11780 = vst [vmem:[%s8 + $0xb8] sm:$0xff] %v11732
    %11781 = vst [vmem:[%s8 + $0xc0] sm:$0xff] %v11733
    %11782 = vst [vmem:[%s8 + $0xc8] sm:$0xff] %v11734
    %11783 = vst [vmem:[%s8 + $0xd0] sm:$0xff] %v11735
    %11784 = vst [vmem:[%s8 + $0xd8] sm:$0xff] %v11736
    %11785 = vst [vmem:[%s8 + $0xe0] sm:$0xff] %v11737
    %11786 = vst [vmem:[%s8 + $0xe8] sm:$0xff] %v11738
    %11787 = vst [vmem:[%s8 + $0xf0] sm:$0xff] %v11739
    %11788 = vst [vmem:[%s8 + $0xf8] sm:$0xff] %v11740
    %11789 = vst [vmem:[%s8 + $0x100] sm:$0xff] %v11741
    %11790 = vst [vmem:[%s8 + $0x108] sm:$0xff] %v11742
    %11791 = vst [vmem:[%s8 + $0x110] sm:$0xff] %v11743
    %11792 = vst [vmem:[%s8 + $0x118] sm:$0xff] %v11744
    %11793 = vst [vmem:[%s8 + $0x120] sm:$0xff] %v11745
    %11794 = vst [vmem:[%s8 + $0x128] sm:$0xff] %v11746
    %11795 = vst [vmem:[%s8 + $0x130] sm:$0xff] %v11747
    %11796 = vst [vmem:[%s8 + $0x138] sm:$0xff] %v11748
    %11797 = vst [vmem:[%s8 + $0x140] sm:$0xff] %v11749
    %11798 = vst [vmem:[%s8 + $0x148] sm:$0xff] %v11750
    %11799 = vst [vmem:[%s8 + $0x150] sm:$0xff] %v11751
    %11800 = vst [vmem:[%s8 + $0x158] sm:$0xff] %v11752
    %11801 = vst [vmem:[%s8 + $0x160] sm:$0xff] %v11753
    %11802 = vst [vmem:[%s8 + $0x168] sm:$0xff] %v11754
    %11803 = vst [vmem:[%s8 + $0x170] sm:$0xff] %v11755
    %11804 = vst [vmem:[%s8 + $0x178] sm:$0xff] %v11756
    // Predicated region
    $region66: #{generator_forward.1} parent=1 // pred_check
      _
    $region67: #{generator_forward.1} parent=1 // pred_check_branch
      %11806 = sbr.rel (0) target = $region69
    $region68: #{generator_forward.1} parent=1 // pred_region
      _
    $region69: #{generator_forward.1} parent=1 // pred_fallthru
      _
    // Predicated region
    $region70: #{generator_forward.1} parent=1 // pred_check
      _
    $region71: #{generator_forward.1} parent=1 // pred_check_branch
      %11808 = sbr.rel (0) target = $region73
    $region72: #{generator_forward.1} parent=1 // pred_region
      _
    $region73: #{generator_forward.1} parent=1 // pred_fallthru
      _
    %11809 = vsyncpa [#allocation11], 1
    %11810 = vsyncpa [#allocation13], 1
    %11811 = vsyncpa [#allocation16], 1
    %11812 = vsyncpa [#allocation19], 1
    %11813 = vsyncpa [#allocation22], 1

</llo_original>
